<compile_context>
chip_gen: v7x
topology: tpu7x:2x2x1
jax: 0.10.0
libtpu: 0.0.40
codegen_flags: <defaults>
</compile_context>

<pallas_src>
import functools

import jax
import jax.numpy as jnp
from jax.experimental import pallas as pl
from jax.experimental.pallas import tpu as pltpu

_SLOPE = 0.01  # LeakyReLU negative slope

# Order of packed parameters as passed to the kernel (after x).
_PARAM_ORDER = (
    'w_c2a', 'bst_c2a', 'w_c2b', 'bst_c2b', 'w_c2c', 'bst_c2c',
    'w_c3a', 'bst_c3a', 'w_c3b', 'bst_c3b', 'w_c3c', 'bst_c3c',
    'w_i12a', 'bst_i12a', 'w_i12b', 'bst_i12b', 'w_i3', 'bst_i3',
    'w_ih', 'w_hh', 'b_lstm', 'w_fc', 'b_fc',
)


# --------------------------------------------------------------------------
# Fused kernel: one batch element per grid step.
# --------------------------------------------------------------------------

def _deepvol_kernel(
        x_ref,
        w_c2a, bst_c2a, w_c2b, bst_c2b, w_c2c, bst_c2c,
        w_c3a, bst_c3a, w_c3b, bst_c3b, w_c3c, bst_c3c,
        w_i12a, bst_i12a, w_i12b, bst_i12b, w_i3, bst_i3,
        w_ih, w_hh, b_lstm, w_fc, b_fc,
        o_ref,
        pad_c2, pad_c3, pad_i, pad_mp, gx,
        *, T, I, H):
    f32 = jnp.float32

    def act_bn(y, bst_ref):
        # Conv bias -> LeakyReLU -> folded BatchNorm (eval mode), per channel.
        bst = bst_ref[...]                      # [3, N] = (bias, scale, shift)
        y = y + bst[0:1, :]
        y = jnp.where(y >= 0.0, y, _SLOPE * y)
        return y * bst[1:2, :] + bst[2:3, :]

    def mm(x, w_ref, bst_ref):
        y = jnp.dot(x, w_ref[...], preferred_element_type=f32)
        return act_bn(y, bst_ref)

    def tconv(x, w_ref, bst_ref, pad_top, buf):
        # (K,1) 'same' temporal conv (cross-correlation) over T, channels-last.
        # Padding is done in-kernel in a VMEM scratch buffer; taps are static
        # sublane-offset loads.  TODO(synk): at production T (100+) replace the
        # per-tap slices with pltpu.roll + iota-mask to use the XLU slot.
        K = w_ref.shape[0]
        N = w_ref.shape[2]
        pad_bot = K - 1 - pad_top
        ncol = x.shape[1]
        buf[0:pad_top, :] = jnp.zeros((pad_top, ncol), f32)
        buf[pad_top:pad_top + T, :] = x
        buf[pad_top + T:pad_top + T + pad_bot, :] = jnp.zeros((pad_bot, ncol), f32)
        w = w_ref[...]
        acc = jnp.zeros((T, N), f32)
        for k in range(K):                       # K in {4, 5}, static
            acc = acc + jnp.dot(buf[k:k + T, :], w[k],
                                preferred_element_type=f32)
        return act_bn(acc, bst_ref)

    def maxpool3(x, buf):
        # MaxPool2d((3,1), stride 1, padding (1,0)) with -inf padding.
        ncol = x.shape[1]
        neg = jnp.full((1, ncol), -jnp.inf, f32)
        buf[0:1, :] = neg
        buf[1:1 + T, :] = x
        buf[1 + T:2 + T, :] = neg
        return jnp.maximum(jnp.maximum(buf[0:T, :], buf[1:T + 1, :]),
                           buf[2:T + 2, :])

    x = x_ref[0]                                 # [T, 2L]

    # ---- conv2 block ----
    # Conv(1->C,(1,2),stride(1,2)) expanded to one [2L, L*C] matmul, then two
    # (4,1) 'same' convs as block-diagonal-over-levels matmuls on [T, L*C].
    y = mm(x, w_c2a, bst_c2a)                    # [T, L*C]
    y = tconv(y, w_c2b, bst_c2b, 1, pad_c2)
    y = tconv(y, w_c2c, bst_c2c, 1, pad_c2)

    # ---- conv3 block ----
    # Conv(C->C,(1,L)) collapses the level dim: [T, L*C] @ [L*C, C].
    y = mm(y, w_c3a, bst_c3a)                    # [T, C]
    y = tconv(y, w_c3b, bst_c3b, 1, pad_c3)
    y = tconv(y, w_c3c, bst_c3c, 1, pad_c3)

    # ---- inception ----
    # Branches 1+2: merged 1x1 conv [C,2I], then merged (5,1) block-diag conv
    # (the branch-1 (3,1) kernel is embedded at taps 1..3).
    ab = mm(y, w_i12a, bst_i12a)                 # [T, 2I]
    ab = tconv(ab, w_i12b, bst_i12b, 2, pad_i)   # [T, 2I]
    # Branch 3: maxpool(3,1) then 1x1 conv.
    mp = maxpool3(y, pad_mp)                     # [T, C]
    c3 = mm(mp, w_i3, bst_i3)                    # [T, I]

    # ---- LSTM ----
    # Hoist the input projection out of the recurrence.  The channel concat
    # (inp1, inp2, inp3) is folded into two matmuls against row-blocks of Wih.
    gx[...] = (jnp.dot(ab, w_ih[0:2 * I, :], preferred_element_type=f32)
               + jnp.dot(c3, w_ih[2 * I:3 * I, :], preferred_element_type=f32)
               + b_lstm[...])                    # [T, 4H]
    whh = w_hh[...]

    def step(t, carry):
        h, c = carry
        g = gx[pl.ds(t, 1), :] + jnp.dot(h, whh, preferred_element_type=f32)
        i_g = jax.nn.sigmoid(g[:, 0:H])
        f_g = jax.nn.sigmoid(g[:, H:2 * H])
        g_g = jnp.tanh(g[:, 2 * H:3 * H])
        o_g = jax.nn.sigmoid(g[:, 3 * H:4 * H])
        c = f_g * c + i_g * g_g
        h = o_g * jnp.tanh(c)
        return h, c

    h0 = jnp.zeros((1, H), f32)
    h, _ = jax.lax.fori_loop(0, T, step, (h0, h0), unroll=True)

    # ---- FC on the last hidden state ----
    out = jnp.dot(h, w_fc[...], preferred_element_type=f32) + b_fc[...]
    o_ref[...] = out.reshape(1, 1, out.shape[-1])


# --------------------------------------------------------------------------
# Raw parameters (mirror the PyTorch module; BN folded to eval scale/shift)
# --------------------------------------------------------------------------

def init_params(key, *, L, C, I, H, NT):
    keys = iter(jax.random.split(key, 96))

    def w(shape, scale=0.1):
        return scale * jax.random.normal(next(keys), shape, jnp.float32)

    def bn(n):
        gamma = 1.0 + 0.1 * jax.random.normal(next(keys), (n,), jnp.float32)
        beta = 0.1 * jax.random.normal(next(keys), (n,), jnp.float32)
        mean = 0.1 * jax.random.normal(next(keys), (n,), jnp.float32)
        var = 0.5 + jax.random.uniform(next(keys), (n,), jnp.float32)
        s = gamma * jax.lax.rsqrt(var + 1e-5)
        t = beta - mean * s
        return s, t

    p = {}

    def conv(name, w_shape):
        p[name + '_w'] = w(w_shape)
        p[name + '_b'] = w((w_shape[-1],))
        p[name + '_s'], p[name + '_t'] = bn(w_shape[-1])

    # conv2: Conv(1->C,(1,2),s=(1,2)); Conv(C->C,(4,1)) x2
    conv('c2a', (2, C)); conv('c2b', (4, C, C)); conv('c2c', (4, C, C))
    # conv3: Conv(C->C,(1,L)); Conv(C->C,(4,1)) x2   (c3a_w rows ordered l*C+cin)
    conv('c3a', (L * C, C)); conv('c3b', (4, C, C)); conv('c3c', (4, C, C))
    # inception branches
    conv('i1a', (C, I)); conv('i1b', (3, I, I))
    conv('i2a', (C, I)); conv('i2b', (5, I, I))
    conv('i3', (C, I))
    # LSTM (single layer, gate order i,f,g,o) + FC
    p['lstm_wih'] = w((3 * I, 4 * H))
    p['lstm_whh'] = w((H, 4 * H))
    p['lstm_b'] = w((4 * H,))          # = b_ih + b_hh
    p['fc_w'] = w((H, NT))
    p['fc_b'] = w((NT,))
    return p


# --------------------------------------------------------------------------
# One-time parameter packing: expand / merge weights for the fused kernel.
# --------------------------------------------------------------------------

def pack_params(p, *, L, I, H, NT):
    f32 = jnp.float32
    eye_l = jnp.eye(L, dtype=f32)

    def bst(name, tile=1):
        b, s, t = p[name + '_b'], p[name + '_s'], p[name + '_t']
        if tile > 1:
            b, s, t = (jnp.tile(v, tile) for v in (b, s, t))
        return jnp.stack([b, s, t], axis=0)                       # [3, N]

    def bst_cat(n1, n2):
        return jnp.stack([jnp.concatenate([p[n1 + sfx], p[n2 + sfx]])
                          for sfx in ('_b', '_s', '_t')], axis=0)

    pp = {}
    # (1,2)-stride-2 conv as a [2L, L*C] matmul: W[2l+j, l*C+c] = w[j, c]
    pp['w_c2a'] = jnp.einsum('ab,jc->ajbc', eye_l,
                             p['c2a_w']).reshape(2 * L, -1)
    pp['bst_c2a'] = bst('c2a', tile=L)
    # (4,1) convs of conv2: block-diagonal over the L levels
    for n in ('c2b', 'c2c'):
        k, cin, cout = p[n + '_w'].shape
        pp['w_' + n] = jnp.einsum('ab,kio->kaibo', eye_l,
                                  p[n + '_w']).reshape(k, L * cin, L * cout)
        pp['bst_' + n] = bst(n, tile=L)
    pp['w_c3a'] = p['c3a_w']; pp['bst_c3a'] = bst('c3a')
    pp['w_c3b'] = p['c3b_w']; pp['bst_c3b'] = bst('c3b')
    pp['w_c3c'] = p['c3c_w']; pp['bst_c3c'] = bst('c3c')
    # Inception: merge the two 1x1 convs; merge the (3,1)+(5,1) convs into one
    # (5,1) block-diagonal conv (the (3,1) kernel embedded at taps 1..3 so its
    # 'same' padding (1,1) matches the (5,1) padding (2,2)).
    pp['w_i12a'] = jnp.concatenate([p['i1a_w'], p['i2a_w']], axis=1)   # [C,2I]
    pp['bst_i12a'] = bst_cat('i1a', 'i2a')
    w12b = jnp.zeros((5, 2 * I, 2 * I), f32)
    w12b = w12b.at[1:4, :I, :I].set(p['i1b_w'])
    w12b = w12b.at[:, I:, I:].set(p['i2b_w'])
    pp['w_i12b'] = w12b
    pp['bst_i12b'] = bst_cat('i1b', 'i2b')
    pp['w_i3'] = p['i3_w']; pp['bst_i3'] = bst('i3')
    # LSTM + FC
    pp['w_ih'] = p['lstm_wih']
    pp['w_hh'] = p['lstm_whh']
    pp['b_lstm'] = p['lstm_b'].reshape(1, 4 * H)
    pp['w_fc'] = p['fc_w']
    pp['b_fc'] = p['fc_b'].reshape(1, NT)
    return pp


# --------------------------------------------------------------------------
# Forward: one fused pallas_call, grid over batch.
# --------------------------------------------------------------------------

def deepvol_forward(x, pp, *, L, C, I, H, NT):
    B, T, two_l = x.shape
    assert two_l == 2 * L

    def full_spec(a):
        return pl.BlockSpec(a.shape, lambda b, _nd=a.ndim: (0,) * _nd)

    in_specs = [pl.BlockSpec((1, T, 2 * L), lambda b: (b, 0, 0))]
    in_specs += [full_spec(pp[n]) for n in _PARAM_ORDER]
    args = [x] + [pp[n] for n in _PARAM_ORDER]

    out = pl.pallas_call(
        functools.partial(_deepvol_kernel, T=T, I=I, H=H),
        grid=(B,),
        out_shape=jax.ShapeDtypeStruct((B, 1, NT), jnp.float32),
        in_specs=in_specs,
        out_specs=pl.BlockSpec((1, 1, NT), lambda b: (b, 0, 0)),
        scratch_shapes=[
            pltpu.VMEM((T + 3, L * C), jnp.float32),   # pad buf: conv2 (4,1)
            pltpu.VMEM((T + 3, C), jnp.float32),       # pad buf: conv3 (4,1)
            pltpu.VMEM((T + 4, 2 * I), jnp.float32),   # pad buf: merged (5,1)
            pltpu.VMEM((T + 2, C), jnp.float32),       # pad buf: maxpool(3,1)
            pltpu.VMEM((T, 4 * H), jnp.float32),       # hoisted LSTM gates_x
        ],
        compiler_params=pltpu.CompilerParams(
            dimension_semantics=("parallel",)),
    )(*args)
    return out.reshape(B, NT)


# --------------------------------------------------------------------------

if __name__ == "__main__":
    # small config: num_levels L=4 (-> 2L=8 features), conv_out=8, incep_out=8,
    # lstm_hidden=32, num_targets=1, batch=2, T=16
    B, T, L = 2, 16, 4
    C, I, H, NT = 8, 8, 32, 1

    key = jax.random.PRNGKey(0)
    kx, kp = jax.random.split(key)
    x = jax.random.normal(kx, (B, T, 2 * L), jnp.float32)
    raw = init_params(kp, L=L, C=C, I=I, H=H, NT=NT)
    packed = pack_params(raw, L=L, I=I, H=H, NT=NT)

    fwd = jax.jit(functools.partial(deepvol_forward, L=L, C=C, I=I, H=H, NT=NT))
    out = jax.block_until_ready(fwd(x, packed))

    assert out.shape == (B, NT), out.shape
    assert bool(jnp.all(jnp.isfinite(out)))
    print("KERNEL_OK")
</pallas_src>

<mosaic_0001>
module attributes {stable_mosaic.version = 11 : i64} {
  func.func @_deepvol_kernel(%arg0: i32, %arg1: memref<1x16x8xf32, #tpu.memory_space<vmem>>, %arg2: memref<8x32xf32, #tpu.memory_space<vmem>>, %arg3: memref<3x32xf32, #tpu.memory_space<vmem>>, %arg4: memref<4x32x32xf32, #tpu.memory_space<vmem>>, %arg5: memref<3x32xf32, #tpu.memory_space<vmem>>, %arg6: memref<4x32x32xf32, #tpu.memory_space<vmem>>, %arg7: memref<3x32xf32, #tpu.memory_space<vmem>>, %arg8: memref<32x8xf32, #tpu.memory_space<vmem>>, %arg9: memref<3x8xf32, #tpu.memory_space<vmem>>, %arg10: memref<4x8x8xf32, #tpu.memory_space<vmem>>, %arg11: memref<3x8xf32, #tpu.memory_space<vmem>>, %arg12: memref<4x8x8xf32, #tpu.memory_space<vmem>>, %arg13: memref<3x8xf32, #tpu.memory_space<vmem>>, %arg14: memref<8x16xf32, #tpu.memory_space<vmem>>, %arg15: memref<3x16xf32, #tpu.memory_space<vmem>>, %arg16: memref<5x16x16xf32, #tpu.memory_space<vmem>>, %arg17: memref<3x16xf32, #tpu.memory_space<vmem>>, %arg18: memref<8x8xf32, #tpu.memory_space<vmem>>, %arg19: memref<3x8xf32, #tpu.memory_space<vmem>>, %arg20: memref<24x128xf32, #tpu.memory_space<vmem>>, %arg21: memref<32x128xf32, #tpu.memory_space<vmem>>, %arg22: memref<1x128xf32, #tpu.memory_space<vmem>>, %arg23: memref<32x1xf32, #tpu.memory_space<vmem>>, %arg24: memref<1x1xf32, #tpu.memory_space<vmem>>, %arg25: memref<1x1x1xf32, #tpu.memory_space<vmem>>, %arg26: memref<19x32xf32, #tpu.memory_space<vmem>>, %arg27: memref<19x8xf32, #tpu.memory_space<vmem>>, %arg28: memref<20x16xf32, #tpu.memory_space<vmem>>, %arg29: memref<18x8xf32, #tpu.memory_space<vmem>>, %arg30: memref<16x128xf32, #tpu.memory_space<vmem>>) attributes {dimension_semantics = [#tpu.dimension_semantics<parallel>], iteration_bounds = array<i64: 2>, scalar_prefetch = 0 : i64, scratch_operands = 5 : i64, tpu.core_type = #tpu.core_type<tc>, window_params = [{transform_indices = @transform_0, window_bounds = array<i64: 1, 16, 8>}, {pipeline_mode = #tpu.pipeline_mode<synchronous>, transform_indices = @transform_1, window_bounds = array<i64: 8, 32>}, {pipeline_mode = #tpu.pipeline_mode<synchronous>, transform_indices = @transform_2, window_bounds = array<i64: 3, 32>}, {pipeline_mode = #tpu.pipeline_mode<synchronous>, transform_indices = @transform_3, window_bounds = array<i64: 4, 32, 32>}, {pipeline_mode = #tpu.pipeline_mode<synchronous>, transform_indices = @transform_4, window_bounds = array<i64: 3, 32>}, {pipeline_mode = #tpu.pipeline_mode<synchronous>, transform_indices = @transform_5, window_bounds = array<i64: 4, 32, 32>}, {pipeline_mode = #tpu.pipeline_mode<synchronous>, transform_indices = @transform_6, window_bounds = array<i64: 3, 32>}, {pipeline_mode = #tpu.pipeline_mode<synchronous>, transform_indices = @transform_7, window_bounds = array<i64: 32, 8>}, {pipeline_mode = #tpu.pipeline_mode<synchronous>, transform_indices = @transform_8, window_bounds = array<i64: 3, 8>}, {pipeline_mode = #tpu.pipeline_mode<synchronous>, transform_indices = @transform_9, window_bounds = array<i64: 4, 8, 8>}, {pipeline_mode = #tpu.pipeline_mode<synchronous>, transform_indices = @transform_10, window_bounds = array<i64: 3, 8>}, {pipeline_mode = #tpu.pipeline_mode<synchronous>, transform_indices = @transform_11, window_bounds = array<i64: 4, 8, 8>}, {pipeline_mode = #tpu.pipeline_mode<synchronous>, transform_indices = @transform_12, window_bounds = array<i64: 3, 8>}, {pipeline_mode = #tpu.pipeline_mode<synchronous>, transform_indices = @transform_13, window_bounds = array<i64: 8, 16>}, {pipeline_mode = #tpu.pipeline_mode<synchronous>, transform_indices = @transform_14, window_bounds = array<i64: 3, 16>}, {pipeline_mode = #tpu.pipeline_mode<synchronous>, transform_indices = @transform_15, window_bounds = array<i64: 5, 16, 16>}, {pipeline_mode = #tpu.pipeline_mode<synchronous>, transform_indices = @transform_16, window_bounds = array<i64: 3, 16>}, {pipeline_mode = #tpu.pipeline_mode<synchronous>, transform_indices = @transform_17, window_bounds = array<i64: 8, 8>}, {pipeline_mode = #tpu.pipeline_mode<synchronous>, transform_indices = @transform_18, window_bounds = array<i64: 3, 8>}, {pipeline_mode = #tpu.pipeline_mode<synchronous>, transform_indices = @transform_19, window_bounds = array<i64: 24, 128>}, {pipeline_mode = #tpu.pipeline_mode<synchronous>, transform_indices = @transform_20, window_bounds = array<i64: 32, 128>}, {pipeline_mode = #tpu.pipeline_mode<synchronous>, transform_indices = @transform_21, window_bounds = array<i64: 1, 128>}, {pipeline_mode = #tpu.pipeline_mode<synchronous>, transform_indices = @transform_22, window_bounds = array<i64: 32, 1>}, {pipeline_mode = #tpu.pipeline_mode<synchronous>, transform_indices = @transform_23, window_bounds = array<i64: 1, 1>}, {transform_indices = @transform_24, window_bounds = array<i64: 1, 1, 1>}]} {
    %c0 = arith.constant 0 : index
    %c0_0 = arith.constant 0 : index
    %c0_1 = arith.constant 0 : index
    %0 = vector.load %arg1[%c0, %c0_0, %c0_1] : memref<1x16x8xf32, #tpu.memory_space<vmem>>, vector<1x16x8xf32>
    %1 = vector.shape_cast %0 : vector<1x16x8xf32> to vector<16x8xf32>
    %c0_2 = arith.constant 0 : index
    %c0_3 = arith.constant 0 : index
    %2 = vector.load %arg2[%c0_2, %c0_3] : memref<8x32xf32, #tpu.memory_space<vmem>>, vector<8x32xf32>
    %cst = arith.constant dense<0.000000e+00> : vector<16x32xf32>
    %3 = tpu.matmul %1, %2, %cst {dimension_numbers = #tpu.dot_dimension_numbers<[1], [0], [0], [1], [0, 0, 1, 1], [], []>} : vector<16x8xf32>, vector<8x32xf32>, vector<16x32xf32> -> vector<16x32xf32>
    %c0_4 = arith.constant 0 : index
    %c0_5 = arith.constant 0 : index
    %4 = vector.load %arg3[%c0_4, %c0_5] : memref<3x32xf32, #tpu.memory_space<vmem>>, vector<3x32xf32>
    %5 = vector.extract_strided_slice %4 {offsets = [0, 0], sizes = [1, 32], strides = [1, 1]} : vector<3x32xf32> to vector<1x32xf32>
    %6 = vector.broadcast %5 : vector<1x32xf32> to vector<16x32xf32>
    %7 = arith.addf %3, %6 : vector<16x32xf32>
    %cst_6 = arith.constant 0.000000e+00 : f32
    %8 = vector.broadcast %cst_6 : f32 to vector<16x32xf32>
    %9 = arith.cmpf oge, %7, %8 : vector<16x32xf32>
    %cst_7 = arith.constant 0.00999999977 : f32
    %10 = vector.broadcast %cst_7 : f32 to vector<16x32xf32>
    %11 = arith.mulf %10, %7 : vector<16x32xf32>
    %12 = arith.select %9, %7, %11 : vector<16x32xi1>, vector<16x32xf32>
    %13 = vector.extract_strided_slice %4 {offsets = [1, 0], sizes = [1, 32], strides = [1, 1]} : vector<3x32xf32> to vector<1x32xf32>
    %14 = vector.broadcast %13 : vector<1x32xf32> to vector<16x32xf32>
    %15 = arith.mulf %12, %14 : vector<16x32xf32>
    %16 = vector.extract_strided_slice %4 {offsets = [2, 0], sizes = [1, 32], strides = [1, 1]} : vector<3x32xf32> to vector<1x32xf32>
    %17 = vector.broadcast %16 : vector<1x32xf32> to vector<16x32xf32>
    %18 = arith.addf %15, %17 : vector<16x32xf32>
    %cst_8 = arith.constant 0.000000e+00 : f32
    %19 = vector.broadcast %cst_8 : f32 to vector<1x32xf32>
    %c0_9 = arith.constant 0 : index
    %c0_10 = arith.constant 0 : index
    %20 = vector.load %arg26[%c0_9, %c0_10] : memref<19x32xf32, #tpu.memory_space<vmem>>, vector<1x32xf32>
    tpu.vector_store %arg26[%c0_9, %c0_10], %19 {strides = array<i32>} : memref<19x32xf32, #tpu.memory_space<vmem>>, vector<1x32xf32>,
    %c1 = arith.constant 1 : index
    %c0_11 = arith.constant 0 : index
    %21 = vector.load %arg26[%c1, %c0_11] : memref<19x32xf32, #tpu.memory_space<vmem>>, vector<16x32xf32>
    tpu.vector_store %arg26[%c1, %c0_11], %18 {strides = array<i32>} : memref<19x32xf32, #tpu.memory_space<vmem>>, vector<16x32xf32>,
    %cst_12 = arith.constant 0.000000e+00 : f32
    %22 = vector.broadcast %cst_12 : f32 to vector<2x32xf32>
    %c17 = arith.constant 17 : index
    %c0_13 = arith.constant 0 : index
    %23 = vector.load %arg26[%c17, %c0_13] : memref<19x32xf32, #tpu.memory_space<vmem>>, vector<2x32xf32>
    tpu.vector_store %arg26[%c17, %c0_13], %22 {strides = array<i32>} : memref<19x32xf32, #tpu.memory_space<vmem>>, vector<2x32xf32>,
    %c0_14 = arith.constant 0 : index
    %c0_15 = arith.constant 0 : index
    %c0_16 = arith.constant 0 : index
    %24 = vector.load %arg4[%c0_14, %c0_15, %c0_16] : memref<4x32x32xf32, #tpu.memory_space<vmem>>, vector<4x32x32xf32>
    %cst_17 = arith.constant 0.000000e+00 : f32
    %25 = vector.broadcast %cst_17 : f32 to vector<16x32xf32>
    %c0_18 = arith.constant 0 : index
    %c0_19 = arith.constant 0 : index
    %26 = vector.load %arg26[%c0_18, %c0_19] : memref<19x32xf32, #tpu.memory_space<vmem>>, vector<16x32xf32>
    %27 = vector.extract_strided_slice %24 {offsets = [0, 0, 0], sizes = [1, 32, 32], strides = [1, 1, 1]} : vector<4x32x32xf32> to vector<1x32x32xf32>
    %28 = vector.shape_cast %27 : vector<1x32x32xf32> to vector<32x32xf32>
    %cst_20 = arith.constant dense<0.000000e+00> : vector<16x32xf32>
    %29 = tpu.matmul %26, %28, %cst_20 {dimension_numbers = #tpu.dot_dimension_numbers<[1], [0], [0], [1], [0, 0, 1, 1], [], []>} : vector<16x32xf32>, vector<32x32xf32>, vector<16x32xf32> -> vector<16x32xf32>
    %30 = arith.addf %25, %29 : vector<16x32xf32>
    %c1_21 = arith.constant 1 : index
    %c0_22 = arith.constant 0 : index
    %31 = vector.load %arg26[%c1_21, %c0_22] : memref<19x32xf32, #tpu.memory_space<vmem>>, vector<16x32xf32>
    %32 = vector.extract_strided_slice %24 {offsets = [1, 0, 0], sizes = [1, 32, 32], strides = [1, 1, 1]} : vector<4x32x32xf32> to vector<1x32x32xf32>
    %33 = vector.shape_cast %32 : vector<1x32x32xf32> to vector<32x32xf32>
    %cst_23 = arith.constant dense<0.000000e+00> : vector<16x32xf32>
    %34 = tpu.matmul %31, %33, %cst_23 {dimension_numbers = #tpu.dot_dimension_numbers<[1], [0], [0], [1], [0, 0, 1, 1], [], []>} : vector<16x32xf32>, vector<32x32xf32>, vector<16x32xf32> -> vector<16x32xf32>
    %35 = arith.addf %30, %34 : vector<16x32xf32>
    %c2 = arith.constant 2 : index
    %c0_24 = arith.constant 0 : index
    %36 = vector.load %arg26[%c2, %c0_24] : memref<19x32xf32, #tpu.memory_space<vmem>>, vector<16x32xf32>
    %37 = vector.extract_strided_slice %24 {offsets = [2, 0, 0], sizes = [1, 32, 32], strides = [1, 1, 1]} : vector<4x32x32xf32> to vector<1x32x32xf32>
    %38 = vector.shape_cast %37 : vector<1x32x32xf32> to vector<32x32xf32>
    %cst_25 = arith.constant dense<0.000000e+00> : vector<16x32xf32>
    %39 = tpu.matmul %36, %38, %cst_25 {dimension_numbers = #tpu.dot_dimension_numbers<[1], [0], [0], [1], [0, 0, 1, 1], [], []>} : vector<16x32xf32>, vector<32x32xf32>, vector<16x32xf32> -> vector<16x32xf32>
    %40 = arith.addf %35, %39 : vector<16x32xf32>
    %c3 = arith.constant 3 : index
    %c0_26 = arith.constant 0 : index
    %41 = vector.load %arg26[%c3, %c0_26] : memref<19x32xf32, #tpu.memory_space<vmem>>, vector<16x32xf32>
    %42 = vector.extract_strided_slice %24 {offsets = [3, 0, 0], sizes = [1, 32, 32], strides = [1, 1, 1]} : vector<4x32x32xf32> to vector<1x32x32xf32>
    %43 = vector.shape_cast %42 : vector<1x32x32xf32> to vector<32x32xf32>
    %cst_27 = arith.constant dense<0.000000e+00> : vector<16x32xf32>
    %44 = tpu.matmul %41, %43, %cst_27 {dimension_numbers = #tpu.dot_dimension_numbers<[1], [0], [0], [1], [0, 0, 1, 1], [], []>} : vector<16x32xf32>, vector<32x32xf32>, vector<16x32xf32> -> vector<16x32xf32>
    %45 = arith.addf %40, %44 : vector<16x32xf32>
    %c0_28 = arith.constant 0 : index
    %c0_29 = arith.constant 0 : index
    %46 = vector.load %arg5[%c0_28, %c0_29] : memref<3x32xf32, #tpu.memory_space<vmem>>, vector<3x32xf32>
    %47 = vector.extract_strided_slice %46 {offsets = [0, 0], sizes = [1, 32], strides = [1, 1]} : vector<3x32xf32> to vector<1x32xf32>
    %48 = vector.broadcast %47 : vector<1x32xf32> to vector<16x32xf32>
    %49 = arith.addf %45, %48 : vector<16x32xf32>
    %cst_30 = arith.constant 0.000000e+00 : f32
    %50 = vector.broadcast %cst_30 : f32 to vector<16x32xf32>
    %51 = arith.cmpf oge, %49, %50 : vector<16x32xf32>
    %cst_31 = arith.constant 0.00999999977 : f32
    %52 = vector.broadcast %cst_31 : f32 to vector<16x32xf32>
    %53 = arith.mulf %52, %49 : vector<16x32xf32>
    %54 = arith.select %51, %49, %53 : vector<16x32xi1>, vector<16x32xf32>
    %55 = vector.extract_strided_slice %46 {offsets = [1, 0], sizes = [1, 32], strides = [1, 1]} : vector<3x32xf32> to vector<1x32xf32>
    %56 = vector.broadcast %55 : vector<1x32xf32> to vector<16x32xf32>
    %57 = arith.mulf %54, %56 : vector<16x32xf32>
    %58 = vector.extract_strided_slice %46 {offsets = [2, 0], sizes = [1, 32], strides = [1, 1]} : vector<3x32xf32> to vector<1x32xf32>
    %59 = vector.broadcast %58 : vector<1x32xf32> to vector<16x32xf32>
    %60 = arith.addf %57, %59 : vector<16x32xf32>
    %cst_32 = arith.constant 0.000000e+00 : f32
    %61 = vector.broadcast %cst_32 : f32 to vector<1x32xf32>
    %c0_33 = arith.constant 0 : index
    %c0_34 = arith.constant 0 : index
    %62 = vector.load %arg26[%c0_33, %c0_34] : memref<19x32xf32, #tpu.memory_space<vmem>>, vector<1x32xf32>
    tpu.vector_store %arg26[%c0_33, %c0_34], %61 {strides = array<i32>} : memref<19x32xf32, #tpu.memory_space<vmem>>, vector<1x32xf32>,
    %c1_35 = arith.constant 1 : index
    %c0_36 = arith.constant 0 : index
    %63 = vector.load %arg26[%c1_35, %c0_36] : memref<19x32xf32, #tpu.memory_space<vmem>>, vector<16x32xf32>
    tpu.vector_store %arg26[%c1_35, %c0_36], %60 {strides = array<i32>} : memref<19x32xf32, #tpu.memory_space<vmem>>, vector<16x32xf32>,
    %cst_37 = arith.constant 0.000000e+00 : f32
    %64 = vector.broadcast %cst_37 : f32 to vector<2x32xf32>
    %c17_38 = arith.constant 17 : index
    %c0_39 = arith.constant 0 : index
    %65 = vector.load %arg26[%c17_38, %c0_39] : memref<19x32xf32, #tpu.memory_space<vmem>>, vector<2x32xf32>
    tpu.vector_store %arg26[%c17_38, %c0_39], %64 {strides = array<i32>} : memref<19x32xf32, #tpu.memory_space<vmem>>, vector<2x32xf32>,
    %c0_40 = arith.constant 0 : index
    %c0_41 = arith.constant 0 : index
    %c0_42 = arith.constant 0 : index
    %66 = vector.load %arg6[%c0_40, %c0_41, %c0_42] : memref<4x32x32xf32, #tpu.memory_space<vmem>>, vector<4x32x32xf32>
    %cst_43 = arith.constant 0.000000e+00 : f32
    %67 = vector.broadcast %cst_43 : f32 to vector<16x32xf32>
    %c0_44 = arith.constant 0 : index
    %c0_45 = arith.constant 0 : index
    %68 = vector.load %arg26[%c0_44, %c0_45] : memref<19x32xf32, #tpu.memory_space<vmem>>, vector<16x32xf32>
    %69 = vector.extract_strided_slice %66 {offsets = [0, 0, 0], sizes = [1, 32, 32], strides = [1, 1, 1]} : vector<4x32x32xf32> to vector<1x32x32xf32>
    %70 = vector.shape_cast %69 : vector<1x32x32xf32> to vector<32x32xf32>
    %cst_46 = arith.constant dense<0.000000e+00> : vector<16x32xf32>
    %71 = tpu.matmul %68, %70, %cst_46 {dimension_numbers = #tpu.dot_dimension_numbers<[1], [0], [0], [1], [0, 0, 1, 1], [], []>} : vector<16x32xf32>, vector<32x32xf32>, vector<16x32xf32> -> vector<16x32xf32>
    %72 = arith.addf %67, %71 : vector<16x32xf32>
    %c1_47 = arith.constant 1 : index
    %c0_48 = arith.constant 0 : index
    %73 = vector.load %arg26[%c1_47, %c0_48] : memref<19x32xf32, #tpu.memory_space<vmem>>, vector<16x32xf32>
    %74 = vector.extract_strided_slice %66 {offsets = [1, 0, 0], sizes = [1, 32, 32], strides = [1, 1, 1]} : vector<4x32x32xf32> to vector<1x32x32xf32>
    %75 = vector.shape_cast %74 : vector<1x32x32xf32> to vector<32x32xf32>
    %cst_49 = arith.constant dense<0.000000e+00> : vector<16x32xf32>
    %76 = tpu.matmul %73, %75, %cst_49 {dimension_numbers = #tpu.dot_dimension_numbers<[1], [0], [0], [1], [0, 0, 1, 1], [], []>} : vector<16x32xf32>, vector<32x32xf32>, vector<16x32xf32> -> vector<16x32xf32>
    %77 = arith.addf %72, %76 : vector<16x32xf32>
    %c2_50 = arith.constant 2 : index
    %c0_51 = arith.constant 0 : index
    %78 = vector.load %arg26[%c2_50, %c0_51] : memref<19x32xf32, #tpu.memory_space<vmem>>, vector<16x32xf32>
    %79 = vector.extract_strided_slice %66 {offsets = [2, 0, 0], sizes = [1, 32, 32], strides = [1, 1, 1]} : vector<4x32x32xf32> to vector<1x32x32xf32>
    %80 = vector.shape_cast %79 : vector<1x32x32xf32> to vector<32x32xf32>
    %cst_52 = arith.constant dense<0.000000e+00> : vector<16x32xf32>
    %81 = tpu.matmul %78, %80, %cst_52 {dimension_numbers = #tpu.dot_dimension_numbers<[1], [0], [0], [1], [0, 0, 1, 1], [], []>} : vector<16x32xf32>, vector<32x32xf32>, vector<16x32xf32> -> vector<16x32xf32>
    %82 = arith.addf %77, %81 : vector<16x32xf32>
    %c3_53 = arith.constant 3 : index
    %c0_54 = arith.constant 0 : index
    %83 = vector.load %arg26[%c3_53, %c0_54] : memref<19x32xf32, #tpu.memory_space<vmem>>, vector<16x32xf32>
    %84 = vector.extract_strided_slice %66 {offsets = [3, 0, 0], sizes = [1, 32, 32], strides = [1, 1, 1]} : vector<4x32x32xf32> to vector<1x32x32xf32>
    %85 = vector.shape_cast %84 : vector<1x32x32xf32> to vector<32x32xf32>
    %cst_55 = arith.constant dense<0.000000e+00> : vector<16x32xf32>
    %86 = tpu.matmul %83, %85, %cst_55 {dimension_numbers = #tpu.dot_dimension_numbers<[1], [0], [0], [1], [0, 0, 1, 1], [], []>} : vector<16x32xf32>, vector<32x32xf32>, vector<16x32xf32> -> vector<16x32xf32>
    %87 = arith.addf %82, %86 : vector<16x32xf32>
    %c0_56 = arith.constant 0 : index
    %c0_57 = arith.constant 0 : index
    %88 = vector.load %arg7[%c0_56, %c0_57] : memref<3x32xf32, #tpu.memory_space<vmem>>, vector<3x32xf32>
    %89 = vector.extract_strided_slice %88 {offsets = [0, 0], sizes = [1, 32], strides = [1, 1]} : vector<3x32xf32> to vector<1x32xf32>
    %90 = vector.broadcast %89 : vector<1x32xf32> to vector<16x32xf32>
    %91 = arith.addf %87, %90 : vector<16x32xf32>
    %cst_58 = arith.constant 0.000000e+00 : f32
    %92 = vector.broadcast %cst_58 : f32 to vector<16x32xf32>
    %93 = arith.cmpf oge, %91, %92 : vector<16x32xf32>
    %cst_59 = arith.constant 0.00999999977 : f32
    %94 = vector.broadcast %cst_59 : f32 to vector<16x32xf32>
    %95 = arith.mulf %94, %91 : vector<16x32xf32>
    %96 = arith.select %93, %91, %95 : vector<16x32xi1>, vector<16x32xf32>
    %97 = vector.extract_strided_slice %88 {offsets = [1, 0], sizes = [1, 32], strides = [1, 1]} : vector<3x32xf32> to vector<1x32xf32>
    %98 = vector.broadcast %97 : vector<1x32xf32> to vector<16x32xf32>
    %99 = arith.mulf %96, %98 : vector<16x32xf32>
    %100 = vector.extract_strided_slice %88 {offsets = [2, 0], sizes = [1, 32], strides = [1, 1]} : vector<3x32xf32> to vector<1x32xf32>
    %101 = vector.broadcast %100 : vector<1x32xf32> to vector<16x32xf32>
    %102 = arith.addf %99, %101 : vector<16x32xf32>
    %c0_60 = arith.constant 0 : index
    %c0_61 = arith.constant 0 : index
    %103 = vector.load %arg8[%c0_60, %c0_61] : memref<32x8xf32, #tpu.memory_space<vmem>>, vector<32x8xf32>
    %cst_62 = arith.constant dense<0.000000e+00> : vector<16x8xf32>
    %104 = tpu.matmul %102, %103, %cst_62 {dimension_numbers = #tpu.dot_dimension_numbers<[1], [0], [0], [1], [0, 0, 1, 1], [], []>} : vector<16x32xf32>, vector<32x8xf32>, vector<16x8xf32> -> vector<16x8xf32>
    %c0_63 = arith.constant 0 : index
    %c0_64 = arith.constant 0 : index
    %105 = vector.load %arg9[%c0_63, %c0_64] : memref<3x8xf32, #tpu.memory_space<vmem>>, vector<3x8xf32>
    %106 = vector.extract_strided_slice %105 {offsets = [0, 0], sizes = [1, 8], strides = [1, 1]} : vector<3x8xf32> to vector<1x8xf32>
    %107 = vector.broadcast %106 : vector<1x8xf32> to vector<16x8xf32>
    %108 = arith.addf %104, %107 : vector<16x8xf32>
    %cst_65 = arith.constant 0.000000e+00 : f32
    %109 = vector.broadcast %cst_65 : f32 to vector<16x8xf32>
    %110 = arith.cmpf oge, %108, %109 : vector<16x8xf32>
    %cst_66 = arith.constant 0.00999999977 : f32
    %111 = vector.broadcast %cst_66 : f32 to vector<16x8xf32>
    %112 = arith.mulf %111, %108 : vector<16x8xf32>
    %113 = arith.select %110, %108, %112 : vector<16x8xi1>, vector<16x8xf32>
    %114 = vector.extract_strided_slice %105 {offsets = [1, 0], sizes = [1, 8], strides = [1, 1]} : vector<3x8xf32> to vector<1x8xf32>
    %115 = vector.broadcast %114 : vector<1x8xf32> to vector<16x8xf32>
    %116 = arith.mulf %113, %115 : vector<16x8xf32>
    %117 = vector.extract_strided_slice %105 {offsets = [2, 0], sizes = [1, 8], strides = [1, 1]} : vector<3x8xf32> to vector<1x8xf32>
    %118 = vector.broadcast %117 : vector<1x8xf32> to vector<16x8xf32>
    %119 = arith.addf %116, %118 : vector<16x8xf32>
    %cst_67 = arith.constant 0.000000e+00 : f32
    %120 = vector.broadcast %cst_67 : f32 to vector<1x8xf32>
    %c0_68 = arith.constant 0 : index
    %c0_69 = arith.constant 0 : index
    %121 = vector.load %arg27[%c0_68, %c0_69] : memref<19x8xf32, #tpu.memory_space<vmem>>, vector<1x8xf32>
    tpu.vector_store %arg27[%c0_68, %c0_69], %120 {strides = array<i32>} : memref<19x8xf32, #tpu.memory_space<vmem>>, vector<1x8xf32>,
    %c1_70 = arith.constant 1 : index
    %c0_71 = arith.constant 0 : index
    %122 = vector.load %arg27[%c1_70, %c0_71] : memref<19x8xf32, #tpu.memory_space<vmem>>, vector<16x8xf32>
    tpu.vector_store %arg27[%c1_70, %c0_71], %119 {strides = array<i32>} : memref<19x8xf32, #tpu.memory_space<vmem>>, vector<16x8xf32>,
    %cst_72 = arith.constant 0.000000e+00 : f32
    %123 = vector.broadcast %cst_72 : f32 to vector<2x8xf32>
    %c17_73 = arith.constant 17 : index
    %c0_74 = arith.constant 0 : index
    %124 = vector.load %arg27[%c17_73, %c0_74] : memref<19x8xf32, #tpu.memory_space<vmem>>, vector<2x8xf32>
    tpu.vector_store %arg27[%c17_73, %c0_74], %123 {strides = array<i32>} : memref<19x8xf32, #tpu.memory_space<vmem>>, vector<2x8xf32>,
    %c0_75 = arith.constant 0 : index
    %c0_76 = arith.constant 0 : index
    %c0_77 = arith.constant 0 : index
    %125 = vector.load %arg10[%c0_75, %c0_76, %c0_77] : memref<4x8x8xf32, #tpu.memory_space<vmem>>, vector<4x8x8xf32>
    %cst_78 = arith.constant 0.000000e+00 : f32
    %126 = vector.broadcast %cst_78 : f32 to vector<16x8xf32>
    %c0_79 = arith.constant 0 : index
    %c0_80 = arith.constant 0 : index
    %127 = vector.load %arg27[%c0_79, %c0_80] : memref<19x8xf32, #tpu.memory_space<vmem>>, vector<16x8xf32>
    %128 = vector.extract_strided_slice %125 {offsets = [0, 0, 0], sizes = [1, 8, 8], strides = [1, 1, 1]} : vector<4x8x8xf32> to vector<1x8x8xf32>
    %129 = vector.shape_cast %128 : vector<1x8x8xf32> to vector<8x8xf32>
    %cst_81 = arith.constant dense<0.000000e+00> : vector<16x8xf32>
    %130 = tpu.matmul %127, %129, %cst_81 {dimension_numbers = #tpu.dot_dimension_numbers<[1], [0], [0], [1], [0, 0, 1, 1], [], []>} : vector<16x8xf32>, vector<8x8xf32>, vector<16x8xf32> -> vector<16x8xf32>
    %131 = arith.addf %126, %130 : vector<16x8xf32>
    %c1_82 = arith.constant 1 : index
    %c0_83 = arith.constant 0 : index
    %132 = vector.load %arg27[%c1_82, %c0_83] : memref<19x8xf32, #tpu.memory_space<vmem>>, vector<16x8xf32>
    %133 = vector.extract_strided_slice %125 {offsets = [1, 0, 0], sizes = [1, 8, 8], strides = [1, 1, 1]} : vector<4x8x8xf32> to vector<1x8x8xf32>
    %134 = vector.shape_cast %133 : vector<1x8x8xf32> to vector<8x8xf32>
    %cst_84 = arith.constant dense<0.000000e+00> : vector<16x8xf32>
    %135 = tpu.matmul %132, %134, %cst_84 {dimension_numbers = #tpu.dot_dimension_numbers<[1], [0], [0], [1], [0, 0, 1, 1], [], []>} : vector<16x8xf32>, vector<8x8xf32>, vector<16x8xf32> -> vector<16x8xf32>
    %136 = arith.addf %131, %135 : vector<16x8xf32>
    %c2_85 = arith.constant 2 : index
    %c0_86 = arith.constant 0 : index
    %137 = vector.load %arg27[%c2_85, %c0_86] : memref<19x8xf32, #tpu.memory_space<vmem>>, vector<16x8xf32>
    %138 = vector.extract_strided_slice %125 {offsets = [2, 0, 0], sizes = [1, 8, 8], strides = [1, 1, 1]} : vector<4x8x8xf32> to vector<1x8x8xf32>
    %139 = vector.shape_cast %138 : vector<1x8x8xf32> to vector<8x8xf32>
    %cst_87 = arith.constant dense<0.000000e+00> : vector<16x8xf32>
    %140 = tpu.matmul %137, %139, %cst_87 {dimension_numbers = #tpu.dot_dimension_numbers<[1], [0], [0], [1], [0, 0, 1, 1], [], []>} : vector<16x8xf32>, vector<8x8xf32>, vector<16x8xf32> -> vector<16x8xf32>
    %141 = arith.addf %136, %140 : vector<16x8xf32>
    %c3_88 = arith.constant 3 : index
    %c0_89 = arith.constant 0 : index
    %142 = vector.load %arg27[%c3_88, %c0_89] : memref<19x8xf32, #tpu.memory_space<vmem>>, vector<16x8xf32>
    %143 = vector.extract_strided_slice %125 {offsets = [3, 0, 0], sizes = [1, 8, 8], strides = [1, 1, 1]} : vector<4x8x8xf32> to vector<1x8x8xf32>
    %144 = vector.shape_cast %143 : vector<1x8x8xf32> to vector<8x8xf32>
    %cst_90 = arith.constant dense<0.000000e+00> : vector<16x8xf32>
    %145 = tpu.matmul %142, %144, %cst_90 {dimension_numbers = #tpu.dot_dimension_numbers<[1], [0], [0], [1], [0, 0, 1, 1], [], []>} : vector<16x8xf32>, vector<8x8xf32>, vector<16x8xf32> -> vector<16x8xf32>
    %146 = arith.addf %141, %145 : vector<16x8xf32>
    %c0_91 = arith.constant 0 : index
    %c0_92 = arith.constant 0 : index
    %147 = vector.load %arg11[%c0_91, %c0_92] : memref<3x8xf32, #tpu.memory_space<vmem>>, vector<3x8xf32>
    %148 = vector.extract_strided_slice %147 {offsets = [0, 0], sizes = [1, 8], strides = [1, 1]} : vector<3x8xf32> to vector<1x8xf32>
    %149 = vector.broadcast %148 : vector<1x8xf32> to vector<16x8xf32>
    %150 = arith.addf %146, %149 : vector<16x8xf32>
    %cst_93 = arith.constant 0.000000e+00 : f32
    %151 = vector.broadcast %cst_93 : f32 to vector<16x8xf32>
    %152 = arith.cmpf oge, %150, %151 : vector<16x8xf32>
    %cst_94 = arith.constant 0.00999999977 : f32
    %153 = vector.broadcast %cst_94 : f32 to vector<16x8xf32>
    %154 = arith.mulf %153, %150 : vector<16x8xf32>
    %155 = arith.select %152, %150, %154 : vector<16x8xi1>, vector<16x8xf32>
    %156 = vector.extract_strided_slice %147 {offsets = [1, 0], sizes = [1, 8], strides = [1, 1]} : vector<3x8xf32> to vector<1x8xf32>
    %157 = vector.broadcast %156 : vector<1x8xf32> to vector<16x8xf32>
    %158 = arith.mulf %155, %157 : vector<16x8xf32>
    %159 = vector.extract_strided_slice %147 {offsets = [2, 0], sizes = [1, 8], strides = [1, 1]} : vector<3x8xf32> to vector<1x8xf32>
    %160 = vector.broadcast %159 : vector<1x8xf32> to vector<16x8xf32>
    %161 = arith.addf %158, %160 : vector<16x8xf32>
    %cst_95 = arith.constant 0.000000e+00 : f32
    %162 = vector.broadcast %cst_95 : f32 to vector<1x8xf32>
    %c0_96 = arith.constant 0 : index
    %c0_97 = arith.constant 0 : index
    %163 = vector.load %arg27[%c0_96, %c0_97] : memref<19x8xf32, #tpu.memory_space<vmem>>, vector<1x8xf32>
    tpu.vector_store %arg27[%c0_96, %c0_97], %162 {strides = array<i32>} : memref<19x8xf32, #tpu.memory_space<vmem>>, vector<1x8xf32>,
    %c1_98 = arith.constant 1 : index
    %c0_99 = arith.constant 0 : index
    %164 = vector.load %arg27[%c1_98, %c0_99] : memref<19x8xf32, #tpu.memory_space<vmem>>, vector<16x8xf32>
    tpu.vector_store %arg27[%c1_98, %c0_99], %161 {strides = array<i32>} : memref<19x8xf32, #tpu.memory_space<vmem>>, vector<16x8xf32>,
    %cst_100 = arith.constant 0.000000e+00 : f32
    %165 = vector.broadcast %cst_100 : f32 to vector<2x8xf32>
    %c17_101 = arith.constant 17 : index
    %c0_102 = arith.constant 0 : index
    %166 = vector.load %arg27[%c17_101, %c0_102] : memref<19x8xf32, #tpu.memory_space<vmem>>, vector<2x8xf32>
    tpu.vector_store %arg27[%c17_101, %c0_102], %165 {strides = array<i32>} : memref<19x8xf32, #tpu.memory_space<vmem>>, vector<2x8xf32>,
    %c0_103 = arith.constant 0 : index
    %c0_104 = arith.constant 0 : index
    %c0_105 = arith.constant 0 : index
    %167 = vector.load %arg12[%c0_103, %c0_104, %c0_105] : memref<4x8x8xf32, #tpu.memory_space<vmem>>, vector<4x8x8xf32>
    %cst_106 = arith.constant 0.000000e+00 : f32
    %168 = vector.broadcast %cst_106 : f32 to vector<16x8xf32>
    %c0_107 = arith.constant 0 : index
    %c0_108 = arith.constant 0 : index
    %169 = vector.load %arg27[%c0_107, %c0_108] : memref<19x8xf32, #tpu.memory_space<vmem>>, vector<16x8xf32>
    %170 = vector.extract_strided_slice %167 {offsets = [0, 0, 0], sizes = [1, 8, 8], strides = [1, 1, 1]} : vector<4x8x8xf32> to vector<1x8x8xf32>
    %171 = vector.shape_cast %170 : vector<1x8x8xf32> to vector<8x8xf32>
    %cst_109 = arith.constant dense<0.000000e+00> : vector<16x8xf32>
    %172 = tpu.matmul %169, %171, %cst_109 {dimension_numbers = #tpu.dot_dimension_numbers<[1], [0], [0], [1], [0, 0, 1, 1], [], []>} : vector<16x8xf32>, vector<8x8xf32>, vector<16x8xf32> -> vector<16x8xf32>
    %173 = arith.addf %168, %172 : vector<16x8xf32>
    %c1_110 = arith.constant 1 : index
    %c0_111 = arith.constant 0 : index
    %174 = vector.load %arg27[%c1_110, %c0_111] : memref<19x8xf32, #tpu.memory_space<vmem>>, vector<16x8xf32>
    %175 = vector.extract_strided_slice %167 {offsets = [1, 0, 0], sizes = [1, 8, 8], strides = [1, 1, 1]} : vector<4x8x8xf32> to vector<1x8x8xf32>
    %176 = vector.shape_cast %175 : vector<1x8x8xf32> to vector<8x8xf32>
    %cst_112 = arith.constant dense<0.000000e+00> : vector<16x8xf32>
    %177 = tpu.matmul %174, %176, %cst_112 {dimension_numbers = #tpu.dot_dimension_numbers<[1], [0], [0], [1], [0, 0, 1, 1], [], []>} : vector<16x8xf32>, vector<8x8xf32>, vector<16x8xf32> -> vector<16x8xf32>
    %178 = arith.addf %173, %177 : vector<16x8xf32>
    %c2_113 = arith.constant 2 : index
    %c0_114 = arith.constant 0 : index
    %179 = vector.load %arg27[%c2_113, %c0_114] : memref<19x8xf32, #tpu.memory_space<vmem>>, vector<16x8xf32>
    %180 = vector.extract_strided_slice %167 {offsets = [2, 0, 0], sizes = [1, 8, 8], strides = [1, 1, 1]} : vector<4x8x8xf32> to vector<1x8x8xf32>
    %181 = vector.shape_cast %180 : vector<1x8x8xf32> to vector<8x8xf32>
    %cst_115 = arith.constant dense<0.000000e+00> : vector<16x8xf32>
    %182 = tpu.matmul %179, %181, %cst_115 {dimension_numbers = #tpu.dot_dimension_numbers<[1], [0], [0], [1], [0, 0, 1, 1], [], []>} : vector<16x8xf32>, vector<8x8xf32>, vector<16x8xf32> -> vector<16x8xf32>
    %183 = arith.addf %178, %182 : vector<16x8xf32>
    %c3_116 = arith.constant 3 : index
    %c0_117 = arith.constant 0 : index
    %184 = vector.load %arg27[%c3_116, %c0_117] : memref<19x8xf32, #tpu.memory_space<vmem>>, vector<16x8xf32>
    %185 = vector.extract_strided_slice %167 {offsets = [3, 0, 0], sizes = [1, 8, 8], strides = [1, 1, 1]} : vector<4x8x8xf32> to vector<1x8x8xf32>
    %186 = vector.shape_cast %185 : vector<1x8x8xf32> to vector<8x8xf32>
    %cst_118 = arith.constant dense<0.000000e+00> : vector<16x8xf32>
    %187 = tpu.matmul %184, %186, %cst_118 {dimension_numbers = #tpu.dot_dimension_numbers<[1], [0], [0], [1], [0, 0, 1, 1], [], []>} : vector<16x8xf32>, vector<8x8xf32>, vector<16x8xf32> -> vector<16x8xf32>
    %188 = arith.addf %183, %187 : vector<16x8xf32>
    %c0_119 = arith.constant 0 : index
    %c0_120 = arith.constant 0 : index
    %189 = vector.load %arg13[%c0_119, %c0_120] : memref<3x8xf32, #tpu.memory_space<vmem>>, vector<3x8xf32>
    %190 = vector.extract_strided_slice %189 {offsets = [0, 0], sizes = [1, 8], strides = [1, 1]} : vector<3x8xf32> to vector<1x8xf32>
    %191 = vector.broadcast %190 : vector<1x8xf32> to vector<16x8xf32>
    %192 = arith.addf %188, %191 : vector<16x8xf32>
    %cst_121 = arith.constant 0.000000e+00 : f32
    %193 = vector.broadcast %cst_121 : f32 to vector<16x8xf32>
    %194 = arith.cmpf oge, %192, %193 : vector<16x8xf32>
    %cst_122 = arith.constant 0.00999999977 : f32
    %195 = vector.broadcast %cst_122 : f32 to vector<16x8xf32>
    %196 = arith.mulf %195, %192 : vector<16x8xf32>
    %197 = arith.select %194, %192, %196 : vector<16x8xi1>, vector<16x8xf32>
    %198 = vector.extract_strided_slice %189 {offsets = [1, 0], sizes = [1, 8], strides = [1, 1]} : vector<3x8xf32> to vector<1x8xf32>
    %199 = vector.broadcast %198 : vector<1x8xf32> to vector<16x8xf32>
    %200 = arith.mulf %197, %199 : vector<16x8xf32>
    %201 = vector.extract_strided_slice %189 {offsets = [2, 0], sizes = [1, 8], strides = [1, 1]} : vector<3x8xf32> to vector<1x8xf32>
    %202 = vector.broadcast %201 : vector<1x8xf32> to vector<16x8xf32>
    %203 = arith.addf %200, %202 : vector<16x8xf32>
    %c0_123 = arith.constant 0 : index
    %c0_124 = arith.constant 0 : index
    %204 = vector.load %arg14[%c0_123, %c0_124] : memref<8x16xf32, #tpu.memory_space<vmem>>, vector<8x16xf32>
    %cst_125 = arith.constant dense<0.000000e+00> : vector<16x16xf32>
    %205 = tpu.matmul %203, %204, %cst_125 {dimension_numbers = #tpu.dot_dimension_numbers<[1], [0], [0], [1], [0, 0, 1, 1], [], []>} : vector<16x8xf32>, vector<8x16xf32>, vector<16x16xf32> -> vector<16x16xf32>
    %c0_126 = arith.constant 0 : index
    %c0_127 = arith.constant 0 : index
    %206 = vector.load %arg15[%c0_126, %c0_127] : memref<3x16xf32, #tpu.memory_space<vmem>>, vector<3x16xf32>
    %207 = vector.extract_strided_slice %206 {offsets = [0, 0], sizes = [1, 16], strides = [1, 1]} : vector<3x16xf32> to vector<1x16xf32>
    %208 = vector.broadcast %207 : vector<1x16xf32> to vector<16x16xf32>
    %209 = arith.addf %205, %208 : vector<16x16xf32>
    %cst_128 = arith.constant 0.000000e+00 : f32
    %210 = vector.broadcast %cst_128 : f32 to vector<16x16xf32>
    %211 = arith.cmpf oge, %209, %210 : vector<16x16xf32>
    %cst_129 = arith.constant 0.00999999977 : f32
    %212 = vector.broadcast %cst_129 : f32 to vector<16x16xf32>
    %213 = arith.mulf %212, %209 : vector<16x16xf32>
    %214 = arith.select %211, %209, %213 : vector<16x16xi1>, vector<16x16xf32>
    %215 = vector.extract_strided_slice %206 {offsets = [1, 0], sizes = [1, 16], strides = [1, 1]} : vector<3x16xf32> to vector<1x16xf32>
    %216 = vector.broadcast %215 : vector<1x16xf32> to vector<16x16xf32>
    %217 = arith.mulf %214, %216 : vector<16x16xf32>
    %218 = vector.extract_strided_slice %206 {offsets = [2, 0], sizes = [1, 16], strides = [1, 1]} : vector<3x16xf32> to vector<1x16xf32>
    %219 = vector.broadcast %218 : vector<1x16xf32> to vector<16x16xf32>
    %220 = arith.addf %217, %219 : vector<16x16xf32>
    %cst_130 = arith.constant 0.000000e+00 : f32
    %221 = vector.broadcast %cst_130 : f32 to vector<2x16xf32>
    %c0_131 = arith.constant 0 : index
    %c0_132 = arith.constant 0 : index
    %222 = vector.load %arg28[%c0_131, %c0_132] : memref<20x16xf32, #tpu.memory_space<vmem>>, vector<2x16xf32>
    tpu.vector_store %arg28[%c0_131, %c0_132], %221 {strides = array<i32>} : memref<20x16xf32, #tpu.memory_space<vmem>>, vector<2x16xf32>,
    %c2_133 = arith.constant 2 : index
    %c0_134 = arith.constant 0 : index
    %223 = vector.load %arg28[%c2_133, %c0_134] : memref<20x16xf32, #tpu.memory_space<vmem>>, vector<16x16xf32>
    tpu.vector_store %arg28[%c2_133, %c0_134], %220 {strides = array<i32>} : memref<20x16xf32, #tpu.memory_space<vmem>>, vector<16x16xf32>,
    %cst_135 = arith.constant 0.000000e+00 : f32
    %224 = vector.broadcast %cst_135 : f32 to vector<2x16xf32>
    %c18 = arith.constant 18 : index
    %c0_136 = arith.constant 0 : index
    %225 = vector.load %arg28[%c18, %c0_136] : memref<20x16xf32, #tpu.memory_space<vmem>>, vector<2x16xf32>
    tpu.vector_store %arg28[%c18, %c0_136], %224 {strides = array<i32>} : memref<20x16xf32, #tpu.memory_space<vmem>>, vector<2x16xf32>,
    %c0_137 = arith.constant 0 : index
    %c0_138 = arith.constant 0 : index
    %c0_139 = arith.constant 0 : index
    %226 = vector.load %arg16[%c0_137, %c0_138, %c0_139] : memref<5x16x16xf32, #tpu.memory_space<vmem>>, vector<5x16x16xf32>
    %cst_140 = arith.constant 0.000000e+00 : f32
    %227 = vector.broadcast %cst_140 : f32 to vector<16x16xf32>
    %c0_141 = arith.constant 0 : index
    %c0_142 = arith.constant 0 : index
    %228 = vector.load %arg28[%c0_141, %c0_142] : memref<20x16xf32, #tpu.memory_space<vmem>>, vector<16x16xf32>
    %229 = vector.extract_strided_slice %226 {offsets = [0, 0, 0], sizes = [1, 16, 16], strides = [1, 1, 1]} : vector<5x16x16xf32> to vector<1x16x16xf32>
    %230 = vector.shape_cast %229 : vector<1x16x16xf32> to vector<16x16xf32>
    %cst_143 = arith.constant dense<0.000000e+00> : vector<16x16xf32>
    %231 = tpu.matmul %228, %230, %cst_143 {dimension_numbers = #tpu.dot_dimension_numbers<[1], [0], [0], [1], [0, 0, 1, 1], [], []>} : vector<16x16xf32>, vector<16x16xf32>, vector<16x16xf32> -> vector<16x16xf32>
    %232 = arith.addf %227, %231 : vector<16x16xf32>
    %c1_144 = arith.constant 1 : index
    %c0_145 = arith.constant 0 : index
    %233 = vector.load %arg28[%c1_144, %c0_145] : memref<20x16xf32, #tpu.memory_space<vmem>>, vector<16x16xf32>
    %234 = vector.extract_strided_slice %226 {offsets = [1, 0, 0], sizes = [1, 16, 16], strides = [1, 1, 1]} : vector<5x16x16xf32> to vector<1x16x16xf32>
    %235 = vector.shape_cast %234 : vector<1x16x16xf32> to vector<16x16xf32>
    %cst_146 = arith.constant dense<0.000000e+00> : vector<16x16xf32>
    %236 = tpu.matmul %233, %235, %cst_146 {dimension_numbers = #tpu.dot_dimension_numbers<[1], [0], [0], [1], [0, 0, 1, 1], [], []>} : vector<16x16xf32>, vector<16x16xf32>, vector<16x16xf32> -> vector<16x16xf32>
    %237 = arith.addf %232, %236 : vector<16x16xf32>
    %c2_147 = arith.constant 2 : index
    %c0_148 = arith.constant 0 : index
    %238 = vector.load %arg28[%c2_147, %c0_148] : memref<20x16xf32, #tpu.memory_space<vmem>>, vector<16x16xf32>
    %239 = vector.extract_strided_slice %226 {offsets = [2, 0, 0], sizes = [1, 16, 16], strides = [1, 1, 1]} : vector<5x16x16xf32> to vector<1x16x16xf32>
    %240 = vector.shape_cast %239 : vector<1x16x16xf32> to vector<16x16xf32>
    %cst_149 = arith.constant dense<0.000000e+00> : vector<16x16xf32>
    %241 = tpu.matmul %238, %240, %cst_149 {dimension_numbers = #tpu.dot_dimension_numbers<[1], [0], [0], [1], [0, 0, 1, 1], [], []>} : vector<16x16xf32>, vector<16x16xf32>, vector<16x16xf32> -> vector<16x16xf32>
    %242 = arith.addf %237, %241 : vector<16x16xf32>
    %c3_150 = arith.constant 3 : index
    %c0_151 = arith.constant 0 : index
    %243 = vector.load %arg28[%c3_150, %c0_151] : memref<20x16xf32, #tpu.memory_space<vmem>>, vector<16x16xf32>
    %244 = vector.extract_strided_slice %226 {offsets = [3, 0, 0], sizes = [1, 16, 16], strides = [1, 1, 1]} : vector<5x16x16xf32> to vector<1x16x16xf32>
    %245 = vector.shape_cast %244 : vector<1x16x16xf32> to vector<16x16xf32>
    %cst_152 = arith.constant dense<0.000000e+00> : vector<16x16xf32>
    %246 = tpu.matmul %243, %245, %cst_152 {dimension_numbers = #tpu.dot_dimension_numbers<[1], [0], [0], [1], [0, 0, 1, 1], [], []>} : vector<16x16xf32>, vector<16x16xf32>, vector<16x16xf32> -> vector<16x16xf32>
    %247 = arith.addf %242, %246 : vector<16x16xf32>
    %c4 = arith.constant 4 : index
    %c0_153 = arith.constant 0 : index
    %248 = vector.load %arg28[%c4, %c0_153] : memref<20x16xf32, #tpu.memory_space<vmem>>, vector<16x16xf32>
    %249 = vector.extract_strided_slice %226 {offsets = [4, 0, 0], sizes = [1, 16, 16], strides = [1, 1, 1]} : vector<5x16x16xf32> to vector<1x16x16xf32>
    %250 = vector.shape_cast %249 : vector<1x16x16xf32> to vector<16x16xf32>
    %cst_154 = arith.constant dense<0.000000e+00> : vector<16x16xf32>
    %251 = tpu.matmul %248, %250, %cst_154 {dimension_numbers = #tpu.dot_dimension_numbers<[1], [0], [0], [1], [0, 0, 1, 1], [], []>} : vector<16x16xf32>, vector<16x16xf32>, vector<16x16xf32> -> vector<16x16xf32>
    %252 = arith.addf %247, %251 : vector<16x16xf32>
    %c0_155 = arith.constant 0 : index
    %c0_156 = arith.constant 0 : index
    %253 = vector.load %arg17[%c0_155, %c0_156] : memref<3x16xf32, #tpu.memory_space<vmem>>, vector<3x16xf32>
    %254 = vector.extract_strided_slice %253 {offsets = [0, 0], sizes = [1, 16], strides = [1, 1]} : vector<3x16xf32> to vector<1x16xf32>
    %255 = vector.broadcast %254 : vector<1x16xf32> to vector<16x16xf32>
    %256 = arith.addf %252, %255 : vector<16x16xf32>
    %cst_157 = arith.constant 0.000000e+00 : f32
    %257 = vector.broadcast %cst_157 : f32 to vector<16x16xf32>
    %258 = arith.cmpf oge, %256, %257 : vector<16x16xf32>
    %cst_158 = arith.constant 0.00999999977 : f32
    %259 = vector.broadcast %cst_158 : f32 to vector<16x16xf32>
    %260 = arith.mulf %259, %256 : vector<16x16xf32>
    %261 = arith.select %258, %256, %260 : vector<16x16xi1>, vector<16x16xf32>
    %262 = vector.extract_strided_slice %253 {offsets = [1, 0], sizes = [1, 16], strides = [1, 1]} : vector<3x16xf32> to vector<1x16xf32>
    %263 = vector.broadcast %262 : vector<1x16xf32> to vector<16x16xf32>
    %264 = arith.mulf %261, %263 : vector<16x16xf32>
    %265 = vector.extract_strided_slice %253 {offsets = [2, 0], sizes = [1, 16], strides = [1, 1]} : vector<3x16xf32> to vector<1x16xf32>
    %266 = vector.broadcast %265 : vector<1x16xf32> to vector<16x16xf32>
    %267 = arith.addf %264, %266 : vector<16x16xf32>
    %cst_159 = arith.constant 0xFF800000 : f32
    %268 = vector.broadcast %cst_159 : f32 to vector<1x8xf32>
    %c0_160 = arith.constant 0 : index
    %c0_161 = arith.constant 0 : index
    %269 = vector.load %arg29[%c0_160, %c0_161] : memref<18x8xf32, #tpu.memory_space<vmem>>, vector<1x8xf32>
    tpu.vector_store %arg29[%c0_160, %c0_161], %268 {strides = array<i32>} : memref<18x8xf32, #tpu.memory_space<vmem>>, vector<1x8xf32>,
    %c1_162 = arith.constant 1 : index
    %c0_163 = arith.constant 0 : index
    %270 = vector.load %arg29[%c1_162, %c0_163] : memref<18x8xf32, #tpu.memory_space<vmem>>, vector<16x8xf32>
    tpu.vector_store %arg29[%c1_162, %c0_163], %203 {strides = array<i32>} : memref<18x8xf32, #tpu.memory_space<vmem>>, vector<16x8xf32>,
    %c17_164 = arith.constant 17 : index
    %c0_165 = arith.constant 0 : index
    %271 = vector.load %arg29[%c17_164, %c0_165] : memref<18x8xf32, #tpu.memory_space<vmem>>, vector<1x8xf32>
    tpu.vector_store %arg29[%c17_164, %c0_165], %268 {strides = array<i32>} : memref<18x8xf32, #tpu.memory_space<vmem>>, vector<1x8xf32>,
    %c0_166 = arith.constant 0 : index
    %c0_167 = arith.constant 0 : index
    %272 = vector.load %arg29[%c0_166, %c0_167] : memref<18x8xf32, #tpu.memory_space<vmem>>, vector<16x8xf32>
    %c1_168 = arith.constant 1 : index
    %c0_169 = arith.constant 0 : index
    %273 = vector.load %arg29[%c1_168, %c0_169] : memref<18x8xf32, #tpu.memory_space<vmem>>, vector<16x8xf32>
    %274 = arith.maximumf %272, %273 : vector<16x8xf32>
    %c2_170 = arith.constant 2 : index
    %c0_171 = arith.constant 0 : index
    %275 = vector.load %arg29[%c2_170, %c0_171] : memref<18x8xf32, #tpu.memory_space<vmem>>, vector<16x8xf32>
    %276 = arith.maximumf %274, %275 : vector<16x8xf32>
    %c0_172 = arith.constant 0 : index
    %c0_173 = arith.constant 0 : index
    %277 = vector.load %arg18[%c0_172, %c0_173] : memref<8x8xf32, #tpu.memory_space<vmem>>, vector<8x8xf32>
    %cst_174 = arith.constant dense<0.000000e+00> : vector<16x8xf32>
    %278 = tpu.matmul %276, %277, %cst_174 {dimension_numbers = #tpu.dot_dimension_numbers<[1], [0], [0], [1], [0, 0, 1, 1], [], []>} : vector<16x8xf32>, vector<8x8xf32>, vector<16x8xf32> -> vector<16x8xf32>
    %c0_175 = arith.constant 0 : index
    %c0_176 = arith.constant 0 : index
    %279 = vector.load %arg19[%c0_175, %c0_176] : memref<3x8xf32, #tpu.memory_space<vmem>>, vector<3x8xf32>
    %280 = vector.extract_strided_slice %279 {offsets = [0, 0], sizes = [1, 8], strides = [1, 1]} : vector<3x8xf32> to vector<1x8xf32>
    %281 = vector.broadcast %280 : vector<1x8xf32> to vector<16x8xf32>
    %282 = arith.addf %278, %281 : vector<16x8xf32>
    %cst_177 = arith.constant 0.000000e+00 : f32
    %283 = vector.broadcast %cst_177 : f32 to vector<16x8xf32>
    %284 = arith.cmpf oge, %282, %283 : vector<16x8xf32>
    %cst_178 = arith.constant 0.00999999977 : f32
    %285 = vector.broadcast %cst_178 : f32 to vector<16x8xf32>
    %286 = arith.mulf %285, %282 : vector<16x8xf32>
    %287 = arith.select %284, %282, %286 : vector<16x8xi1>, vector<16x8xf32>
    %288 = vector.extract_strided_slice %279 {offsets = [1, 0], sizes = [1, 8], strides = [1, 1]} : vector<3x8xf32> to vector<1x8xf32>
    %289 = vector.broadcast %288 : vector<1x8xf32> to vector<16x8xf32>
    %290 = arith.mulf %287, %289 : vector<16x8xf32>
    %291 = vector.extract_strided_slice %279 {offsets = [2, 0], sizes = [1, 8], strides = [1, 1]} : vector<3x8xf32> to vector<1x8xf32>
    %292 = vector.broadcast %291 : vector<1x8xf32> to vector<16x8xf32>
    %293 = arith.addf %290, %292 : vector<16x8xf32>
    %c0_179 = arith.constant 0 : index
    %c0_180 = arith.constant 0 : index
    %294 = vector.load %arg20[%c0_179, %c0_180] : memref<24x128xf32, #tpu.memory_space<vmem>>, vector<16x128xf32>
    %cst_181 = arith.constant dense<0.000000e+00> : vector<16x128xf32>
    %295 = tpu.matmul %267, %294, %cst_181 {dimension_numbers = #tpu.dot_dimension_numbers<[1], [0], [0], [1], [0, 0, 1, 1], [], []>} : vector<16x16xf32>, vector<16x128xf32>, vector<16x128xf32> -> vector<16x128xf32>
    %c16 = arith.constant 16 : index
    %c0_182 = arith.constant 0 : index
    %296 = vector.load %arg20[%c16, %c0_182] : memref<24x128xf32, #tpu.memory_space<vmem>>, vector<8x128xf32>
    %cst_183 = arith.constant dense<0.000000e+00> : vector<16x128xf32>
    %297 = tpu.matmul %293, %296, %cst_183 {dimension_numbers = #tpu.dot_dimension_numbers<[1], [0], [0], [1], [0, 0, 1, 1], [], []>} : vector<16x8xf32>, vector<8x128xf32>, vector<16x128xf32> -> vector<16x128xf32>
    %298 = arith.addf %295, %297 : vector<16x128xf32>
    %c0_184 = arith.constant 0 : index
    %c0_185 = arith.constant 0 : index
    %299 = vector.load %arg22[%c0_184, %c0_185] : memref<1x128xf32, #tpu.memory_space<vmem>>, vector<1x128xf32>
    %300 = vector.broadcast %299 : vector<1x128xf32> to vector<16x128xf32>
    %301 = arith.addf %298, %300 : vector<16x128xf32>
    %c0_186 = arith.constant 0 : index
    %c0_187 = arith.constant 0 : index
    %302 = vector.load %arg30[%c0_186, %c0_187] : memref<16x128xf32, #tpu.memory_space<vmem>>, vector<16x128xf32>
    tpu.vector_store %arg30[%c0_186, %c0_187], %301 {strides = array<i32>} : memref<16x128xf32, #tpu.memory_space<vmem>>, vector<16x128xf32>,
    %c0_188 = arith.constant 0 : index
    %c0_189 = arith.constant 0 : index
    %303 = vector.load %arg21[%c0_188, %c0_189] : memref<32x128xf32, #tpu.memory_space<vmem>>, vector<32x128xf32>
    %cst_190 = arith.constant 0.000000e+00 : f32
    %304 = vector.broadcast %cst_190 : f32 to vector<1x32xf32>
    %c0_i32 = arith.constant 0 : i32
    %305 = arith.index_cast %c0_i32 : i32 to index
    %c0_191 = arith.constant 0 : index
    %306 = vector.load %arg30[%305, %c0_191] : memref<16x128xf32, #tpu.memory_space<vmem>>, vector<1x128xf32>
    %cst_192 = arith.constant dense<0.000000e+00> : vector<1x128xf32>
    %307 = tpu.matmul %304, %303, %cst_192 {dimension_numbers = #tpu.dot_dimension_numbers<[1], [0], [0], [1], [0, 0, 1, 1], [], []>} : vector<1x32xf32>, vector<32x128xf32>, vector<1x128xf32> -> vector<1x128xf32>
    %308 = arith.addf %306, %307 : vector<1x128xf32>
    %309 = vector.extract_strided_slice %308 {offsets = [0, 0], sizes = [1, 32], strides = [1, 1]} : vector<1x128xf32> to vector<1x32xf32>
    %310 = arith.negf %309 : vector<1x32xf32>
    %311 = math.exp %310 : vector<1x32xf32>
    %cst_193 = arith.constant 1.000000e+00 : f32
    %312 = vector.broadcast %cst_193 : f32 to vector<1x32xf32>
    %313 = arith.addf %312, %311 : vector<1x32xf32>
    %314 = arith.divf %312, %313 : vector<1x32xf32>
    %315 = vector.extract_strided_slice %308 {offsets = [0, 32], sizes = [1, 32], strides = [1, 1]} : vector<1x128xf32> to vector<1x32xf32>
    %316 = arith.negf %315 : vector<1x32xf32>
    %317 = math.exp %316 : vector<1x32xf32>
    %cst_194 = arith.constant 1.000000e+00 : f32
    %318 = vector.broadcast %cst_194 : f32 to vector<1x32xf32>
    %319 = arith.addf %318, %317 : vector<1x32xf32>
    %320 = arith.divf %318, %319 : vector<1x32xf32>
    %321 = vector.extract_strided_slice %308 {offsets = [0, 64], sizes = [1, 32], strides = [1, 1]} : vector<1x128xf32> to vector<1x32xf32>
    %322 = math.tanh %321 : vector<1x32xf32>
    %323 = vector.extract_strided_slice %308 {offsets = [0, 96], sizes = [1, 32], strides = [1, 1]} : vector<1x128xf32> to vector<1x32xf32>
    %324 = arith.negf %323 : vector<1x32xf32>
    %325 = math.exp %324 : vector<1x32xf32>
    %cst_195 = arith.constant 1.000000e+00 : f32
    %326 = vector.broadcast %cst_195 : f32 to vector<1x32xf32>
    %327 = arith.addf %326, %325 : vector<1x32xf32>
    %328 = arith.divf %326, %327 : vector<1x32xf32>
    %329 = arith.mulf %320, %304 : vector<1x32xf32>
    %330 = arith.mulf %314, %322 : vector<1x32xf32>
    %331 = arith.addf %329, %330 : vector<1x32xf32>
    %332 = math.tanh %331 : vector<1x32xf32>
    %333 = arith.mulf %328, %332 : vector<1x32xf32>
    %c1_i32 = arith.constant 1 : i32
    %334 = arith.index_cast %c1_i32 : i32 to index
    %c0_196 = arith.constant 0 : index
    %335 = vector.load %arg30[%334, %c0_196] : memref<16x128xf32, #tpu.memory_space<vmem>>, vector<1x128xf32>
    %cst_197 = arith.constant dense<0.000000e+00> : vector<1x128xf32>
    %336 = tpu.matmul %333, %303, %cst_197 {dimension_numbers = #tpu.dot_dimension_numbers<[1], [0], [0], [1], [0, 0, 1, 1], [], []>} : vector<1x32xf32>, vector<32x128xf32>, vector<1x128xf32> -> vector<1x128xf32>
    %337 = arith.addf %335, %336 : vector<1x128xf32>
    %338 = vector.extract_strided_slice %337 {offsets = [0, 0], sizes = [1, 32], strides = [1, 1]} : vector<1x128xf32> to vector<1x32xf32>
    %339 = arith.negf %338 : vector<1x32xf32>
    %340 = math.exp %339 : vector<1x32xf32>
    %cst_198 = arith.constant 1.000000e+00 : f32
    %341 = vector.broadcast %cst_198 : f32 to vector<1x32xf32>
    %342 = arith.addf %341, %340 : vector<1x32xf32>
    %343 = arith.divf %341, %342 : vector<1x32xf32>
    %344 = vector.extract_strided_slice %337 {offsets = [0, 32], sizes = [1, 32], strides = [1, 1]} : vector<1x128xf32> to vector<1x32xf32>
    %345 = arith.negf %344 : vector<1x32xf32>
    %346 = math.exp %345 : vector<1x32xf32>
    %cst_199 = arith.constant 1.000000e+00 : f32
    %347 = vector.broadcast %cst_199 : f32 to vector<1x32xf32>
    %348 = arith.addf %347, %346 : vector<1x32xf32>
    %349 = arith.divf %347, %348 : vector<1x32xf32>
    %350 = vector.extract_strided_slice %337 {offsets = [0, 64], sizes = [1, 32], strides = [1, 1]} : vector<1x128xf32> to vector<1x32xf32>
    %351 = math.tanh %350 : vector<1x32xf32>
    %352 = vector.extract_strided_slice %337 {offsets = [0, 96], sizes = [1, 32], strides = [1, 1]} : vector<1x128xf32> to vector<1x32xf32>
    %353 = arith.negf %352 : vector<1x32xf32>
    %354 = math.exp %353 : vector<1x32xf32>
    %cst_200 = arith.constant 1.000000e+00 : f32
    %355 = vector.broadcast %cst_200 : f32 to vector<1x32xf32>
    %356 = arith.addf %355, %354 : vector<1x32xf32>
    %357 = arith.divf %355, %356 : vector<1x32xf32>
    %358 = arith.mulf %349, %331 : vector<1x32xf32>
    %359 = arith.mulf %343, %351 : vector<1x32xf32>
    %360 = arith.addf %358, %359 : vector<1x32xf32>
    %361 = math.tanh %360 : vector<1x32xf32>
    %362 = arith.mulf %357, %361 : vector<1x32xf32>
    %c2_i32 = arith.constant 2 : i32
    %363 = arith.index_cast %c2_i32 : i32 to index
    %c0_201 = arith.constant 0 : index
    %364 = vector.load %arg30[%363, %c0_201] : memref<16x128xf32, #tpu.memory_space<vmem>>, vector<1x128xf32>
    %cst_202 = arith.constant dense<0.000000e+00> : vector<1x128xf32>
    %365 = tpu.matmul %362, %303, %cst_202 {dimension_numbers = #tpu.dot_dimension_numbers<[1], [0], [0], [1], [0, 0, 1, 1], [], []>} : vector<1x32xf32>, vector<32x128xf32>, vector<1x128xf32> -> vector<1x128xf32>
    %366 = arith.addf %364, %365 : vector<1x128xf32>
    %367 = vector.extract_strided_slice %366 {offsets = [0, 0], sizes = [1, 32], strides = [1, 1]} : vector<1x128xf32> to vector<1x32xf32>
    %368 = arith.negf %367 : vector<1x32xf32>
    %369 = math.exp %368 : vector<1x32xf32>
    %cst_203 = arith.constant 1.000000e+00 : f32
    %370 = vector.broadcast %cst_203 : f32 to vector<1x32xf32>
    %371 = arith.addf %370, %369 : vector<1x32xf32>
    %372 = arith.divf %370, %371 : vector<1x32xf32>
    %373 = vector.extract_strided_slice %366 {offsets = [0, 32], sizes = [1, 32], strides = [1, 1]} : vector<1x128xf32> to vector<1x32xf32>
    %374 = arith.negf %373 : vector<1x32xf32>
    %375 = math.exp %374 : vector<1x32xf32>
    %cst_204 = arith.constant 1.000000e+00 : f32
    %376 = vector.broadcast %cst_204 : f32 to vector<1x32xf32>
    %377 = arith.addf %376, %375 : vector<1x32xf32>
    %378 = arith.divf %376, %377 : vector<1x32xf32>
    %379 = vector.extract_strided_slice %366 {offsets = [0, 64], sizes = [1, 32], strides = [1, 1]} : vector<1x128xf32> to vector<1x32xf32>
    %380 = math.tanh %379 : vector<1x32xf32>
    %381 = vector.extract_strided_slice %366 {offsets = [0, 96], sizes = [1, 32], strides = [1, 1]} : vector<1x128xf32> to vector<1x32xf32>
    %382 = arith.negf %381 : vector<1x32xf32>
    %383 = math.exp %382 : vector<1x32xf32>
    %cst_205 = arith.constant 1.000000e+00 : f32
    %384 = vector.broadcast %cst_205 : f32 to vector<1x32xf32>
    %385 = arith.addf %384, %383 : vector<1x32xf32>
    %386 = arith.divf %384, %385 : vector<1x32xf32>
    %387 = arith.mulf %378, %360 : vector<1x32xf32>
    %388 = arith.mulf %372, %380 : vector<1x32xf32>
    %389 = arith.addf %387, %388 : vector<1x32xf32>
    %390 = math.tanh %389 : vector<1x32xf32>
    %391 = arith.mulf %386, %390 : vector<1x32xf32>
    %c3_i32 = arith.constant 3 : i32
    %392 = arith.index_cast %c3_i32 : i32 to index
    %c0_206 = arith.constant 0 : index
    %393 = vector.load %arg30[%392, %c0_206] : memref<16x128xf32, #tpu.memory_space<vmem>>, vector<1x128xf32>
    %cst_207 = arith.constant dense<0.000000e+00> : vector<1x128xf32>
    %394 = tpu.matmul %391, %303, %cst_207 {dimension_numbers = #tpu.dot_dimension_numbers<[1], [0], [0], [1], [0, 0, 1, 1], [], []>} : vector<1x32xf32>, vector<32x128xf32>, vector<1x128xf32> -> vector<1x128xf32>
    %395 = arith.addf %393, %394 : vector<1x128xf32>
    %396 = vector.extract_strided_slice %395 {offsets = [0, 0], sizes = [1, 32], strides = [1, 1]} : vector<1x128xf32> to vector<1x32xf32>
    %397 = arith.negf %396 : vector<1x32xf32>
    %398 = math.exp %397 : vector<1x32xf32>
    %cst_208 = arith.constant 1.000000e+00 : f32
    %399 = vector.broadcast %cst_208 : f32 to vector<1x32xf32>
    %400 = arith.addf %399, %398 : vector<1x32xf32>
    %401 = arith.divf %399, %400 : vector<1x32xf32>
    %402 = vector.extract_strided_slice %395 {offsets = [0, 32], sizes = [1, 32], strides = [1, 1]} : vector<1x128xf32> to vector<1x32xf32>
    %403 = arith.negf %402 : vector<1x32xf32>
    %404 = math.exp %403 : vector<1x32xf32>
    %cst_209 = arith.constant 1.000000e+00 : f32
    %405 = vector.broadcast %cst_209 : f32 to vector<1x32xf32>
    %406 = arith.addf %405, %404 : vector<1x32xf32>
    %407 = arith.divf %405, %406 : vector<1x32xf32>
    %408 = vector.extract_strided_slice %395 {offsets = [0, 64], sizes = [1, 32], strides = [1, 1]} : vector<1x128xf32> to vector<1x32xf32>
    %409 = math.tanh %408 : vector<1x32xf32>
    %410 = vector.extract_strided_slice %395 {offsets = [0, 96], sizes = [1, 32], strides = [1, 1]} : vector<1x128xf32> to vector<1x32xf32>
    %411 = arith.negf %410 : vector<1x32xf32>
    %412 = math.exp %411 : vector<1x32xf32>
    %cst_210 = arith.constant 1.000000e+00 : f32
    %413 = vector.broadcast %cst_210 : f32 to vector<1x32xf32>
    %414 = arith.addf %413, %412 : vector<1x32xf32>
    %415 = arith.divf %413, %414 : vector<1x32xf32>
    %416 = arith.mulf %407, %389 : vector<1x32xf32>
    %417 = arith.mulf %401, %409 : vector<1x32xf32>
    %418 = arith.addf %416, %417 : vector<1x32xf32>
    %419 = math.tanh %418 : vector<1x32xf32>
    %420 = arith.mulf %415, %419 : vector<1x32xf32>
    %c4_i32 = arith.constant 4 : i32
    %421 = arith.index_cast %c4_i32 : i32 to index
    %c0_211 = arith.constant 0 : index
    %422 = vector.load %arg30[%421, %c0_211] : memref<16x128xf32, #tpu.memory_space<vmem>>, vector<1x128xf32>
    %cst_212 = arith.constant dense<0.000000e+00> : vector<1x128xf32>
    %423 = tpu.matmul %420, %303, %cst_212 {dimension_numbers = #tpu.dot_dimension_numbers<[1], [0], [0], [1], [0, 0, 1, 1], [], []>} : vector<1x32xf32>, vector<32x128xf32>, vector<1x128xf32> -> vector<1x128xf32>
    %424 = arith.addf %422, %423 : vector<1x128xf32>
    %425 = vector.extract_strided_slice %424 {offsets = [0, 0], sizes = [1, 32], strides = [1, 1]} : vector<1x128xf32> to vector<1x32xf32>
    %426 = arith.negf %425 : vector<1x32xf32>
    %427 = math.exp %426 : vector<1x32xf32>
    %cst_213 = arith.constant 1.000000e+00 : f32
    %428 = vector.broadcast %cst_213 : f32 to vector<1x32xf32>
    %429 = arith.addf %428, %427 : vector<1x32xf32>
    %430 = arith.divf %428, %429 : vector<1x32xf32>
    %431 = vector.extract_strided_slice %424 {offsets = [0, 32], sizes = [1, 32], strides = [1, 1]} : vector<1x128xf32> to vector<1x32xf32>
    %432 = arith.negf %431 : vector<1x32xf32>
    %433 = math.exp %432 : vector<1x32xf32>
    %cst_214 = arith.constant 1.000000e+00 : f32
    %434 = vector.broadcast %cst_214 : f32 to vector<1x32xf32>
    %435 = arith.addf %434, %433 : vector<1x32xf32>
    %436 = arith.divf %434, %435 : vector<1x32xf32>
    %437 = vector.extract_strided_slice %424 {offsets = [0, 64], sizes = [1, 32], strides = [1, 1]} : vector<1x128xf32> to vector<1x32xf32>
    %438 = math.tanh %437 : vector<1x32xf32>
    %439 = vector.extract_strided_slice %424 {offsets = [0, 96], sizes = [1, 32], strides = [1, 1]} : vector<1x128xf32> to vector<1x32xf32>
    %440 = arith.negf %439 : vector<1x32xf32>
    %441 = math.exp %440 : vector<1x32xf32>
    %cst_215 = arith.constant 1.000000e+00 : f32
    %442 = vector.broadcast %cst_215 : f32 to vector<1x32xf32>
    %443 = arith.addf %442, %441 : vector<1x32xf32>
    %444 = arith.divf %442, %443 : vector<1x32xf32>
    %445 = arith.mulf %436, %418 : vector<1x32xf32>
    %446 = arith.mulf %430, %438 : vector<1x32xf32>
    %447 = arith.addf %445, %446 : vector<1x32xf32>
    %448 = math.tanh %447 : vector<1x32xf32>
    %449 = arith.mulf %444, %448 : vector<1x32xf32>
    %c5_i32 = arith.constant 5 : i32
    %450 = arith.index_cast %c5_i32 : i32 to index
    %c0_216 = arith.constant 0 : index
    %451 = vector.load %arg30[%450, %c0_216] : memref<16x128xf32, #tpu.memory_space<vmem>>, vector<1x128xf32>
    %cst_217 = arith.constant dense<0.000000e+00> : vector<1x128xf32>
    %452 = tpu.matmul %449, %303, %cst_217 {dimension_numbers = #tpu.dot_dimension_numbers<[1], [0], [0], [1], [0, 0, 1, 1], [], []>} : vector<1x32xf32>, vector<32x128xf32>, vector<1x128xf32> -> vector<1x128xf32>
    %453 = arith.addf %451, %452 : vector<1x128xf32>
    %454 = vector.extract_strided_slice %453 {offsets = [0, 0], sizes = [1, 32], strides = [1, 1]} : vector<1x128xf32> to vector<1x32xf32>
    %455 = arith.negf %454 : vector<1x32xf32>
    %456 = math.exp %455 : vector<1x32xf32>
    %cst_218 = arith.constant 1.000000e+00 : f32
    %457 = vector.broadcast %cst_218 : f32 to vector<1x32xf32>
    %458 = arith.addf %457, %456 : vector<1x32xf32>
    %459 = arith.divf %457, %458 : vector<1x32xf32>
    %460 = vector.extract_strided_slice %453 {offsets = [0, 32], sizes = [1, 32], strides = [1, 1]} : vector<1x128xf32> to vector<1x32xf32>
    %461 = arith.negf %460 : vector<1x32xf32>
    %462 = math.exp %461 : vector<1x32xf32>
    %cst_219 = arith.constant 1.000000e+00 : f32
    %463 = vector.broadcast %cst_219 : f32 to vector<1x32xf32>
    %464 = arith.addf %463, %462 : vector<1x32xf32>
    %465 = arith.divf %463, %464 : vector<1x32xf32>
    %466 = vector.extract_strided_slice %453 {offsets = [0, 64], sizes = [1, 32], strides = [1, 1]} : vector<1x128xf32> to vector<1x32xf32>
    %467 = math.tanh %466 : vector<1x32xf32>
    %468 = vector.extract_strided_slice %453 {offsets = [0, 96], sizes = [1, 32], strides = [1, 1]} : vector<1x128xf32> to vector<1x32xf32>
    %469 = arith.negf %468 : vector<1x32xf32>
    %470 = math.exp %469 : vector<1x32xf32>
    %cst_220 = arith.constant 1.000000e+00 : f32
    %471 = vector.broadcast %cst_220 : f32 to vector<1x32xf32>
    %472 = arith.addf %471, %470 : vector<1x32xf32>
    %473 = arith.divf %471, %472 : vector<1x32xf32>
    %474 = arith.mulf %465, %447 : vector<1x32xf32>
    %475 = arith.mulf %459, %467 : vector<1x32xf32>
    %476 = arith.addf %474, %475 : vector<1x32xf32>
    %477 = math.tanh %476 : vector<1x32xf32>
    %478 = arith.mulf %473, %477 : vector<1x32xf32>
    %c6_i32 = arith.constant 6 : i32
    %479 = arith.index_cast %c6_i32 : i32 to index
    %c0_221 = arith.constant 0 : index
    %480 = vector.load %arg30[%479, %c0_221] : memref<16x128xf32, #tpu.memory_space<vmem>>, vector<1x128xf32>
    %cst_222 = arith.constant dense<0.000000e+00> : vector<1x128xf32>
    %481 = tpu.matmul %478, %303, %cst_222 {dimension_numbers = #tpu.dot_dimension_numbers<[1], [0], [0], [1], [0, 0, 1, 1], [], []>} : vector<1x32xf32>, vector<32x128xf32>, vector<1x128xf32> -> vector<1x128xf32>
    %482 = arith.addf %480, %481 : vector<1x128xf32>
    %483 = vector.extract_strided_slice %482 {offsets = [0, 0], sizes = [1, 32], strides = [1, 1]} : vector<1x128xf32> to vector<1x32xf32>
    %484 = arith.negf %483 : vector<1x32xf32>
    %485 = math.exp %484 : vector<1x32xf32>
    %cst_223 = arith.constant 1.000000e+00 : f32
    %486 = vector.broadcast %cst_223 : f32 to vector<1x32xf32>
    %487 = arith.addf %486, %485 : vector<1x32xf32>
    %488 = arith.divf %486, %487 : vector<1x32xf32>
    %489 = vector.extract_strided_slice %482 {offsets = [0, 32], sizes = [1, 32], strides = [1, 1]} : vector<1x128xf32> to vector<1x32xf32>
    %490 = arith.negf %489 : vector<1x32xf32>
    %491 = math.exp %490 : vector<1x32xf32>
    %cst_224 = arith.constant 1.000000e+00 : f32
    %492 = vector.broadcast %cst_224 : f32 to vector<1x32xf32>
    %493 = arith.addf %492, %491 : vector<1x32xf32>
    %494 = arith.divf %492, %493 : vector<1x32xf32>
    %495 = vector.extract_strided_slice %482 {offsets = [0, 64], sizes = [1, 32], strides = [1, 1]} : vector<1x128xf32> to vector<1x32xf32>
    %496 = math.tanh %495 : vector<1x32xf32>
    %497 = vector.extract_strided_slice %482 {offsets = [0, 96], sizes = [1, 32], strides = [1, 1]} : vector<1x128xf32> to vector<1x32xf32>
    %498 = arith.negf %497 : vector<1x32xf32>
    %499 = math.exp %498 : vector<1x32xf32>
    %cst_225 = arith.constant 1.000000e+00 : f32
    %500 = vector.broadcast %cst_225 : f32 to vector<1x32xf32>
    %501 = arith.addf %500, %499 : vector<1x32xf32>
    %502 = arith.divf %500, %501 : vector<1x32xf32>
    %503 = arith.mulf %494, %476 : vector<1x32xf32>
    %504 = arith.mulf %488, %496 : vector<1x32xf32>
    %505 = arith.addf %503, %504 : vector<1x32xf32>
    %506 = math.tanh %505 : vector<1x32xf32>
    %507 = arith.mulf %502, %506 : vector<1x32xf32>
    %c7_i32 = arith.constant 7 : i32
    %508 = arith.index_cast %c7_i32 : i32 to index
    %c0_226 = arith.constant 0 : index
    %509 = vector.load %arg30[%508, %c0_226] : memref<16x128xf32, #tpu.memory_space<vmem>>, vector<1x128xf32>
    %cst_227 = arith.constant dense<0.000000e+00> : vector<1x128xf32>
    %510 = tpu.matmul %507, %303, %cst_227 {dimension_numbers = #tpu.dot_dimension_numbers<[1], [0], [0], [1], [0, 0, 1, 1], [], []>} : vector<1x32xf32>, vector<32x128xf32>, vector<1x128xf32> -> vector<1x128xf32>
    %511 = arith.addf %509, %510 : vector<1x128xf32>
    %512 = vector.extract_strided_slice %511 {offsets = [0, 0], sizes = [1, 32], strides = [1, 1]} : vector<1x128xf32> to vector<1x32xf32>
    %513 = arith.negf %512 : vector<1x32xf32>
    %514 = math.exp %513 : vector<1x32xf32>
    %cst_228 = arith.constant 1.000000e+00 : f32
    %515 = vector.broadcast %cst_228 : f32 to vector<1x32xf32>
    %516 = arith.addf %515, %514 : vector<1x32xf32>
    %517 = arith.divf %515, %516 : vector<1x32xf32>
    %518 = vector.extract_strided_slice %511 {offsets = [0, 32], sizes = [1, 32], strides = [1, 1]} : vector<1x128xf32> to vector<1x32xf32>
    %519 = arith.negf %518 : vector<1x32xf32>
    %520 = math.exp %519 : vector<1x32xf32>
    %cst_229 = arith.constant 1.000000e+00 : f32
    %521 = vector.broadcast %cst_229 : f32 to vector<1x32xf32>
    %522 = arith.addf %521, %520 : vector<1x32xf32>
    %523 = arith.divf %521, %522 : vector<1x32xf32>
    %524 = vector.extract_strided_slice %511 {offsets = [0, 64], sizes = [1, 32], strides = [1, 1]} : vector<1x128xf32> to vector<1x32xf32>
    %525 = math.tanh %524 : vector<1x32xf32>
    %526 = vector.extract_strided_slice %511 {offsets = [0, 96], sizes = [1, 32], strides = [1, 1]} : vector<1x128xf32> to vector<1x32xf32>
    %527 = arith.negf %526 : vector<1x32xf32>
    %528 = math.exp %527 : vector<1x32xf32>
    %cst_230 = arith.constant 1.000000e+00 : f32
    %529 = vector.broadcast %cst_230 : f32 to vector<1x32xf32>
    %530 = arith.addf %529, %528 : vector<1x32xf32>
    %531 = arith.divf %529, %530 : vector<1x32xf32>
    %532 = arith.mulf %523, %505 : vector<1x32xf32>
    %533 = arith.mulf %517, %525 : vector<1x32xf32>
    %534 = arith.addf %532, %533 : vector<1x32xf32>
    %535 = math.tanh %534 : vector<1x32xf32>
    %536 = arith.mulf %531, %535 : vector<1x32xf32>
    %c8_i32 = arith.constant 8 : i32
    %537 = arith.index_cast %c8_i32 : i32 to index
    %c0_231 = arith.constant 0 : index
    %538 = vector.load %arg30[%537, %c0_231] : memref<16x128xf32, #tpu.memory_space<vmem>>, vector<1x128xf32>
    %cst_232 = arith.constant dense<0.000000e+00> : vector<1x128xf32>
    %539 = tpu.matmul %536, %303, %cst_232 {dimension_numbers = #tpu.dot_dimension_numbers<[1], [0], [0], [1], [0, 0, 1, 1], [], []>} : vector<1x32xf32>, vector<32x128xf32>, vector<1x128xf32> -> vector<1x128xf32>
    %540 = arith.addf %538, %539 : vector<1x128xf32>
    %541 = vector.extract_strided_slice %540 {offsets = [0, 0], sizes = [1, 32], strides = [1, 1]} : vector<1x128xf32> to vector<1x32xf32>
    %542 = arith.negf %541 : vector<1x32xf32>
    %543 = math.exp %542 : vector<1x32xf32>
    %cst_233 = arith.constant 1.000000e+00 : f32
    %544 = vector.broadcast %cst_233 : f32 to vector<1x32xf32>
    %545 = arith.addf %544, %543 : vector<1x32xf32>
    %546 = arith.divf %544, %545 : vector<1x32xf32>
    %547 = vector.extract_strided_slice %540 {offsets = [0, 32], sizes = [1, 32], strides = [1, 1]} : vector<1x128xf32> to vector<1x32xf32>
    %548 = arith.negf %547 : vector<1x32xf32>
    %549 = math.exp %548 : vector<1x32xf32>
    %cst_234 = arith.constant 1.000000e+00 : f32
    %550 = vector.broadcast %cst_234 : f32 to vector<1x32xf32>
    %551 = arith.addf %550, %549 : vector<1x32xf32>
    %552 = arith.divf %550, %551 : vector<1x32xf32>
    %553 = vector.extract_strided_slice %540 {offsets = [0, 64], sizes = [1, 32], strides = [1, 1]} : vector<1x128xf32> to vector<1x32xf32>
    %554 = math.tanh %553 : vector<1x32xf32>
    %555 = vector.extract_strided_slice %540 {offsets = [0, 96], sizes = [1, 32], strides = [1, 1]} : vector<1x128xf32> to vector<1x32xf32>
    %556 = arith.negf %555 : vector<1x32xf32>
    %557 = math.exp %556 : vector<1x32xf32>
    %cst_235 = arith.constant 1.000000e+00 : f32
    %558 = vector.broadcast %cst_235 : f32 to vector<1x32xf32>
    %559 = arith.addf %558, %557 : vector<1x32xf32>
    %560 = arith.divf %558, %559 : vector<1x32xf32>
    %561 = arith.mulf %552, %534 : vector<1x32xf32>
    %562 = arith.mulf %546, %554 : vector<1x32xf32>
    %563 = arith.addf %561, %562 : vector<1x32xf32>
    %564 = math.tanh %563 : vector<1x32xf32>
    %565 = arith.mulf %560, %564 : vector<1x32xf32>
    %c9_i32 = arith.constant 9 : i32
    %566 = arith.index_cast %c9_i32 : i32 to index
    %c0_236 = arith.constant 0 : index
    %567 = vector.load %arg30[%566, %c0_236] : memref<16x128xf32, #tpu.memory_space<vmem>>, vector<1x128xf32>
    %cst_237 = arith.constant dense<0.000000e+00> : vector<1x128xf32>
    %568 = tpu.matmul %565, %303, %cst_237 {dimension_numbers = #tpu.dot_dimension_numbers<[1], [0], [0], [1], [0, 0, 1, 1], [], []>} : vector<1x32xf32>, vector<32x128xf32>, vector<1x128xf32> -> vector<1x128xf32>
    %569 = arith.addf %567, %568 : vector<1x128xf32>
    %570 = vector.extract_strided_slice %569 {offsets = [0, 0], sizes = [1, 32], strides = [1, 1]} : vector<1x128xf32> to vector<1x32xf32>
    %571 = arith.negf %570 : vector<1x32xf32>
    %572 = math.exp %571 : vector<1x32xf32>
    %cst_238 = arith.constant 1.000000e+00 : f32
    %573 = vector.broadcast %cst_238 : f32 to vector<1x32xf32>
    %574 = arith.addf %573, %572 : vector<1x32xf32>
    %575 = arith.divf %573, %574 : vector<1x32xf32>
    %576 = vector.extract_strided_slice %569 {offsets = [0, 32], sizes = [1, 32], strides = [1, 1]} : vector<1x128xf32> to vector<1x32xf32>
    %577 = arith.negf %576 : vector<1x32xf32>
    %578 = math.exp %577 : vector<1x32xf32>
    %cst_239 = arith.constant 1.000000e+00 : f32
    %579 = vector.broadcast %cst_239 : f32 to vector<1x32xf32>
    %580 = arith.addf %579, %578 : vector<1x32xf32>
    %581 = arith.divf %579, %580 : vector<1x32xf32>
    %582 = vector.extract_strided_slice %569 {offsets = [0, 64], sizes = [1, 32], strides = [1, 1]} : vector<1x128xf32> to vector<1x32xf32>
    %583 = math.tanh %582 : vector<1x32xf32>
    %584 = vector.extract_strided_slice %569 {offsets = [0, 96], sizes = [1, 32], strides = [1, 1]} : vector<1x128xf32> to vector<1x32xf32>
    %585 = arith.negf %584 : vector<1x32xf32>
    %586 = math.exp %585 : vector<1x32xf32>
    %cst_240 = arith.constant 1.000000e+00 : f32
    %587 = vector.broadcast %cst_240 : f32 to vector<1x32xf32>
    %588 = arith.addf %587, %586 : vector<1x32xf32>
    %589 = arith.divf %587, %588 : vector<1x32xf32>
    %590 = arith.mulf %581, %563 : vector<1x32xf32>
    %591 = arith.mulf %575, %583 : vector<1x32xf32>
    %592 = arith.addf %590, %591 : vector<1x32xf32>
    %593 = math.tanh %592 : vector<1x32xf32>
    %594 = arith.mulf %589, %593 : vector<1x32xf32>
    %c10_i32 = arith.constant 10 : i32
    %595 = arith.index_cast %c10_i32 : i32 to index
    %c0_241 = arith.constant 0 : index
    %596 = vector.load %arg30[%595, %c0_241] : memref<16x128xf32, #tpu.memory_space<vmem>>, vector<1x128xf32>
    %cst_242 = arith.constant dense<0.000000e+00> : vector<1x128xf32>
    %597 = tpu.matmul %594, %303, %cst_242 {dimension_numbers = #tpu.dot_dimension_numbers<[1], [0], [0], [1], [0, 0, 1, 1], [], []>} : vector<1x32xf32>, vector<32x128xf32>, vector<1x128xf32> -> vector<1x128xf32>
    %598 = arith.addf %596, %597 : vector<1x128xf32>
    %599 = vector.extract_strided_slice %598 {offsets = [0, 0], sizes = [1, 32], strides = [1, 1]} : vector<1x128xf32> to vector<1x32xf32>
    %600 = arith.negf %599 : vector<1x32xf32>
    %601 = math.exp %600 : vector<1x32xf32>
    %cst_243 = arith.constant 1.000000e+00 : f32
    %602 = vector.broadcast %cst_243 : f32 to vector<1x32xf32>
    %603 = arith.addf %602, %601 : vector<1x32xf32>
    %604 = arith.divf %602, %603 : vector<1x32xf32>
    %605 = vector.extract_strided_slice %598 {offsets = [0, 32], sizes = [1, 32], strides = [1, 1]} : vector<1x128xf32> to vector<1x32xf32>
    %606 = arith.negf %605 : vector<1x32xf32>
    %607 = math.exp %606 : vector<1x32xf32>
    %cst_244 = arith.constant 1.000000e+00 : f32
    %608 = vector.broadcast %cst_244 : f32 to vector<1x32xf32>
    %609 = arith.addf %608, %607 : vector<1x32xf32>
    %610 = arith.divf %608, %609 : vector<1x32xf32>
    %611 = vector.extract_strided_slice %598 {offsets = [0, 64], sizes = [1, 32], strides = [1, 1]} : vector<1x128xf32> to vector<1x32xf32>
    %612 = math.tanh %611 : vector<1x32xf32>
    %613 = vector.extract_strided_slice %598 {offsets = [0, 96], sizes = [1, 32], strides = [1, 1]} : vector<1x128xf32> to vector<1x32xf32>
    %614 = arith.negf %613 : vector<1x32xf32>
    %615 = math.exp %614 : vector<1x32xf32>
    %cst_245 = arith.constant 1.000000e+00 : f32
    %616 = vector.broadcast %cst_245 : f32 to vector<1x32xf32>
    %617 = arith.addf %616, %615 : vector<1x32xf32>
    %618 = arith.divf %616, %617 : vector<1x32xf32>
    %619 = arith.mulf %610, %592 : vector<1x32xf32>
    %620 = arith.mulf %604, %612 : vector<1x32xf32>
    %621 = arith.addf %619, %620 : vector<1x32xf32>
    %622 = math.tanh %621 : vector<1x32xf32>
    %623 = arith.mulf %618, %622 : vector<1x32xf32>
    %c11_i32 = arith.constant 11 : i32
    %624 = arith.index_cast %c11_i32 : i32 to index
    %c0_246 = arith.constant 0 : index
    %625 = vector.load %arg30[%624, %c0_246] : memref<16x128xf32, #tpu.memory_space<vmem>>, vector<1x128xf32>
    %cst_247 = arith.constant dense<0.000000e+00> : vector<1x128xf32>
    %626 = tpu.matmul %623, %303, %cst_247 {dimension_numbers = #tpu.dot_dimension_numbers<[1], [0], [0], [1], [0, 0, 1, 1], [], []>} : vector<1x32xf32>, vector<32x128xf32>, vector<1x128xf32> -> vector<1x128xf32>
    %627 = arith.addf %625, %626 : vector<1x128xf32>
    %628 = vector.extract_strided_slice %627 {offsets = [0, 0], sizes = [1, 32], strides = [1, 1]} : vector<1x128xf32> to vector<1x32xf32>
    %629 = arith.negf %628 : vector<1x32xf32>
    %630 = math.exp %629 : vector<1x32xf32>
    %cst_248 = arith.constant 1.000000e+00 : f32
    %631 = vector.broadcast %cst_248 : f32 to vector<1x32xf32>
    %632 = arith.addf %631, %630 : vector<1x32xf32>
    %633 = arith.divf %631, %632 : vector<1x32xf32>
    %634 = vector.extract_strided_slice %627 {offsets = [0, 32], sizes = [1, 32], strides = [1, 1]} : vector<1x128xf32> to vector<1x32xf32>
    %635 = arith.negf %634 : vector<1x32xf32>
    %636 = math.exp %635 : vector<1x32xf32>
    %cst_249 = arith.constant 1.000000e+00 : f32
    %637 = vector.broadcast %cst_249 : f32 to vector<1x32xf32>
    %638 = arith.addf %637, %636 : vector<1x32xf32>
    %639 = arith.divf %637, %638 : vector<1x32xf32>
    %640 = vector.extract_strided_slice %627 {offsets = [0, 64], sizes = [1, 32], strides = [1, 1]} : vector<1x128xf32> to vector<1x32xf32>
    %641 = math.tanh %640 : vector<1x32xf32>
    %642 = vector.extract_strided_slice %627 {offsets = [0, 96], sizes = [1, 32], strides = [1, 1]} : vector<1x128xf32> to vector<1x32xf32>
    %643 = arith.negf %642 : vector<1x32xf32>
    %644 = math.exp %643 : vector<1x32xf32>
    %cst_250 = arith.constant 1.000000e+00 : f32
    %645 = vector.broadcast %cst_250 : f32 to vector<1x32xf32>
    %646 = arith.addf %645, %644 : vector<1x32xf32>
    %647 = arith.divf %645, %646 : vector<1x32xf32>
    %648 = arith.mulf %639, %621 : vector<1x32xf32>
    %649 = arith.mulf %633, %641 : vector<1x32xf32>
    %650 = arith.addf %648, %649 : vector<1x32xf32>
    %651 = math.tanh %650 : vector<1x32xf32>
    %652 = arith.mulf %647, %651 : vector<1x32xf32>
    %c12_i32 = arith.constant 12 : i32
    %653 = arith.index_cast %c12_i32 : i32 to index
    %c0_251 = arith.constant 0 : index
    %654 = vector.load %arg30[%653, %c0_251] : memref<16x128xf32, #tpu.memory_space<vmem>>, vector<1x128xf32>
    %cst_252 = arith.constant dense<0.000000e+00> : vector<1x128xf32>
    %655 = tpu.matmul %652, %303, %cst_252 {dimension_numbers = #tpu.dot_dimension_numbers<[1], [0], [0], [1], [0, 0, 1, 1], [], []>} : vector<1x32xf32>, vector<32x128xf32>, vector<1x128xf32> -> vector<1x128xf32>
    %656 = arith.addf %654, %655 : vector<1x128xf32>
    %657 = vector.extract_strided_slice %656 {offsets = [0, 0], sizes = [1, 32], strides = [1, 1]} : vector<1x128xf32> to vector<1x32xf32>
    %658 = arith.negf %657 : vector<1x32xf32>
    %659 = math.exp %658 : vector<1x32xf32>
    %cst_253 = arith.constant 1.000000e+00 : f32
    %660 = vector.broadcast %cst_253 : f32 to vector<1x32xf32>
    %661 = arith.addf %660, %659 : vector<1x32xf32>
    %662 = arith.divf %660, %661 : vector<1x32xf32>
    %663 = vector.extract_strided_slice %656 {offsets = [0, 32], sizes = [1, 32], strides = [1, 1]} : vector<1x128xf32> to vector<1x32xf32>
    %664 = arith.negf %663 : vector<1x32xf32>
    %665 = math.exp %664 : vector<1x32xf32>
    %cst_254 = arith.constant 1.000000e+00 : f32
    %666 = vector.broadcast %cst_254 : f32 to vector<1x32xf32>
    %667 = arith.addf %666, %665 : vector<1x32xf32>
    %668 = arith.divf %666, %667 : vector<1x32xf32>
    %669 = vector.extract_strided_slice %656 {offsets = [0, 64], sizes = [1, 32], strides = [1, 1]} : vector<1x128xf32> to vector<1x32xf32>
    %670 = math.tanh %669 : vector<1x32xf32>
    %671 = vector.extract_strided_slice %656 {offsets = [0, 96], sizes = [1, 32], strides = [1, 1]} : vector<1x128xf32> to vector<1x32xf32>
    %672 = arith.negf %671 : vector<1x32xf32>
    %673 = math.exp %672 : vector<1x32xf32>
    %cst_255 = arith.constant 1.000000e+00 : f32
    %674 = vector.broadcast %cst_255 : f32 to vector<1x32xf32>
    %675 = arith.addf %674, %673 : vector<1x32xf32>
    %676 = arith.divf %674, %675 : vector<1x32xf32>
    %677 = arith.mulf %668, %650 : vector<1x32xf32>
    %678 = arith.mulf %662, %670 : vector<1x32xf32>
    %679 = arith.addf %677, %678 : vector<1x32xf32>
    %680 = math.tanh %679 : vector<1x32xf32>
    %681 = arith.mulf %676, %680 : vector<1x32xf32>
    %c13_i32 = arith.constant 13 : i32
    %682 = arith.index_cast %c13_i32 : i32 to index
    %c0_256 = arith.constant 0 : index
    %683 = vector.load %arg30[%682, %c0_256] : memref<16x128xf32, #tpu.memory_space<vmem>>, vector<1x128xf32>
    %cst_257 = arith.constant dense<0.000000e+00> : vector<1x128xf32>
    %684 = tpu.matmul %681, %303, %cst_257 {dimension_numbers = #tpu.dot_dimension_numbers<[1], [0], [0], [1], [0, 0, 1, 1], [], []>} : vector<1x32xf32>, vector<32x128xf32>, vector<1x128xf32> -> vector<1x128xf32>
    %685 = arith.addf %683, %684 : vector<1x128xf32>
    %686 = vector.extract_strided_slice %685 {offsets = [0, 0], sizes = [1, 32], strides = [1, 1]} : vector<1x128xf32> to vector<1x32xf32>
    %687 = arith.negf %686 : vector<1x32xf32>
    %688 = math.exp %687 : vector<1x32xf32>
    %cst_258 = arith.constant 1.000000e+00 : f32
    %689 = vector.broadcast %cst_258 : f32 to vector<1x32xf32>
    %690 = arith.addf %689, %688 : vector<1x32xf32>
    %691 = arith.divf %689, %690 : vector<1x32xf32>
    %692 = vector.extract_strided_slice %685 {offsets = [0, 32], sizes = [1, 32], strides = [1, 1]} : vector<1x128xf32> to vector<1x32xf32>
    %693 = arith.negf %692 : vector<1x32xf32>
    %694 = math.exp %693 : vector<1x32xf32>
    %cst_259 = arith.constant 1.000000e+00 : f32
    %695 = vector.broadcast %cst_259 : f32 to vector<1x32xf32>
    %696 = arith.addf %695, %694 : vector<1x32xf32>
    %697 = arith.divf %695, %696 : vector<1x32xf32>
    %698 = vector.extract_strided_slice %685 {offsets = [0, 64], sizes = [1, 32], strides = [1, 1]} : vector<1x128xf32> to vector<1x32xf32>
    %699 = math.tanh %698 : vector<1x32xf32>
    %700 = vector.extract_strided_slice %685 {offsets = [0, 96], sizes = [1, 32], strides = [1, 1]} : vector<1x128xf32> to vector<1x32xf32>
    %701 = arith.negf %700 : vector<1x32xf32>
    %702 = math.exp %701 : vector<1x32xf32>
    %cst_260 = arith.constant 1.000000e+00 : f32
    %703 = vector.broadcast %cst_260 : f32 to vector<1x32xf32>
    %704 = arith.addf %703, %702 : vector<1x32xf32>
    %705 = arith.divf %703, %704 : vector<1x32xf32>
    %706 = arith.mulf %697, %679 : vector<1x32xf32>
    %707 = arith.mulf %691, %699 : vector<1x32xf32>
    %708 = arith.addf %706, %707 : vector<1x32xf32>
    %709 = math.tanh %708 : vector<1x32xf32>
    %710 = arith.mulf %705, %709 : vector<1x32xf32>
    %c14_i32 = arith.constant 14 : i32
    %711 = arith.index_cast %c14_i32 : i32 to index
    %c0_261 = arith.constant 0 : index
    %712 = vector.load %arg30[%711, %c0_261] : memref<16x128xf32, #tpu.memory_space<vmem>>, vector<1x128xf32>
    %cst_262 = arith.constant dense<0.000000e+00> : vector<1x128xf32>
    %713 = tpu.matmul %710, %303, %cst_262 {dimension_numbers = #tpu.dot_dimension_numbers<[1], [0], [0], [1], [0, 0, 1, 1], [], []>} : vector<1x32xf32>, vector<32x128xf32>, vector<1x128xf32> -> vector<1x128xf32>
    %714 = arith.addf %712, %713 : vector<1x128xf32>
    %715 = vector.extract_strided_slice %714 {offsets = [0, 0], sizes = [1, 32], strides = [1, 1]} : vector<1x128xf32> to vector<1x32xf32>
    %716 = arith.negf %715 : vector<1x32xf32>
    %717 = math.exp %716 : vector<1x32xf32>
    %cst_263 = arith.constant 1.000000e+00 : f32
    %718 = vector.broadcast %cst_263 : f32 to vector<1x32xf32>
    %719 = arith.addf %718, %717 : vector<1x32xf32>
    %720 = arith.divf %718, %719 : vector<1x32xf32>
    %721 = vector.extract_strided_slice %714 {offsets = [0, 32], sizes = [1, 32], strides = [1, 1]} : vector<1x128xf32> to vector<1x32xf32>
    %722 = arith.negf %721 : vector<1x32xf32>
    %723 = math.exp %722 : vector<1x32xf32>
    %cst_264 = arith.constant 1.000000e+00 : f32
    %724 = vector.broadcast %cst_264 : f32 to vector<1x32xf32>
    %725 = arith.addf %724, %723 : vector<1x32xf32>
    %726 = arith.divf %724, %725 : vector<1x32xf32>
    %727 = vector.extract_strided_slice %714 {offsets = [0, 64], sizes = [1, 32], strides = [1, 1]} : vector<1x128xf32> to vector<1x32xf32>
    %728 = math.tanh %727 : vector<1x32xf32>
    %729 = vector.extract_strided_slice %714 {offsets = [0, 96], sizes = [1, 32], strides = [1, 1]} : vector<1x128xf32> to vector<1x32xf32>
    %730 = arith.negf %729 : vector<1x32xf32>
    %731 = math.exp %730 : vector<1x32xf32>
    %cst_265 = arith.constant 1.000000e+00 : f32
    %732 = vector.broadcast %cst_265 : f32 to vector<1x32xf32>
    %733 = arith.addf %732, %731 : vector<1x32xf32>
    %734 = arith.divf %732, %733 : vector<1x32xf32>
    %735 = arith.mulf %726, %708 : vector<1x32xf32>
    %736 = arith.mulf %720, %728 : vector<1x32xf32>
    %737 = arith.addf %735, %736 : vector<1x32xf32>
    %738 = math.tanh %737 : vector<1x32xf32>
    %739 = arith.mulf %734, %738 : vector<1x32xf32>
    %c15_i32 = arith.constant 15 : i32
    %740 = arith.index_cast %c15_i32 : i32 to index
    %c0_266 = arith.constant 0 : index
    %741 = vector.load %arg30[%740, %c0_266] : memref<16x128xf32, #tpu.memory_space<vmem>>, vector<1x128xf32>
    %cst_267 = arith.constant dense<0.000000e+00> : vector<1x128xf32>
    %742 = tpu.matmul %739, %303, %cst_267 {dimension_numbers = #tpu.dot_dimension_numbers<[1], [0], [0], [1], [0, 0, 1, 1], [], []>} : vector<1x32xf32>, vector<32x128xf32>, vector<1x128xf32> -> vector<1x128xf32>
    %743 = arith.addf %741, %742 : vector<1x128xf32>
    %744 = vector.extract_strided_slice %743 {offsets = [0, 0], sizes = [1, 32], strides = [1, 1]} : vector<1x128xf32> to vector<1x32xf32>
    %745 = arith.negf %744 : vector<1x32xf32>
    %746 = math.exp %745 : vector<1x32xf32>
    %cst_268 = arith.constant 1.000000e+00 : f32
    %747 = vector.broadcast %cst_268 : f32 to vector<1x32xf32>
    %748 = arith.addf %747, %746 : vector<1x32xf32>
    %749 = arith.divf %747, %748 : vector<1x32xf32>
    %750 = vector.extract_strided_slice %743 {offsets = [0, 32], sizes = [1, 32], strides = [1, 1]} : vector<1x128xf32> to vector<1x32xf32>
    %751 = arith.negf %750 : vector<1x32xf32>
    %752 = math.exp %751 : vector<1x32xf32>
    %cst_269 = arith.constant 1.000000e+00 : f32
    %753 = vector.broadcast %cst_269 : f32 to vector<1x32xf32>
    %754 = arith.addf %753, %752 : vector<1x32xf32>
    %755 = arith.divf %753, %754 : vector<1x32xf32>
    %756 = vector.extract_strided_slice %743 {offsets = [0, 64], sizes = [1, 32], strides = [1, 1]} : vector<1x128xf32> to vector<1x32xf32>
    %757 = math.tanh %756 : vector<1x32xf32>
    %758 = vector.extract_strided_slice %743 {offsets = [0, 96], sizes = [1, 32], strides = [1, 1]} : vector<1x128xf32> to vector<1x32xf32>
    %759 = arith.negf %758 : vector<1x32xf32>
    %760 = math.exp %759 : vector<1x32xf32>
    %cst_270 = arith.constant 1.000000e+00 : f32
    %761 = vector.broadcast %cst_270 : f32 to vector<1x32xf32>
    %762 = arith.addf %761, %760 : vector<1x32xf32>
    %763 = arith.divf %761, %762 : vector<1x32xf32>
    %764 = arith.mulf %755, %737 : vector<1x32xf32>
    %765 = arith.mulf %749, %757 : vector<1x32xf32>
    %766 = arith.addf %764, %765 : vector<1x32xf32>
    %767 = math.tanh %766 : vector<1x32xf32>
    %768 = arith.mulf %763, %767 : vector<1x32xf32>
    %c16_i32 = arith.constant 16 : i32
    %c0_271 = arith.constant 0 : index
    %c0_272 = arith.constant 0 : index
    %769 = vector.load %arg23[%c0_271, %c0_272] : memref<32x1xf32, #tpu.memory_space<vmem>>, vector<32x1xf32>
    %cst_273 = arith.constant dense<0.000000e+00> : vector<1x1xf32>
    %770 = tpu.matmul %768, %769, %cst_273 {dimension_numbers = #tpu.dot_dimension_numbers<[1], [0], [0], [1], [0, 0, 1, 1], [], []>} : vector<1x32xf32>, vector<32x1xf32>, vector<1x1xf32> -> vector<1x1xf32>
    %c0_274 = arith.constant 0 : index
    %c0_275 = arith.constant 0 : index
    %771 = vector.load %arg24[%c0_274, %c0_275] : memref<1x1xf32, #tpu.memory_space<vmem>>, vector<1x1xf32>
    %772 = arith.addf %770, %771 : vector<1x1xf32>
    %773 = vector.shape_cast %772 : vector<1x1xf32> to vector<1x1x1xf32>
    %c0_276 = arith.constant 0 : index
    %c0_277 = arith.constant 0 : index
    %c0_278 = arith.constant 0 : index
    %774 = vector.load %arg25[%c0_276, %c0_277, %c0_278] : memref<1x1x1xf32, #tpu.memory_space<vmem>>, vector<1x1x1xf32>
    tpu.vector_store %arg25[%c0_276, %c0_277, %c0_278], %773 {strides = array<i32>} : memref<1x1x1xf32, #tpu.memory_space<vmem>>, vector<1x1x1xf32>,
    return
  }
  func.func @transform_0(%arg0: i32) -> (i32, i32, i32) {
    %c0_i32 = arith.constant 0 : i32
    %c0_i32_0 = arith.constant 0 : i32
    %c0_i32_1 = arith.constant 0 : i32
    return %arg0, %c0_i32, %c0_i32_0 : i32, i32, i32
  }
  func.func @transform_1(%arg0: i32) -> (i32, i32) {
    %c0_i32 = arith.constant 0 : i32
    %c0_i32_0 = arith.constant 0 : i32
    %c0_i32_1 = arith.constant 0 : i32
    return %c0_i32, %c0_i32_0 : i32, i32
  }
  func.func @transform_2(%arg0: i32) -> (i32, i32) {
    %c0_i32 = arith.constant 0 : i32
    %c0_i32_0 = arith.constant 0 : i32
    %c0_i32_1 = arith.constant 0 : i32
    return %c0_i32, %c0_i32_0 : i32, i32
  }
  func.func @transform_3(%arg0: i32) -> (i32, i32, i32) {
    %c0_i32 = arith.constant 0 : i32
    %c0_i32_0 = arith.constant 0 : i32
    %c0_i32_1 = arith.constant 0 : i32
    %c0_i32_2 = arith.constant 0 : i32
    return %c0_i32, %c0_i32_0, %c0_i32_1 : i32, i32, i32
  }
  func.func @transform_4(%arg0: i32) -> (i32, i32) {
    %c0_i32 = arith.constant 0 : i32
    %c0_i32_0 = arith.constant 0 : i32
    %c0_i32_1 = arith.constant 0 : i32
    return %c0_i32, %c0_i32_0 : i32, i32
  }
  func.func @transform_5(%arg0: i32) -> (i32, i32, i32) {
    %c0_i32 = arith.constant 0 : i32
    %c0_i32_0 = arith.constant 0 : i32
    %c0_i32_1 = arith.constant 0 : i32
    %c0_i32_2 = arith.constant 0 : i32
    return %c0_i32, %c0_i32_0, %c0_i32_1 : i32, i32, i32
  }
  func.func @transform_6(%arg0: i32) -> (i32, i32) {
    %c0_i32 = arith.constant 0 : i32
    %c0_i32_0 = arith.constant 0 : i32
    %c0_i32_1 = arith.constant 0 : i32
    return %c0_i32, %c0_i32_0 : i32, i32
  }
  func.func @transform_7(%arg0: i32) -> (i32, i32) {
    %c0_i32 = arith.constant 0 : i32
    %c0_i32_0 = arith.constant 0 : i32
    %c0_i32_1 = arith.constant 0 : i32
    return %c0_i32, %c0_i32_0 : i32, i32
  }
  func.func @transform_8(%arg0: i32) -> (i32, i32) {
    %c0_i32 = arith.constant 0 : i32
    %c0_i32_0 = arith.constant 0 : i32
    %c0_i32_1 = arith.constant 0 : i32
    return %c0_i32, %c0_i32_0 : i32, i32
  }
  func.func @transform_9(%arg0: i32) -> (i32, i32, i32) {
    %c0_i32 = arith.constant 0 : i32
    %c0_i32_0 = arith.constant 0 : i32
    %c0_i32_1 = arith.constant 0 : i32
    %c0_i32_2 = arith.constant 0 : i32
    return %c0_i32, %c0_i32_0, %c0_i32_1 : i32, i32, i32
  }
  func.func @transform_10(%arg0: i32) -> (i32, i32) {
    %c0_i32 = arith.constant 0 : i32
    %c0_i32_0 = arith.constant 0 : i32
    %c0_i32_1 = arith.constant 0 : i32
    return %c0_i32, %c0_i32_0 : i32, i32
  }
  func.func @transform_11(%arg0: i32) -> (i32, i32, i32) {
    %c0_i32 = arith.constant 0 : i32
    %c0_i32_0 = arith.constant 0 : i32
    %c0_i32_1 = arith.constant 0 : i32
    %c0_i32_2 = arith.constant 0 : i32
    return %c0_i32, %c0_i32_0, %c0_i32_1 : i32, i32, i32
  }
  func.func @transform_12(%arg0: i32) -> (i32, i32) {
    %c0_i32 = arith.constant 0 : i32
    %c0_i32_0 = arith.constant 0 : i32
    %c0_i32_1 = arith.constant 0 : i32
    return %c0_i32, %c0_i32_0 : i32, i32
  }
  func.func @transform_13(%arg0: i32) -> (i32, i32) {
    %c0_i32 = arith.constant 0 : i32
    %c0_i32_0 = arith.constant 0 : i32
    %c0_i32_1 = arith.constant 0 : i32
    return %c0_i32, %c0_i32_0 : i32, i32
  }
  func.func @transform_14(%arg0: i32) -> (i32, i32) {
    %c0_i32 = arith.constant 0 : i32
    %c0_i32_0 = arith.constant 0 : i32
    %c0_i32_1 = arith.constant 0 : i32
    return %c0_i32, %c0_i32_0 : i32, i32
  }
  func.func @transform_15(%arg0: i32) -> (i32, i32, i32) {
    %c0_i32 = arith.constant 0 : i32
    %c0_i32_0 = arith.constant 0 : i32
    %c0_i32_1 = arith.constant 0 : i32
    %c0_i32_2 = arith.constant 0 : i32
    return %c0_i32, %c0_i32_0, %c0_i32_1 : i32, i32, i32
  }
  func.func @transform_16(%arg0: i32) -> (i32, i32) {
    %c0_i32 = arith.constant 0 : i32
    %c0_i32_0 = arith.constant 0 : i32
    %c0_i32_1 = arith.constant 0 : i32
    return %c0_i32, %c0_i32_0 : i32, i32
  }
  func.func @transform_17(%arg0: i32) -> (i32, i32) {
    %c0_i32 = arith.constant 0 : i32
    %c0_i32_0 = arith.constant 0 : i32
    %c0_i32_1 = arith.constant 0 : i32
    return %c0_i32, %c0_i32_0 : i32, i32
  }
  func.func @transform_18(%arg0: i32) -> (i32, i32) {
    %c0_i32 = arith.constant 0 : i32
    %c0_i32_0 = arith.constant 0 : i32
    %c0_i32_1 = arith.constant 0 : i32
    return %c0_i32, %c0_i32_0 : i32, i32
  }
  func.func @transform_19(%arg0: i32) -> (i32, i32) {
    %c0_i32 = arith.constant 0 : i32
    %c0_i32_0 = arith.constant 0 : i32
    %c0_i32_1 = arith.constant 0 : i32
    return %c0_i32, %c0_i32_0 : i32, i32
  }
  func.func @transform_20(%arg0: i32) -> (i32, i32) {
    %c0_i32 = arith.constant 0 : i32
    %c0_i32_0 = arith.constant 0 : i32
    %c0_i32_1 = arith.constant 0 : i32
    return %c0_i32, %c0_i32_0 : i32, i32
  }
  func.func @transform_21(%arg0: i32) -> (i32, i32) {
    %c0_i32 = arith.constant 0 : i32
    %c0_i32_0 = arith.constant 0 : i32
    %c0_i32_1 = arith.constant 0 : i32
    return %c0_i32, %c0_i32_0 : i32, i32
  }
  func.func @transform_22(%arg0: i32) -> (i32, i32) {
    %c0_i32 = arith.constant 0 : i32
    %c0_i32_0 = arith.constant 0 : i32
    %c0_i32_1 = arith.constant 0 : i32
    return %c0_i32, %c0_i32_0 : i32, i32
  }
  func.func @transform_23(%arg0: i32) -> (i32, i32) {
    %c0_i32 = arith.constant 0 : i32
    %c0_i32_0 = arith.constant 0 : i32
    %c0_i32_1 = arith.constant 0 : i32
    return %c0_i32, %c0_i32_0 : i32, i32
  }
  func.func @transform_24(%arg0: i32) -> (i32, i32, i32) {
    %c0_i32 = arith.constant 0 : i32
    %c0_i32_0 = arith.constant 0 : i32
    %c0_i32_1 = arith.constant 0 : i32
    return %arg0, %c0_i32, %c0_i32_0 : i32, i32, i32
  }
}

</mosaic_0001>

<llo_original>
// kernel: deepvol_forward.1
$region0: #{deepvol_forward.1}
  #allocation0 [shape = 'u32[]', space=smem, size = 0x4, offset = 0x4, fixed_abs, tag = 'smem constant byte address 0x4 - core index']
  #allocation1 [shape = 'u32[144,128]{1,0:T(1,128)}', space=vmem, size = 0x12000, scoped, tag = 'internal scratch']
  #allocation2 [shape = 'f32[19,32]{1,0:T(8,128)}', space=vmem, size = 0x3000, scoped, tag = 'scratch operand']
  #allocation3 [shape = 'f32[19,8]{1,0:T(8,128)}', space=vmem, size = 0x3000, scoped, tag = 'scratch operand']
  #allocation4 [shape = 'f32[20,16]{1,0:T(8,128)}', space=vmem, size = 0x3000, scoped, tag = 'scratch operand']
  #allocation5 [shape = 'f32[18,8]{1,0:T(8,128)}', space=vmem, size = 0x3000, scoped, tag = 'scratch operand']
  #allocation6 [shape = 'f32[16,128]{1,0:T(8,128)}', space=vmem, size = 0x2000, scoped, tag = 'scratch operand']
  #allocation7 [shape = 'f32[1,1]{1,0:T(1,128)S(1)}', space=vmem, size = 0x200, scoped, tag = 'scoped memory for deepvol_forward.1']
  %s0 = inlined_call_operand.vmem [shape: f32[2,16,8], index: 0, kind: input, shape index: {}]
  %s1 = inlined_call_operand.hbm [shape: f32[8,32], index: 1, kind: input, shape index: {}]
  %s2 = inlined_call_operand.hbm [shape: f32[3,32], index: 2, kind: input, shape index: {}]
  %s3 = inlined_call_operand.vmem [shape: f32[4,32,32], index: 3, kind: input, shape index: {}]
  %s4 = inlined_call_operand.hbm [shape: f32[3,32], index: 4, kind: input, shape index: {}]
  %s5 = inlined_call_operand.hbm [shape: f32[4,32,32], index: 5, kind: input, shape index: {}]
  %s6 = inlined_call_operand.hbm [shape: f32[3,32], index: 6, kind: input, shape index: {}]
  %s7 = inlined_call_operand.vmem [shape: f32[32,8], index: 7, kind: input, shape index: {}]
  %s8 = inlined_call_operand.hbm [shape: f32[3,8], index: 8, kind: input, shape index: {}]
  %s9 = inlined_call_operand.vmem [shape: f32[4,8,8], index: 9, kind: input, shape index: {}]
  %s10 = inlined_call_operand.hbm [shape: f32[3,8], index: 10, kind: input, shape index: {}]
  %s11 = inlined_call_operand.hbm [shape: f32[4,8,8], index: 11, kind: input, shape index: {}]
  %s12 = inlined_call_operand.hbm [shape: f32[3,8], index: 12, kind: input, shape index: {}]
  %s13 = inlined_call_operand.hbm [shape: f32[8,16], index: 13, kind: input, shape index: {}]
  %s14 = inlined_call_operand.hbm [shape: f32[3,16], index: 14, kind: input, shape index: {}]
  %s15 = inlined_call_operand.hbm [shape: f32[5,16,16], index: 15, kind: input, shape index: {}]
  %s16 = inlined_call_operand.hbm [shape: f32[3,16], index: 16, kind: input, shape index: {}]
  %s17 = inlined_call_operand.vmem [shape: f32[8,8], index: 17, kind: input, shape index: {}]
  %s18 = inlined_call_operand.hbm [shape: f32[3,8], index: 18, kind: input, shape index: {}]
  %s19 = inlined_call_operand.hbm [shape: f32[24,128], index: 19, kind: input, shape index: {}]
  %s20 = inlined_call_operand.vmem [shape: f32[32,128], index: 20, kind: input, shape index: {}]
  %s21 = inlined_call_operand.hbm [shape: f32[1,128], index: 21, kind: input, shape index: {}]
  %s22 = inlined_call_operand.vmem [shape: f32[32,1], index: 22, kind: input, shape index: {}]
  %s23 = inlined_call_operand.<no memory space> [shape: f32[1,1], index: 23, kind: input, shape index: {}]
  %s24 = inlined_call_operand.vmem [shape: f32[2,1,1], index: 24, kind: output, shape index: {}]
  %s25 = sld [smem:[#allocation0]]
  $region193: #{deepvol_forward.1} parent=0
    _
  %s27 = ssub.s32 1, %s25
  %s28 = scalar_select 0, %s27, %s25
  %v29 = vstv %s23
  %30 = vst [vmem:[#allocation7] sm:$0x1] %v29
  $region1: #{deepvol_forward.1} parent=0
    #allocation8 [shape = 'u8[4096]{0}', space=vmem, size = 0x1000, scoped, tag = 'input window, operand 1, single buffered']
    #allocation9 [shape = 's32[2]{0}', space=sflag, size = 0x8, scoped, tag = 'scoped memory for deepvol_forward.1']
    #allocation10 [shape = 'u8[2048]{0}', space=vmem, size = 0x800, scoped, tag = 'input window, operand 2, single buffered']
    #allocation11 [shape = 's32[1]{0}', space=sflag, size = 0x4, scoped, tag = 'scoped memory for deepvol_forward.1']
    #allocation12 [shape = 'u8[2048]{0}', space=vmem, size = 0x800, scoped, tag = 'input window, operand 4, single buffered']
    #allocation13 [shape = 'u8[65536]{0}', space=vmem, size = 0x10000, scoped, tag = 'input window, operand 5, single buffered']
    #allocation14 [shape = 's32[1]{0}', space=sflag, size = 0x4, scoped, tag = 'scoped memory for deepvol_forward.1']
    #allocation15 [shape = 'u8[2048]{0}', space=vmem, size = 0x800, scoped, tag = 'input window, operand 6, single buffered']
    #allocation16 [shape = 'u8[2048]{0}', space=vmem, size = 0x800, scoped, tag = 'input window, operand 8, single buffered']
    #allocation17 [shape = 's32[1]{0}', space=sflag, size = 0x4, scoped, tag = 'scoped memory for deepvol_forward.1']
    #allocation18 [shape = 'u8[2048]{0}', space=vmem, size = 0x800, scoped, tag = 'input window, operand 10, single buffered']
    #allocation19 [shape = 'u8[16384]{0}', space=vmem, size = 0x4000, scoped, tag = 'input window, operand 11, single buffered']
    #allocation20 [shape = 's32[1]{0}', space=sflag, size = 0x4, scoped, tag = 'scoped memory for deepvol_forward.1']
    #allocation21 [shape = 'u8[2048]{0}', space=vmem, size = 0x800, scoped, tag = 'input window, operand 12, single buffered']
    #allocation22 [shape = 'u8[4096]{0}', space=vmem, size = 0x1000, scoped, tag = 'input window, operand 13, single buffered']
    #allocation23 [shape = 's32[1]{0}', space=sflag, size = 0x4, scoped, tag = 'scoped memory for deepvol_forward.1']
    #allocation24 [shape = 'u8[2048]{0}', space=vmem, size = 0x800, scoped, tag = 'input window, operand 14, single buffered']
    #allocation25 [shape = 'u8[40960]{0}', space=vmem, size = 0xa000, scoped, tag = 'input window, operand 15, single buffered']
    #allocation26 [shape = 's32[1]{0}', space=sflag, size = 0x4, scoped, tag = 'scoped memory for deepvol_forward.1']
    #allocation27 [shape = 'u8[2048]{0}', space=vmem, size = 0x800, scoped, tag = 'input window, operand 16, single buffered']
    #allocation28 [shape = 'u8[2048]{0}', space=vmem, size = 0x800, scoped, tag = 'input window, operand 18, single buffered']
    #allocation29 [shape = 's32[1]{0}', space=sflag, size = 0x4, scoped, tag = 'scoped memory for deepvol_forward.1']
    #allocation30 [shape = 'u8[12288]{0}', space=vmem, size = 0x3000, scoped, tag = 'input window, operand 19, single buffered']
    #allocation31 [shape = 'u8[512]{0}', space=vmem, size = 0x400, scoped, tag = 'input window, operand 21, single buffered']
    #allocation32 [shape = 's32[1]{0}', space=sflag, size = 0x4, scoped, tag = 'scoped memory for deepvol_forward.1']
    %31 = vsyncpa [#allocation9], 0
    %32 = vsyncpa [#allocation11], 0
    %33 = vsyncpa [#allocation14], 0
    %34 = vsyncpa [#allocation17], 0
    %35 = vsyncpa [#allocation20], 0
    %36 = vsyncpa [#allocation23], 0
    %37 = vsyncpa [#allocation26], 0
    %38 = vsyncpa [#allocation29], 0
    %39 = vsyncpa [#allocation32], 0
    loop: start=0, step=1, limit=4
    $region2: #{deepvol_forward.1} parent=1 // loop_pre_header
      _
    $region3: #{deepvol_forward.1} parent=1 // loop_header
      %s41 = sphi 0, %s45
      %p42 = scmp.ge.s32.totalorder %s41, 4
      %s51 = sphi 0, %s53
      %s54 = sphi 0, %s51
      %s55 = sphi 0, %s54
      %s71 = sphi 0, %s55
      %s75 = sphi 0, %s75
      %s77 = sphi 0, %s75
      %s78 = sphi 0, %s77
      %s92 = sphi 0, %s78
      %s96 = sphi 0, %s96
      %s98 = sphi 0, %s96
      %s99 = sphi 0, %s98
      %s113 = sphi 0, %s99
      %s117 = sphi 0, %s117
      %s119 = sphi 0, %s117
      %s120 = sphi 0, %s119
      %s134 = sphi 0, %s120
      %s138 = sphi 0, %s138
      %s140 = sphi 0, %s138
      %s141 = sphi 0, %s140
      %s155 = sphi 0, %s141
      %s159 = sphi 0, %s159
      %s161 = sphi 0, %s159
      %s162 = sphi 0, %s161
      %s176 = sphi 0, %s162
      %s180 = sphi 0, %s180
      %s182 = sphi 0, %s180
      %s183 = sphi 0, %s182
      %s197 = sphi 0, %s183
      %s201 = sphi 0, %s201
      %s203 = sphi 0, %s201
      %s204 = sphi 0, %s203
      %s218 = sphi 0, %s204
      %s222 = sphi 0, %s222
      %s224 = sphi 0, %s222
      %s225 = sphi 0, %s224
      %s239 = sphi 0, %s225
      %s243 = sphi 0, %s243
      %s245 = sphi 0, %s243
      %s246 = sphi 0, %s245
      %s260 = sphi 0, %s246
      %s264 = sphi 0, %s264
      %s266 = sphi 0, %s264
      %s267 = sphi 0, %s266
      %s281 = sphi 0, %s267
      %s285 = sphi 0, %s285
      %s287 = sphi 0, %s285
      %s288 = sphi 0, %s287
      %s302 = sphi 0, %s288
      %s306 = sphi 0, %s306
      %s308 = sphi 0, %s306
      %s309 = sphi 0, %s308
      %s323 = sphi 0, %s309
      %s327 = sphi 0, %s327
      %s329 = sphi 0, %s327
      %s330 = sphi 0, %s329
      %s344 = sphi 0, %s330
      %s348 = sphi 0, %s348
      %s350 = sphi 0, %s348
      %s351 = sphi 0, %s350
      %s365 = sphi 0, %s351
      %s369 = sphi 0, %s369
      %s371 = sphi 0, %s369
      %s372 = sphi 0, %s371
      %s386 = sphi 0, %s372
      %s390 = sphi 0, %s390
      %s392 = sphi 0, %s390
      %s393 = sphi 0, %s392
      %s407 = sphi 0, %s393
      %s411 = sphi 0, %s411
      %s413 = sphi 0, %s411
      %s414 = sphi 0, %s413
      %s428 = sphi 0, %s414
      %s432 = sphi 0, %s432
      %s434 = sphi 0, %s432
      %s435 = sphi 0, %s434
      %s449 = sphi 0, %s435
      %s453 = sphi 0, %s453
      %s455 = sphi 0, %s453
      %s456 = sphi 0, %s455
      %s470 = sphi 0, %s456
      %s474 = sphi 0, %s474
      %s476 = sphi 0, %s474
      %s477 = sphi 0, %s476
      %s491 = sphi 0, %s477
      %s495 = sphi 0, %s495
      %s497 = sphi 0, %s495
      %s498 = sphi 0, %s497
      %s512 = sphi 0, %s498
      %s516 = sphi 0, %s516
      %s518 = sphi 0, %s516
      %s519 = sphi 0, %s518
      %s533 = sphi 0, %s519
      %s537 = sphi 0, %s537
      %s539 = sphi 0, %s537
      %s540 = sphi 0, %s539
      %s554 = sphi 0, %s540
      %s560 = sphi 0, %s562
      %s563 = sphi 0, %s560
      %s564 = sphi 0, %s563
      %s580 = sphi 0, %s564
    $region4: #{deepvol_forward.1} parent=1 // loop_header_branch
      %44 = sbr.rel (%p42) target = $region8
    $region5: #{deepvol_forward.1} parent=1 // loop_body
      %s46 = ssub.s32 %s41, 1
      %s47 = ssub.s32 %s41, 2
      %s48 = sadd.s32 %s41, 1
      %s49 = ssub.s32 %s41, %s48
      %p50 = scmp.eq.s32.totalorder %s49, 0
      %s52 = sadd.s32 %s51, 1
      %s53 = scalar_select %p50, %s51, %s52
      %p56 = pneg %p50
      %p57 = scmp.eq.s32.totalorder %s41, 1
      %p58 = por %p56, %p57
      %p59 = scmp.ne.s32.totalorder %s51, %s54
      %p60 = scmp.eq.s32.totalorder %s41, 0
      %p61 = por %p59, %p60
      %p62 = scmp.ne.s32.totalorder %s51, %s54
      %p63 = scmp.eq.s32.totalorder %s46, 1
      %p64 = por %p62, %p63
      %p65 = scmp.ne.s32.totalorder %s54, %s55
      %p66 = scmp.eq.s32.totalorder %s46, 0
      %p67 = por %p65, %p66
      %p68 = scmp.ne.s32.totalorder %s54, %s55
      %p69 = scmp.eq.s32.totalorder %s47, 1
      %p70 = por %p68, %p69
      %p72 = scmp.ne.s32.totalorder %s55, %s71
      %p73 = scmp.eq.s32.totalorder %s47, 0
      %p74 = por %p72, %p73
      %s76 = sadd.s32 %s75, 1
      %p79 = scmp.eq.s32.totalorder %s41, 1
      %p80 = scmp.ne.s32.totalorder %s75, %s77
      %p81 = scmp.eq.s32.totalorder %s41, 0
      %p82 = por %p80, %p81
      %p83 = scmp.ne.s32.totalorder %s75, %s77
      %p84 = scmp.eq.s32.totalorder %s46, 1
      %p85 = por %p83, %p84
      %p86 = scmp.ne.s32.totalorder %s77, %s78
      %p87 = scmp.eq.s32.totalorder %s46, 0
      %p88 = por %p86, %p87
      %p89 = scmp.ne.s32.totalorder %s77, %s78
      %p90 = scmp.eq.s32.totalorder %s47, 1
      %p91 = por %p89, %p90
      %p93 = scmp.ne.s32.totalorder %s78, %s92
      %p94 = scmp.eq.s32.totalorder %s47, 0
      %p95 = por %p93, %p94
      %s97 = sadd.s32 %s96, 1
      %p100 = scmp.eq.s32.totalorder %s41, 1
      %p101 = scmp.ne.s32.totalorder %s96, %s98
      %p102 = scmp.eq.s32.totalorder %s41, 0
      %p103 = por %p101, %p102
      %p104 = scmp.ne.s32.totalorder %s96, %s98
      %p105 = scmp.eq.s32.totalorder %s46, 1
      %p106 = por %p104, %p105
      %p107 = scmp.ne.s32.totalorder %s98, %s99
      %p108 = scmp.eq.s32.totalorder %s46, 0
      %p109 = por %p107, %p108
      %p110 = scmp.ne.s32.totalorder %s98, %s99
      %p111 = scmp.eq.s32.totalorder %s47, 1
      %p112 = por %p110, %p111
      %p114 = scmp.ne.s32.totalorder %s99, %s113
      %p115 = scmp.eq.s32.totalorder %s47, 0
      %p116 = por %p114, %p115
      %s118 = sadd.s32 %s117, 1
      %p121 = scmp.eq.s32.totalorder %s41, 1
      %p122 = scmp.ne.s32.totalorder %s117, %s119
      %p123 = scmp.eq.s32.totalorder %s41, 0
      %p124 = por %p122, %p123
      %p125 = scmp.ne.s32.totalorder %s117, %s119
      %p126 = scmp.eq.s32.totalorder %s46, 1
      %p127 = por %p125, %p126
      %p128 = scmp.ne.s32.totalorder %s119, %s120
      %p129 = scmp.eq.s32.totalorder %s46, 0
      %p130 = por %p128, %p129
      %p131 = scmp.ne.s32.totalorder %s119, %s120
      %p132 = scmp.eq.s32.totalorder %s47, 1
      %p133 = por %p131, %p132
      %p135 = scmp.ne.s32.totalorder %s120, %s134
      %p136 = scmp.eq.s32.totalorder %s47, 0
      %p137 = por %p135, %p136
      %s139 = sadd.s32 %s138, 1
      %p142 = scmp.eq.s32.totalorder %s41, 1
      %p143 = scmp.ne.s32.totalorder %s138, %s140
      %p144 = scmp.eq.s32.totalorder %s41, 0
      %p145 = por %p143, %p144
      %p146 = scmp.ne.s32.totalorder %s138, %s140
      %p147 = scmp.eq.s32.totalorder %s46, 1
      %p148 = por %p146, %p147
      %p149 = scmp.ne.s32.totalorder %s140, %s141
      %p150 = scmp.eq.s32.totalorder %s46, 0
      %p151 = por %p149, %p150
      %p152 = scmp.ne.s32.totalorder %s140, %s141
      %p153 = scmp.eq.s32.totalorder %s47, 1
      %p154 = por %p152, %p153
      %p156 = scmp.ne.s32.totalorder %s141, %s155
      %p157 = scmp.eq.s32.totalorder %s47, 0
      %p158 = por %p156, %p157
      %s160 = sadd.s32 %s159, 1
      %p163 = scmp.eq.s32.totalorder %s41, 1
      %p164 = scmp.ne.s32.totalorder %s159, %s161
      %p165 = scmp.eq.s32.totalorder %s41, 0
      %p166 = por %p164, %p165
      %p167 = scmp.ne.s32.totalorder %s159, %s161
      %p168 = scmp.eq.s32.totalorder %s46, 1
      %p169 = por %p167, %p168
      %p170 = scmp.ne.s32.totalorder %s161, %s162
      %p171 = scmp.eq.s32.totalorder %s46, 0
      %p172 = por %p170, %p171
      %p173 = scmp.ne.s32.totalorder %s161, %s162
      %p174 = scmp.eq.s32.totalorder %s47, 1
      %p175 = por %p173, %p174
      %p177 = scmp.ne.s32.totalorder %s162, %s176
      %p178 = scmp.eq.s32.totalorder %s47, 0
      %p179 = por %p177, %p178
      %s181 = sadd.s32 %s180, 1
      %p184 = scmp.eq.s32.totalorder %s41, 1
      %p185 = scmp.ne.s32.totalorder %s180, %s182
      %p186 = scmp.eq.s32.totalorder %s41, 0
      %p187 = por %p185, %p186
      %p188 = scmp.ne.s32.totalorder %s180, %s182
      %p189 = scmp.eq.s32.totalorder %s46, 1
      %p190 = por %p188, %p189
      %p191 = scmp.ne.s32.totalorder %s182, %s183
      %p192 = scmp.eq.s32.totalorder %s46, 0
      %p193 = por %p191, %p192
      %p194 = scmp.ne.s32.totalorder %s182, %s183
      %p195 = scmp.eq.s32.totalorder %s47, 1
      %p196 = por %p194, %p195
      %p198 = scmp.ne.s32.totalorder %s183, %s197
      %p199 = scmp.eq.s32.totalorder %s47, 0
      %p200 = por %p198, %p199
      %s202 = sadd.s32 %s201, 1
      %p205 = scmp.eq.s32.totalorder %s41, 1
      %p206 = scmp.ne.s32.totalorder %s201, %s203
      %p207 = scmp.eq.s32.totalorder %s41, 0
      %p208 = por %p206, %p207
      %p209 = scmp.ne.s32.totalorder %s201, %s203
      %p210 = scmp.eq.s32.totalorder %s46, 1
      %p211 = por %p209, %p210
      %p212 = scmp.ne.s32.totalorder %s203, %s204
      %p213 = scmp.eq.s32.totalorder %s46, 0
      %p214 = por %p212, %p213
      %p215 = scmp.ne.s32.totalorder %s203, %s204
      %p216 = scmp.eq.s32.totalorder %s47, 1
      %p217 = por %p215, %p216
      %p219 = scmp.ne.s32.totalorder %s204, %s218
      %p220 = scmp.eq.s32.totalorder %s47, 0
      %p221 = por %p219, %p220
      %s223 = sadd.s32 %s222, 1
      %p226 = scmp.eq.s32.totalorder %s41, 1
      %p227 = scmp.ne.s32.totalorder %s222, %s224
      %p228 = scmp.eq.s32.totalorder %s41, 0
      %p229 = por %p227, %p228
      %p230 = scmp.ne.s32.totalorder %s222, %s224
      %p231 = scmp.eq.s32.totalorder %s46, 1
      %p232 = por %p230, %p231
      %p233 = scmp.ne.s32.totalorder %s224, %s225
      %p234 = scmp.eq.s32.totalorder %s46, 0
      %p235 = por %p233, %p234
      %p236 = scmp.ne.s32.totalorder %s224, %s225
      %p237 = scmp.eq.s32.totalorder %s47, 1
      %p238 = por %p236, %p237
      %p240 = scmp.ne.s32.totalorder %s225, %s239
      %p241 = scmp.eq.s32.totalorder %s47, 0
      %p242 = por %p240, %p241
      %s244 = sadd.s32 %s243, 1
      %p247 = scmp.eq.s32.totalorder %s41, 1
      %p248 = scmp.ne.s32.totalorder %s243, %s245
      %p249 = scmp.eq.s32.totalorder %s41, 0
      %p250 = por %p248, %p249
      %p251 = scmp.ne.s32.totalorder %s243, %s245
      %p252 = scmp.eq.s32.totalorder %s46, 1
      %p253 = por %p251, %p252
      %p254 = scmp.ne.s32.totalorder %s245, %s246
      %p255 = scmp.eq.s32.totalorder %s46, 0
      %p256 = por %p254, %p255
      %p257 = scmp.ne.s32.totalorder %s245, %s246
      %p258 = scmp.eq.s32.totalorder %s47, 1
      %p259 = por %p257, %p258
      %p261 = scmp.ne.s32.totalorder %s246, %s260
      %p262 = scmp.eq.s32.totalorder %s47, 0
      %p263 = por %p261, %p262
      %s265 = sadd.s32 %s264, 1
      %p268 = scmp.eq.s32.totalorder %s41, 1
      %p269 = scmp.ne.s32.totalorder %s264, %s266
      %p270 = scmp.eq.s32.totalorder %s41, 0
      %p271 = por %p269, %p270
      %p272 = scmp.ne.s32.totalorder %s264, %s266
      %p273 = scmp.eq.s32.totalorder %s46, 1
      %p274 = por %p272, %p273
      %p275 = scmp.ne.s32.totalorder %s266, %s267
      %p276 = scmp.eq.s32.totalorder %s46, 0
      %p277 = por %p275, %p276
      %p278 = scmp.ne.s32.totalorder %s266, %s267
      %p279 = scmp.eq.s32.totalorder %s47, 1
      %p280 = por %p278, %p279
      %p282 = scmp.ne.s32.totalorder %s267, %s281
      %p283 = scmp.eq.s32.totalorder %s47, 0
      %p284 = por %p282, %p283
      %s286 = sadd.s32 %s285, 1
      %p289 = scmp.eq.s32.totalorder %s41, 1
      %p290 = scmp.ne.s32.totalorder %s285, %s287
      %p291 = scmp.eq.s32.totalorder %s41, 0
      %p292 = por %p290, %p291
      %p293 = scmp.ne.s32.totalorder %s285, %s287
      %p294 = scmp.eq.s32.totalorder %s46, 1
      %p295 = por %p293, %p294
      %p296 = scmp.ne.s32.totalorder %s287, %s288
      %p297 = scmp.eq.s32.totalorder %s46, 0
      %p298 = por %p296, %p297
      %p299 = scmp.ne.s32.totalorder %s287, %s288
      %p300 = scmp.eq.s32.totalorder %s47, 1
      %p301 = por %p299, %p300
      %p303 = scmp.ne.s32.totalorder %s288, %s302
      %p304 = scmp.eq.s32.totalorder %s47, 0
      %p305 = por %p303, %p304
      %s307 = sadd.s32 %s306, 1
      %p310 = scmp.eq.s32.totalorder %s41, 1
      %p311 = scmp.ne.s32.totalorder %s306, %s308
      %p312 = scmp.eq.s32.totalorder %s41, 0
      %p313 = por %p311, %p312
      %p314 = scmp.ne.s32.totalorder %s306, %s308
      %p315 = scmp.eq.s32.totalorder %s46, 1
      %p316 = por %p314, %p315
      %p317 = scmp.ne.s32.totalorder %s308, %s309
      %p318 = scmp.eq.s32.totalorder %s46, 0
      %p319 = por %p317, %p318
      %p320 = scmp.ne.s32.totalorder %s308, %s309
      %p321 = scmp.eq.s32.totalorder %s47, 1
      %p322 = por %p320, %p321
      %p324 = scmp.ne.s32.totalorder %s309, %s323
      %p325 = scmp.eq.s32.totalorder %s47, 0
      %p326 = por %p324, %p325
      %s328 = sadd.s32 %s327, 1
      %p331 = scmp.eq.s32.totalorder %s41, 1
      %p332 = scmp.ne.s32.totalorder %s327, %s329
      %p333 = scmp.eq.s32.totalorder %s41, 0
      %p334 = por %p332, %p333
      %p335 = scmp.ne.s32.totalorder %s327, %s329
      %p336 = scmp.eq.s32.totalorder %s46, 1
      %p337 = por %p335, %p336
      %p338 = scmp.ne.s32.totalorder %s329, %s330
      %p339 = scmp.eq.s32.totalorder %s46, 0
      %p340 = por %p338, %p339
      %p341 = scmp.ne.s32.totalorder %s329, %s330
      %p342 = scmp.eq.s32.totalorder %s47, 1
      %p343 = por %p341, %p342
      %p345 = scmp.ne.s32.totalorder %s330, %s344
      %p346 = scmp.eq.s32.totalorder %s47, 0
      %p347 = por %p345, %p346
      %s349 = sadd.s32 %s348, 1
      %p352 = scmp.eq.s32.totalorder %s41, 1
      %p353 = scmp.ne.s32.totalorder %s348, %s350
      %p354 = scmp.eq.s32.totalorder %s41, 0
      %p355 = por %p353, %p354
      %p356 = scmp.ne.s32.totalorder %s348, %s350
      %p357 = scmp.eq.s32.totalorder %s46, 1
      %p358 = por %p356, %p357
      %p359 = scmp.ne.s32.totalorder %s350, %s351
      %p360 = scmp.eq.s32.totalorder %s46, 0
      %p361 = por %p359, %p360
      %p362 = scmp.ne.s32.totalorder %s350, %s351
      %p363 = scmp.eq.s32.totalorder %s47, 1
      %p364 = por %p362, %p363
      %p366 = scmp.ne.s32.totalorder %s351, %s365
      %p367 = scmp.eq.s32.totalorder %s47, 0
      %p368 = por %p366, %p367
      %s370 = sadd.s32 %s369, 1
      %p373 = scmp.eq.s32.totalorder %s41, 1
      %p374 = scmp.ne.s32.totalorder %s369, %s371
      %p375 = scmp.eq.s32.totalorder %s41, 0
      %p376 = por %p374, %p375
      %p377 = scmp.ne.s32.totalorder %s369, %s371
      %p378 = scmp.eq.s32.totalorder %s46, 1
      %p379 = por %p377, %p378
      %p380 = scmp.ne.s32.totalorder %s371, %s372
      %p381 = scmp.eq.s32.totalorder %s46, 0
      %p382 = por %p380, %p381
      %p383 = scmp.ne.s32.totalorder %s371, %s372
      %p384 = scmp.eq.s32.totalorder %s47, 1
      %p385 = por %p383, %p384
      %p387 = scmp.ne.s32.totalorder %s372, %s386
      %p388 = scmp.eq.s32.totalorder %s47, 0
      %p389 = por %p387, %p388
      %s391 = sadd.s32 %s390, 1
      %p394 = scmp.eq.s32.totalorder %s41, 1
      %p395 = scmp.ne.s32.totalorder %s390, %s392
      %p396 = scmp.eq.s32.totalorder %s41, 0
      %p397 = por %p395, %p396
      %p398 = scmp.ne.s32.totalorder %s390, %s392
      %p399 = scmp.eq.s32.totalorder %s46, 1
      %p400 = por %p398, %p399
      %p401 = scmp.ne.s32.totalorder %s392, %s393
      %p402 = scmp.eq.s32.totalorder %s46, 0
      %p403 = por %p401, %p402
      %p404 = scmp.ne.s32.totalorder %s392, %s393
      %p405 = scmp.eq.s32.totalorder %s47, 1
      %p406 = por %p404, %p405
      %p408 = scmp.ne.s32.totalorder %s393, %s407
      %p409 = scmp.eq.s32.totalorder %s47, 0
      %p410 = por %p408, %p409
      %s412 = sadd.s32 %s411, 1
      %p415 = scmp.eq.s32.totalorder %s41, 1
      %p416 = scmp.ne.s32.totalorder %s411, %s413
      %p417 = scmp.eq.s32.totalorder %s41, 0
      %p418 = por %p416, %p417
      %p419 = scmp.ne.s32.totalorder %s411, %s413
      %p420 = scmp.eq.s32.totalorder %s46, 1
      %p421 = por %p419, %p420
      %p422 = scmp.ne.s32.totalorder %s413, %s414
      %p423 = scmp.eq.s32.totalorder %s46, 0
      %p424 = por %p422, %p423
      %p425 = scmp.ne.s32.totalorder %s413, %s414
      %p426 = scmp.eq.s32.totalorder %s47, 1
      %p427 = por %p425, %p426
      %p429 = scmp.ne.s32.totalorder %s414, %s428
      %p430 = scmp.eq.s32.totalorder %s47, 0
      %p431 = por %p429, %p430
      %s433 = sadd.s32 %s432, 1
      %p436 = scmp.eq.s32.totalorder %s41, 1
      %p437 = scmp.ne.s32.totalorder %s432, %s434
      %p438 = scmp.eq.s32.totalorder %s41, 0
      %p439 = por %p437, %p438
      %p440 = scmp.ne.s32.totalorder %s432, %s434
      %p441 = scmp.eq.s32.totalorder %s46, 1
      %p442 = por %p440, %p441
      %p443 = scmp.ne.s32.totalorder %s434, %s435
      %p444 = scmp.eq.s32.totalorder %s46, 0
      %p445 = por %p443, %p444
      %p446 = scmp.ne.s32.totalorder %s434, %s435
      %p447 = scmp.eq.s32.totalorder %s47, 1
      %p448 = por %p446, %p447
      %p450 = scmp.ne.s32.totalorder %s435, %s449
      %p451 = scmp.eq.s32.totalorder %s47, 0
      %p452 = por %p450, %p451
      %s454 = sadd.s32 %s453, 1
      %p457 = scmp.eq.s32.totalorder %s41, 1
      %p458 = scmp.ne.s32.totalorder %s453, %s455
      %p459 = scmp.eq.s32.totalorder %s41, 0
      %p460 = por %p458, %p459
      %p461 = scmp.ne.s32.totalorder %s453, %s455
      %p462 = scmp.eq.s32.totalorder %s46, 1
      %p463 = por %p461, %p462
      %p464 = scmp.ne.s32.totalorder %s455, %s456
      %p465 = scmp.eq.s32.totalorder %s46, 0
      %p466 = por %p464, %p465
      %p467 = scmp.ne.s32.totalorder %s455, %s456
      %p468 = scmp.eq.s32.totalorder %s47, 1
      %p469 = por %p467, %p468
      %p471 = scmp.ne.s32.totalorder %s456, %s470
      %p472 = scmp.eq.s32.totalorder %s47, 0
      %p473 = por %p471, %p472
      %s475 = sadd.s32 %s474, 1
      %p478 = scmp.eq.s32.totalorder %s41, 1
      %p479 = scmp.ne.s32.totalorder %s474, %s476
      %p480 = scmp.eq.s32.totalorder %s41, 0
      %p481 = por %p479, %p480
      %p482 = scmp.ne.s32.totalorder %s474, %s476
      %p483 = scmp.eq.s32.totalorder %s46, 1
      %p484 = por %p482, %p483
      %p485 = scmp.ne.s32.totalorder %s476, %s477
      %p486 = scmp.eq.s32.totalorder %s46, 0
      %p487 = por %p485, %p486
      %p488 = scmp.ne.s32.totalorder %s476, %s477
      %p489 = scmp.eq.s32.totalorder %s47, 1
      %p490 = por %p488, %p489
      %p492 = scmp.ne.s32.totalorder %s477, %s491
      %p493 = scmp.eq.s32.totalorder %s47, 0
      %p494 = por %p492, %p493
      %s496 = sadd.s32 %s495, 1
      %p499 = scmp.eq.s32.totalorder %s41, 1
      %p500 = scmp.ne.s32.totalorder %s495, %s497
      %p501 = scmp.eq.s32.totalorder %s41, 0
      %p502 = por %p500, %p501
      %p503 = scmp.ne.s32.totalorder %s495, %s497
      %p504 = scmp.eq.s32.totalorder %s46, 1
      %p505 = por %p503, %p504
      %p506 = scmp.ne.s32.totalorder %s497, %s498
      %p507 = scmp.eq.s32.totalorder %s46, 0
      %p508 = por %p506, %p507
      %p509 = scmp.ne.s32.totalorder %s497, %s498
      %p510 = scmp.eq.s32.totalorder %s47, 1
      %p511 = por %p509, %p510
      %p513 = scmp.ne.s32.totalorder %s498, %s512
      %p514 = scmp.eq.s32.totalorder %s47, 0
      %p515 = por %p513, %p514
      %s517 = sadd.s32 %s516, 1
      %p520 = scmp.eq.s32.totalorder %s41, 1
      %p521 = scmp.ne.s32.totalorder %s516, %s518
      %p522 = scmp.eq.s32.totalorder %s41, 0
      %p523 = por %p521, %p522
      %p524 = scmp.ne.s32.totalorder %s516, %s518
      %p525 = scmp.eq.s32.totalorder %s46, 1
      %p526 = por %p524, %p525
      %p527 = scmp.ne.s32.totalorder %s518, %s519
      %p528 = scmp.eq.s32.totalorder %s46, 0
      %p529 = por %p527, %p528
      %p530 = scmp.ne.s32.totalorder %s518, %s519
      %p531 = scmp.eq.s32.totalorder %s47, 1
      %p532 = por %p530, %p531
      %p534 = scmp.ne.s32.totalorder %s519, %s533
      %p535 = scmp.eq.s32.totalorder %s47, 0
      %p536 = por %p534, %p535
      %s538 = sadd.s32 %s537, 1
      %p541 = scmp.eq.s32.totalorder %s41, 1
      %p542 = scmp.ne.s32.totalorder %s537, %s539
      %p543 = scmp.eq.s32.totalorder %s41, 0
      %p544 = por %p542, %p543
      %p545 = scmp.ne.s32.totalorder %s537, %s539
      %p546 = scmp.eq.s32.totalorder %s46, 1
      %p547 = por %p545, %p546
      %p548 = scmp.ne.s32.totalorder %s539, %s540
      %p549 = scmp.eq.s32.totalorder %s46, 0
      %p550 = por %p548, %p549
      %p551 = scmp.ne.s32.totalorder %s539, %s540
      %p552 = scmp.eq.s32.totalorder %s47, 1
      %p553 = por %p551, %p552
      %p555 = scmp.ne.s32.totalorder %s540, %s554
      %p556 = scmp.eq.s32.totalorder %s47, 0
      %p557 = por %p555, %p556
      %s558 = ssub.s32 %s41, %s48
      %p559 = scmp.eq.s32.totalorder %s558, 0
      %s561 = sadd.s32 %s560, 1
      %s562 = scalar_select %p559, %s560, %s561
      %p565 = pneg %p559
      %p566 = scmp.eq.s32.totalorder %s41, 1
      %p567 = por %p565, %p566
      %p568 = scmp.ne.s32.totalorder %s560, %s563
      %p569 = scmp.eq.s32.totalorder %s41, 0
      %p570 = por %p568, %p569
      %p571 = scmp.ne.s32.totalorder %s560, %s563
      %p572 = scmp.eq.s32.totalorder %s46, 1
      %p573 = por %p571, %p572
      %p574 = scmp.ne.s32.totalorder %s563, %s564
      %p575 = scmp.eq.s32.totalorder %s46, 0
      %p576 = por %p574, %p575
      %p577 = scmp.ne.s32.totalorder %s563, %s564
      %p578 = scmp.eq.s32.totalorder %s47, 1
      %p579 = por %p577, %p578
      %p581 = scmp.ne.s32.totalorder %s564, %s580
      %p582 = scmp.eq.s32.totalorder %s47, 0
      %p583 = por %p581, %p582
      %p584 = scmp.le.s32.totalorder 1, %s41
      %p585 = scmp.lt.s32.totalorder %s41, 3
      %p586 = pnand %p584, %p585
      %p587 = pneg %p586
      // Predicated region
      $region9: #{deepvol_forward.1} parent=5 // pred_check
        _
      $region10: #{deepvol_forward.1} parent=5 // pred_check_branch
        %589 = sbr.rel (%p586) target = $region12
      $region11: #{deepvol_forward.1} parent=5 // pred_region
        %s590 = ssub.s32 %s41, 1
        // Predicated region
        $region13: #{deepvol_forward.1} parent=11 // pred_check
          %p591 = pneg %p88
        $region14: #{deepvol_forward.1} parent=11 // pred_check_branch
          %593 = sbr.rel (%p591) target = $region16
        $region15: #{deepvol_forward.1} parent=11 // pred_region
          %s595 = ssub.s32 128, 128
          %596 = vsyncadd [#allocation9], %s595
          %s598 = sshll.u32 [#allocation8], 4
          %s599 = int_to_ptr.vmem [resolvable:$true] %s598
          %601 = dma.hbm_to_vmem [thread:$0]  %s1, 128, %s599, [#allocation9]
        $region16: #{deepvol_forward.1} parent=11 // pred_fallthru
          _
        // Predicated region
        $region17: #{deepvol_forward.1} parent=11 // pred_check
          %p602 = pneg %p109
        $region18: #{deepvol_forward.1} parent=11 // pred_check_branch
          %604 = sbr.rel (%p602) target = $region20
        $region19: #{deepvol_forward.1} parent=11 // pred_region
          %s606 = ssub.s32 64, 64
          %607 = vsyncadd [#allocation11], %s606
          %s609 = sshll.u32 [#allocation10], 4
          %s610 = int_to_ptr.vmem [resolvable:$true] %s609
          %612 = dma.hbm_to_vmem [thread:$0]  %s2, 64, %s610, [#allocation11]
        $region20: #{deepvol_forward.1} parent=11 // pred_fallthru
          _
        // Predicated region
        $region21: #{deepvol_forward.1} parent=11 // pred_check
          %p613 = pneg %p130
        $region22: #{deepvol_forward.1} parent=11 // pred_check_branch
          %615 = sbr.rel (%p613) target = $region24
        $region23: #{deepvol_forward.1} parent=11 // pred_region
          _
        $region24: #{deepvol_forward.1} parent=11 // pred_fallthru
          _
        // Predicated region
        $region25: #{deepvol_forward.1} parent=11 // pred_check
          %p616 = pneg %p151
        $region26: #{deepvol_forward.1} parent=11 // pred_check_branch
          %618 = sbr.rel (%p616) target = $region28
        $region27: #{deepvol_forward.1} parent=11 // pred_region
          %s620 = ssub.s32 64, 64
          %621 = vsyncadd [#allocation11], %s620
          %s623 = sshll.u32 [#allocation12], 4
          %s624 = int_to_ptr.vmem [resolvable:$true] %s623
          %626 = dma.hbm_to_vmem [thread:$0]  %s4, 64, %s624, [#allocation11]
        $region28: #{deepvol_forward.1} parent=11 // pred_fallthru
          _
        // Predicated region
        $region29: #{deepvol_forward.1} parent=11 // pred_check
          %p627 = pneg %p172
        $region30: #{deepvol_forward.1} parent=11 // pred_check_branch
          %629 = sbr.rel (%p627) target = $region32
        $region31: #{deepvol_forward.1} parent=11 // pred_region
          %s631 = ssub.s32 2048, 2048
          %632 = vsyncadd [#allocation14], %s631
          %s633 = sshll.u32 [#allocation13], 4
          %s634 = int_to_ptr.vmem [resolvable:$true] %s633
          %639 = dma.hbm_to_vmem [thread:$0]  %s5, 2048, %s634, [#allocation14], 128, 128, 8
        $region32: #{deepvol_forward.1} parent=11 // pred_fallthru
          _
        // Predicated region
        $region33: #{deepvol_forward.1} parent=11 // pred_check
          %p640 = pneg %p193
        $region34: #{deepvol_forward.1} parent=11 // pred_check_branch
          %642 = sbr.rel (%p640) target = $region36
        $region35: #{deepvol_forward.1} parent=11 // pred_region
          %s644 = ssub.s32 64, 64
          %645 = vsyncadd [#allocation14], %s644
          %s647 = sshll.u32 [#allocation15], 4
          %s648 = int_to_ptr.vmem [resolvable:$true] %s647
          %650 = dma.hbm_to_vmem [thread:$0]  %s6, 64, %s648, [#allocation14]
        $region36: #{deepvol_forward.1} parent=11 // pred_fallthru
          _
        // Predicated region
        $region37: #{deepvol_forward.1} parent=11 // pred_check
          %p651 = pneg %p214
        $region38: #{deepvol_forward.1} parent=11 // pred_check_branch
          %653 = sbr.rel (%p651) target = $region40
        $region39: #{deepvol_forward.1} parent=11 // pred_region
          _
        $region40: #{deepvol_forward.1} parent=11 // pred_fallthru
          _
        // Predicated region
        $region41: #{deepvol_forward.1} parent=11 // pred_check
          %p654 = pneg %p235
        $region42: #{deepvol_forward.1} parent=11 // pred_check_branch
          %656 = sbr.rel (%p654) target = $region44
        $region43: #{deepvol_forward.1} parent=11 // pred_region
          %s658 = ssub.s32 64, 64
          %659 = vsyncadd [#allocation17], %s658
          %s661 = sshll.u32 [#allocation16], 4
          %s662 = int_to_ptr.vmem [resolvable:$true] %s661
          %664 = dma.hbm_to_vmem [thread:$0]  %s8, 64, %s662, [#allocation17]
        $region44: #{deepvol_forward.1} parent=11 // pred_fallthru
          _
        // Predicated region
        $region45: #{deepvol_forward.1} parent=11 // pred_check
          %p665 = pneg %p256
        $region46: #{deepvol_forward.1} parent=11 // pred_check_branch
          %667 = sbr.rel (%p665) target = $region48
        $region47: #{deepvol_forward.1} parent=11 // pred_region
          _
        $region48: #{deepvol_forward.1} parent=11 // pred_fallthru
          _
        // Predicated region
        $region49: #{deepvol_forward.1} parent=11 // pred_check
          %p668 = pneg %p277
        $region50: #{deepvol_forward.1} parent=11 // pred_check_branch
          %670 = sbr.rel (%p668) target = $region52
        $region51: #{deepvol_forward.1} parent=11 // pred_region
          %s672 = ssub.s32 64, 64
          %673 = vsyncadd [#allocation17], %s672
          %s675 = sshll.u32 [#allocation18], 4
          %s676 = int_to_ptr.vmem [resolvable:$true] %s675
          %678 = dma.hbm_to_vmem [thread:$0]  %s10, 64, %s676, [#allocation17]
        $region52: #{deepvol_forward.1} parent=11 // pred_fallthru
          _
        // Predicated region
        $region53: #{deepvol_forward.1} parent=11 // pred_check
          %p679 = pneg %p298
        $region54: #{deepvol_forward.1} parent=11 // pred_check_branch
          %681 = sbr.rel (%p679) target = $region56
        $region55: #{deepvol_forward.1} parent=11 // pred_region
          %s683 = ssub.s32 512, 512
          %684 = vsyncadd [#allocation20], %s683
          %s685 = sshll.u32 [#allocation19], 4
          %s686 = int_to_ptr.vmem [resolvable:$true] %s685
          %691 = dma.hbm_to_vmem [thread:$0]  %s11, 512, %s686, [#allocation20], 128, 128, 8
        $region56: #{deepvol_forward.1} parent=11 // pred_fallthru
          _
        // Predicated region
        $region57: #{deepvol_forward.1} parent=11 // pred_check
          %p692 = pneg %p319
        $region58: #{deepvol_forward.1} parent=11 // pred_check_branch
          %694 = sbr.rel (%p692) target = $region60
        $region59: #{deepvol_forward.1} parent=11 // pred_region
          %s696 = ssub.s32 64, 64
          %697 = vsyncadd [#allocation20], %s696
          %s699 = sshll.u32 [#allocation21], 4
          %s700 = int_to_ptr.vmem [resolvable:$true] %s699
          %702 = dma.hbm_to_vmem [thread:$0]  %s12, 64, %s700, [#allocation20]
        $region60: #{deepvol_forward.1} parent=11 // pred_fallthru
          _
        // Predicated region
        $region61: #{deepvol_forward.1} parent=11 // pred_check
          %p703 = pneg %p340
        $region62: #{deepvol_forward.1} parent=11 // pred_check_branch
          %705 = sbr.rel (%p703) target = $region64
        $region63: #{deepvol_forward.1} parent=11 // pred_region
          %s707 = ssub.s32 128, 128
          %708 = vsyncadd [#allocation23], %s707
          %s710 = sshll.u32 [#allocation22], 4
          %s711 = int_to_ptr.vmem [resolvable:$true] %s710
          %713 = dma.hbm_to_vmem [thread:$0]  %s13, 128, %s711, [#allocation23]
        $region64: #{deepvol_forward.1} parent=11 // pred_fallthru
          _
        // Predicated region
        $region65: #{deepvol_forward.1} parent=11 // pred_check
          %p714 = pneg %p361
        $region66: #{deepvol_forward.1} parent=11 // pred_check_branch
          %716 = sbr.rel (%p714) target = $region68
        $region67: #{deepvol_forward.1} parent=11 // pred_region
          %s718 = ssub.s32 64, 64
          %719 = vsyncadd [#allocation23], %s718
          %s721 = sshll.u32 [#allocation24], 4
          %s722 = int_to_ptr.vmem [resolvable:$true] %s721
          %724 = dma.hbm_to_vmem [thread:$0]  %s14, 64, %s722, [#allocation23]
        $region68: #{deepvol_forward.1} parent=11 // pred_fallthru
          _
        // Predicated region
        $region69: #{deepvol_forward.1} parent=11 // pred_check
          %p725 = pneg %p382
        $region70: #{deepvol_forward.1} parent=11 // pred_check_branch
          %727 = sbr.rel (%p725) target = $region72
        $region71: #{deepvol_forward.1} parent=11 // pred_region
          %s729 = ssub.s32 1280, 1280
          %730 = vsyncadd [#allocation26], %s729
          %s731 = sshll.u32 [#allocation25], 4
          %s732 = int_to_ptr.vmem [resolvable:$true] %s731
          %737 = dma.hbm_to_vmem [thread:$0]  %s15, 1280, %s732, [#allocation26], 128, 128, 8
        $region72: #{deepvol_forward.1} parent=11 // pred_fallthru
          _
        // Predicated region
        $region73: #{deepvol_forward.1} parent=11 // pred_check
          %p738 = pneg %p403
        $region74: #{deepvol_forward.1} parent=11 // pred_check_branch
          %740 = sbr.rel (%p738) target = $region76
        $region75: #{deepvol_forward.1} parent=11 // pred_region
          %s742 = ssub.s32 64, 64
          %743 = vsyncadd [#allocation26], %s742
          %s745 = sshll.u32 [#allocation27], 4
          %s746 = int_to_ptr.vmem [resolvable:$true] %s745
          %748 = dma.hbm_to_vmem [thread:$0]  %s16, 64, %s746, [#allocation26]
        $region76: #{deepvol_forward.1} parent=11 // pred_fallthru
          _
        // Predicated region
        $region77: #{deepvol_forward.1} parent=11 // pred_check
          %p749 = pneg %p424
        $region78: #{deepvol_forward.1} parent=11 // pred_check_branch
          %751 = sbr.rel (%p749) target = $region80
        $region79: #{deepvol_forward.1} parent=11 // pred_region
          _
        $region80: #{deepvol_forward.1} parent=11 // pred_fallthru
          _
        // Predicated region
        $region81: #{deepvol_forward.1} parent=11 // pred_check
          %p752 = pneg %p445
        $region82: #{deepvol_forward.1} parent=11 // pred_check_branch
          %754 = sbr.rel (%p752) target = $region84
        $region83: #{deepvol_forward.1} parent=11 // pred_region
          %s756 = ssub.s32 64, 64
          %757 = vsyncadd [#allocation29], %s756
          %s759 = sshll.u32 [#allocation28], 4
          %s760 = int_to_ptr.vmem [resolvable:$true] %s759
          %762 = dma.hbm_to_vmem [thread:$0]  %s18, 64, %s760, [#allocation29]
        $region84: #{deepvol_forward.1} parent=11 // pred_fallthru
          _
        // Predicated region
        $region85: #{deepvol_forward.1} parent=11 // pred_check
          %p763 = pneg %p466
        $region86: #{deepvol_forward.1} parent=11 // pred_check_branch
          %765 = sbr.rel (%p763) target = $region88
        $region87: #{deepvol_forward.1} parent=11 // pred_region
          %s767 = ssub.s32 384, 384
          %768 = vsyncadd [#allocation29], %s767
          %s769 = sshll.u32 [#allocation30], 4
          %s770 = int_to_ptr.vmem [resolvable:$true] %s769
          %775 = dma.hbm_to_vmem [thread:$0]  %s19, 384, %s770, [#allocation29], 128, 128, 8
        $region88: #{deepvol_forward.1} parent=11 // pred_fallthru
          _
        // Predicated region
        $region89: #{deepvol_forward.1} parent=11 // pred_check
          %p776 = pneg %p487
        $region90: #{deepvol_forward.1} parent=11 // pred_check_branch
          %778 = sbr.rel (%p776) target = $region92
        $region91: #{deepvol_forward.1} parent=11 // pred_region
          _
        $region92: #{deepvol_forward.1} parent=11 // pred_fallthru
          _
        // Predicated region
        $region93: #{deepvol_forward.1} parent=11 // pred_check
          %p779 = pneg %p508
        $region94: #{deepvol_forward.1} parent=11 // pred_check_branch
          %781 = sbr.rel (%p779) target = $region96
        $region95: #{deepvol_forward.1} parent=11 // pred_region
          %s783 = ssub.s32 16, 16
          %784 = vsyncadd [#allocation32], %s783
          %s786 = sshll.u32 [#allocation31], 4
          %s787 = int_to_ptr.vmem [resolvable:$true] %s786
          %789 = dma.hbm_to_vmem [thread:$0]  %s21, 16, %s787, [#allocation32]
        $region96: #{deepvol_forward.1} parent=11 // pred_fallthru
          _
        // Predicated region
        $region97: #{deepvol_forward.1} parent=11 // pred_check
          %p790 = pneg %p529
        $region98: #{deepvol_forward.1} parent=11 // pred_check_branch
          %792 = sbr.rel (%p790) target = $region100
        $region99: #{deepvol_forward.1} parent=11 // pred_region
          _
        $region100: #{deepvol_forward.1} parent=11 // pred_fallthru
          _
        // Predicated region
        $region101: #{deepvol_forward.1} parent=11 // pred_check
          %p793 = pneg %p550
        $region102: #{deepvol_forward.1} parent=11 // pred_check_branch
          %795 = sbr.rel (%p793) target = $region104
        $region103: #{deepvol_forward.1} parent=11 // pred_region
          _
        $region104: #{deepvol_forward.1} parent=11 // pred_fallthru
          _
      $region12: #{deepvol_forward.1} parent=5 // pred_fallthru
        _
      %p796 = scmp.lt.s32.totalorder %s41, 2
      // Predicated region
      $region105: #{deepvol_forward.1} parent=5 // pred_check
        %p797 = pneg %p796
      $region106: #{deepvol_forward.1} parent=5 // pred_check_branch
        %799 = sbr.rel (%p797) target = $region108
      $region107: #{deepvol_forward.1} parent=5 // pred_region
        // Predicated region
        $region109: #{deepvol_forward.1} parent=107 // pred_check
          %p800 = pneg %p61
        $region110: #{deepvol_forward.1} parent=107 // pred_check_branch
          %802 = sbr.rel (%p800) target = $region112
        $region111: #{deepvol_forward.1} parent=107 // pred_region
          %p803 = scmp.lt.s32.totalorder %s41, 1
          %s804 = scalar_select %p803, %s41, 1
          %s805 = smul.addr %s804, 2
          %s806 = smul.addr %s805, 8
          %s807 = scalar_lea.vmem %s0, %s806
        $region112: #{deepvol_forward.1} parent=107 // pred_fallthru
          _
      $region108: #{deepvol_forward.1} parent=5 // pred_fallthru
        _
      %p808 = scmp.le.s32.totalorder 1, %s41
      %p809 = scmp.lt.s32.totalorder %s41, 3
      %p810 = pnand %p808, %p809
      %p811 = pneg %p810
      // Predicated region
      $region113: #{deepvol_forward.1} parent=5 // pred_check
        _
      $region114: #{deepvol_forward.1} parent=5 // pred_check_branch
        %813 = sbr.rel (%p810) target = $region116
      $region115: #{deepvol_forward.1} parent=5 // pred_region
        %s814 = ssub.s32 %s41, 1
        // Predicated region
        $region117: #{deepvol_forward.1} parent=115 // pred_check
          %p815 = pneg %p88
        $region118: #{deepvol_forward.1} parent=115 // pred_check_branch
          %817 = sbr.rel (%p815) target = $region120
        $region119: #{deepvol_forward.1} parent=115 // pred_region
          %818 = dma.done [#allocation9], 128
        $region120: #{deepvol_forward.1} parent=115 // pred_fallthru
          _
        // Predicated region
        $region121: #{deepvol_forward.1} parent=115 // pred_check
          %p819 = pneg %p109
        $region122: #{deepvol_forward.1} parent=115 // pred_check_branch
          %821 = sbr.rel (%p819) target = $region124
        $region123: #{deepvol_forward.1} parent=115 // pred_region
          %822 = dma.done [#allocation11], 64
        $region124: #{deepvol_forward.1} parent=115 // pred_fallthru
          _
        // Predicated region
        $region125: #{deepvol_forward.1} parent=115 // pred_check
          %p823 = pneg %p151
        $region126: #{deepvol_forward.1} parent=115 // pred_check_branch
          %825 = sbr.rel (%p823) target = $region128
        $region127: #{deepvol_forward.1} parent=115 // pred_region
          %826 = dma.done [#allocation11], 64
        $region128: #{deepvol_forward.1} parent=115 // pred_fallthru
          _
        // Predicated region
        $region129: #{deepvol_forward.1} parent=115 // pred_check
          %p827 = pneg %p172
        $region130: #{deepvol_forward.1} parent=115 // pred_check_branch
          %829 = sbr.rel (%p827) target = $region132
        $region131: #{deepvol_forward.1} parent=115 // pred_region
          %830 = dma.done [#allocation14], 2048
        $region132: #{deepvol_forward.1} parent=115 // pred_fallthru
          _
        // Predicated region
        $region133: #{deepvol_forward.1} parent=115 // pred_check
          %p831 = pneg %p193
        $region134: #{deepvol_forward.1} parent=115 // pred_check_branch
          %833 = sbr.rel (%p831) target = $region136
        $region135: #{deepvol_forward.1} parent=115 // pred_region
          %834 = dma.done [#allocation14], 64
        $region136: #{deepvol_forward.1} parent=115 // pred_fallthru
          _
        // Predicated region
        $region137: #{deepvol_forward.1} parent=115 // pred_check
          %p835 = pneg %p235
        $region138: #{deepvol_forward.1} parent=115 // pred_check_branch
          %837 = sbr.rel (%p835) target = $region140
        $region139: #{deepvol_forward.1} parent=115 // pred_region
          %838 = dma.done [#allocation17], 64
        $region140: #{deepvol_forward.1} parent=115 // pred_fallthru
          _
        // Predicated region
        $region141: #{deepvol_forward.1} parent=115 // pred_check
          %p839 = pneg %p277
        $region142: #{deepvol_forward.1} parent=115 // pred_check_branch
          %841 = sbr.rel (%p839) target = $region144
        $region143: #{deepvol_forward.1} parent=115 // pred_region
          %842 = dma.done [#allocation17], 64
        $region144: #{deepvol_forward.1} parent=115 // pred_fallthru
          _
        // Predicated region
        $region145: #{deepvol_forward.1} parent=115 // pred_check
          %p843 = pneg %p298
        $region146: #{deepvol_forward.1} parent=115 // pred_check_branch
          %845 = sbr.rel (%p843) target = $region148
        $region147: #{deepvol_forward.1} parent=115 // pred_region
          %846 = dma.done [#allocation20], 512
        $region148: #{deepvol_forward.1} parent=115 // pred_fallthru
          _
        // Predicated region
        $region149: #{deepvol_forward.1} parent=115 // pred_check
          %p847 = pneg %p319
        $region150: #{deepvol_forward.1} parent=115 // pred_check_branch
          %849 = sbr.rel (%p847) target = $region152
        $region151: #{deepvol_forward.1} parent=115 // pred_region
          %850 = dma.done [#allocation20], 64
        $region152: #{deepvol_forward.1} parent=115 // pred_fallthru
          _
        // Predicated region
        $region153: #{deepvol_forward.1} parent=115 // pred_check
          %p851 = pneg %p340
        $region154: #{deepvol_forward.1} parent=115 // pred_check_branch
          %853 = sbr.rel (%p851) target = $region156
        $region155: #{deepvol_forward.1} parent=115 // pred_region
          %854 = dma.done [#allocation23], 128
        $region156: #{deepvol_forward.1} parent=115 // pred_fallthru
          _
        // Predicated region
        $region157: #{deepvol_forward.1} parent=115 // pred_check
          %p855 = pneg %p361
        $region158: #{deepvol_forward.1} parent=115 // pred_check_branch
          %857 = sbr.rel (%p855) target = $region160
        $region159: #{deepvol_forward.1} parent=115 // pred_region
          %858 = dma.done [#allocation23], 64
        $region160: #{deepvol_forward.1} parent=115 // pred_fallthru
          _
        // Predicated region
        $region161: #{deepvol_forward.1} parent=115 // pred_check
          %p859 = pneg %p382
        $region162: #{deepvol_forward.1} parent=115 // pred_check_branch
          %861 = sbr.rel (%p859) target = $region164
        $region163: #{deepvol_forward.1} parent=115 // pred_region
          %862 = dma.done [#allocation26], 1280
        $region164: #{deepvol_forward.1} parent=115 // pred_fallthru
          _
        // Predicated region
        $region165: #{deepvol_forward.1} parent=115 // pred_check
          %p863 = pneg %p403
        $region166: #{deepvol_forward.1} parent=115 // pred_check_branch
          %865 = sbr.rel (%p863) target = $region168
        $region167: #{deepvol_forward.1} parent=115 // pred_region
          %866 = dma.done [#allocation26], 64
        $region168: #{deepvol_forward.1} parent=115 // pred_fallthru
          _
        // Predicated region
        $region169: #{deepvol_forward.1} parent=115 // pred_check
          %p867 = pneg %p445
        $region170: #{deepvol_forward.1} parent=115 // pred_check_branch
          %869 = sbr.rel (%p867) target = $region172
        $region171: #{deepvol_forward.1} parent=115 // pred_region
          %870 = dma.done [#allocation29], 64
        $region172: #{deepvol_forward.1} parent=115 // pred_fallthru
          _
        // Predicated region
        $region173: #{deepvol_forward.1} parent=115 // pred_check
          %p871 = pneg %p466
        $region174: #{deepvol_forward.1} parent=115 // pred_check_branch
          %873 = sbr.rel (%p871) target = $region176
        $region175: #{deepvol_forward.1} parent=115 // pred_region
          %874 = dma.done [#allocation29], 384
        $region176: #{deepvol_forward.1} parent=115 // pred_fallthru
          _
        // Predicated region
        $region177: #{deepvol_forward.1} parent=115 // pred_check
          %p875 = pneg %p508
        $region178: #{deepvol_forward.1} parent=115 // pred_check_branch
          %877 = sbr.rel (%p875) target = $region180
        $region179: #{deepvol_forward.1} parent=115 // pred_region
          %878 = dma.done [#allocation32], 16
        $region180: #{deepvol_forward.1} parent=115 // pred_fallthru
          _
        %p879 = scmp.lt.s32.totalorder %s46, 1
        %s880 = scalar_select %p879, %s46, 1
        %s881 = smul.addr %s880, 2
        %s882 = smul.addr %s881, 8
        %s883 = scalar_lea.vmem %s0, %s882
        %p884 = pneg %p67
        %p885 = pneg %p64
        %p886 = pneg %p88
        %p887 = pneg %p85
        %p888 = pneg %p109
        %p889 = pneg %p106
        %p890 = pneg %p130
        %p891 = pneg %p127
        %p892 = pneg %p151
        %p893 = pneg %p148
        %p894 = pneg %p172
        %p895 = pneg %p169
        %p896 = pneg %p193
        %p897 = pneg %p190
        %p898 = pneg %p214
        %p899 = pneg %p211
        %p900 = pneg %p235
        %p901 = pneg %p232
        %p902 = pneg %p256
        %p903 = pneg %p253
        %p904 = pneg %p277
        %p905 = pneg %p274
        %p906 = pneg %p298
        %p907 = pneg %p295
        %p908 = pneg %p319
        %p909 = pneg %p316
        %p910 = pneg %p340
        %p911 = pneg %p337
        %p912 = pneg %p361
        %p913 = pneg %p358
        %p914 = pneg %p382
        %p915 = pneg %p379
        %p916 = pneg %p403
        %p917 = pneg %p400
        %p918 = pneg %p424
        %p919 = pneg %p421
        %p920 = pneg %p445
        %p921 = pneg %p442
        %p922 = pneg %p466
        %p923 = pneg %p463
        %p924 = pneg %p487
        %p925 = pneg %p484
        %p926 = pneg %p508
        %p927 = pneg %p505
        %p928 = pneg %p529
        %p929 = pneg %p526
        %p930 = pneg %p550
        %p931 = pneg %p547
        %p932 = pneg %p576
        %p933 = pneg %p573
        %p934 = scmp.lt.s32.totalorder %s46, 1
        %s935 = scalar_select %p934, %s46, 1
        %s936 = scalar_lea.vmem %s24, %s935
        %p937 = scmp.lt.s32.totalorder %s46, 1
        %s938 = scalar_select %p937, %s46, 1
        %s939 = smul.addr %s938, 2
        %s940 = smul.addr %s939, 8
        %s941 = scalar_lea.vmem %s0, %s940
        %p942 = scmp.lt.s32.totalorder %s46, 1
        %s943 = scalar_select %p942, %s46, 1
        %s944 = scalar_lea.vmem %s24, %s943
        %v945 = vld [vmem:[%s941] sm:$0xff]
        %v946 = vld [vmem:[%s941 + $0x8] sm:$0xff]
        %v947 = vld [vmem:[#allocation8] sm:$0xff]
        %v948 = vld [vmem:[#allocation10] sm:$0x7]
        %v949 = vlaneseq
        %v950 = vshrl.u32 %v949, 7
        %v951 = vsub.s32 0, %v950
        %v952 = vrot.slane %v948, %v951
        %vm953 = vcmask 64512
        %v955 = vsel %vm953, %v945, 0
        %v958 = vsel %vm953, %v946, 0
        %960 = vmatprep.subr.mxu0 0.0
        %961 = vmatpush1.msra.mxu0 %v947
        %962 = vmatprep.subr.mxu0 0.0
        %963 = vmatpush1.msra.mxu0 0.0
        %964 = vmatprep.subr.mxu0 0.0
        %965 = vmatpush1.msra.mxu0 0.0
        %966 = vmatprep.subr.mxu0 0.0
        %967 = vmatpush1.msra.mxu0 0.0
        %968 = vmatprep.subr.mxu0 0.0
        %969 = vmatpush1.msra.mxu0 0.0
        %970 = vmatprep.subr.mxu0 0.0
        %971 = vmatpush1.msra.mxu0 0.0
        %972 = vmatprep.subr.mxu0 0.0
        %973 = vmatpush1.msra.mxu0 0.0
        %974 = vmatprep.subr.mxu0 0.0
        %975 = vmatpush1.msra.mxu0 0.0
        %976 = vmatprep.subr.mxu0 0.0
        %977 = vmatpush1.msra.mxu0 0.0
        %978 = vmatprep.subr.mxu0 0.0
        %979 = vmatpush1.msra.mxu0 0.0
        %980 = vmatprep.subr.mxu0 0.0
        %981 = vmatpush1.msra.mxu0 0.0
        %982 = vmatprep.subr.mxu0 0.0
        %983 = vmatpush1.msra.mxu0 0.0
        %984 = vmatprep.subr.mxu0 0.0
        %985 = vmatpush1.msra.mxu0 0.0
        %986 = vmatprep.subr.mxu0 0.0
        %987 = vmatpush1.msra.mxu0 0.0
        %988 = vmatprep.subr.mxu0 0.0
        %989 = vmatpush1.msra.mxu0 0.0
        %990 = vmatprep.subr.mxu0 0.0
        %991 = vmatpush1.msra.mxu0 0.0
        %992 = vmatprep.subr.mxu0 0.0
        %993 = vmatpush1.msra.mxu0 0.0
        %994 = vmatprep.subr.mxu0 0.0
        %995 = vmatpush1.msra.mxu0 0.0
        %996 = vmatprep.subr.mxu0 0.0
        %997 = vmatpush1.msra.mxu0 0.0
        %998 = vmatprep.subr.mxu0 0.0
        %999 = vmatpush1.msra.mxu0 0.0
        %1000 = vmatprep.subr.mxu0 0.0
        %1001 = vmatpush1.msra.mxu0 0.0
        %1002 = vmatprep.subr.mxu0 0.0
        %1003 = vmatpush1.msra.mxu0 0.0
        %1004 = vmatprep.subr.mxu0 0.0
        %1005 = vmatpush1.msra.mxu0 0.0
        %1006 = vmatprep.subr.mxu0 0.0
        %1007 = vmatpush1.msra.mxu0 0.0
        %1008 = vmatprep.subr.mxu0 0.0
        %1009 = vmatpush1.msra.mxu0 0.0
        %1010 = vmatprep.subr.mxu0 0.0
        %1011 = vmatpush1.msra.mxu0 0.0
        %1012 = vmatprep.subr.mxu0 0.0
        %1013 = vmatpush1.msra.mxu0 0.0
        %1014 = vmatprep.subr.mxu0 0.0
        %1015 = vmatpush1.msra.mxu0 0.0
        %1016 = vmatprep.subr.mxu0 0.0
        %1017 = vmatpush1.msra.mxu0 0.0
        %1018 = vmatprep.subr.mxu0 0.0
        %1019 = vmatpush1.msra.mxu0 0.0
        %1020 = vmatprep.subr.mxu0 0.0
        %1021 = vmatpush1.msra.mxu0 0.0
        %1022 = vmatprep.subr.mxu0 0.0
        %1023 = vmatpush1.msra.mxu0 0.0
        %1024 = vmatprep.mubr.f32.mxu0 0.0
        %1025 = vmatmul.mubr.f32.gmra.mrb[0].mxu0 %v955
        %v1026 = vpop.f32.mrb[0].mxu0
        %v1027 = vadd.f32 %v952, %v1026
        %v1028 = vpop.f32.mrb[0].mxu0
        %1029 = vmatprep.mubr.f32.mxu0 0.0
        %1030 = vmatmul.mubr.f32.gmra.mrb[0].mxu0 %v958
        %v1031 = vpop.f32.mrb[0].mxu0
        %v1032 = vadd.f32 %v952, %v1031
        %v1033 = vpop.f32.mrb[0].mxu0
        %1034 = vdwg.mxu0
        %vm1035 = vcmp.ge.f32.partialorder %v1027, 0.0
        %vm1036 = vcmp.ge.f32.partialorder %v1032, 0.0
        %v1037 = vmul.f32 %v1027, 0.01
        %v1038 = vmul.f32 %v1032, 0.01
        %v1039 = vsel %vm1035, %v1027, %v1037
        %v1040 = vsel %vm1036, %v1032, %v1038
        %v1041 = vlaneseq
        %v1042 = vshrl.u32 %v1041, 7
        %v1043 = vsub.s32 1, %v1042
        %v1044 = vrot.slane %v948, %v1043
        %v1045 = vmul.f32 %v1039, %v1044
        %v1046 = vmul.f32 %v1040, %v1044
        %v1047 = vlaneseq
        %v1048 = vshrl.u32 %v1047, 7
        %v1049 = vsub.s32 2, %v1048
        %v1050 = vrot.slane %v948, %v1049
        %v1051 = vadd.f32 %v1045, %v1050
        %v1052 = vadd.f32 %v1046, %v1050
        %vm1053 = vcmask 253952
        %1054 = vst.msk [vmem:[#allocation2] sm:$0x1] %vm1053, 0.0
        %vm1055 = vcmask 261120
        %1056 = vst.msk [vmem:[#allocation2 + $0x1] sm:$0xff] %vm1055, %v1051
        %1057 = vst.msk [vmem:[#allocation2 + $0x9] sm:$0xff] %vm1055, %v1052
        %vm1058 = vcmask 254976
        %1059 = vst.msk [vmem:[#allocation2 + $0x11] sm:$0x3] %vm1058, 0.0
        %v1060 = vld [vmem:[%s3] sm:$0xff]
        %v1061 = vld [vmem:[%s3 + $0x8] sm:$0xff]
        %v1062 = vld [vmem:[%s3 + $0x10] sm:$0xff]
        %v1063 = vld [vmem:[%s3 + $0x18] sm:$0xff]
        %v1064 = vld [vmem:[%s3 + $0x20] sm:$0xff]
        %v1065 = vld [vmem:[%s3 + $0x28] sm:$0xff]
        %v1066 = vld [vmem:[%s3 + $0x30] sm:$0xff]
        %v1067 = vld [vmem:[%s3 + $0x38] sm:$0xff]
        %v1068 = vld [vmem:[%s3 + $0x40] sm:$0xff]
        %v1069 = vld [vmem:[%s3 + $0x48] sm:$0xff]
        %v1070 = vld [vmem:[%s3 + $0x50] sm:$0xff]
        %v1071 = vld [vmem:[%s3 + $0x58] sm:$0xff]
        %v1072 = vld [vmem:[%s3 + $0x60] sm:$0xff]
        %v1073 = vld [vmem:[%s3 + $0x68] sm:$0xff]
        %v1074 = vld [vmem:[%s3 + $0x70] sm:$0xff]
        %v1075 = vld [vmem:[%s3 + $0x78] sm:$0xff]
        %v1076 = vld [vmem:[#allocation2] sm:$0xff]
        %v1077 = vld [vmem:[#allocation2 + $0x8] sm:$0xff]
        %v1078 = vld [vmem:[#allocation2 + $0x1] sm:$0xff]
        %v1079 = vld [vmem:[#allocation2 + $0x9] sm:$0xff]
        %v1081 = vsel %vm1055, %v1078, 0
        %v1084 = vsel %vm1055, %v1079, 0
        %1086 = vmatprep.subr.mxu0 0.0
        %1087 = vmatpush1.msra.mxu0 %v1064
        %1088 = vmatprep.subr.mxu0 0.0
        %1089 = vmatpush1.msra.mxu0 %v1065
        %1090 = vmatprep.subr.mxu0 0.0
        %1091 = vmatpush1.msra.mxu0 %v1066
        %1092 = vmatprep.subr.mxu0 0.0
        %1093 = vmatpush1.msra.mxu0 %v1067
        %1094 = vmatprep.subr.mxu0 0.0
        %1095 = vmatpush1.msra.mxu0 0.0
        %1096 = vmatprep.subr.mxu0 0.0
        %1097 = vmatpush1.msra.mxu0 0.0
        %1098 = vmatprep.subr.mxu0 0.0
        %1099 = vmatpush1.msra.mxu0 0.0
        %1100 = vmatprep.subr.mxu0 0.0
        %1101 = vmatpush1.msra.mxu0 0.0
        %1102 = vmatprep.subr.mxu0 0.0
        %1103 = vmatpush1.msra.mxu0 0.0
        %1104 = vmatprep.subr.mxu0 0.0
        %1105 = vmatpush1.msra.mxu0 0.0
        %1106 = vmatprep.subr.mxu0 0.0
        %1107 = vmatpush1.msra.mxu0 0.0
        %1108 = vmatprep.subr.mxu0 0.0
        %1109 = vmatpush1.msra.mxu0 0.0
        %1110 = vmatprep.subr.mxu0 0.0
        %1111 = vmatpush1.msra.mxu0 0.0
        %1112 = vmatprep.subr.mxu0 0.0
        %1113 = vmatpush1.msra.mxu0 0.0
        %1114 = vmatprep.subr.mxu0 0.0
        %1115 = vmatpush1.msra.mxu0 0.0
        %1116 = vmatprep.subr.mxu0 0.0
        %1117 = vmatpush1.msra.mxu0 0.0
        %1118 = vmatprep.subr.mxu0 0.0
        %1119 = vmatpush1.msra.mxu0 0.0
        %1120 = vmatprep.subr.mxu0 0.0
        %1121 = vmatpush1.msra.mxu0 0.0
        %1122 = vmatprep.subr.mxu0 0.0
        %1123 = vmatpush1.msra.mxu0 0.0
        %1124 = vmatprep.subr.mxu0 0.0
        %1125 = vmatpush1.msra.mxu0 0.0
        %1126 = vmatprep.subr.mxu0 0.0
        %1127 = vmatpush1.msra.mxu0 0.0
        %1128 = vmatprep.subr.mxu0 0.0
        %1129 = vmatpush1.msra.mxu0 0.0
        %1130 = vmatprep.subr.mxu0 0.0
        %1131 = vmatpush1.msra.mxu0 0.0
        %1132 = vmatprep.subr.mxu0 0.0
        %1133 = vmatpush1.msra.mxu0 0.0
        %1134 = vmatprep.subr.mxu0 0.0
        %1135 = vmatpush1.msra.mxu0 0.0
        %1136 = vmatprep.subr.mxu0 0.0
        %1137 = vmatpush1.msra.mxu0 0.0
        %1138 = vmatprep.subr.mxu0 0.0
        %1139 = vmatpush1.msra.mxu0 0.0
        %1140 = vmatprep.subr.mxu0 0.0
        %1141 = vmatpush1.msra.mxu0 0.0
        %1142 = vmatprep.subr.mxu0 0.0
        %1143 = vmatpush1.msra.mxu0 0.0
        %1144 = vmatprep.subr.mxu0 0.0
        %1145 = vmatpush1.msra.mxu0 0.0
        %1146 = vmatprep.subr.mxu0 0.0
        %1147 = vmatpush1.msra.mxu0 0.0
        %1148 = vmatprep.subr.mxu0 0.0
        %1149 = vmatpush1.msra.mxu0 0.0
        %1150 = vmatprep.mubr.f32.mxu0 0.0
        %1151 = vmatmul.mubr.f32.gmra.mrb[0].mxu0 %v1081
        %v1152 = vpop.f32.mrb[0].mxu0
        %v1153 = vadd.f32 0.0, %v1152
        %v1154 = vpop.f32.mrb[0].mxu0
        %1155 = vmatprep.mubr.f32.mxu0 0.0
        %1156 = vmatmul.mubr.f32.gmra.mrb[0].mxu0 %v1084
        %v1157 = vpop.f32.mrb[0].mxu0
        %v1158 = vadd.f32 0.0, %v1157
        %v1159 = vpop.f32.mrb[0].mxu0
        %1160 = vdwg.mxu0
        %v1162 = vsel %vm1055, %v1076, 0
        %v1165 = vsel %vm1055, %v1077, 0
        %1167 = vmatprep.subr.mxu0 0.0
        %1168 = vmatpush1.msra.mxu0 %v1060
        %1169 = vmatprep.subr.mxu0 0.0
        %1170 = vmatpush1.msra.mxu0 %v1061
        %1171 = vmatprep.subr.mxu0 0.0
        %1172 = vmatpush1.msra.mxu0 %v1062
        %1173 = vmatprep.subr.mxu0 0.0
        %1174 = vmatpush1.msra.mxu0 %v1063
        %1175 = vmatprep.subr.mxu0 0.0
        %1176 = vmatpush1.msra.mxu0 0.0
        %1177 = vmatprep.subr.mxu0 0.0
        %1178 = vmatpush1.msra.mxu0 0.0
        %1179 = vmatprep.subr.mxu0 0.0
        %1180 = vmatpush1.msra.mxu0 0.0
        %1181 = vmatprep.subr.mxu0 0.0
        %1182 = vmatpush1.msra.mxu0 0.0
        %1183 = vmatprep.subr.mxu0 0.0
        %1184 = vmatpush1.msra.mxu0 0.0
        %1185 = vmatprep.subr.mxu0 0.0
        %1186 = vmatpush1.msra.mxu0 0.0
        %1187 = vmatprep.subr.mxu0 0.0
        %1188 = vmatpush1.msra.mxu0 0.0
        %1189 = vmatprep.subr.mxu0 0.0
        %1190 = vmatpush1.msra.mxu0 0.0
        %1191 = vmatprep.subr.mxu0 0.0
        %1192 = vmatpush1.msra.mxu0 0.0
        %1193 = vmatprep.subr.mxu0 0.0
        %1194 = vmatpush1.msra.mxu0 0.0
        %1195 = vmatprep.subr.mxu0 0.0
        %1196 = vmatpush1.msra.mxu0 0.0
        %1197 = vmatprep.subr.mxu0 0.0
        %1198 = vmatpush1.msra.mxu0 0.0
        %1199 = vmatprep.subr.mxu0 0.0
        %1200 = vmatpush1.msra.mxu0 0.0
        %1201 = vmatprep.subr.mxu0 0.0
        %1202 = vmatpush1.msra.mxu0 0.0
        %1203 = vmatprep.subr.mxu0 0.0
        %1204 = vmatpush1.msra.mxu0 0.0
        %1205 = vmatprep.subr.mxu0 0.0
        %1206 = vmatpush1.msra.mxu0 0.0
        %1207 = vmatprep.subr.mxu0 0.0
        %1208 = vmatpush1.msra.mxu0 0.0
        %1209 = vmatprep.subr.mxu0 0.0
        %1210 = vmatpush1.msra.mxu0 0.0
        %1211 = vmatprep.subr.mxu0 0.0
        %1212 = vmatpush1.msra.mxu0 0.0
        %1213 = vmatprep.subr.mxu0 0.0
        %1214 = vmatpush1.msra.mxu0 0.0
        %1215 = vmatprep.subr.mxu0 0.0
        %1216 = vmatpush1.msra.mxu0 0.0
        %1217 = vmatprep.subr.mxu0 0.0
        %1218 = vmatpush1.msra.mxu0 0.0
        %1219 = vmatprep.subr.mxu0 0.0
        %1220 = vmatpush1.msra.mxu0 0.0
        %1221 = vmatprep.subr.mxu0 0.0
        %1222 = vmatpush1.msra.mxu0 0.0
        %1223 = vmatprep.subr.mxu0 0.0
        %1224 = vmatpush1.msra.mxu0 0.0
        %1225 = vmatprep.subr.mxu0 0.0
        %1226 = vmatpush1.msra.mxu0 0.0
        %1227 = vmatprep.subr.mxu0 0.0
        %1228 = vmatpush1.msra.mxu0 0.0
        %1229 = vmatprep.subr.mxu0 0.0
        %1230 = vmatpush1.msra.mxu0 0.0
        %1231 = vmatprep.mubr.f32.mxu0 0.0
        %1232 = vmatmul.mubr.f32.gmra.mrb[0].mxu0 %v1162
        %v1233 = vpop.f32.mrb[0].mxu0
        %v1234 = vadd.f32 %v1153, %v1233
        %v1235 = vpop.f32.mrb[0].mxu0
        %1236 = vmatprep.mubr.f32.mxu0 0.0
        %1237 = vmatmul.mubr.f32.gmra.mrb[0].mxu0 %v1165
        %v1238 = vpop.f32.mrb[0].mxu0
        %v1239 = vadd.f32 %v1158, %v1238
        %v1240 = vpop.f32.mrb[0].mxu0
        %1241 = vdwg.mxu0
        %v1242 = vld [vmem:[#allocation2 + $0x2] sm:$0xff]
        %v1243 = vld [vmem:[#allocation2 + $0xa] sm:$0xff]
        %v1245 = vsel %vm1055, %v1242, 0
        %v1248 = vsel %vm1055, %v1243, 0
        %1250 = vmatprep.subr.mxu0 0.0
        %1251 = vmatpush1.msra.mxu0 %v1068
        %1252 = vmatprep.subr.mxu0 0.0
        %1253 = vmatpush1.msra.mxu0 %v1069
        %1254 = vmatprep.subr.mxu0 0.0
        %1255 = vmatpush1.msra.mxu0 %v1070
        %1256 = vmatprep.subr.mxu0 0.0
        %1257 = vmatpush1.msra.mxu0 %v1071
        %1258 = vmatprep.subr.mxu0 0.0
        %1259 = vmatpush1.msra.mxu0 0.0
        %1260 = vmatprep.subr.mxu0 0.0
        %1261 = vmatpush1.msra.mxu0 0.0
        %1262 = vmatprep.subr.mxu0 0.0
        %1263 = vmatpush1.msra.mxu0 0.0
        %1264 = vmatprep.subr.mxu0 0.0
        %1265 = vmatpush1.msra.mxu0 0.0
        %1266 = vmatprep.subr.mxu0 0.0
        %1267 = vmatpush1.msra.mxu0 0.0
        %1268 = vmatprep.subr.mxu0 0.0
        %1269 = vmatpush1.msra.mxu0 0.0
        %1270 = vmatprep.subr.mxu0 0.0
        %1271 = vmatpush1.msra.mxu0 0.0
        %1272 = vmatprep.subr.mxu0 0.0
        %1273 = vmatpush1.msra.mxu0 0.0
        %1274 = vmatprep.subr.mxu0 0.0
        %1275 = vmatpush1.msra.mxu0 0.0
        %1276 = vmatprep.subr.mxu0 0.0
        %1277 = vmatpush1.msra.mxu0 0.0
        %1278 = vmatprep.subr.mxu0 0.0
        %1279 = vmatpush1.msra.mxu0 0.0
        %1280 = vmatprep.subr.mxu0 0.0
        %1281 = vmatpush1.msra.mxu0 0.0
        %1282 = vmatprep.subr.mxu0 0.0
        %1283 = vmatpush1.msra.mxu0 0.0
        %1284 = vmatprep.subr.mxu0 0.0
        %1285 = vmatpush1.msra.mxu0 0.0
        %1286 = vmatprep.subr.mxu0 0.0
        %1287 = vmatpush1.msra.mxu0 0.0
        %1288 = vmatprep.subr.mxu0 0.0
        %1289 = vmatpush1.msra.mxu0 0.0
        %1290 = vmatprep.subr.mxu0 0.0
        %1291 = vmatpush1.msra.mxu0 0.0
        %1292 = vmatprep.subr.mxu0 0.0
        %1293 = vmatpush1.msra.mxu0 0.0
        %1294 = vmatprep.subr.mxu0 0.0
        %1295 = vmatpush1.msra.mxu0 0.0
        %1296 = vmatprep.subr.mxu0 0.0
        %1297 = vmatpush1.msra.mxu0 0.0
        %1298 = vmatprep.subr.mxu0 0.0
        %1299 = vmatpush1.msra.mxu0 0.0
        %1300 = vmatprep.subr.mxu0 0.0
        %1301 = vmatpush1.msra.mxu0 0.0
        %1302 = vmatprep.subr.mxu0 0.0
        %1303 = vmatpush1.msra.mxu0 0.0
        %1304 = vmatprep.subr.mxu0 0.0
        %1305 = vmatpush1.msra.mxu0 0.0
        %1306 = vmatprep.subr.mxu0 0.0
        %1307 = vmatpush1.msra.mxu0 0.0
        %1308 = vmatprep.subr.mxu0 0.0
        %1309 = vmatpush1.msra.mxu0 0.0
        %1310 = vmatprep.subr.mxu0 0.0
        %1311 = vmatpush1.msra.mxu0 0.0
        %1312 = vmatprep.subr.mxu0 0.0
        %1313 = vmatpush1.msra.mxu0 0.0
        %1314 = vmatprep.mubr.f32.mxu0 0.0
        %1315 = vmatmul.mubr.f32.gmra.mrb[0].mxu0 %v1245
        %v1316 = vpop.f32.mrb[0].mxu0
        %v1317 = vadd.f32 0.0, %v1316
        %v1318 = vpop.f32.mrb[0].mxu0
        %1319 = vmatprep.mubr.f32.mxu0 0.0
        %1320 = vmatmul.mubr.f32.gmra.mrb[0].mxu0 %v1248
        %v1321 = vpop.f32.mrb[0].mxu0
        %v1322 = vadd.f32 0.0, %v1321
        %v1323 = vpop.f32.mrb[0].mxu0
        %1324 = vdwg.mxu0
        %v1325 = vadd.f32 %v1234, %v1317
        %v1326 = vadd.f32 %v1239, %v1322
        %v1327 = vld [vmem:[#allocation2 + $0x3] sm:$0xff]
        %v1328 = vld [vmem:[#allocation2 + $0xb] sm:$0xff]
        %v1330 = vsel %vm1055, %v1327, 0
        %v1333 = vsel %vm1055, %v1328, 0
        %1335 = vmatprep.subr.mxu0 0.0
        %1336 = vmatpush1.msra.mxu0 %v1072
        %1337 = vmatprep.subr.mxu0 0.0
        %1338 = vmatpush1.msra.mxu0 %v1073
        %1339 = vmatprep.subr.mxu0 0.0
        %1340 = vmatpush1.msra.mxu0 %v1074
        %1341 = vmatprep.subr.mxu0 0.0
        %1342 = vmatpush1.msra.mxu0 %v1075
        %1343 = vmatprep.subr.mxu0 0.0
        %1344 = vmatpush1.msra.mxu0 0.0
        %1345 = vmatprep.subr.mxu0 0.0
        %1346 = vmatpush1.msra.mxu0 0.0
        %1347 = vmatprep.subr.mxu0 0.0
        %1348 = vmatpush1.msra.mxu0 0.0
        %1349 = vmatprep.subr.mxu0 0.0
        %1350 = vmatpush1.msra.mxu0 0.0
        %1351 = vmatprep.subr.mxu0 0.0
        %1352 = vmatpush1.msra.mxu0 0.0
        %1353 = vmatprep.subr.mxu0 0.0
        %1354 = vmatpush1.msra.mxu0 0.0
        %1355 = vmatprep.subr.mxu0 0.0
        %1356 = vmatpush1.msra.mxu0 0.0
        %1357 = vmatprep.subr.mxu0 0.0
        %1358 = vmatpush1.msra.mxu0 0.0
        %1359 = vmatprep.subr.mxu0 0.0
        %1360 = vmatpush1.msra.mxu0 0.0
        %1361 = vmatprep.subr.mxu0 0.0
        %1362 = vmatpush1.msra.mxu0 0.0
        %1363 = vmatprep.subr.mxu0 0.0
        %1364 = vmatpush1.msra.mxu0 0.0
        %1365 = vmatprep.subr.mxu0 0.0
        %1366 = vmatpush1.msra.mxu0 0.0
        %1367 = vmatprep.subr.mxu0 0.0
        %1368 = vmatpush1.msra.mxu0 0.0
        %1369 = vmatprep.subr.mxu0 0.0
        %1370 = vmatpush1.msra.mxu0 0.0
        %1371 = vmatprep.subr.mxu0 0.0
        %1372 = vmatpush1.msra.mxu0 0.0
        %1373 = vmatprep.subr.mxu0 0.0
        %1374 = vmatpush1.msra.mxu0 0.0
        %1375 = vmatprep.subr.mxu0 0.0
        %1376 = vmatpush1.msra.mxu0 0.0
        %1377 = vmatprep.subr.mxu0 0.0
        %1378 = vmatpush1.msra.mxu0 0.0
        %1379 = vmatprep.subr.mxu0 0.0
        %1380 = vmatpush1.msra.mxu0 0.0
        %1381 = vmatprep.subr.mxu0 0.0
        %1382 = vmatpush1.msra.mxu0 0.0
        %1383 = vmatprep.subr.mxu0 0.0
        %1384 = vmatpush1.msra.mxu0 0.0
        %1385 = vmatprep.subr.mxu0 0.0
        %1386 = vmatpush1.msra.mxu0 0.0
        %1387 = vmatprep.subr.mxu0 0.0
        %1388 = vmatpush1.msra.mxu0 0.0
        %1389 = vmatprep.subr.mxu0 0.0
        %1390 = vmatpush1.msra.mxu0 0.0
        %1391 = vmatprep.subr.mxu0 0.0
        %1392 = vmatpush1.msra.mxu0 0.0
        %1393 = vmatprep.subr.mxu0 0.0
        %1394 = vmatpush1.msra.mxu0 0.0
        %1395 = vmatprep.subr.mxu0 0.0
        %1396 = vmatpush1.msra.mxu0 0.0
        %1397 = vmatprep.subr.mxu0 0.0
        %1398 = vmatpush1.msra.mxu0 0.0
        %1399 = vmatprep.mubr.f32.mxu0 0.0
        %1400 = vmatmul.mubr.f32.gmra.mrb[0].mxu0 %v1330
        %v1401 = vpop.f32.mrb[0].mxu0
        %v1402 = vadd.f32 0.0, %v1401
        %v1403 = vpop.f32.mrb[0].mxu0
        %1404 = vmatprep.mubr.f32.mxu0 0.0
        %1405 = vmatmul.mubr.f32.gmra.mrb[0].mxu0 %v1333
        %v1406 = vpop.f32.mrb[0].mxu0
        %v1407 = vadd.f32 0.0, %v1406
        %v1408 = vpop.f32.mrb[0].mxu0
        %1409 = vdwg.mxu0
        %v1410 = vadd.f32 %v1325, %v1402
        %v1411 = vadd.f32 %v1326, %v1407
        %v1412 = vld [vmem:[#allocation12] sm:$0x7]
        %v1413 = vlaneseq
        %v1414 = vshrl.u32 %v1413, 7
        %v1415 = vsub.s32 0, %v1414
        %v1416 = vrot.slane %v1412, %v1415
        %v1417 = vadd.f32 %v1410, %v1416
        %v1418 = vadd.f32 %v1411, %v1416
        %vm1419 = vcmp.ge.f32.partialorder %v1417, 0.0
        %vm1420 = vcmp.ge.f32.partialorder %v1418, 0.0
        %v1421 = vmul.f32 %v1417, 0.01
        %v1422 = vmul.f32 %v1418, 0.01
        %v1423 = vsel %vm1419, %v1417, %v1421
        %v1424 = vsel %vm1420, %v1418, %v1422
        %v1425 = vlaneseq
        %v1426 = vshrl.u32 %v1425, 7
        %v1427 = vsub.s32 1, %v1426
        %v1428 = vrot.slane %v1412, %v1427
        %v1429 = vmul.f32 %v1423, %v1428
        %v1430 = vmul.f32 %v1424, %v1428
        %v1431 = vlaneseq
        %v1432 = vshrl.u32 %v1431, 7
        %v1433 = vsub.s32 2, %v1432
        %v1434 = vrot.slane %v1412, %v1433
        %v1435 = vadd.f32 %v1429, %v1434
        %v1436 = vadd.f32 %v1430, %v1434
        %1437 = vst.msk [vmem:[#allocation2] sm:$0x1] %vm1053, 0.0
        %1438 = vst.msk [vmem:[#allocation2 + $0x1] sm:$0xff] %vm1055, %v1435
        %1439 = vst.msk [vmem:[#allocation2 + $0x9] sm:$0xff] %vm1055, %v1436
        %1440 = vst.msk [vmem:[#allocation2 + $0x11] sm:$0x3] %vm1058, 0.0
        %v1441 = vld [vmem:[#allocation13] sm:$0xff]
        %v1442 = vld [vmem:[#allocation13 + $0x8] sm:$0xff]
        %v1443 = vld [vmem:[#allocation13 + $0x10] sm:$0xff]
        %v1444 = vld [vmem:[#allocation13 + $0x18] sm:$0xff]
        %v1445 = vld [vmem:[#allocation13 + $0x20] sm:$0xff]
        %v1446 = vld [vmem:[#allocation13 + $0x28] sm:$0xff]
        %v1447 = vld [vmem:[#allocation13 + $0x30] sm:$0xff]
        %v1448 = vld [vmem:[#allocation13 + $0x38] sm:$0xff]
        %v1449 = vld [vmem:[#allocation13 + $0x40] sm:$0xff]
        %v1450 = vld [vmem:[#allocation13 + $0x48] sm:$0xff]
        %v1451 = vld [vmem:[#allocation13 + $0x50] sm:$0xff]
        %v1452 = vld [vmem:[#allocation13 + $0x58] sm:$0xff]
        %v1453 = vld [vmem:[#allocation13 + $0x60] sm:$0xff]
        %v1454 = vld [vmem:[#allocation13 + $0x68] sm:$0xff]
        %v1455 = vld [vmem:[#allocation13 + $0x70] sm:$0xff]
        %v1456 = vld [vmem:[#allocation13 + $0x78] sm:$0xff]
        %v1457 = vld [vmem:[#allocation2] sm:$0xff]
        %v1458 = vld [vmem:[#allocation2 + $0x8] sm:$0xff]
        %v1459 = vld [vmem:[#allocation2 + $0x1] sm:$0xff]
        %v1460 = vld [vmem:[#allocation2 + $0x9] sm:$0xff]
        %v1462 = vsel %vm1055, %v1459, 0
        %v1465 = vsel %vm1055, %v1460, 0
        %1467 = vmatprep.subr.mxu0 0.0
        %1468 = vmatpush1.msra.mxu0 %v1445
        %1469 = vmatprep.subr.mxu0 0.0
        %1470 = vmatpush1.msra.mxu0 %v1446
        %1471 = vmatprep.subr.mxu0 0.0
        %1472 = vmatpush1.msra.mxu0 %v1447
        %1473 = vmatprep.subr.mxu0 0.0
        %1474 = vmatpush1.msra.mxu0 %v1448
        %1475 = vmatprep.subr.mxu0 0.0
        %1476 = vmatpush1.msra.mxu0 0.0
        %1477 = vmatprep.subr.mxu0 0.0
        %1478 = vmatpush1.msra.mxu0 0.0
        %1479 = vmatprep.subr.mxu0 0.0
        %1480 = vmatpush1.msra.mxu0 0.0
        %1481 = vmatprep.subr.mxu0 0.0
        %1482 = vmatpush1.msra.mxu0 0.0
        %1483 = vmatprep.subr.mxu0 0.0
        %1484 = vmatpush1.msra.mxu0 0.0
        %1485 = vmatprep.subr.mxu0 0.0
        %1486 = vmatpush1.msra.mxu0 0.0
        %1487 = vmatprep.subr.mxu0 0.0
        %1488 = vmatpush1.msra.mxu0 0.0
        %1489 = vmatprep.subr.mxu0 0.0
        %1490 = vmatpush1.msra.mxu0 0.0
        %1491 = vmatprep.subr.mxu0 0.0
        %1492 = vmatpush1.msra.mxu0 0.0
        %1493 = vmatprep.subr.mxu0 0.0
        %1494 = vmatpush1.msra.mxu0 0.0
        %1495 = vmatprep.subr.mxu0 0.0
        %1496 = vmatpush1.msra.mxu0 0.0
        %1497 = vmatprep.subr.mxu0 0.0
        %1498 = vmatpush1.msra.mxu0 0.0
        %1499 = vmatprep.subr.mxu0 0.0
        %1500 = vmatpush1.msra.mxu0 0.0
        %1501 = vmatprep.subr.mxu0 0.0
        %1502 = vmatpush1.msra.mxu0 0.0
        %1503 = vmatprep.subr.mxu0 0.0
        %1504 = vmatpush1.msra.mxu0 0.0
        %1505 = vmatprep.subr.mxu0 0.0
        %1506 = vmatpush1.msra.mxu0 0.0
        %1507 = vmatprep.subr.mxu0 0.0
        %1508 = vmatpush1.msra.mxu0 0.0
        %1509 = vmatprep.subr.mxu0 0.0
        %1510 = vmatpush1.msra.mxu0 0.0
        %1511 = vmatprep.subr.mxu0 0.0
        %1512 = vmatpush1.msra.mxu0 0.0
        %1513 = vmatprep.subr.mxu0 0.0
        %1514 = vmatpush1.msra.mxu0 0.0
        %1515 = vmatprep.subr.mxu0 0.0
        %1516 = vmatpush1.msra.mxu0 0.0
        %1517 = vmatprep.subr.mxu0 0.0
        %1518 = vmatpush1.msra.mxu0 0.0
        %1519 = vmatprep.subr.mxu0 0.0
        %1520 = vmatpush1.msra.mxu0 0.0
        %1521 = vmatprep.subr.mxu0 0.0
        %1522 = vmatpush1.msra.mxu0 0.0
        %1523 = vmatprep.subr.mxu0 0.0
        %1524 = vmatpush1.msra.mxu0 0.0
        %1525 = vmatprep.subr.mxu0 0.0
        %1526 = vmatpush1.msra.mxu0 0.0
        %1527 = vmatprep.subr.mxu0 0.0
        %1528 = vmatpush1.msra.mxu0 0.0
        %1529 = vmatprep.subr.mxu0 0.0
        %1530 = vmatpush1.msra.mxu0 0.0
        %1531 = vmatprep.mubr.f32.mxu0 0.0
        %1532 = vmatmul.mubr.f32.gmra.mrb[0].mxu0 %v1462
        %v1533 = vpop.f32.mrb[0].mxu0
        %v1534 = vadd.f32 0.0, %v1533
        %v1535 = vpop.f32.mrb[0].mxu0
        %1536 = vmatprep.mubr.f32.mxu0 0.0
        %1537 = vmatmul.mubr.f32.gmra.mrb[0].mxu0 %v1465
        %v1538 = vpop.f32.mrb[0].mxu0
        %v1539 = vadd.f32 0.0, %v1538
        %v1540 = vpop.f32.mrb[0].mxu0
        %1541 = vdwg.mxu0
        %v1543 = vsel %vm1055, %v1457, 0
        %v1546 = vsel %vm1055, %v1458, 0
        %1548 = vmatprep.subr.mxu0 0.0
        %1549 = vmatpush1.msra.mxu0 %v1441
        %1550 = vmatprep.subr.mxu0 0.0
        %1551 = vmatpush1.msra.mxu0 %v1442
        %1552 = vmatprep.subr.mxu0 0.0
        %1553 = vmatpush1.msra.mxu0 %v1443
        %1554 = vmatprep.subr.mxu0 0.0
        %1555 = vmatpush1.msra.mxu0 %v1444
        %1556 = vmatprep.subr.mxu0 0.0
        %1557 = vmatpush1.msra.mxu0 0.0
        %1558 = vmatprep.subr.mxu0 0.0
        %1559 = vmatpush1.msra.mxu0 0.0
        %1560 = vmatprep.subr.mxu0 0.0
        %1561 = vmatpush1.msra.mxu0 0.0
        %1562 = vmatprep.subr.mxu0 0.0
        %1563 = vmatpush1.msra.mxu0 0.0
        %1564 = vmatprep.subr.mxu0 0.0
        %1565 = vmatpush1.msra.mxu0 0.0
        %1566 = vmatprep.subr.mxu0 0.0
        %1567 = vmatpush1.msra.mxu0 0.0
        %1568 = vmatprep.subr.mxu0 0.0
        %1569 = vmatpush1.msra.mxu0 0.0
        %1570 = vmatprep.subr.mxu0 0.0
        %1571 = vmatpush1.msra.mxu0 0.0
        %1572 = vmatprep.subr.mxu0 0.0
        %1573 = vmatpush1.msra.mxu0 0.0
        %1574 = vmatprep.subr.mxu0 0.0
        %1575 = vmatpush1.msra.mxu0 0.0
        %1576 = vmatprep.subr.mxu0 0.0
        %1577 = vmatpush1.msra.mxu0 0.0
        %1578 = vmatprep.subr.mxu0 0.0
        %1579 = vmatpush1.msra.mxu0 0.0
        %1580 = vmatprep.subr.mxu0 0.0
        %1581 = vmatpush1.msra.mxu0 0.0
        %1582 = vmatprep.subr.mxu0 0.0
        %1583 = vmatpush1.msra.mxu0 0.0
        %1584 = vmatprep.subr.mxu0 0.0
        %1585 = vmatpush1.msra.mxu0 0.0
        %1586 = vmatprep.subr.mxu0 0.0
        %1587 = vmatpush1.msra.mxu0 0.0
        %1588 = vmatprep.subr.mxu0 0.0
        %1589 = vmatpush1.msra.mxu0 0.0
        %1590 = vmatprep.subr.mxu0 0.0
        %1591 = vmatpush1.msra.mxu0 0.0
        %1592 = vmatprep.subr.mxu0 0.0
        %1593 = vmatpush1.msra.mxu0 0.0
        %1594 = vmatprep.subr.mxu0 0.0
        %1595 = vmatpush1.msra.mxu0 0.0
        %1596 = vmatprep.subr.mxu0 0.0
        %1597 = vmatpush1.msra.mxu0 0.0
        %1598 = vmatprep.subr.mxu0 0.0
        %1599 = vmatpush1.msra.mxu0 0.0
        %1600 = vmatprep.subr.mxu0 0.0
        %1601 = vmatpush1.msra.mxu0 0.0
        %1602 = vmatprep.subr.mxu0 0.0
        %1603 = vmatpush1.msra.mxu0 0.0
        %1604 = vmatprep.subr.mxu0 0.0
        %1605 = vmatpush1.msra.mxu0 0.0
        %1606 = vmatprep.subr.mxu0 0.0
        %1607 = vmatpush1.msra.mxu0 0.0
        %1608 = vmatprep.subr.mxu0 0.0
        %1609 = vmatpush1.msra.mxu0 0.0
        %1610 = vmatprep.subr.mxu0 0.0
        %1611 = vmatpush1.msra.mxu0 0.0
        %1612 = vmatprep.mubr.f32.mxu0 0.0
        %1613 = vmatmul.mubr.f32.gmra.mrb[0].mxu0 %v1543
        %v1614 = vpop.f32.mrb[0].mxu0
        %v1615 = vadd.f32 %v1534, %v1614
        %v1616 = vpop.f32.mrb[0].mxu0
        %1617 = vmatprep.mubr.f32.mxu0 0.0
        %1618 = vmatmul.mubr.f32.gmra.mrb[0].mxu0 %v1546
        %v1619 = vpop.f32.mrb[0].mxu0
        %v1620 = vadd.f32 %v1539, %v1619
        %v1621 = vpop.f32.mrb[0].mxu0
        %1622 = vdwg.mxu0
        %v1623 = vld [vmem:[#allocation2 + $0x2] sm:$0xff]
        %v1624 = vld [vmem:[#allocation2 + $0xa] sm:$0xff]
        %v1626 = vsel %vm1055, %v1623, 0
        %v1629 = vsel %vm1055, %v1624, 0
        %1631 = vmatprep.subr.mxu0 0.0
        %1632 = vmatpush1.msra.mxu0 %v1449
        %1633 = vmatprep.subr.mxu0 0.0
        %1634 = vmatpush1.msra.mxu0 %v1450
        %1635 = vmatprep.subr.mxu0 0.0
        %1636 = vmatpush1.msra.mxu0 %v1451
        %1637 = vmatprep.subr.mxu0 0.0
        %1638 = vmatpush1.msra.mxu0 %v1452
        %1639 = vmatprep.subr.mxu0 0.0
        %1640 = vmatpush1.msra.mxu0 0.0
        %1641 = vmatprep.subr.mxu0 0.0
        %1642 = vmatpush1.msra.mxu0 0.0
        %1643 = vmatprep.subr.mxu0 0.0
        %1644 = vmatpush1.msra.mxu0 0.0
        %1645 = vmatprep.subr.mxu0 0.0
        %1646 = vmatpush1.msra.mxu0 0.0
        %1647 = vmatprep.subr.mxu0 0.0
        %1648 = vmatpush1.msra.mxu0 0.0
        %1649 = vmatprep.subr.mxu0 0.0
        %1650 = vmatpush1.msra.mxu0 0.0
        %1651 = vmatprep.subr.mxu0 0.0
        %1652 = vmatpush1.msra.mxu0 0.0
        %1653 = vmatprep.subr.mxu0 0.0
        %1654 = vmatpush1.msra.mxu0 0.0
        %1655 = vmatprep.subr.mxu0 0.0
        %1656 = vmatpush1.msra.mxu0 0.0
        %1657 = vmatprep.subr.mxu0 0.0
        %1658 = vmatpush1.msra.mxu0 0.0
        %1659 = vmatprep.subr.mxu0 0.0
        %1660 = vmatpush1.msra.mxu0 0.0
        %1661 = vmatprep.subr.mxu0 0.0
        %1662 = vmatpush1.msra.mxu0 0.0
        %1663 = vmatprep.subr.mxu0 0.0
        %1664 = vmatpush1.msra.mxu0 0.0
        %1665 = vmatprep.subr.mxu0 0.0
        %1666 = vmatpush1.msra.mxu0 0.0
        %1667 = vmatprep.subr.mxu0 0.0
        %1668 = vmatpush1.msra.mxu0 0.0
        %1669 = vmatprep.subr.mxu0 0.0
        %1670 = vmatpush1.msra.mxu0 0.0
        %1671 = vmatprep.subr.mxu0 0.0
        %1672 = vmatpush1.msra.mxu0 0.0
        %1673 = vmatprep.subr.mxu0 0.0
        %1674 = vmatpush1.msra.mxu0 0.0
        %1675 = vmatprep.subr.mxu0 0.0
        %1676 = vmatpush1.msra.mxu0 0.0
        %1677 = vmatprep.subr.mxu0 0.0
        %1678 = vmatpush1.msra.mxu0 0.0
        %1679 = vmatprep.subr.mxu0 0.0
        %1680 = vmatpush1.msra.mxu0 0.0
        %1681 = vmatprep.subr.mxu0 0.0
        %1682 = vmatpush1.msra.mxu0 0.0
        %1683 = vmatprep.subr.mxu0 0.0
        %1684 = vmatpush1.msra.mxu0 0.0
        %1685 = vmatprep.subr.mxu0 0.0
        %1686 = vmatpush1.msra.mxu0 0.0
        %1687 = vmatprep.subr.mxu0 0.0
        %1688 = vmatpush1.msra.mxu0 0.0
        %1689 = vmatprep.subr.mxu0 0.0
        %1690 = vmatpush1.msra.mxu0 0.0
        %1691 = vmatprep.subr.mxu0 0.0
        %1692 = vmatpush1.msra.mxu0 0.0
        %1693 = vmatprep.subr.mxu0 0.0
        %1694 = vmatpush1.msra.mxu0 0.0
        %1695 = vmatprep.mubr.f32.mxu0 0.0
        %1696 = vmatmul.mubr.f32.gmra.mrb[0].mxu0 %v1626
        %v1697 = vpop.f32.mrb[0].mxu0
        %v1698 = vadd.f32 0.0, %v1697
        %v1699 = vpop.f32.mrb[0].mxu0
        %1700 = vmatprep.mubr.f32.mxu0 0.0
        %1701 = vmatmul.mubr.f32.gmra.mrb[0].mxu0 %v1629
        %v1702 = vpop.f32.mrb[0].mxu0
        %v1703 = vadd.f32 0.0, %v1702
        %v1704 = vpop.f32.mrb[0].mxu0
        %1705 = vdwg.mxu0
        %v1706 = vadd.f32 %v1615, %v1698
        %v1707 = vadd.f32 %v1620, %v1703
        %v1708 = vld [vmem:[#allocation2 + $0x3] sm:$0xff]
        %v1709 = vld [vmem:[#allocation2 + $0xb] sm:$0xff]
        %v1711 = vsel %vm1055, %v1708, 0
        %v1714 = vsel %vm1055, %v1709, 0
        %1716 = vmatprep.subr.mxu0 0.0
        %1717 = vmatpush1.msra.mxu0 %v1453
        %1718 = vmatprep.subr.mxu0 0.0
        %1719 = vmatpush1.msra.mxu0 %v1454
        %1720 = vmatprep.subr.mxu0 0.0
        %1721 = vmatpush1.msra.mxu0 %v1455
        %1722 = vmatprep.subr.mxu0 0.0
        %1723 = vmatpush1.msra.mxu0 %v1456
        %1724 = vmatprep.subr.mxu0 0.0
        %1725 = vmatpush1.msra.mxu0 0.0
        %1726 = vmatprep.subr.mxu0 0.0
        %1727 = vmatpush1.msra.mxu0 0.0
        %1728 = vmatprep.subr.mxu0 0.0
        %1729 = vmatpush1.msra.mxu0 0.0
        %1730 = vmatprep.subr.mxu0 0.0
        %1731 = vmatpush1.msra.mxu0 0.0
        %1732 = vmatprep.subr.mxu0 0.0
        %1733 = vmatpush1.msra.mxu0 0.0
        %1734 = vmatprep.subr.mxu0 0.0
        %1735 = vmatpush1.msra.mxu0 0.0
        %1736 = vmatprep.subr.mxu0 0.0
        %1737 = vmatpush1.msra.mxu0 0.0
        %1738 = vmatprep.subr.mxu0 0.0
        %1739 = vmatpush1.msra.mxu0 0.0
        %1740 = vmatprep.subr.mxu0 0.0
        %1741 = vmatpush1.msra.mxu0 0.0
        %1742 = vmatprep.subr.mxu0 0.0
        %1743 = vmatpush1.msra.mxu0 0.0
        %1744 = vmatprep.subr.mxu0 0.0
        %1745 = vmatpush1.msra.mxu0 0.0
        %1746 = vmatprep.subr.mxu0 0.0
        %1747 = vmatpush1.msra.mxu0 0.0
        %1748 = vmatprep.subr.mxu0 0.0
        %1749 = vmatpush1.msra.mxu0 0.0
        %1750 = vmatprep.subr.mxu0 0.0
        %1751 = vmatpush1.msra.mxu0 0.0
        %1752 = vmatprep.subr.mxu0 0.0
        %1753 = vmatpush1.msra.mxu0 0.0
        %1754 = vmatprep.subr.mxu0 0.0
        %1755 = vmatpush1.msra.mxu0 0.0
        %1756 = vmatprep.subr.mxu0 0.0
        %1757 = vmatpush1.msra.mxu0 0.0
        %1758 = vmatprep.subr.mxu0 0.0
        %1759 = vmatpush1.msra.mxu0 0.0
        %1760 = vmatprep.subr.mxu0 0.0
        %1761 = vmatpush1.msra.mxu0 0.0
        %1762 = vmatprep.subr.mxu0 0.0
        %1763 = vmatpush1.msra.mxu0 0.0
        %1764 = vmatprep.subr.mxu0 0.0
        %1765 = vmatpush1.msra.mxu0 0.0
        %1766 = vmatprep.subr.mxu0 0.0
        %1767 = vmatpush1.msra.mxu0 0.0
        %1768 = vmatprep.subr.mxu0 0.0
        %1769 = vmatpush1.msra.mxu0 0.0
        %1770 = vmatprep.subr.mxu0 0.0
        %1771 = vmatpush1.msra.mxu0 0.0
        %1772 = vmatprep.subr.mxu0 0.0
        %1773 = vmatpush1.msra.mxu0 0.0
        %1774 = vmatprep.subr.mxu0 0.0
        %1775 = vmatpush1.msra.mxu0 0.0
        %1776 = vmatprep.subr.mxu0 0.0
        %1777 = vmatpush1.msra.mxu0 0.0
        %1778 = vmatprep.subr.mxu0 0.0
        %1779 = vmatpush1.msra.mxu0 0.0
        %1780 = vmatprep.mubr.f32.mxu0 0.0
        %1781 = vmatmul.mubr.f32.gmra.mrb[0].mxu0 %v1711
        %v1782 = vpop.f32.mrb[0].mxu0
        %v1783 = vadd.f32 0.0, %v1782
        %v1784 = vpop.f32.mrb[0].mxu0
        %1785 = vmatprep.mubr.f32.mxu0 0.0
        %1786 = vmatmul.mubr.f32.gmra.mrb[0].mxu0 %v1714
        %v1787 = vpop.f32.mrb[0].mxu0
        %v1788 = vadd.f32 0.0, %v1787
        %v1789 = vpop.f32.mrb[0].mxu0
        %1790 = vdwg.mxu0
        %v1791 = vadd.f32 %v1706, %v1783
        %v1792 = vadd.f32 %v1707, %v1788
        %v1793 = vld [vmem:[#allocation15] sm:$0x7]
        %v1794 = vlaneseq
        %v1795 = vshrl.u32 %v1794, 7
        %v1796 = vsub.s32 0, %v1795
        %v1797 = vrot.slane %v1793, %v1796
        %v1798 = vadd.f32 %v1791, %v1797
        %v1799 = vadd.f32 %v1792, %v1797
        %vm1800 = vcmp.ge.f32.partialorder %v1798, 0.0
        %vm1801 = vcmp.ge.f32.partialorder %v1799, 0.0
        %v1802 = vmul.f32 %v1798, 0.01
        %v1803 = vmul.f32 %v1799, 0.01
        %v1804 = vsel %vm1800, %v1798, %v1802
        %v1805 = vsel %vm1801, %v1799, %v1803
        %v1806 = vlaneseq
        %v1807 = vshrl.u32 %v1806, 7
        %v1808 = vsub.s32 1, %v1807
        %v1809 = vrot.slane %v1793, %v1808
        %v1810 = vmul.f32 %v1804, %v1809
        %v1811 = vmul.f32 %v1805, %v1809
        %v1812 = vlaneseq
        %v1813 = vshrl.u32 %v1812, 7
        %v1814 = vsub.s32 2, %v1813
        %v1815 = vrot.slane %v1793, %v1814
        %v1816 = vadd.f32 %v1810, %v1815
        %v1817 = vadd.f32 %v1811, %v1815
        %v1818 = vld [vmem:[%s7] sm:$0xff]
        %v1819 = vld [vmem:[%s7 + $0x8] sm:$0xff]
        %v1820 = vld [vmem:[%s7 + $0x10] sm:$0xff]
        %v1821 = vld [vmem:[%s7 + $0x18] sm:$0xff]
        %v1822 = vld [vmem:[#allocation16] sm:$0x7]
        %v1823 = vlaneseq
        %v1824 = vshrl.u32 %v1823, 7
        %v1825 = vsub.s32 0, %v1824
        %v1826 = vrot.slane %v1822, %v1825
        %v1828 = vsel %vm1055, %v1816, 0
        %v1831 = vsel %vm1055, %v1817, 0
        %1833 = vmatprep.subr.mxu0 0.0
        %1834 = vmatpush1.msra.mxu0 %v1818
        %1835 = vmatprep.subr.mxu0 0.0
        %1836 = vmatpush1.msra.mxu0 %v1819
        %1837 = vmatprep.subr.mxu0 0.0
        %1838 = vmatpush1.msra.mxu0 %v1820
        %1839 = vmatprep.subr.mxu0 0.0
        %1840 = vmatpush1.msra.mxu0 %v1821
        %1841 = vmatprep.subr.mxu0 0.0
        %1842 = vmatpush1.msra.mxu0 0.0
        %1843 = vmatprep.subr.mxu0 0.0
        %1844 = vmatpush1.msra.mxu0 0.0
        %1845 = vmatprep.subr.mxu0 0.0
        %1846 = vmatpush1.msra.mxu0 0.0
        %1847 = vmatprep.subr.mxu0 0.0
        %1848 = vmatpush1.msra.mxu0 0.0
        %1849 = vmatprep.subr.mxu0 0.0
        %1850 = vmatpush1.msra.mxu0 0.0
        %1851 = vmatprep.subr.mxu0 0.0
        %1852 = vmatpush1.msra.mxu0 0.0
        %1853 = vmatprep.subr.mxu0 0.0
        %1854 = vmatpush1.msra.mxu0 0.0
        %1855 = vmatprep.subr.mxu0 0.0
        %1856 = vmatpush1.msra.mxu0 0.0
        %1857 = vmatprep.subr.mxu0 0.0
        %1858 = vmatpush1.msra.mxu0 0.0
        %1859 = vmatprep.subr.mxu0 0.0
        %1860 = vmatpush1.msra.mxu0 0.0
        %1861 = vmatprep.subr.mxu0 0.0
        %1862 = vmatpush1.msra.mxu0 0.0
        %1863 = vmatprep.subr.mxu0 0.0
        %1864 = vmatpush1.msra.mxu0 0.0
        %1865 = vmatprep.subr.mxu0 0.0
        %1866 = vmatpush1.msra.mxu0 0.0
        %1867 = vmatprep.subr.mxu0 0.0
        %1868 = vmatpush1.msra.mxu0 0.0
        %1869 = vmatprep.subr.mxu0 0.0
        %1870 = vmatpush1.msra.mxu0 0.0
        %1871 = vmatprep.subr.mxu0 0.0
        %1872 = vmatpush1.msra.mxu0 0.0
        %1873 = vmatprep.subr.mxu0 0.0
        %1874 = vmatpush1.msra.mxu0 0.0
        %1875 = vmatprep.subr.mxu0 0.0
        %1876 = vmatpush1.msra.mxu0 0.0
        %1877 = vmatprep.subr.mxu0 0.0
        %1878 = vmatpush1.msra.mxu0 0.0
        %1879 = vmatprep.subr.mxu0 0.0
        %1880 = vmatpush1.msra.mxu0 0.0
        %1881 = vmatprep.subr.mxu0 0.0
        %1882 = vmatpush1.msra.mxu0 0.0
        %1883 = vmatprep.subr.mxu0 0.0
        %1884 = vmatpush1.msra.mxu0 0.0
        %1885 = vmatprep.subr.mxu0 0.0
        %1886 = vmatpush1.msra.mxu0 0.0
        %1887 = vmatprep.subr.mxu0 0.0
        %1888 = vmatpush1.msra.mxu0 0.0
        %1889 = vmatprep.subr.mxu0 0.0
        %1890 = vmatpush1.msra.mxu0 0.0
        %1891 = vmatprep.subr.mxu0 0.0
        %1892 = vmatpush1.msra.mxu0 0.0
        %1893 = vmatprep.subr.mxu0 0.0
        %1894 = vmatpush1.msra.mxu0 0.0
        %1895 = vmatprep.subr.mxu0 0.0
        %1896 = vmatpush1.msra.mxu0 0.0
        %1897 = vmatprep.mubr.f32.mxu0 0.0
        %1898 = vmatmul.mubr.f32.gmra.mrb[0].mxu0 %v1828
        %v1899 = vpop.f32.mrb[0].mxu0
        %v1900 = vadd.f32 %v1826, %v1899
        %v1901 = vpop.f32.mrb[0].mxu0
        %1902 = vmatprep.mubr.f32.mxu0 0.0
        %1903 = vmatmul.mubr.f32.gmra.mrb[0].mxu0 %v1831
        %v1904 = vpop.f32.mrb[0].mxu0
        %v1905 = vadd.f32 %v1826, %v1904
        %v1906 = vpop.f32.mrb[0].mxu0
        %1907 = vdwg.mxu0
        %vm1908 = vcmp.ge.f32.partialorder %v1900, 0.0
        %vm1909 = vcmp.ge.f32.partialorder %v1905, 0.0
        %v1910 = vmul.f32 %v1900, 0.01
        %v1911 = vmul.f32 %v1905, 0.01
        %v1912 = vsel %vm1908, %v1900, %v1910
        %v1913 = vsel %vm1909, %v1905, %v1911
        %v1914 = vlaneseq
        %v1915 = vshrl.u32 %v1914, 7
        %v1916 = vsub.s32 1, %v1915
        %v1917 = vrot.slane %v1822, %v1916
        %v1918 = vmul.f32 %v1912, %v1917
        %v1919 = vmul.f32 %v1913, %v1917
        %v1920 = vlaneseq
        %v1921 = vshrl.u32 %v1920, 7
        %v1922 = vsub.s32 2, %v1921
        %v1923 = vrot.slane %v1822, %v1922
        %v1924 = vadd.f32 %v1918, %v1923
        %v1925 = vadd.f32 %v1919, %v1923
        %vm1926 = vcmask 57344
        %1927 = vst.msk [vmem:[#allocation3] sm:$0x1] %vm1926, 0.0
        %1928 = vst.msk [vmem:[#allocation3 + $0x1] sm:$0xff] %vm953, %v1924
        %1929 = vst.msk [vmem:[#allocation3 + $0x9] sm:$0xff] %vm953, %v1925
        %vm1930 = vcmask 58368
        %1931 = vst.msk [vmem:[#allocation3 + $0x11] sm:$0x3] %vm1930, 0.0
        %v1932 = vld [vmem:[%s9] sm:$0xff]
        %v1933 = vld [vmem:[%s9 + $0x8] sm:$0xff]
        %v1934 = vld [vmem:[%s9 + $0x10] sm:$0xff]
        %v1935 = vld [vmem:[%s9 + $0x18] sm:$0xff]
        %v1936 = vld [vmem:[#allocation3] sm:$0xff]
        %v1937 = vld [vmem:[#allocation3 + $0x8] sm:$0xff]
        %v1938 = vld [vmem:[#allocation3 + $0x1] sm:$0xff]
        %v1939 = vld [vmem:[#allocation3 + $0x9] sm:$0xff]
        %v1941 = vsel %vm953, %v1938, 0
        %v1944 = vsel %vm953, %v1939, 0
        %1946 = vmatprep.subr.mxu0 0.0
        %1947 = vmatpush1.msra.mxu0 %v1933
        %1948 = vmatprep.subr.mxu0 0.0
        %1949 = vmatpush1.msra.mxu0 0.0
        %1950 = vmatprep.subr.mxu0 0.0
        %1951 = vmatpush1.msra.mxu0 0.0
        %1952 = vmatprep.subr.mxu0 0.0
        %1953 = vmatpush1.msra.mxu0 0.0
        %1954 = vmatprep.subr.mxu0 0.0
        %1955 = vmatpush1.msra.mxu0 0.0
        %1956 = vmatprep.subr.mxu0 0.0
        %1957 = vmatpush1.msra.mxu0 0.0
        %1958 = vmatprep.subr.mxu0 0.0
        %1959 = vmatpush1.msra.mxu0 0.0
        %1960 = vmatprep.subr.mxu0 0.0
        %1961 = vmatpush1.msra.mxu0 0.0
        %1962 = vmatprep.subr.mxu0 0.0
        %1963 = vmatpush1.msra.mxu0 0.0
        %1964 = vmatprep.subr.mxu0 0.0
        %1965 = vmatpush1.msra.mxu0 0.0
        %1966 = vmatprep.subr.mxu0 0.0
        %1967 = vmatpush1.msra.mxu0 0.0
        %1968 = vmatprep.subr.mxu0 0.0
        %1969 = vmatpush1.msra.mxu0 0.0
        %1970 = vmatprep.subr.mxu0 0.0
        %1971 = vmatpush1.msra.mxu0 0.0
        %1972 = vmatprep.subr.mxu0 0.0
        %1973 = vmatpush1.msra.mxu0 0.0
        %1974 = vmatprep.subr.mxu0 0.0
        %1975 = vmatpush1.msra.mxu0 0.0
        %1976 = vmatprep.subr.mxu0 0.0
        %1977 = vmatpush1.msra.mxu0 0.0
        %1978 = vmatprep.subr.mxu0 0.0
        %1979 = vmatpush1.msra.mxu0 0.0
        %1980 = vmatprep.subr.mxu0 0.0
        %1981 = vmatpush1.msra.mxu0 0.0
        %1982 = vmatprep.subr.mxu0 0.0
        %1983 = vmatpush1.msra.mxu0 0.0
        %1984 = vmatprep.subr.mxu0 0.0
        %1985 = vmatpush1.msra.mxu0 0.0
        %1986 = vmatprep.subr.mxu0 0.0
        %1987 = vmatpush1.msra.mxu0 0.0
        %1988 = vmatprep.subr.mxu0 0.0
        %1989 = vmatpush1.msra.mxu0 0.0
        %1990 = vmatprep.subr.mxu0 0.0
        %1991 = vmatpush1.msra.mxu0 0.0
        %1992 = vmatprep.subr.mxu0 0.0
        %1993 = vmatpush1.msra.mxu0 0.0
        %1994 = vmatprep.subr.mxu0 0.0
        %1995 = vmatpush1.msra.mxu0 0.0
        %1996 = vmatprep.subr.mxu0 0.0
        %1997 = vmatpush1.msra.mxu0 0.0
        %1998 = vmatprep.subr.mxu0 0.0
        %1999 = vmatpush1.msra.mxu0 0.0
        %2000 = vmatprep.subr.mxu0 0.0
        %2001 = vmatpush1.msra.mxu0 0.0
        %2002 = vmatprep.subr.mxu0 0.0
        %2003 = vmatpush1.msra.mxu0 0.0
        %2004 = vmatprep.subr.mxu0 0.0
        %2005 = vmatpush1.msra.mxu0 0.0
        %2006 = vmatprep.subr.mxu0 0.0
        %2007 = vmatpush1.msra.mxu0 0.0
        %2008 = vmatprep.subr.mxu0 0.0
        %2009 = vmatpush1.msra.mxu0 0.0
        %2010 = vmatprep.mubr.f32.mxu0 0.0
        %2011 = vmatmul.mubr.f32.gmra.mrb[0].mxu0 %v1941
        %v2012 = vpop.f32.mrb[0].mxu0
        %v2013 = vadd.f32 0.0, %v2012
        %v2014 = vpop.f32.mrb[0].mxu0
        %2015 = vmatprep.mubr.f32.mxu0 0.0
        %2016 = vmatmul.mubr.f32.gmra.mrb[0].mxu0 %v1944
        %v2017 = vpop.f32.mrb[0].mxu0
        %v2018 = vadd.f32 0.0, %v2017
        %v2019 = vpop.f32.mrb[0].mxu0
        %2020 = vdwg.mxu0
        %v2022 = vsel %vm953, %v1936, 0
        %v2025 = vsel %vm953, %v1937, 0
        %2027 = vmatprep.subr.mxu0 0.0
        %2028 = vmatpush1.msra.mxu0 %v1932
        %2029 = vmatprep.subr.mxu0 0.0
        %2030 = vmatpush1.msra.mxu0 0.0
        %2031 = vmatprep.subr.mxu0 0.0
        %2032 = vmatpush1.msra.mxu0 0.0
        %2033 = vmatprep.subr.mxu0 0.0
        %2034 = vmatpush1.msra.mxu0 0.0
        %2035 = vmatprep.subr.mxu0 0.0
        %2036 = vmatpush1.msra.mxu0 0.0
        %2037 = vmatprep.subr.mxu0 0.0
        %2038 = vmatpush1.msra.mxu0 0.0
        %2039 = vmatprep.subr.mxu0 0.0
        %2040 = vmatpush1.msra.mxu0 0.0
        %2041 = vmatprep.subr.mxu0 0.0
        %2042 = vmatpush1.msra.mxu0 0.0
        %2043 = vmatprep.subr.mxu0 0.0
        %2044 = vmatpush1.msra.mxu0 0.0
        %2045 = vmatprep.subr.mxu0 0.0
        %2046 = vmatpush1.msra.mxu0 0.0
        %2047 = vmatprep.subr.mxu0 0.0
        %2048 = vmatpush1.msra.mxu0 0.0
        %2049 = vmatprep.subr.mxu0 0.0
        %2050 = vmatpush1.msra.mxu0 0.0
        %2051 = vmatprep.subr.mxu0 0.0
        %2052 = vmatpush1.msra.mxu0 0.0
        %2053 = vmatprep.subr.mxu0 0.0
        %2054 = vmatpush1.msra.mxu0 0.0
        %2055 = vmatprep.subr.mxu0 0.0
        %2056 = vmatpush1.msra.mxu0 0.0
        %2057 = vmatprep.subr.mxu0 0.0
        %2058 = vmatpush1.msra.mxu0 0.0
        %2059 = vmatprep.subr.mxu0 0.0
        %2060 = vmatpush1.msra.mxu0 0.0
        %2061 = vmatprep.subr.mxu0 0.0
        %2062 = vmatpush1.msra.mxu0 0.0
        %2063 = vmatprep.subr.mxu0 0.0
        %2064 = vmatpush1.msra.mxu0 0.0
        %2065 = vmatprep.subr.mxu0 0.0
        %2066 = vmatpush1.msra.mxu0 0.0
        %2067 = vmatprep.subr.mxu0 0.0
        %2068 = vmatpush1.msra.mxu0 0.0
        %2069 = vmatprep.subr.mxu0 0.0
        %2070 = vmatpush1.msra.mxu0 0.0
        %2071 = vmatprep.subr.mxu0 0.0
        %2072 = vmatpush1.msra.mxu0 0.0
        %2073 = vmatprep.subr.mxu0 0.0
        %2074 = vmatpush1.msra.mxu0 0.0
        %2075 = vmatprep.subr.mxu0 0.0
        %2076 = vmatpush1.msra.mxu0 0.0
        %2077 = vmatprep.subr.mxu0 0.0
        %2078 = vmatpush1.msra.mxu0 0.0
        %2079 = vmatprep.subr.mxu0 0.0
        %2080 = vmatpush1.msra.mxu0 0.0
        %2081 = vmatprep.subr.mxu0 0.0
        %2082 = vmatpush1.msra.mxu0 0.0
        %2083 = vmatprep.subr.mxu0 0.0
        %2084 = vmatpush1.msra.mxu0 0.0
        %2085 = vmatprep.subr.mxu0 0.0
        %2086 = vmatpush1.msra.mxu0 0.0
        %2087 = vmatprep.subr.mxu0 0.0
        %2088 = vmatpush1.msra.mxu0 0.0
        %2089 = vmatprep.subr.mxu0 0.0
        %2090 = vmatpush1.msra.mxu0 0.0
        %2091 = vmatprep.mubr.f32.mxu0 0.0
        %2092 = vmatmul.mubr.f32.gmra.mrb[0].mxu0 %v2022
        %v2093 = vpop.f32.mrb[0].mxu0
        %v2094 = vadd.f32 %v2013, %v2093
        %v2095 = vpop.f32.mrb[0].mxu0
        %2096 = vmatprep.mubr.f32.mxu0 0.0
        %2097 = vmatmul.mubr.f32.gmra.mrb[0].mxu0 %v2025
        %v2098 = vpop.f32.mrb[0].mxu0
        %v2099 = vadd.f32 %v2018, %v2098
        %v2100 = vpop.f32.mrb[0].mxu0
        %2101 = vdwg.mxu0
        %v2102 = vld [vmem:[#allocation3 + $0x2] sm:$0xff]
        %v2103 = vld [vmem:[#allocation3 + $0xa] sm:$0xff]
        %v2105 = vsel %vm953, %v2102, 0
        %v2108 = vsel %vm953, %v2103, 0
        %2110 = vmatprep.subr.mxu0 0.0
        %2111 = vmatpush1.msra.mxu0 %v1934
        %2112 = vmatprep.subr.mxu0 0.0
        %2113 = vmatpush1.msra.mxu0 0.0
        %2114 = vmatprep.subr.mxu0 0.0
        %2115 = vmatpush1.msra.mxu0 0.0
        %2116 = vmatprep.subr.mxu0 0.0
        %2117 = vmatpush1.msra.mxu0 0.0
        %2118 = vmatprep.subr.mxu0 0.0
        %2119 = vmatpush1.msra.mxu0 0.0
        %2120 = vmatprep.subr.mxu0 0.0
        %2121 = vmatpush1.msra.mxu0 0.0
        %2122 = vmatprep.subr.mxu0 0.0
        %2123 = vmatpush1.msra.mxu0 0.0
        %2124 = vmatprep.subr.mxu0 0.0
        %2125 = vmatpush1.msra.mxu0 0.0
        %2126 = vmatprep.subr.mxu0 0.0
        %2127 = vmatpush1.msra.mxu0 0.0
        %2128 = vmatprep.subr.mxu0 0.0
        %2129 = vmatpush1.msra.mxu0 0.0
        %2130 = vmatprep.subr.mxu0 0.0
        %2131 = vmatpush1.msra.mxu0 0.0
        %2132 = vmatprep.subr.mxu0 0.0
        %2133 = vmatpush1.msra.mxu0 0.0
        %2134 = vmatprep.subr.mxu0 0.0
        %2135 = vmatpush1.msra.mxu0 0.0
        %2136 = vmatprep.subr.mxu0 0.0
        %2137 = vmatpush1.msra.mxu0 0.0
        %2138 = vmatprep.subr.mxu0 0.0
        %2139 = vmatpush1.msra.mxu0 0.0
        %2140 = vmatprep.subr.mxu0 0.0
        %2141 = vmatpush1.msra.mxu0 0.0
        %2142 = vmatprep.subr.mxu0 0.0
        %2143 = vmatpush1.msra.mxu0 0.0
        %2144 = vmatprep.subr.mxu0 0.0
        %2145 = vmatpush1.msra.mxu0 0.0
        %2146 = vmatprep.subr.mxu0 0.0
        %2147 = vmatpush1.msra.mxu0 0.0
        %2148 = vmatprep.subr.mxu0 0.0
        %2149 = vmatpush1.msra.mxu0 0.0
        %2150 = vmatprep.subr.mxu0 0.0
        %2151 = vmatpush1.msra.mxu0 0.0
        %2152 = vmatprep.subr.mxu0 0.0
        %2153 = vmatpush1.msra.mxu0 0.0
        %2154 = vmatprep.subr.mxu0 0.0
        %2155 = vmatpush1.msra.mxu0 0.0
        %2156 = vmatprep.subr.mxu0 0.0
        %2157 = vmatpush1.msra.mxu0 0.0
        %2158 = vmatprep.subr.mxu0 0.0
        %2159 = vmatpush1.msra.mxu0 0.0
        %2160 = vmatprep.subr.mxu0 0.0
        %2161 = vmatpush1.msra.mxu0 0.0
        %2162 = vmatprep.subr.mxu0 0.0
        %2163 = vmatpush1.msra.mxu0 0.0
        %2164 = vmatprep.subr.mxu0 0.0
        %2165 = vmatpush1.msra.mxu0 0.0
        %2166 = vmatprep.subr.mxu0 0.0
        %2167 = vmatpush1.msra.mxu0 0.0
        %2168 = vmatprep.subr.mxu0 0.0
        %2169 = vmatpush1.msra.mxu0 0.0
        %2170 = vmatprep.subr.mxu0 0.0
        %2171 = vmatpush1.msra.mxu0 0.0
        %2172 = vmatprep.subr.mxu0 0.0
        %2173 = vmatpush1.msra.mxu0 0.0
        %2174 = vmatprep.mubr.f32.mxu0 0.0
        %2175 = vmatmul.mubr.f32.gmra.mrb[0].mxu0 %v2105
        %v2176 = vpop.f32.mrb[0].mxu0
        %v2177 = vadd.f32 0.0, %v2176
        %v2178 = vpop.f32.mrb[0].mxu0
        %2179 = vmatprep.mubr.f32.mxu0 0.0
        %2180 = vmatmul.mubr.f32.gmra.mrb[0].mxu0 %v2108
        %v2181 = vpop.f32.mrb[0].mxu0
        %v2182 = vadd.f32 0.0, %v2181
        %v2183 = vpop.f32.mrb[0].mxu0
        %2184 = vdwg.mxu0
        %v2185 = vadd.f32 %v2094, %v2177
        %v2186 = vadd.f32 %v2099, %v2182
        %v2187 = vld [vmem:[#allocation3 + $0x3] sm:$0xff]
        %v2188 = vld [vmem:[#allocation3 + $0xb] sm:$0xff]
        %v2190 = vsel %vm953, %v2187, 0
        %v2193 = vsel %vm953, %v2188, 0
        %2195 = vmatprep.subr.mxu0 0.0
        %2196 = vmatpush1.msra.mxu0 %v1935
        %2197 = vmatprep.subr.mxu0 0.0
        %2198 = vmatpush1.msra.mxu0 0.0
        %2199 = vmatprep.subr.mxu0 0.0
        %2200 = vmatpush1.msra.mxu0 0.0
        %2201 = vmatprep.subr.mxu0 0.0
        %2202 = vmatpush1.msra.mxu0 0.0
        %2203 = vmatprep.subr.mxu0 0.0
        %2204 = vmatpush1.msra.mxu0 0.0
        %2205 = vmatprep.subr.mxu0 0.0
        %2206 = vmatpush1.msra.mxu0 0.0
        %2207 = vmatprep.subr.mxu0 0.0
        %2208 = vmatpush1.msra.mxu0 0.0
        %2209 = vmatprep.subr.mxu0 0.0
        %2210 = vmatpush1.msra.mxu0 0.0
        %2211 = vmatprep.subr.mxu0 0.0
        %2212 = vmatpush1.msra.mxu0 0.0
        %2213 = vmatprep.subr.mxu0 0.0
        %2214 = vmatpush1.msra.mxu0 0.0
        %2215 = vmatprep.subr.mxu0 0.0
        %2216 = vmatpush1.msra.mxu0 0.0
        %2217 = vmatprep.subr.mxu0 0.0
        %2218 = vmatpush1.msra.mxu0 0.0
        %2219 = vmatprep.subr.mxu0 0.0
        %2220 = vmatpush1.msra.mxu0 0.0
        %2221 = vmatprep.subr.mxu0 0.0
        %2222 = vmatpush1.msra.mxu0 0.0
        %2223 = vmatprep.subr.mxu0 0.0
        %2224 = vmatpush1.msra.mxu0 0.0
        %2225 = vmatprep.subr.mxu0 0.0
        %2226 = vmatpush1.msra.mxu0 0.0
        %2227 = vmatprep.subr.mxu0 0.0
        %2228 = vmatpush1.msra.mxu0 0.0
        %2229 = vmatprep.subr.mxu0 0.0
        %2230 = vmatpush1.msra.mxu0 0.0
        %2231 = vmatprep.subr.mxu0 0.0
        %2232 = vmatpush1.msra.mxu0 0.0
        %2233 = vmatprep.subr.mxu0 0.0
        %2234 = vmatpush1.msra.mxu0 0.0
        %2235 = vmatprep.subr.mxu0 0.0
        %2236 = vmatpush1.msra.mxu0 0.0
        %2237 = vmatprep.subr.mxu0 0.0
        %2238 = vmatpush1.msra.mxu0 0.0
        %2239 = vmatprep.subr.mxu0 0.0
        %2240 = vmatpush1.msra.mxu0 0.0
        %2241 = vmatprep.subr.mxu0 0.0
        %2242 = vmatpush1.msra.mxu0 0.0
        %2243 = vmatprep.subr.mxu0 0.0
        %2244 = vmatpush1.msra.mxu0 0.0
        %2245 = vmatprep.subr.mxu0 0.0
        %2246 = vmatpush1.msra.mxu0 0.0
        %2247 = vmatprep.subr.mxu0 0.0
        %2248 = vmatpush1.msra.mxu0 0.0
        %2249 = vmatprep.subr.mxu0 0.0
        %2250 = vmatpush1.msra.mxu0 0.0
        %2251 = vmatprep.subr.mxu0 0.0
        %2252 = vmatpush1.msra.mxu0 0.0
        %2253 = vmatprep.subr.mxu0 0.0
        %2254 = vmatpush1.msra.mxu0 0.0
        %2255 = vmatprep.subr.mxu0 0.0
        %2256 = vmatpush1.msra.mxu0 0.0
        %2257 = vmatprep.subr.mxu0 0.0
        %2258 = vmatpush1.msra.mxu0 0.0
        %2259 = vmatprep.mubr.f32.mxu0 0.0
        %2260 = vmatmul.mubr.f32.gmra.mrb[0].mxu0 %v2190
        %v2261 = vpop.f32.mrb[0].mxu0
        %v2262 = vadd.f32 0.0, %v2261
        %v2263 = vpop.f32.mrb[0].mxu0
        %2264 = vmatprep.mubr.f32.mxu0 0.0
        %2265 = vmatmul.mubr.f32.gmra.mrb[0].mxu0 %v2193
        %v2266 = vpop.f32.mrb[0].mxu0
        %v2267 = vadd.f32 0.0, %v2266
        %v2268 = vpop.f32.mrb[0].mxu0
        %2269 = vdwg.mxu0
        %v2270 = vadd.f32 %v2185, %v2262
        %v2271 = vadd.f32 %v2186, %v2267
        %v2272 = vld [vmem:[#allocation18] sm:$0x7]
        %v2273 = vlaneseq
        %v2274 = vshrl.u32 %v2273, 7
        %v2275 = vsub.s32 0, %v2274
        %v2276 = vrot.slane %v2272, %v2275
        %v2277 = vadd.f32 %v2270, %v2276
        %v2278 = vadd.f32 %v2271, %v2276
        %vm2279 = vcmp.ge.f32.partialorder %v2277, 0.0
        %vm2280 = vcmp.ge.f32.partialorder %v2278, 0.0
        %v2281 = vmul.f32 %v2277, 0.01
        %v2282 = vmul.f32 %v2278, 0.01
        %v2283 = vsel %vm2279, %v2277, %v2281
        %v2284 = vsel %vm2280, %v2278, %v2282
        %v2285 = vlaneseq
        %v2286 = vshrl.u32 %v2285, 7
        %v2287 = vsub.s32 1, %v2286
        %v2288 = vrot.slane %v2272, %v2287
        %v2289 = vmul.f32 %v2283, %v2288
        %v2290 = vmul.f32 %v2284, %v2288
        %v2291 = vlaneseq
        %v2292 = vshrl.u32 %v2291, 7
        %v2293 = vsub.s32 2, %v2292
        %v2294 = vrot.slane %v2272, %v2293
        %v2295 = vadd.f32 %v2289, %v2294
        %v2296 = vadd.f32 %v2290, %v2294
        %2297 = vst.msk [vmem:[#allocation3] sm:$0x1] %vm1926, 0.0
        %2298 = vst.msk [vmem:[#allocation3 + $0x1] sm:$0xff] %vm953, %v2295
        %2299 = vst.msk [vmem:[#allocation3 + $0x9] sm:$0xff] %vm953, %v2296
        %2300 = vst.msk [vmem:[#allocation3 + $0x11] sm:$0x3] %vm1930, 0.0
        %v2301 = vld [vmem:[#allocation19] sm:$0xff]
        %v2302 = vld [vmem:[#allocation19 + $0x8] sm:$0xff]
        %v2303 = vld [vmem:[#allocation19 + $0x10] sm:$0xff]
        %v2304 = vld [vmem:[#allocation19 + $0x18] sm:$0xff]
        %v2305 = vld [vmem:[#allocation3] sm:$0xff]
        %v2306 = vld [vmem:[#allocation3 + $0x8] sm:$0xff]
        %v2307 = vld [vmem:[#allocation3 + $0x1] sm:$0xff]
        %v2308 = vld [vmem:[#allocation3 + $0x9] sm:$0xff]
        %v2310 = vsel %vm953, %v2307, 0
        %v2313 = vsel %vm953, %v2308, 0
        %2315 = vmatprep.subr.mxu0 0.0
        %2316 = vmatpush1.msra.mxu0 %v2302
        %2317 = vmatprep.subr.mxu0 0.0
        %2318 = vmatpush1.msra.mxu0 0.0
        %2319 = vmatprep.subr.mxu0 0.0
        %2320 = vmatpush1.msra.mxu0 0.0
        %2321 = vmatprep.subr.mxu0 0.0
        %2322 = vmatpush1.msra.mxu0 0.0
        %2323 = vmatprep.subr.mxu0 0.0
        %2324 = vmatpush1.msra.mxu0 0.0
        %2325 = vmatprep.subr.mxu0 0.0
        %2326 = vmatpush1.msra.mxu0 0.0
        %2327 = vmatprep.subr.mxu0 0.0
        %2328 = vmatpush1.msra.mxu0 0.0
        %2329 = vmatprep.subr.mxu0 0.0
        %2330 = vmatpush1.msra.mxu0 0.0
        %2331 = vmatprep.subr.mxu0 0.0
        %2332 = vmatpush1.msra.mxu0 0.0
        %2333 = vmatprep.subr.mxu0 0.0
        %2334 = vmatpush1.msra.mxu0 0.0
        %2335 = vmatprep.subr.mxu0 0.0
        %2336 = vmatpush1.msra.mxu0 0.0
        %2337 = vmatprep.subr.mxu0 0.0
        %2338 = vmatpush1.msra.mxu0 0.0
        %2339 = vmatprep.subr.mxu0 0.0
        %2340 = vmatpush1.msra.mxu0 0.0
        %2341 = vmatprep.subr.mxu0 0.0
        %2342 = vmatpush1.msra.mxu0 0.0
        %2343 = vmatprep.subr.mxu0 0.0
        %2344 = vmatpush1.msra.mxu0 0.0
        %2345 = vmatprep.subr.mxu0 0.0
        %2346 = vmatpush1.msra.mxu0 0.0
        %2347 = vmatprep.subr.mxu0 0.0
        %2348 = vmatpush1.msra.mxu0 0.0
        %2349 = vmatprep.subr.mxu0 0.0
        %2350 = vmatpush1.msra.mxu0 0.0
        %2351 = vmatprep.subr.mxu0 0.0
        %2352 = vmatpush1.msra.mxu0 0.0
        %2353 = vmatprep.subr.mxu0 0.0
        %2354 = vmatpush1.msra.mxu0 0.0
        %2355 = vmatprep.subr.mxu0 0.0
        %2356 = vmatpush1.msra.mxu0 0.0
        %2357 = vmatprep.subr.mxu0 0.0
        %2358 = vmatpush1.msra.mxu0 0.0
        %2359 = vmatprep.subr.mxu0 0.0
        %2360 = vmatpush1.msra.mxu0 0.0
        %2361 = vmatprep.subr.mxu0 0.0
        %2362 = vmatpush1.msra.mxu0 0.0
        %2363 = vmatprep.subr.mxu0 0.0
        %2364 = vmatpush1.msra.mxu0 0.0
        %2365 = vmatprep.subr.mxu0 0.0
        %2366 = vmatpush1.msra.mxu0 0.0
        %2367 = vmatprep.subr.mxu0 0.0
        %2368 = vmatpush1.msra.mxu0 0.0
        %2369 = vmatprep.subr.mxu0 0.0
        %2370 = vmatpush1.msra.mxu0 0.0
        %2371 = vmatprep.subr.mxu0 0.0
        %2372 = vmatpush1.msra.mxu0 0.0
        %2373 = vmatprep.subr.mxu0 0.0
        %2374 = vmatpush1.msra.mxu0 0.0
        %2375 = vmatprep.subr.mxu0 0.0
        %2376 = vmatpush1.msra.mxu0 0.0
        %2377 = vmatprep.subr.mxu0 0.0
        %2378 = vmatpush1.msra.mxu0 0.0
        %2379 = vmatprep.mubr.f32.mxu0 0.0
        %2380 = vmatmul.mubr.f32.gmra.mrb[0].mxu0 %v2310
        %v2381 = vpop.f32.mrb[0].mxu0
        %v2382 = vadd.f32 0.0, %v2381
        %v2383 = vpop.f32.mrb[0].mxu0
        %2384 = vmatprep.mubr.f32.mxu0 0.0
        %2385 = vmatmul.mubr.f32.gmra.mrb[0].mxu0 %v2313
        %v2386 = vpop.f32.mrb[0].mxu0
        %v2387 = vadd.f32 0.0, %v2386
        %v2388 = vpop.f32.mrb[0].mxu0
        %2389 = vdwg.mxu0
        %v2391 = vsel %vm953, %v2305, 0
        %v2394 = vsel %vm953, %v2306, 0
        %2396 = vmatprep.subr.mxu0 0.0
        %2397 = vmatpush1.msra.mxu0 %v2301
        %2398 = vmatprep.subr.mxu0 0.0
        %2399 = vmatpush1.msra.mxu0 0.0
        %2400 = vmatprep.subr.mxu0 0.0
        %2401 = vmatpush1.msra.mxu0 0.0
        %2402 = vmatprep.subr.mxu0 0.0
        %2403 = vmatpush1.msra.mxu0 0.0
        %2404 = vmatprep.subr.mxu0 0.0
        %2405 = vmatpush1.msra.mxu0 0.0
        %2406 = vmatprep.subr.mxu0 0.0
        %2407 = vmatpush1.msra.mxu0 0.0
        %2408 = vmatprep.subr.mxu0 0.0
        %2409 = vmatpush1.msra.mxu0 0.0
        %2410 = vmatprep.subr.mxu0 0.0
        %2411 = vmatpush1.msra.mxu0 0.0
        %2412 = vmatprep.subr.mxu0 0.0
        %2413 = vmatpush1.msra.mxu0 0.0
        %2414 = vmatprep.subr.mxu0 0.0
        %2415 = vmatpush1.msra.mxu0 0.0
        %2416 = vmatprep.subr.mxu0 0.0
        %2417 = vmatpush1.msra.mxu0 0.0
        %2418 = vmatprep.subr.mxu0 0.0
        %2419 = vmatpush1.msra.mxu0 0.0
        %2420 = vmatprep.subr.mxu0 0.0
        %2421 = vmatpush1.msra.mxu0 0.0
        %2422 = vmatprep.subr.mxu0 0.0
        %2423 = vmatpush1.msra.mxu0 0.0
        %2424 = vmatprep.subr.mxu0 0.0
        %2425 = vmatpush1.msra.mxu0 0.0
        %2426 = vmatprep.subr.mxu0 0.0
        %2427 = vmatpush1.msra.mxu0 0.0
        %2428 = vmatprep.subr.mxu0 0.0
        %2429 = vmatpush1.msra.mxu0 0.0
        %2430 = vmatprep.subr.mxu0 0.0
        %2431 = vmatpush1.msra.mxu0 0.0
        %2432 = vmatprep.subr.mxu0 0.0
        %2433 = vmatpush1.msra.mxu0 0.0
        %2434 = vmatprep.subr.mxu0 0.0
        %2435 = vmatpush1.msra.mxu0 0.0
        %2436 = vmatprep.subr.mxu0 0.0
        %2437 = vmatpush1.msra.mxu0 0.0
        %2438 = vmatprep.subr.mxu0 0.0
        %2439 = vmatpush1.msra.mxu0 0.0
        %2440 = vmatprep.subr.mxu0 0.0
        %2441 = vmatpush1.msra.mxu0 0.0
        %2442 = vmatprep.subr.mxu0 0.0
        %2443 = vmatpush1.msra.mxu0 0.0
        %2444 = vmatprep.subr.mxu0 0.0
        %2445 = vmatpush1.msra.mxu0 0.0
        %2446 = vmatprep.subr.mxu0 0.0
        %2447 = vmatpush1.msra.mxu0 0.0
        %2448 = vmatprep.subr.mxu0 0.0
        %2449 = vmatpush1.msra.mxu0 0.0
        %2450 = vmatprep.subr.mxu0 0.0
        %2451 = vmatpush1.msra.mxu0 0.0
        %2452 = vmatprep.subr.mxu0 0.0
        %2453 = vmatpush1.msra.mxu0 0.0
        %2454 = vmatprep.subr.mxu0 0.0
        %2455 = vmatpush1.msra.mxu0 0.0
        %2456 = vmatprep.subr.mxu0 0.0
        %2457 = vmatpush1.msra.mxu0 0.0
        %2458 = vmatprep.subr.mxu0 0.0
        %2459 = vmatpush1.msra.mxu0 0.0
        %2460 = vmatprep.mubr.f32.mxu0 0.0
        %2461 = vmatmul.mubr.f32.gmra.mrb[0].mxu0 %v2391
        %v2462 = vpop.f32.mrb[0].mxu0
        %v2463 = vadd.f32 %v2382, %v2462
        %v2464 = vpop.f32.mrb[0].mxu0
        %2465 = vmatprep.mubr.f32.mxu0 0.0
        %2466 = vmatmul.mubr.f32.gmra.mrb[0].mxu0 %v2394
        %v2467 = vpop.f32.mrb[0].mxu0
        %v2468 = vadd.f32 %v2387, %v2467
        %v2469 = vpop.f32.mrb[0].mxu0
        %2470 = vdwg.mxu0
        %v2471 = vld [vmem:[#allocation3 + $0x2] sm:$0xff]
        %v2472 = vld [vmem:[#allocation3 + $0xa] sm:$0xff]
        %v2474 = vsel %vm953, %v2471, 0
        %v2477 = vsel %vm953, %v2472, 0
        %2479 = vmatprep.subr.mxu0 0.0
        %2480 = vmatpush1.msra.mxu0 %v2303
        %2481 = vmatprep.subr.mxu0 0.0
        %2482 = vmatpush1.msra.mxu0 0.0
        %2483 = vmatprep.subr.mxu0 0.0
        %2484 = vmatpush1.msra.mxu0 0.0
        %2485 = vmatprep.subr.mxu0 0.0
        %2486 = vmatpush1.msra.mxu0 0.0
        %2487 = vmatprep.subr.mxu0 0.0
        %2488 = vmatpush1.msra.mxu0 0.0
        %2489 = vmatprep.subr.mxu0 0.0
        %2490 = vmatpush1.msra.mxu0 0.0
        %2491 = vmatprep.subr.mxu0 0.0
        %2492 = vmatpush1.msra.mxu0 0.0
        %2493 = vmatprep.subr.mxu0 0.0
        %2494 = vmatpush1.msra.mxu0 0.0
        %2495 = vmatprep.subr.mxu0 0.0
        %2496 = vmatpush1.msra.mxu0 0.0
        %2497 = vmatprep.subr.mxu0 0.0
        %2498 = vmatpush1.msra.mxu0 0.0
        %2499 = vmatprep.subr.mxu0 0.0
        %2500 = vmatpush1.msra.mxu0 0.0
        %2501 = vmatprep.subr.mxu0 0.0
        %2502 = vmatpush1.msra.mxu0 0.0
        %2503 = vmatprep.subr.mxu0 0.0
        %2504 = vmatpush1.msra.mxu0 0.0
        %2505 = vmatprep.subr.mxu0 0.0
        %2506 = vmatpush1.msra.mxu0 0.0
        %2507 = vmatprep.subr.mxu0 0.0
        %2508 = vmatpush1.msra.mxu0 0.0
        %2509 = vmatprep.subr.mxu0 0.0
        %2510 = vmatpush1.msra.mxu0 0.0
        %2511 = vmatprep.subr.mxu0 0.0
        %2512 = vmatpush1.msra.mxu0 0.0
        %2513 = vmatprep.subr.mxu0 0.0
        %2514 = vmatpush1.msra.mxu0 0.0
        %2515 = vmatprep.subr.mxu0 0.0
        %2516 = vmatpush1.msra.mxu0 0.0
        %2517 = vmatprep.subr.mxu0 0.0
        %2518 = vmatpush1.msra.mxu0 0.0
        %2519 = vmatprep.subr.mxu0 0.0
        %2520 = vmatpush1.msra.mxu0 0.0
        %2521 = vmatprep.subr.mxu0 0.0
        %2522 = vmatpush1.msra.mxu0 0.0
        %2523 = vmatprep.subr.mxu0 0.0
        %2524 = vmatpush1.msra.mxu0 0.0
        %2525 = vmatprep.subr.mxu0 0.0
        %2526 = vmatpush1.msra.mxu0 0.0
        %2527 = vmatprep.subr.mxu0 0.0
        %2528 = vmatpush1.msra.mxu0 0.0
        %2529 = vmatprep.subr.mxu0 0.0
        %2530 = vmatpush1.msra.mxu0 0.0
        %2531 = vmatprep.subr.mxu0 0.0
        %2532 = vmatpush1.msra.mxu0 0.0
        %2533 = vmatprep.subr.mxu0 0.0
        %2534 = vmatpush1.msra.mxu0 0.0
        %2535 = vmatprep.subr.mxu0 0.0
        %2536 = vmatpush1.msra.mxu0 0.0
        %2537 = vmatprep.subr.mxu0 0.0
        %2538 = vmatpush1.msra.mxu0 0.0
        %2539 = vmatprep.subr.mxu0 0.0
        %2540 = vmatpush1.msra.mxu0 0.0
        %2541 = vmatprep.subr.mxu0 0.0
        %2542 = vmatpush1.msra.mxu0 0.0
        %2543 = vmatprep.mubr.f32.mxu0 0.0
        %2544 = vmatmul.mubr.f32.gmra.mrb[0].mxu0 %v2474
        %v2545 = vpop.f32.mrb[0].mxu0
        %v2546 = vadd.f32 0.0, %v2545
        %v2547 = vpop.f32.mrb[0].mxu0
        %2548 = vmatprep.mubr.f32.mxu0 0.0
        %2549 = vmatmul.mubr.f32.gmra.mrb[0].mxu0 %v2477
        %v2550 = vpop.f32.mrb[0].mxu0
        %v2551 = vadd.f32 0.0, %v2550
        %v2552 = vpop.f32.mrb[0].mxu0
        %2553 = vdwg.mxu0
        %v2554 = vadd.f32 %v2463, %v2546
        %v2555 = vadd.f32 %v2468, %v2551
        %v2556 = vld [vmem:[#allocation3 + $0x3] sm:$0xff]
        %v2557 = vld [vmem:[#allocation3 + $0xb] sm:$0xff]
        %v2559 = vsel %vm953, %v2556, 0
        %v2562 = vsel %vm953, %v2557, 0
        %2564 = vmatprep.subr.mxu0 0.0
        %2565 = vmatpush1.msra.mxu0 %v2304
        %2566 = vmatprep.subr.mxu0 0.0
        %2567 = vmatpush1.msra.mxu0 0.0
        %2568 = vmatprep.subr.mxu0 0.0
        %2569 = vmatpush1.msra.mxu0 0.0
        %2570 = vmatprep.subr.mxu0 0.0
        %2571 = vmatpush1.msra.mxu0 0.0
        %2572 = vmatprep.subr.mxu0 0.0
        %2573 = vmatpush1.msra.mxu0 0.0
        %2574 = vmatprep.subr.mxu0 0.0
        %2575 = vmatpush1.msra.mxu0 0.0
        %2576 = vmatprep.subr.mxu0 0.0
        %2577 = vmatpush1.msra.mxu0 0.0
        %2578 = vmatprep.subr.mxu0 0.0
        %2579 = vmatpush1.msra.mxu0 0.0
        %2580 = vmatprep.subr.mxu0 0.0
        %2581 = vmatpush1.msra.mxu0 0.0
        %2582 = vmatprep.subr.mxu0 0.0
        %2583 = vmatpush1.msra.mxu0 0.0
        %2584 = vmatprep.subr.mxu0 0.0
        %2585 = vmatpush1.msra.mxu0 0.0
        %2586 = vmatprep.subr.mxu0 0.0
        %2587 = vmatpush1.msra.mxu0 0.0
        %2588 = vmatprep.subr.mxu0 0.0
        %2589 = vmatpush1.msra.mxu0 0.0
        %2590 = vmatprep.subr.mxu0 0.0
        %2591 = vmatpush1.msra.mxu0 0.0
        %2592 = vmatprep.subr.mxu0 0.0
        %2593 = vmatpush1.msra.mxu0 0.0
        %2594 = vmatprep.subr.mxu0 0.0
        %2595 = vmatpush1.msra.mxu0 0.0
        %2596 = vmatprep.subr.mxu0 0.0
        %2597 = vmatpush1.msra.mxu0 0.0
        %2598 = vmatprep.subr.mxu0 0.0
        %2599 = vmatpush1.msra.mxu0 0.0
        %2600 = vmatprep.subr.mxu0 0.0
        %2601 = vmatpush1.msra.mxu0 0.0
        %2602 = vmatprep.subr.mxu0 0.0
        %2603 = vmatpush1.msra.mxu0 0.0
        %2604 = vmatprep.subr.mxu0 0.0
        %2605 = vmatpush1.msra.mxu0 0.0
        %2606 = vmatprep.subr.mxu0 0.0
        %2607 = vmatpush1.msra.mxu0 0.0
        %2608 = vmatprep.subr.mxu0 0.0
        %2609 = vmatpush1.msra.mxu0 0.0
        %2610 = vmatprep.subr.mxu0 0.0
        %2611 = vmatpush1.msra.mxu0 0.0
        %2612 = vmatprep.subr.mxu0 0.0
        %2613 = vmatpush1.msra.mxu0 0.0
        %2614 = vmatprep.subr.mxu0 0.0
        %2615 = vmatpush1.msra.mxu0 0.0
        %2616 = vmatprep.subr.mxu0 0.0
        %2617 = vmatpush1.msra.mxu0 0.0
        %2618 = vmatprep.subr.mxu0 0.0
        %2619 = vmatpush1.msra.mxu0 0.0
        %2620 = vmatprep.subr.mxu0 0.0
        %2621 = vmatpush1.msra.mxu0 0.0
        %2622 = vmatprep.subr.mxu0 0.0
        %2623 = vmatpush1.msra.mxu0 0.0
        %2624 = vmatprep.subr.mxu0 0.0
        %2625 = vmatpush1.msra.mxu0 0.0
        %2626 = vmatprep.subr.mxu0 0.0
        %2627 = vmatpush1.msra.mxu0 0.0
        %2628 = vmatprep.mubr.f32.mxu0 0.0
        %2629 = vmatmul.mubr.f32.gmra.mrb[0].mxu0 %v2559
        %v2630 = vpop.f32.mrb[0].mxu0
        %v2631 = vadd.f32 0.0, %v2630
        %v2632 = vpop.f32.mrb[0].mxu0
        %2633 = vmatprep.mubr.f32.mxu0 0.0
        %2634 = vmatmul.mubr.f32.gmra.mrb[0].mxu0 %v2562
        %v2635 = vpop.f32.mrb[0].mxu0
        %v2636 = vadd.f32 0.0, %v2635
        %v2637 = vpop.f32.mrb[0].mxu0
        %2638 = vdwg.mxu0
        %v2639 = vadd.f32 %v2554, %v2631
        %v2640 = vadd.f32 %v2555, %v2636
        %v2641 = vld [vmem:[#allocation21] sm:$0x7]
        %v2642 = vlaneseq
        %v2643 = vshrl.u32 %v2642, 7
        %v2644 = vsub.s32 0, %v2643
        %v2645 = vrot.slane %v2641, %v2644
        %v2646 = vadd.f32 %v2639, %v2645
        %v2647 = vadd.f32 %v2640, %v2645
        %vm2648 = vcmp.ge.f32.partialorder %v2646, 0.0
        %vm2649 = vcmp.ge.f32.partialorder %v2647, 0.0
        %v2650 = vmul.f32 %v2646, 0.01
        %v2651 = vmul.f32 %v2647, 0.01
        %v2652 = vsel %vm2648, %v2646, %v2650
        %v2653 = vsel %vm2649, %v2647, %v2651
        %v2654 = vlaneseq
        %v2655 = vshrl.u32 %v2654, 7
        %v2656 = vsub.s32 1, %v2655
        %v2657 = vrot.slane %v2641, %v2656
        %v2658 = vmul.f32 %v2652, %v2657
        %v2659 = vmul.f32 %v2653, %v2657
        %v2660 = vlaneseq
        %v2661 = vshrl.u32 %v2660, 7
        %v2662 = vsub.s32 2, %v2661
        %v2663 = vrot.slane %v2641, %v2662
        %v2664 = vadd.f32 %v2658, %v2663
        %v2665 = vadd.f32 %v2659, %v2663
        %v2666 = vld [vmem:[#allocation22] sm:$0xff]
        %v2667 = vld [vmem:[#allocation24] sm:$0x7]
        %v2668 = vlaneseq
        %v2669 = vshrl.u32 %v2668, 7
        %v2670 = vsub.s32 0, %v2669
        %v2671 = vrot.slane %v2667, %v2670
        %v2673 = vsel %vm953, %v2664, 0
        %v2676 = vsel %vm953, %v2665, 0
        %2678 = vmatprep.subr.mxu0 0.0
        %2679 = vmatpush1.msra.mxu0 %v2666
        %2680 = vmatprep.subr.mxu0 0.0
        %2681 = vmatpush1.msra.mxu0 0.0
        %2682 = vmatprep.subr.mxu0 0.0
        %2683 = vmatpush1.msra.mxu0 0.0
        %2684 = vmatprep.subr.mxu0 0.0
        %2685 = vmatpush1.msra.mxu0 0.0
        %2686 = vmatprep.subr.mxu0 0.0
        %2687 = vmatpush1.msra.mxu0 0.0
        %2688 = vmatprep.subr.mxu0 0.0
        %2689 = vmatpush1.msra.mxu0 0.0
        %2690 = vmatprep.subr.mxu0 0.0
        %2691 = vmatpush1.msra.mxu0 0.0
        %2692 = vmatprep.subr.mxu0 0.0
        %2693 = vmatpush1.msra.mxu0 0.0
        %2694 = vmatprep.subr.mxu0 0.0
        %2695 = vmatpush1.msra.mxu0 0.0
        %2696 = vmatprep.subr.mxu0 0.0
        %2697 = vmatpush1.msra.mxu0 0.0
        %2698 = vmatprep.subr.mxu0 0.0
        %2699 = vmatpush1.msra.mxu0 0.0
        %2700 = vmatprep.subr.mxu0 0.0
        %2701 = vmatpush1.msra.mxu0 0.0
        %2702 = vmatprep.subr.mxu0 0.0
        %2703 = vmatpush1.msra.mxu0 0.0
        %2704 = vmatprep.subr.mxu0 0.0
        %2705 = vmatpush1.msra.mxu0 0.0
        %2706 = vmatprep.subr.mxu0 0.0
        %2707 = vmatpush1.msra.mxu0 0.0
        %2708 = vmatprep.subr.mxu0 0.0
        %2709 = vmatpush1.msra.mxu0 0.0
        %2710 = vmatprep.subr.mxu0 0.0
        %2711 = vmatpush1.msra.mxu0 0.0
        %2712 = vmatprep.subr.mxu0 0.0
        %2713 = vmatpush1.msra.mxu0 0.0
        %2714 = vmatprep.subr.mxu0 0.0
        %2715 = vmatpush1.msra.mxu0 0.0
        %2716 = vmatprep.subr.mxu0 0.0
        %2717 = vmatpush1.msra.mxu0 0.0
        %2718 = vmatprep.subr.mxu0 0.0
        %2719 = vmatpush1.msra.mxu0 0.0
        %2720 = vmatprep.subr.mxu0 0.0
        %2721 = vmatpush1.msra.mxu0 0.0
        %2722 = vmatprep.subr.mxu0 0.0
        %2723 = vmatpush1.msra.mxu0 0.0
        %2724 = vmatprep.subr.mxu0 0.0
        %2725 = vmatpush1.msra.mxu0 0.0
        %2726 = vmatprep.subr.mxu0 0.0
        %2727 = vmatpush1.msra.mxu0 0.0
        %2728 = vmatprep.subr.mxu0 0.0
        %2729 = vmatpush1.msra.mxu0 0.0
        %2730 = vmatprep.subr.mxu0 0.0
        %2731 = vmatpush1.msra.mxu0 0.0
        %2732 = vmatprep.subr.mxu0 0.0
        %2733 = vmatpush1.msra.mxu0 0.0
        %2734 = vmatprep.subr.mxu0 0.0
        %2735 = vmatpush1.msra.mxu0 0.0
        %2736 = vmatprep.subr.mxu0 0.0
        %2737 = vmatpush1.msra.mxu0 0.0
        %2738 = vmatprep.subr.mxu0 0.0
        %2739 = vmatpush1.msra.mxu0 0.0
        %2740 = vmatprep.subr.mxu0 0.0
        %2741 = vmatpush1.msra.mxu0 0.0
        %2742 = vmatprep.mubr.f32.mxu0 0.0
        %2743 = vmatmul.mubr.f32.gmra.mrb[0].mxu0 %v2673
        %v2744 = vpop.f32.mrb[0].mxu0
        %v2745 = vadd.f32 %v2671, %v2744
        %v2746 = vpop.f32.mrb[0].mxu0
        %2747 = vmatprep.mubr.f32.mxu0 0.0
        %2748 = vmatmul.mubr.f32.gmra.mrb[0].mxu0 %v2676
        %v2749 = vpop.f32.mrb[0].mxu0
        %v2750 = vadd.f32 %v2671, %v2749
        %v2751 = vpop.f32.mrb[0].mxu0
        %2752 = vdwg.mxu0
        %vm2753 = vcmp.ge.f32.partialorder %v2745, 0.0
        %vm2754 = vcmp.ge.f32.partialorder %v2750, 0.0
        %v2755 = vmul.f32 %v2745, 0.01
        %v2756 = vmul.f32 %v2750, 0.01
        %v2757 = vsel %vm2753, %v2745, %v2755
        %v2758 = vsel %vm2754, %v2750, %v2756
        %v2759 = vlaneseq
        %v2760 = vshrl.u32 %v2759, 7
        %v2761 = vsub.s32 1, %v2760
        %v2762 = vrot.slane %v2667, %v2761
        %v2763 = vmul.f32 %v2757, %v2762
        %v2764 = vmul.f32 %v2758, %v2762
        %v2765 = vlaneseq
        %v2766 = vshrl.u32 %v2765, 7
        %v2767 = vsub.s32 2, %v2766
        %v2768 = vrot.slane %v2667, %v2767
        %v2769 = vadd.f32 %v2763, %v2768
        %v2770 = vadd.f32 %v2764, %v2768
        %vm2771 = vcmask 123904
        %2772 = vst.msk [vmem:[#allocation4] sm:$0x3] %vm2771, 0.0
        %vm2773 = vcmask 130048
        %2774 = vst.msk [vmem:[#allocation4 + $0x2] sm:$0xff] %vm2773, %v2769
        %2775 = vst.msk [vmem:[#allocation4 + $0xa] sm:$0xff] %vm2773, %v2770
        %2776 = vst.msk [vmem:[#allocation4 + $0x12] sm:$0x3] %vm2771, 0.0
        %v2777 = vld [vmem:[#allocation25] sm:$0xff]
        %v2778 = vld [vmem:[#allocation25 + $0x8] sm:$0xff]
        %v2779 = vld [vmem:[#allocation25 + $0x10] sm:$0xff]
        %v2780 = vld [vmem:[#allocation25 + $0x18] sm:$0xff]
        %v2781 = vld [vmem:[#allocation25 + $0x20] sm:$0xff]
        %v2782 = vld [vmem:[#allocation25 + $0x28] sm:$0xff]
        %v2783 = vld [vmem:[#allocation25 + $0x30] sm:$0xff]
        %v2784 = vld [vmem:[#allocation25 + $0x38] sm:$0xff]
        %v2785 = vld [vmem:[#allocation25 + $0x40] sm:$0xff]
        %v2786 = vld [vmem:[#allocation25 + $0x48] sm:$0xff]
        %v2787 = vld [vmem:[#allocation4] sm:$0xff]
        %v2788 = vld [vmem:[#allocation4 + $0x8] sm:$0xff]
        %v2789 = vld [vmem:[#allocation4 + $0x1] sm:$0xff]
        %v2790 = vld [vmem:[#allocation4 + $0x9] sm:$0xff]
        %v2792 = vsel %vm2773, %v2789, 0
        %v2795 = vsel %vm2773, %v2790, 0
        %2797 = vmatprep.subr.mxu0 0.0
        %2798 = vmatpush1.msra.mxu0 %v2779
        %2799 = vmatprep.subr.mxu0 0.0
        %2800 = vmatpush1.msra.mxu0 %v2780
        %2801 = vmatprep.subr.mxu0 0.0
        %2802 = vmatpush1.msra.mxu0 0.0
        %2803 = vmatprep.subr.mxu0 0.0
        %2804 = vmatpush1.msra.mxu0 0.0
        %2805 = vmatprep.subr.mxu0 0.0
        %2806 = vmatpush1.msra.mxu0 0.0
        %2807 = vmatprep.subr.mxu0 0.0
        %2808 = vmatpush1.msra.mxu0 0.0
        %2809 = vmatprep.subr.mxu0 0.0
        %2810 = vmatpush1.msra.mxu0 0.0
        %2811 = vmatprep.subr.mxu0 0.0
        %2812 = vmatpush1.msra.mxu0 0.0
        %2813 = vmatprep.subr.mxu0 0.0
        %2814 = vmatpush1.msra.mxu0 0.0
        %2815 = vmatprep.subr.mxu0 0.0
        %2816 = vmatpush1.msra.mxu0 0.0
        %2817 = vmatprep.subr.mxu0 0.0
        %2818 = vmatpush1.msra.mxu0 0.0
        %2819 = vmatprep.subr.mxu0 0.0
        %2820 = vmatpush1.msra.mxu0 0.0
        %2821 = vmatprep.subr.mxu0 0.0
        %2822 = vmatpush1.msra.mxu0 0.0
        %2823 = vmatprep.subr.mxu0 0.0
        %2824 = vmatpush1.msra.mxu0 0.0
        %2825 = vmatprep.subr.mxu0 0.0
        %2826 = vmatpush1.msra.mxu0 0.0
        %2827 = vmatprep.subr.mxu0 0.0
        %2828 = vmatpush1.msra.mxu0 0.0
        %2829 = vmatprep.subr.mxu0 0.0
        %2830 = vmatpush1.msra.mxu0 0.0
        %2831 = vmatprep.subr.mxu0 0.0
        %2832 = vmatpush1.msra.mxu0 0.0
        %2833 = vmatprep.subr.mxu0 0.0
        %2834 = vmatpush1.msra.mxu0 0.0
        %2835 = vmatprep.subr.mxu0 0.0
        %2836 = vmatpush1.msra.mxu0 0.0
        %2837 = vmatprep.subr.mxu0 0.0
        %2838 = vmatpush1.msra.mxu0 0.0
        %2839 = vmatprep.subr.mxu0 0.0
        %2840 = vmatpush1.msra.mxu0 0.0
        %2841 = vmatprep.subr.mxu0 0.0
        %2842 = vmatpush1.msra.mxu0 0.0
        %2843 = vmatprep.subr.mxu0 0.0
        %2844 = vmatpush1.msra.mxu0 0.0
        %2845 = vmatprep.subr.mxu0 0.0
        %2846 = vmatpush1.msra.mxu0 0.0
        %2847 = vmatprep.subr.mxu0 0.0
        %2848 = vmatpush1.msra.mxu0 0.0
        %2849 = vmatprep.subr.mxu0 0.0
        %2850 = vmatpush1.msra.mxu0 0.0
        %2851 = vmatprep.subr.mxu0 0.0
        %2852 = vmatpush1.msra.mxu0 0.0
        %2853 = vmatprep.subr.mxu0 0.0
        %2854 = vmatpush1.msra.mxu0 0.0
        %2855 = vmatprep.subr.mxu0 0.0
        %2856 = vmatpush1.msra.mxu0 0.0
        %2857 = vmatprep.subr.mxu0 0.0
        %2858 = vmatpush1.msra.mxu0 0.0
        %2859 = vmatprep.subr.mxu0 0.0
        %2860 = vmatpush1.msra.mxu0 0.0
        %2861 = vmatprep.mubr.f32.mxu0 0.0
        %2862 = vmatmul.mubr.f32.gmra.mrb[0].mxu0 %v2792
        %v2863 = vpop.f32.mrb[0].mxu0
        %v2864 = vadd.f32 0.0, %v2863
        %v2865 = vpop.f32.mrb[0].mxu0
        %2866 = vmatprep.mubr.f32.mxu0 0.0
        %2867 = vmatmul.mubr.f32.gmra.mrb[0].mxu0 %v2795
        %v2868 = vpop.f32.mrb[0].mxu0
        %v2869 = vadd.f32 0.0, %v2868
        %v2870 = vpop.f32.mrb[0].mxu0
        %2871 = vdwg.mxu0
        %v2873 = vsel %vm2773, %v2787, 0
        %v2876 = vsel %vm2773, %v2788, 0
        %2878 = vmatprep.subr.mxu0 0.0
        %2879 = vmatpush1.msra.mxu0 %v2777
        %2880 = vmatprep.subr.mxu0 0.0
        %2881 = vmatpush1.msra.mxu0 %v2778
        %2882 = vmatprep.subr.mxu0 0.0
        %2883 = vmatpush1.msra.mxu0 0.0
        %2884 = vmatprep.subr.mxu0 0.0
        %2885 = vmatpush1.msra.mxu0 0.0
        %2886 = vmatprep.subr.mxu0 0.0
        %2887 = vmatpush1.msra.mxu0 0.0
        %2888 = vmatprep.subr.mxu0 0.0
        %2889 = vmatpush1.msra.mxu0 0.0
        %2890 = vmatprep.subr.mxu0 0.0
        %2891 = vmatpush1.msra.mxu0 0.0
        %2892 = vmatprep.subr.mxu0 0.0
        %2893 = vmatpush1.msra.mxu0 0.0
        %2894 = vmatprep.subr.mxu0 0.0
        %2895 = vmatpush1.msra.mxu0 0.0
        %2896 = vmatprep.subr.mxu0 0.0
        %2897 = vmatpush1.msra.mxu0 0.0
        %2898 = vmatprep.subr.mxu0 0.0
        %2899 = vmatpush1.msra.mxu0 0.0
        %2900 = vmatprep.subr.mxu0 0.0
        %2901 = vmatpush1.msra.mxu0 0.0
        %2902 = vmatprep.subr.mxu0 0.0
        %2903 = vmatpush1.msra.mxu0 0.0
        %2904 = vmatprep.subr.mxu0 0.0
        %2905 = vmatpush1.msra.mxu0 0.0
        %2906 = vmatprep.subr.mxu0 0.0
        %2907 = vmatpush1.msra.mxu0 0.0
        %2908 = vmatprep.subr.mxu0 0.0
        %2909 = vmatpush1.msra.mxu0 0.0
        %2910 = vmatprep.subr.mxu0 0.0
        %2911 = vmatpush1.msra.mxu0 0.0
        %2912 = vmatprep.subr.mxu0 0.0
        %2913 = vmatpush1.msra.mxu0 0.0
        %2914 = vmatprep.subr.mxu0 0.0
        %2915 = vmatpush1.msra.mxu0 0.0
        %2916 = vmatprep.subr.mxu0 0.0
        %2917 = vmatpush1.msra.mxu0 0.0
        %2918 = vmatprep.subr.mxu0 0.0
        %2919 = vmatpush1.msra.mxu0 0.0
        %2920 = vmatprep.subr.mxu0 0.0
        %2921 = vmatpush1.msra.mxu0 0.0
        %2922 = vmatprep.subr.mxu0 0.0
        %2923 = vmatpush1.msra.mxu0 0.0
        %2924 = vmatprep.subr.mxu0 0.0
        %2925 = vmatpush1.msra.mxu0 0.0
        %2926 = vmatprep.subr.mxu0 0.0
        %2927 = vmatpush1.msra.mxu0 0.0
        %2928 = vmatprep.subr.mxu0 0.0
        %2929 = vmatpush1.msra.mxu0 0.0
        %2930 = vmatprep.subr.mxu0 0.0
        %2931 = vmatpush1.msra.mxu0 0.0
        %2932 = vmatprep.subr.mxu0 0.0
        %2933 = vmatpush1.msra.mxu0 0.0
        %2934 = vmatprep.subr.mxu0 0.0
        %2935 = vmatpush1.msra.mxu0 0.0
        %2936 = vmatprep.subr.mxu0 0.0
        %2937 = vmatpush1.msra.mxu0 0.0
        %2938 = vmatprep.subr.mxu0 0.0
        %2939 = vmatpush1.msra.mxu0 0.0
        %2940 = vmatprep.subr.mxu0 0.0
        %2941 = vmatpush1.msra.mxu0 0.0
        %2942 = vmatprep.mubr.f32.mxu0 0.0
        %2943 = vmatmul.mubr.f32.gmra.mrb[0].mxu0 %v2873
        %v2944 = vpop.f32.mrb[0].mxu0
        %v2945 = vadd.f32 %v2864, %v2944
        %v2946 = vpop.f32.mrb[0].mxu0
        %2947 = vmatprep.mubr.f32.mxu0 0.0
        %2948 = vmatmul.mubr.f32.gmra.mrb[0].mxu0 %v2876
        %v2949 = vpop.f32.mrb[0].mxu0
        %v2950 = vadd.f32 %v2869, %v2949
        %v2951 = vpop.f32.mrb[0].mxu0
        %2952 = vdwg.mxu0
        %v2953 = vld [vmem:[#allocation4 + $0x2] sm:$0xff]
        %v2954 = vld [vmem:[#allocation4 + $0xa] sm:$0xff]
        %v2956 = vsel %vm2773, %v2953, 0
        %v2959 = vsel %vm2773, %v2954, 0
        %2961 = vmatprep.subr.mxu0 0.0
        %2962 = vmatpush1.msra.mxu0 %v2781
        %2963 = vmatprep.subr.mxu0 0.0
        %2964 = vmatpush1.msra.mxu0 %v2782
        %2965 = vmatprep.subr.mxu0 0.0
        %2966 = vmatpush1.msra.mxu0 0.0
        %2967 = vmatprep.subr.mxu0 0.0
        %2968 = vmatpush1.msra.mxu0 0.0
        %2969 = vmatprep.subr.mxu0 0.0
        %2970 = vmatpush1.msra.mxu0 0.0
        %2971 = vmatprep.subr.mxu0 0.0
        %2972 = vmatpush1.msra.mxu0 0.0
        %2973 = vmatprep.subr.mxu0 0.0
        %2974 = vmatpush1.msra.mxu0 0.0
        %2975 = vmatprep.subr.mxu0 0.0
        %2976 = vmatpush1.msra.mxu0 0.0
        %2977 = vmatprep.subr.mxu0 0.0
        %2978 = vmatpush1.msra.mxu0 0.0
        %2979 = vmatprep.subr.mxu0 0.0
        %2980 = vmatpush1.msra.mxu0 0.0
        %2981 = vmatprep.subr.mxu0 0.0
        %2982 = vmatpush1.msra.mxu0 0.0
        %2983 = vmatprep.subr.mxu0 0.0
        %2984 = vmatpush1.msra.mxu0 0.0
        %2985 = vmatprep.subr.mxu0 0.0
        %2986 = vmatpush1.msra.mxu0 0.0
        %2987 = vmatprep.subr.mxu0 0.0
        %2988 = vmatpush1.msra.mxu0 0.0
        %2989 = vmatprep.subr.mxu0 0.0
        %2990 = vmatpush1.msra.mxu0 0.0
        %2991 = vmatprep.subr.mxu0 0.0
        %2992 = vmatpush1.msra.mxu0 0.0
        %2993 = vmatprep.subr.mxu0 0.0
        %2994 = vmatpush1.msra.mxu0 0.0
        %2995 = vmatprep.subr.mxu0 0.0
        %2996 = vmatpush1.msra.mxu0 0.0
        %2997 = vmatprep.subr.mxu0 0.0
        %2998 = vmatpush1.msra.mxu0 0.0
        %2999 = vmatprep.subr.mxu0 0.0
        %3000 = vmatpush1.msra.mxu0 0.0
        %3001 = vmatprep.subr.mxu0 0.0
        %3002 = vmatpush1.msra.mxu0 0.0
        %3003 = vmatprep.subr.mxu0 0.0
        %3004 = vmatpush1.msra.mxu0 0.0
        %3005 = vmatprep.subr.mxu0 0.0
        %3006 = vmatpush1.msra.mxu0 0.0
        %3007 = vmatprep.subr.mxu0 0.0
        %3008 = vmatpush1.msra.mxu0 0.0
        %3009 = vmatprep.subr.mxu0 0.0
        %3010 = vmatpush1.msra.mxu0 0.0
        %3011 = vmatprep.subr.mxu0 0.0
        %3012 = vmatpush1.msra.mxu0 0.0
        %3013 = vmatprep.subr.mxu0 0.0
        %3014 = vmatpush1.msra.mxu0 0.0
        %3015 = vmatprep.subr.mxu0 0.0
        %3016 = vmatpush1.msra.mxu0 0.0
        %3017 = vmatprep.subr.mxu0 0.0
        %3018 = vmatpush1.msra.mxu0 0.0
        %3019 = vmatprep.subr.mxu0 0.0
        %3020 = vmatpush1.msra.mxu0 0.0
        %3021 = vmatprep.subr.mxu0 0.0
        %3022 = vmatpush1.msra.mxu0 0.0
        %3023 = vmatprep.subr.mxu0 0.0
        %3024 = vmatpush1.msra.mxu0 0.0
        %3025 = vmatprep.mubr.f32.mxu0 0.0
        %3026 = vmatmul.mubr.f32.gmra.mrb[0].mxu0 %v2956
        %v3027 = vpop.f32.mrb[0].mxu0
        %v3028 = vadd.f32 0.0, %v3027
        %v3029 = vpop.f32.mrb[0].mxu0
        %3030 = vmatprep.mubr.f32.mxu0 0.0
        %3031 = vmatmul.mubr.f32.gmra.mrb[0].mxu0 %v2959
        %v3032 = vpop.f32.mrb[0].mxu0
        %v3033 = vadd.f32 0.0, %v3032
        %v3034 = vpop.f32.mrb[0].mxu0
        %3035 = vdwg.mxu0
        %v3036 = vadd.f32 %v2945, %v3028
        %v3037 = vadd.f32 %v2950, %v3033
        %v3038 = vld [vmem:[#allocation4 + $0x3] sm:$0xff]
        %v3039 = vld [vmem:[#allocation4 + $0xb] sm:$0xff]
        %v3041 = vsel %vm2773, %v3038, 0
        %v3044 = vsel %vm2773, %v3039, 0
        %3046 = vmatprep.subr.mxu0 0.0
        %3047 = vmatpush1.msra.mxu0 %v2783
        %3048 = vmatprep.subr.mxu0 0.0
        %3049 = vmatpush1.msra.mxu0 %v2784
        %3050 = vmatprep.subr.mxu0 0.0
        %3051 = vmatpush1.msra.mxu0 0.0
        %3052 = vmatprep.subr.mxu0 0.0
        %3053 = vmatpush1.msra.mxu0 0.0
        %3054 = vmatprep.subr.mxu0 0.0
        %3055 = vmatpush1.msra.mxu0 0.0
        %3056 = vmatprep.subr.mxu0 0.0
        %3057 = vmatpush1.msra.mxu0 0.0
        %3058 = vmatprep.subr.mxu0 0.0
        %3059 = vmatpush1.msra.mxu0 0.0
        %3060 = vmatprep.subr.mxu0 0.0
        %3061 = vmatpush1.msra.mxu0 0.0
        %3062 = vmatprep.subr.mxu0 0.0
        %3063 = vmatpush1.msra.mxu0 0.0
        %3064 = vmatprep.subr.mxu0 0.0
        %3065 = vmatpush1.msra.mxu0 0.0
        %3066 = vmatprep.subr.mxu0 0.0
        %3067 = vmatpush1.msra.mxu0 0.0
        %3068 = vmatprep.subr.mxu0 0.0
        %3069 = vmatpush1.msra.mxu0 0.0
        %3070 = vmatprep.subr.mxu0 0.0
        %3071 = vmatpush1.msra.mxu0 0.0
        %3072 = vmatprep.subr.mxu0 0.0
        %3073 = vmatpush1.msra.mxu0 0.0
        %3074 = vmatprep.subr.mxu0 0.0
        %3075 = vmatpush1.msra.mxu0 0.0
        %3076 = vmatprep.subr.mxu0 0.0
        %3077 = vmatpush1.msra.mxu0 0.0
        %3078 = vmatprep.subr.mxu0 0.0
        %3079 = vmatpush1.msra.mxu0 0.0
        %3080 = vmatprep.subr.mxu0 0.0
        %3081 = vmatpush1.msra.mxu0 0.0
        %3082 = vmatprep.subr.mxu0 0.0
        %3083 = vmatpush1.msra.mxu0 0.0
        %3084 = vmatprep.subr.mxu0 0.0
        %3085 = vmatpush1.msra.mxu0 0.0
        %3086 = vmatprep.subr.mxu0 0.0
        %3087 = vmatpush1.msra.mxu0 0.0
        %3088 = vmatprep.subr.mxu0 0.0
        %3089 = vmatpush1.msra.mxu0 0.0
        %3090 = vmatprep.subr.mxu0 0.0
        %3091 = vmatpush1.msra.mxu0 0.0
        %3092 = vmatprep.subr.mxu0 0.0
        %3093 = vmatpush1.msra.mxu0 0.0
        %3094 = vmatprep.subr.mxu0 0.0
        %3095 = vmatpush1.msra.mxu0 0.0
        %3096 = vmatprep.subr.mxu0 0.0
        %3097 = vmatpush1.msra.mxu0 0.0
        %3098 = vmatprep.subr.mxu0 0.0
        %3099 = vmatpush1.msra.mxu0 0.0
        %3100 = vmatprep.subr.mxu0 0.0
        %3101 = vmatpush1.msra.mxu0 0.0
        %3102 = vmatprep.subr.mxu0 0.0
        %3103 = vmatpush1.msra.mxu0 0.0
        %3104 = vmatprep.subr.mxu0 0.0
        %3105 = vmatpush1.msra.mxu0 0.0
        %3106 = vmatprep.subr.mxu0 0.0
        %3107 = vmatpush1.msra.mxu0 0.0
        %3108 = vmatprep.subr.mxu0 0.0
        %3109 = vmatpush1.msra.mxu0 0.0
        %3110 = vmatprep.mubr.f32.mxu0 0.0
        %3111 = vmatmul.mubr.f32.gmra.mrb[0].mxu0 %v3041
        %v3112 = vpop.f32.mrb[0].mxu0
        %v3113 = vadd.f32 0.0, %v3112
        %v3114 = vpop.f32.mrb[0].mxu0
        %3115 = vmatprep.mubr.f32.mxu0 0.0
        %3116 = vmatmul.mubr.f32.gmra.mrb[0].mxu0 %v3044
        %v3117 = vpop.f32.mrb[0].mxu0
        %v3118 = vadd.f32 0.0, %v3117
        %v3119 = vpop.f32.mrb[0].mxu0
        %3120 = vdwg.mxu0
        %v3121 = vadd.f32 %v3036, %v3113
        %v3122 = vadd.f32 %v3037, %v3118
        %v3123 = vld [vmem:[#allocation4 + $0x4] sm:$0xff]
        %v3124 = vld [vmem:[#allocation4 + $0xc] sm:$0xff]
        %v3126 = vsel %vm2773, %v3123, 0
        %v3129 = vsel %vm2773, %v3124, 0
        %3131 = vmatprep.subr.mxu0 0.0
        %3132 = vmatpush1.msra.mxu0 %v2785
        %3133 = vmatprep.subr.mxu0 0.0
        %3134 = vmatpush1.msra.mxu0 %v2786
        %3135 = vmatprep.subr.mxu0 0.0
        %3136 = vmatpush1.msra.mxu0 0.0
        %3137 = vmatprep.subr.mxu0 0.0
        %3138 = vmatpush1.msra.mxu0 0.0
        %3139 = vmatprep.subr.mxu0 0.0
        %3140 = vmatpush1.msra.mxu0 0.0
        %3141 = vmatprep.subr.mxu0 0.0
        %3142 = vmatpush1.msra.mxu0 0.0
        %3143 = vmatprep.subr.mxu0 0.0
        %3144 = vmatpush1.msra.mxu0 0.0
        %3145 = vmatprep.subr.mxu0 0.0
        %3146 = vmatpush1.msra.mxu0 0.0
        %3147 = vmatprep.subr.mxu0 0.0
        %3148 = vmatpush1.msra.mxu0 0.0
        %3149 = vmatprep.subr.mxu0 0.0
        %3150 = vmatpush1.msra.mxu0 0.0
        %3151 = vmatprep.subr.mxu0 0.0
        %3152 = vmatpush1.msra.mxu0 0.0
        %3153 = vmatprep.subr.mxu0 0.0
        %3154 = vmatpush1.msra.mxu0 0.0
        %3155 = vmatprep.subr.mxu0 0.0
        %3156 = vmatpush1.msra.mxu0 0.0
        %3157 = vmatprep.subr.mxu0 0.0
        %3158 = vmatpush1.msra.mxu0 0.0
        %3159 = vmatprep.subr.mxu0 0.0
        %3160 = vmatpush1.msra.mxu0 0.0
        %3161 = vmatprep.subr.mxu0 0.0
        %3162 = vmatpush1.msra.mxu0 0.0
        %3163 = vmatprep.subr.mxu0 0.0
        %3164 = vmatpush1.msra.mxu0 0.0
        %3165 = vmatprep.subr.mxu0 0.0
        %3166 = vmatpush1.msra.mxu0 0.0
        %3167 = vmatprep.subr.mxu0 0.0
        %3168 = vmatpush1.msra.mxu0 0.0
        %3169 = vmatprep.subr.mxu0 0.0
        %3170 = vmatpush1.msra.mxu0 0.0
        %3171 = vmatprep.subr.mxu0 0.0
        %3172 = vmatpush1.msra.mxu0 0.0
        %3173 = vmatprep.subr.mxu0 0.0
        %3174 = vmatpush1.msra.mxu0 0.0
        %3175 = vmatprep.subr.mxu0 0.0
        %3176 = vmatpush1.msra.mxu0 0.0
        %3177 = vmatprep.subr.mxu0 0.0
        %3178 = vmatpush1.msra.mxu0 0.0
        %3179 = vmatprep.subr.mxu0 0.0
        %3180 = vmatpush1.msra.mxu0 0.0
        %3181 = vmatprep.subr.mxu0 0.0
        %3182 = vmatpush1.msra.mxu0 0.0
        %3183 = vmatprep.subr.mxu0 0.0
        %3184 = vmatpush1.msra.mxu0 0.0
        %3185 = vmatprep.subr.mxu0 0.0
        %3186 = vmatpush1.msra.mxu0 0.0
        %3187 = vmatprep.subr.mxu0 0.0
        %3188 = vmatpush1.msra.mxu0 0.0
        %3189 = vmatprep.subr.mxu0 0.0
        %3190 = vmatpush1.msra.mxu0 0.0
        %3191 = vmatprep.subr.mxu0 0.0
        %3192 = vmatpush1.msra.mxu0 0.0
        %3193 = vmatprep.subr.mxu0 0.0
        %3194 = vmatpush1.msra.mxu0 0.0
        %3195 = vmatprep.mubr.f32.mxu0 0.0
        %3196 = vmatmul.mubr.f32.gmra.mrb[0].mxu0 %v3126
        %v3197 = vpop.f32.mrb[0].mxu0
        %v3198 = vadd.f32 0.0, %v3197
        %v3199 = vpop.f32.mrb[0].mxu0
        %3200 = vmatprep.mubr.f32.mxu0 0.0
        %3201 = vmatmul.mubr.f32.gmra.mrb[0].mxu0 %v3129
        %v3202 = vpop.f32.mrb[0].mxu0
        %v3203 = vadd.f32 0.0, %v3202
        %v3204 = vpop.f32.mrb[0].mxu0
        %3205 = vdwg.mxu0
        %v3206 = vadd.f32 %v3121, %v3198
        %v3207 = vadd.f32 %v3122, %v3203
        %v3208 = vld [vmem:[#allocation27] sm:$0x7]
        %v3209 = vlaneseq
        %v3210 = vshrl.u32 %v3209, 7
        %v3211 = vsub.s32 0, %v3210
        %v3212 = vrot.slane %v3208, %v3211
        %v3213 = vadd.f32 %v3206, %v3212
        %v3214 = vadd.f32 %v3207, %v3212
        %vm3215 = vcmp.ge.f32.partialorder %v3213, 0.0
        %vm3216 = vcmp.ge.f32.partialorder %v3214, 0.0
        %v3217 = vmul.f32 %v3213, 0.01
        %v3218 = vmul.f32 %v3214, 0.01
        %v3219 = vsel %vm3215, %v3213, %v3217
        %v3220 = vsel %vm3216, %v3214, %v3218
        %v3221 = vlaneseq
        %v3222 = vshrl.u32 %v3221, 7
        %v3223 = vsub.s32 1, %v3222
        %v3224 = vrot.slane %v3208, %v3223
        %v3225 = vmul.f32 %v3219, %v3224
        %v3226 = vmul.f32 %v3220, %v3224
        %v3227 = vlaneseq
        %v3228 = vshrl.u32 %v3227, 7
        %v3229 = vsub.s32 2, %v3228
        %v3230 = vrot.slane %v3208, %v3229
        %v3231 = vadd.f32 %v3225, %v3230
        %v3232 = vadd.f32 %v3226, %v3230
        %3233 = vst.msk [vmem:[#allocation5] sm:$0x1] %vm1926, -inf
        %3234 = vst.msk [vmem:[#allocation5 + $0x1] sm:$0xff] %vm953, %v2664
        %3235 = vst.msk [vmem:[#allocation5 + $0x9] sm:$0xff] %vm953, %v2665
        %3236 = vst.msk [vmem:[#allocation5 + $0x11] sm:$0x1] %vm1926, -inf
        %v3237 = vld [vmem:[#allocation5] sm:$0xff]
        %v3238 = vld [vmem:[#allocation5 + $0x8] sm:$0xff]
        %v3239 = vld [vmem:[#allocation5 + $0x1] sm:$0xff]
        %v3240 = vld [vmem:[#allocation5 + $0x9] sm:$0xff]
        %v3241 = vmax.f32 %v3237, %v3239
        %v3242 = vmax.f32 %v3238, %v3240
        %v3243 = vld [vmem:[#allocation5 + $0x2] sm:$0xff]
        %v3244 = vld [vmem:[#allocation5 + $0xa] sm:$0xff]
        %v3245 = vmax.f32 %v3241, %v3243
        %v3246 = vmax.f32 %v3242, %v3244
        %v3247 = vld [vmem:[%s17] sm:$0xff]
        %v3248 = vld [vmem:[#allocation28] sm:$0x7]
        %v3249 = vlaneseq
        %v3250 = vshrl.u32 %v3249, 7
        %v3251 = vsub.s32 0, %v3250
        %v3252 = vrot.slane %v3248, %v3251
        %v3254 = vsel %vm953, %v3245, 0
        %v3257 = vsel %vm953, %v3246, 0
        %3259 = vmatprep.subr.mxu0 0.0
        %3260 = vmatpush1.msra.mxu0 %v3247
        %3261 = vmatprep.subr.mxu0 0.0
        %3262 = vmatpush1.msra.mxu0 0.0
        %3263 = vmatprep.subr.mxu0 0.0
        %3264 = vmatpush1.msra.mxu0 0.0
        %3265 = vmatprep.subr.mxu0 0.0
        %3266 = vmatpush1.msra.mxu0 0.0
        %3267 = vmatprep.subr.mxu0 0.0
        %3268 = vmatpush1.msra.mxu0 0.0
        %3269 = vmatprep.subr.mxu0 0.0
        %3270 = vmatpush1.msra.mxu0 0.0
        %3271 = vmatprep.subr.mxu0 0.0
        %3272 = vmatpush1.msra.mxu0 0.0
        %3273 = vmatprep.subr.mxu0 0.0
        %3274 = vmatpush1.msra.mxu0 0.0
        %3275 = vmatprep.subr.mxu0 0.0
        %3276 = vmatpush1.msra.mxu0 0.0
        %3277 = vmatprep.subr.mxu0 0.0
        %3278 = vmatpush1.msra.mxu0 0.0
        %3279 = vmatprep.subr.mxu0 0.0
        %3280 = vmatpush1.msra.mxu0 0.0
        %3281 = vmatprep.subr.mxu0 0.0
        %3282 = vmatpush1.msra.mxu0 0.0
        %3283 = vmatprep.subr.mxu0 0.0
        %3284 = vmatpush1.msra.mxu0 0.0
        %3285 = vmatprep.subr.mxu0 0.0
        %3286 = vmatpush1.msra.mxu0 0.0
        %3287 = vmatprep.subr.mxu0 0.0
        %3288 = vmatpush1.msra.mxu0 0.0
        %3289 = vmatprep.subr.mxu0 0.0
        %3290 = vmatpush1.msra.mxu0 0.0
        %3291 = vmatprep.subr.mxu0 0.0
        %3292 = vmatpush1.msra.mxu0 0.0
        %3293 = vmatprep.subr.mxu0 0.0
        %3294 = vmatpush1.msra.mxu0 0.0
        %3295 = vmatprep.subr.mxu0 0.0
        %3296 = vmatpush1.msra.mxu0 0.0
        %3297 = vmatprep.subr.mxu0 0.0
        %3298 = vmatpush1.msra.mxu0 0.0
        %3299 = vmatprep.subr.mxu0 0.0
        %3300 = vmatpush1.msra.mxu0 0.0
        %3301 = vmatprep.subr.mxu0 0.0
        %3302 = vmatpush1.msra.mxu0 0.0
        %3303 = vmatprep.subr.mxu0 0.0
        %3304 = vmatpush1.msra.mxu0 0.0
        %3305 = vmatprep.subr.mxu0 0.0
        %3306 = vmatpush1.msra.mxu0 0.0
        %3307 = vmatprep.subr.mxu0 0.0
        %3308 = vmatpush1.msra.mxu0 0.0
        %3309 = vmatprep.subr.mxu0 0.0
        %3310 = vmatpush1.msra.mxu0 0.0
        %3311 = vmatprep.subr.mxu0 0.0
        %3312 = vmatpush1.msra.mxu0 0.0
        %3313 = vmatprep.subr.mxu0 0.0
        %3314 = vmatpush1.msra.mxu0 0.0
        %3315 = vmatprep.subr.mxu0 0.0
        %3316 = vmatpush1.msra.mxu0 0.0
        %3317 = vmatprep.subr.mxu0 0.0
        %3318 = vmatpush1.msra.mxu0 0.0
        %3319 = vmatprep.subr.mxu0 0.0
        %3320 = vmatpush1.msra.mxu0 0.0
        %3321 = vmatprep.subr.mxu0 0.0
        %3322 = vmatpush1.msra.mxu0 0.0
        %3323 = vmatprep.mubr.f32.mxu0 0.0
        %3324 = vmatmul.mubr.f32.gmra.mrb[0].mxu0 %v3254
        %v3325 = vpop.f32.mrb[0].mxu0
        %v3326 = vadd.f32 %v3252, %v3325
        %v3327 = vpop.f32.mrb[0].mxu0
        %3328 = vmatprep.mubr.f32.mxu0 0.0
        %3329 = vmatmul.mubr.f32.gmra.mrb[0].mxu0 %v3257
        %v3330 = vpop.f32.mrb[0].mxu0
        %v3331 = vadd.f32 %v3252, %v3330
        %v3332 = vpop.f32.mrb[0].mxu0
        %3333 = vdwg.mxu0
        %vm3334 = vcmp.ge.f32.partialorder %v3326, 0.0
        %vm3335 = vcmp.ge.f32.partialorder %v3331, 0.0
        %v3336 = vmul.f32 %v3326, 0.01
        %v3337 = vmul.f32 %v3331, 0.01
        %v3338 = vsel %vm3334, %v3326, %v3336
        %v3339 = vsel %vm3335, %v3331, %v3337
        %v3340 = vlaneseq
        %v3341 = vshrl.u32 %v3340, 7
        %v3342 = vsub.s32 1, %v3341
        %v3343 = vrot.slane %v3248, %v3342
        %v3344 = vmul.f32 %v3338, %v3343
        %v3345 = vmul.f32 %v3339, %v3343
        %v3346 = vlaneseq
        %v3347 = vshrl.u32 %v3346, 7
        %v3348 = vsub.s32 2, %v3347
        %v3349 = vrot.slane %v3248, %v3348
        %v3350 = vadd.f32 %v3344, %v3349
        %v3351 = vadd.f32 %v3345, %v3349
        %v3352 = vld [vmem:[#allocation30] sm:$0xff]
        %v3353 = vld [vmem:[#allocation30 + $0x8] sm:$0xff]
        %v3354 = vld [vmem:[#allocation30 + $0x10] sm:$0xff]
        %v3356 = vsel %vm953, %v3350, 0
        %v3359 = vsel %vm953, %v3351, 0
        %3361 = vmatprep.subr.mxu0 0.0
        %3362 = vmatpush1.msra.mxu0 %v3354
        %3363 = vmatprep.subr.mxu0 0.0
        %3364 = vmatpush1.msra.mxu0 0.0
        %3365 = vmatprep.subr.mxu0 0.0
        %3366 = vmatpush1.msra.mxu0 0.0
        %3367 = vmatprep.subr.mxu0 0.0
        %3368 = vmatpush1.msra.mxu0 0.0
        %3369 = vmatprep.subr.mxu0 0.0
        %3370 = vmatpush1.msra.mxu0 0.0
        %3371 = vmatprep.subr.mxu0 0.0
        %3372 = vmatpush1.msra.mxu0 0.0
        %3373 = vmatprep.subr.mxu0 0.0
        %3374 = vmatpush1.msra.mxu0 0.0
        %3375 = vmatprep.subr.mxu0 0.0
        %3376 = vmatpush1.msra.mxu0 0.0
        %3377 = vmatprep.subr.mxu0 0.0
        %3378 = vmatpush1.msra.mxu0 0.0
        %3379 = vmatprep.subr.mxu0 0.0
        %3380 = vmatpush1.msra.mxu0 0.0
        %3381 = vmatprep.subr.mxu0 0.0
        %3382 = vmatpush1.msra.mxu0 0.0
        %3383 = vmatprep.subr.mxu0 0.0
        %3384 = vmatpush1.msra.mxu0 0.0
        %3385 = vmatprep.subr.mxu0 0.0
        %3386 = vmatpush1.msra.mxu0 0.0
        %3387 = vmatprep.subr.mxu0 0.0
        %3388 = vmatpush1.msra.mxu0 0.0
        %3389 = vmatprep.subr.mxu0 0.0
        %3390 = vmatpush1.msra.mxu0 0.0
        %3391 = vmatprep.subr.mxu0 0.0
        %3392 = vmatpush1.msra.mxu0 0.0
        %3393 = vmatprep.subr.mxu0 0.0
        %3394 = vmatpush1.msra.mxu0 0.0
        %3395 = vmatprep.subr.mxu0 0.0
        %3396 = vmatpush1.msra.mxu0 0.0
        %3397 = vmatprep.subr.mxu0 0.0
        %3398 = vmatpush1.msra.mxu0 0.0
        %3399 = vmatprep.subr.mxu0 0.0
        %3400 = vmatpush1.msra.mxu0 0.0
        %3401 = vmatprep.subr.mxu0 0.0
        %3402 = vmatpush1.msra.mxu0 0.0
        %3403 = vmatprep.subr.mxu0 0.0
        %3404 = vmatpush1.msra.mxu0 0.0
        %3405 = vmatprep.subr.mxu0 0.0
        %3406 = vmatpush1.msra.mxu0 0.0
        %3407 = vmatprep.subr.mxu0 0.0
        %3408 = vmatpush1.msra.mxu0 0.0
        %3409 = vmatprep.subr.mxu0 0.0
        %3410 = vmatpush1.msra.mxu0 0.0
        %3411 = vmatprep.subr.mxu0 0.0
        %3412 = vmatpush1.msra.mxu0 0.0
        %3413 = vmatprep.subr.mxu0 0.0
        %3414 = vmatpush1.msra.mxu0 0.0
        %3415 = vmatprep.subr.mxu0 0.0
        %3416 = vmatpush1.msra.mxu0 0.0
        %3417 = vmatprep.subr.mxu0 0.0
        %3418 = vmatpush1.msra.mxu0 0.0
        %3419 = vmatprep.subr.mxu0 0.0
        %3420 = vmatpush1.msra.mxu0 0.0
        %3421 = vmatprep.subr.mxu0 0.0
        %3422 = vmatpush1.msra.mxu0 0.0
        %3423 = vmatprep.subr.mxu0 0.0
        %3424 = vmatpush1.msra.mxu0 0.0
        %3425 = vmatprep.mubr.f32.mxu0 0.0
        %3426 = vmatmul.mubr.f32.gmra.mrb[0].mxu0 %v3356
        %v3427 = vpop.f32.mrb[0].mxu0
        %v3428 = vadd.f32 0.0, %v3427
        %v3429 = vpop.f32.mrb[0].mxu0
        %3430 = vmatprep.mubr.f32.mxu0 0.0
        %3431 = vmatmul.mubr.f32.gmra.mrb[0].mxu0 %v3359
        %v3432 = vpop.f32.mrb[0].mxu0
        %v3433 = vadd.f32 0.0, %v3432
        %v3434 = vpop.f32.mrb[0].mxu0
        %3435 = vdwg.mxu0
        %v3437 = vsel %vm2773, %v3231, 0
        %v3440 = vsel %vm2773, %v3232, 0
        %3442 = vmatprep.subr.mxu0 0.0
        %3443 = vmatpush1.msra.mxu0 %v3352
        %3444 = vmatprep.subr.mxu0 0.0
        %3445 = vmatpush1.msra.mxu0 %v3353
        %3446 = vmatprep.subr.mxu0 0.0
        %3447 = vmatpush1.msra.mxu0 0.0
        %3448 = vmatprep.subr.mxu0 0.0
        %3449 = vmatpush1.msra.mxu0 0.0
        %3450 = vmatprep.subr.mxu0 0.0
        %3451 = vmatpush1.msra.mxu0 0.0
        %3452 = vmatprep.subr.mxu0 0.0
        %3453 = vmatpush1.msra.mxu0 0.0
        %3454 = vmatprep.subr.mxu0 0.0
        %3455 = vmatpush1.msra.mxu0 0.0
        %3456 = vmatprep.subr.mxu0 0.0
        %3457 = vmatpush1.msra.mxu0 0.0
        %3458 = vmatprep.subr.mxu0 0.0
        %3459 = vmatpush1.msra.mxu0 0.0
        %3460 = vmatprep.subr.mxu0 0.0
        %3461 = vmatpush1.msra.mxu0 0.0
        %3462 = vmatprep.subr.mxu0 0.0
        %3463 = vmatpush1.msra.mxu0 0.0
        %3464 = vmatprep.subr.mxu0 0.0
        %3465 = vmatpush1.msra.mxu0 0.0
        %3466 = vmatprep.subr.mxu0 0.0
        %3467 = vmatpush1.msra.mxu0 0.0
        %3468 = vmatprep.subr.mxu0 0.0
        %3469 = vmatpush1.msra.mxu0 0.0
        %3470 = vmatprep.subr.mxu0 0.0
        %3471 = vmatpush1.msra.mxu0 0.0
        %3472 = vmatprep.subr.mxu0 0.0
        %3473 = vmatpush1.msra.mxu0 0.0
        %3474 = vmatprep.subr.mxu0 0.0
        %3475 = vmatpush1.msra.mxu0 0.0
        %3476 = vmatprep.subr.mxu0 0.0
        %3477 = vmatpush1.msra.mxu0 0.0
        %3478 = vmatprep.subr.mxu0 0.0
        %3479 = vmatpush1.msra.mxu0 0.0
        %3480 = vmatprep.subr.mxu0 0.0
        %3481 = vmatpush1.msra.mxu0 0.0
        %3482 = vmatprep.subr.mxu0 0.0
        %3483 = vmatpush1.msra.mxu0 0.0
        %3484 = vmatprep.subr.mxu0 0.0
        %3485 = vmatpush1.msra.mxu0 0.0
        %3486 = vmatprep.subr.mxu0 0.0
        %3487 = vmatpush1.msra.mxu0 0.0
        %3488 = vmatprep.subr.mxu0 0.0
        %3489 = vmatpush1.msra.mxu0 0.0
        %3490 = vmatprep.subr.mxu0 0.0
        %3491 = vmatpush1.msra.mxu0 0.0
        %3492 = vmatprep.subr.mxu0 0.0
        %3493 = vmatpush1.msra.mxu0 0.0
        %3494 = vmatprep.subr.mxu0 0.0
        %3495 = vmatpush1.msra.mxu0 0.0
        %3496 = vmatprep.subr.mxu0 0.0
        %3497 = vmatpush1.msra.mxu0 0.0
        %3498 = vmatprep.subr.mxu0 0.0
        %3499 = vmatpush1.msra.mxu0 0.0
        %3500 = vmatprep.subr.mxu0 0.0
        %3501 = vmatpush1.msra.mxu0 0.0
        %3502 = vmatprep.subr.mxu0 0.0
        %3503 = vmatpush1.msra.mxu0 0.0
        %3504 = vmatprep.subr.mxu0 0.0
        %3505 = vmatpush1.msra.mxu0 0.0
        %3506 = vmatprep.mubr.f32.mxu0 0.0
        %3507 = vmatmul.mubr.f32.gmra.mrb[0].mxu0 %v3437
        %v3508 = vpop.f32.mrb[0].mxu0
        %v3509 = vadd.f32 %v3428, %v3508
        %v3510 = vpop.f32.mrb[0].mxu0
        %3511 = vmatprep.mubr.f32.mxu0 0.0
        %3512 = vmatmul.mubr.f32.gmra.mrb[0].mxu0 %v3440
        %v3513 = vpop.f32.mrb[0].mxu0
        %v3514 = vadd.f32 %v3433, %v3513
        %v3515 = vpop.f32.mrb[0].mxu0
        %3516 = vdwg.mxu0
        %v3517 = vld [vmem:[#allocation31] sm:$0x1]
        %v3519 = vlaneseq
        %v3520 = vshrl.u32 %v3519, 7
        %v3521 = vsub.s32 0, %v3520
        %v3522 = vrot.slane %v3517, %v3521
        %v3524 = vadd.f32 %v3509, %v3522
        %v3525 = vadd.f32 %v3514, %v3522
        %3526 = vst [vmem:[#allocation6] sm:$0xff] %v3524
        %3527 = vst [vmem:[#allocation6 + $0x8] sm:$0xff] %v3525
        %v3528 = vld [vmem:[%s20] sm:$0xff]
        %v3529 = vld [vmem:[%s20 + $0x8] sm:$0xff]
        %v3530 = vld [vmem:[%s20 + $0x10] sm:$0xff]
        %v3531 = vld [vmem:[%s20 + $0x18] sm:$0xff]
        %v3532 = vld [vmem:[#allocation6] sm:$0x1]
        %v3534 = vsel %vm1055, 0.0, 0
        %3536 = vmatprep.subr.mxu0 0.0
        %3537 = vmatpush1.msra.mxu0 %v3528
        %3538 = vmatprep.subr.mxu0 0.0
        %3539 = vmatpush1.msra.mxu0 %v3529
        %3540 = vmatprep.subr.mxu0 0.0
        %3541 = vmatpush1.msra.mxu0 %v3530
        %3542 = vmatprep.subr.mxu0 0.0
        %3543 = vmatpush1.msra.mxu0 %v3531
        %3544 = vmatprep.subr.mxu0 0.0
        %3545 = vmatpush1.msra.mxu0 0.0
        %3546 = vmatprep.subr.mxu0 0.0
        %3547 = vmatpush1.msra.mxu0 0.0
        %3548 = vmatprep.subr.mxu0 0.0
        %3549 = vmatpush1.msra.mxu0 0.0
        %3550 = vmatprep.subr.mxu0 0.0
        %3551 = vmatpush1.msra.mxu0 0.0
        %3552 = vmatprep.subr.mxu0 0.0
        %3553 = vmatpush1.msra.mxu0 0.0
        %3554 = vmatprep.subr.mxu0 0.0
        %3555 = vmatpush1.msra.mxu0 0.0
        %3556 = vmatprep.subr.mxu0 0.0
        %3557 = vmatpush1.msra.mxu0 0.0
        %3558 = vmatprep.subr.mxu0 0.0
        %3559 = vmatpush1.msra.mxu0 0.0
        %3560 = vmatprep.subr.mxu0 0.0
        %3561 = vmatpush1.msra.mxu0 0.0
        %3562 = vmatprep.subr.mxu0 0.0
        %3563 = vmatpush1.msra.mxu0 0.0
        %3564 = vmatprep.subr.mxu0 0.0
        %3565 = vmatpush1.msra.mxu0 0.0
        %3566 = vmatprep.subr.mxu0 0.0
        %3567 = vmatpush1.msra.mxu0 0.0
        %3568 = vmatprep.subr.mxu0 0.0
        %3569 = vmatpush1.msra.mxu0 0.0
        %3570 = vmatprep.subr.mxu0 0.0
        %3571 = vmatpush1.msra.mxu0 0.0
        %3572 = vmatprep.subr.mxu0 0.0
        %3573 = vmatpush1.msra.mxu0 0.0
        %3574 = vmatprep.subr.mxu0 0.0
        %3575 = vmatpush1.msra.mxu0 0.0
        %3576 = vmatprep.subr.mxu0 0.0
        %3577 = vmatpush1.msra.mxu0 0.0
        %3578 = vmatprep.subr.mxu0 0.0
        %3579 = vmatpush1.msra.mxu0 0.0
        %3580 = vmatprep.subr.mxu0 0.0
        %3581 = vmatpush1.msra.mxu0 0.0
        %3582 = vmatprep.subr.mxu0 0.0
        %3583 = vmatpush1.msra.mxu0 0.0
        %3584 = vmatprep.subr.mxu0 0.0
        %3585 = vmatpush1.msra.mxu0 0.0
        %3586 = vmatprep.subr.mxu0 0.0
        %3587 = vmatpush1.msra.mxu0 0.0
        %3588 = vmatprep.subr.mxu0 0.0
        %3589 = vmatpush1.msra.mxu0 0.0
        %3590 = vmatprep.subr.mxu0 0.0
        %3591 = vmatpush1.msra.mxu0 0.0
        %3592 = vmatprep.subr.mxu0 0.0
        %3593 = vmatpush1.msra.mxu0 0.0
        %3594 = vmatprep.subr.mxu0 0.0
        %3595 = vmatpush1.msra.mxu0 0.0
        %3596 = vmatprep.subr.mxu0 0.0
        %3597 = vmatpush1.msra.mxu0 0.0
        %3598 = vmatprep.subr.mxu0 0.0
        %3599 = vmatpush1.msra.mxu0 0.0
        %3600 = vmatprep.mubr.f32.mxu0 0.0
        %3601 = vmatmul.mubr.f32.gmra.mrb[0].mxu0 %v3534
        %v3602 = vpop.f32.mrb[0].mxu0
        %v3603 = vadd.f32 0.0, %v3602
        %v3604 = vpop.f32.mrb[0].mxu0
        %3605 = vdwg.mxu0
        %v3606 = vadd.f32 %v3532, %v3603
        %v3607 = vxor.u32 %v3606, 2147483648
        %v3608 = vmul.f32 %v3607, 1.442695
        %v3609 = vpow.pop %v3608
        %v3610 = vadd.f32 %v3609, 1.0
        %v3611 = vrcp.pop %v3610
        %v3612 = vmul.f32 1.0, %v3611
        %v3613 = vtanh.pop %v3606
        %v3614 = vmul.f32 %v3612, 0.0
        %3616 = vrot.lane.b32.xlu0 %v3613, 64
        %v3617 = vpop.permute.xlu0 %3616
        %v3619 = vmul.f32 %v3612, %v3617
        %3621 = vrot.lane.b32.xlu0 %v3619, 32
        %v3622 = vpop.permute.xlu0 %3621
        %v3624 = vadd.f32 %v3614, %v3622
        %v3625 = vtanh.pop %v3624
        %3627 = vrot.lane.b32.xlu0 %v3625, 64
        %v3628 = vpop.permute.xlu0 %3627
        %v3630 = vmul.f32 %v3612, %v3628
        %v3631 = vld [vmem:[#allocation6 + $0x1] sm:$0x1]
        %3633 = vrot.lane.b32.xlu0 %v3630, 32
        %v3634 = vpop.permute.xlu0 %3633
        %v3635 = vsel %vm1055, %v3634, 0
        %3637 = vmatprep.subr.mxu0 0.0
        %3638 = vmatpush1.msra.mxu0 %v3528
        %3639 = vmatprep.subr.mxu0 0.0
        %3640 = vmatpush1.msra.mxu0 %v3529
        %3641 = vmatprep.subr.mxu0 0.0
        %3642 = vmatpush1.msra.mxu0 %v3530
        %3643 = vmatprep.subr.mxu0 0.0
        %3644 = vmatpush1.msra.mxu0 %v3531
        %3645 = vmatprep.subr.mxu0 0.0
        %3646 = vmatpush1.msra.mxu0 0.0
        %3647 = vmatprep.subr.mxu0 0.0
        %3648 = vmatpush1.msra.mxu0 0.0
        %3649 = vmatprep.subr.mxu0 0.0
        %3650 = vmatpush1.msra.mxu0 0.0
        %3651 = vmatprep.subr.mxu0 0.0
        %3652 = vmatpush1.msra.mxu0 0.0
        %3653 = vmatprep.subr.mxu0 0.0
        %3654 = vmatpush1.msra.mxu0 0.0
        %3655 = vmatprep.subr.mxu0 0.0
        %3656 = vmatpush1.msra.mxu0 0.0
        %3657 = vmatprep.subr.mxu0 0.0
        %3658 = vmatpush1.msra.mxu0 0.0
        %3659 = vmatprep.subr.mxu0 0.0
        %3660 = vmatpush1.msra.mxu0 0.0
        %3661 = vmatprep.subr.mxu0 0.0
        %3662 = vmatpush1.msra.mxu0 0.0
        %3663 = vmatprep.subr.mxu0 0.0
        %3664 = vmatpush1.msra.mxu0 0.0
        %3665 = vmatprep.subr.mxu0 0.0
        %3666 = vmatpush1.msra.mxu0 0.0
        %3667 = vmatprep.subr.mxu0 0.0
        %3668 = vmatpush1.msra.mxu0 0.0
        %3669 = vmatprep.subr.mxu0 0.0
        %3670 = vmatpush1.msra.mxu0 0.0
        %3671 = vmatprep.subr.mxu0 0.0
        %3672 = vmatpush1.msra.mxu0 0.0
        %3673 = vmatprep.subr.mxu0 0.0
        %3674 = vmatpush1.msra.mxu0 0.0
        %3675 = vmatprep.subr.mxu0 0.0
        %3676 = vmatpush1.msra.mxu0 0.0
        %3677 = vmatprep.subr.mxu0 0.0
        %3678 = vmatpush1.msra.mxu0 0.0
        %3679 = vmatprep.subr.mxu0 0.0
        %3680 = vmatpush1.msra.mxu0 0.0
        %3681 = vmatprep.subr.mxu0 0.0
        %3682 = vmatpush1.msra.mxu0 0.0
        %3683 = vmatprep.subr.mxu0 0.0
        %3684 = vmatpush1.msra.mxu0 0.0
        %3685 = vmatprep.subr.mxu0 0.0
        %3686 = vmatpush1.msra.mxu0 0.0
        %3687 = vmatprep.subr.mxu0 0.0
        %3688 = vmatpush1.msra.mxu0 0.0
        %3689 = vmatprep.subr.mxu0 0.0
        %3690 = vmatpush1.msra.mxu0 0.0
        %3691 = vmatprep.subr.mxu0 0.0
        %3692 = vmatpush1.msra.mxu0 0.0
        %3693 = vmatprep.subr.mxu0 0.0
        %3694 = vmatpush1.msra.mxu0 0.0
        %3695 = vmatprep.subr.mxu0 0.0
        %3696 = vmatpush1.msra.mxu0 0.0
        %3697 = vmatprep.subr.mxu0 0.0
        %3698 = vmatpush1.msra.mxu0 0.0
        %3699 = vmatprep.subr.mxu0 0.0
        %3700 = vmatpush1.msra.mxu0 0.0
        %3701 = vmatprep.mubr.f32.mxu0 0.0
        %3702 = vmatmul.mubr.f32.gmra.mrb[0].mxu0 %v3635
        %v3703 = vpop.f32.mrb[0].mxu0
        %v3704 = vadd.f32 0.0, %v3703
        %v3705 = vpop.f32.mrb[0].mxu0
        %3706 = vdwg.mxu0
        %v3707 = vadd.f32 %v3631, %v3704
        %v3708 = vxor.u32 %v3707, 2147483648
        %v3709 = vmul.f32 %v3708, 1.442695
        %v3710 = vpow.pop %v3709
        %v3711 = vadd.f32 %v3710, 1.0
        %v3712 = vrcp.pop %v3711
        %v3713 = vmul.f32 1.0, %v3712
        %v3714 = vtanh.pop %v3707
        %v3715 = vmul.f32 %v3713, %v3624
        %3717 = vrot.lane.b32.xlu0 %v3714, 64
        %v3718 = vpop.permute.xlu0 %3717
        %v3720 = vmul.f32 %v3713, %v3718
        %3722 = vrot.lane.b32.xlu0 %v3720, 32
        %v3723 = vpop.permute.xlu0 %3722
        %v3725 = vadd.f32 %v3715, %v3723
        %v3726 = vtanh.pop %v3725
        %3728 = vrot.lane.b32.xlu0 %v3726, 64
        %v3729 = vpop.permute.xlu0 %3728
        %v3731 = vmul.f32 %v3713, %v3729
        %v3732 = vld [vmem:[#allocation6 + $0x2] sm:$0x1]
        %3734 = vrot.lane.b32.xlu0 %v3731, 32
        %v3735 = vpop.permute.xlu0 %3734
        %v3736 = vsel %vm1055, %v3735, 0
        %3738 = vmatprep.subr.mxu0 0.0
        %3739 = vmatpush1.msra.mxu0 %v3528
        %3740 = vmatprep.subr.mxu0 0.0
        %3741 = vmatpush1.msra.mxu0 %v3529
        %3742 = vmatprep.subr.mxu0 0.0
        %3743 = vmatpush1.msra.mxu0 %v3530
        %3744 = vmatprep.subr.mxu0 0.0
        %3745 = vmatpush1.msra.mxu0 %v3531
        %3746 = vmatprep.subr.mxu0 0.0
        %3747 = vmatpush1.msra.mxu0 0.0
        %3748 = vmatprep.subr.mxu0 0.0
        %3749 = vmatpush1.msra.mxu0 0.0
        %3750 = vmatprep.subr.mxu0 0.0
        %3751 = vmatpush1.msra.mxu0 0.0
        %3752 = vmatprep.subr.mxu0 0.0
        %3753 = vmatpush1.msra.mxu0 0.0
        %3754 = vmatprep.subr.mxu0 0.0
        %3755 = vmatpush1.msra.mxu0 0.0
        %3756 = vmatprep.subr.mxu0 0.0
        %3757 = vmatpush1.msra.mxu0 0.0
        %3758 = vmatprep.subr.mxu0 0.0
        %3759 = vmatpush1.msra.mxu0 0.0
        %3760 = vmatprep.subr.mxu0 0.0
        %3761 = vmatpush1.msra.mxu0 0.0
        %3762 = vmatprep.subr.mxu0 0.0
        %3763 = vmatpush1.msra.mxu0 0.0
        %3764 = vmatprep.subr.mxu0 0.0
        %3765 = vmatpush1.msra.mxu0 0.0
        %3766 = vmatprep.subr.mxu0 0.0
        %3767 = vmatpush1.msra.mxu0 0.0
        %3768 = vmatprep.subr.mxu0 0.0
        %3769 = vmatpush1.msra.mxu0 0.0
        %3770 = vmatprep.subr.mxu0 0.0
        %3771 = vmatpush1.msra.mxu0 0.0
        %3772 = vmatprep.subr.mxu0 0.0
        %3773 = vmatpush1.msra.mxu0 0.0
        %3774 = vmatprep.subr.mxu0 0.0
        %3775 = vmatpush1.msra.mxu0 0.0
        %3776 = vmatprep.subr.mxu0 0.0
        %3777 = vmatpush1.msra.mxu0 0.0
        %3778 = vmatprep.subr.mxu0 0.0
        %3779 = vmatpush1.msra.mxu0 0.0
        %3780 = vmatprep.subr.mxu0 0.0
        %3781 = vmatpush1.msra.mxu0 0.0
        %3782 = vmatprep.subr.mxu0 0.0
        %3783 = vmatpush1.msra.mxu0 0.0
        %3784 = vmatprep.subr.mxu0 0.0
        %3785 = vmatpush1.msra.mxu0 0.0
        %3786 = vmatprep.subr.mxu0 0.0
        %3787 = vmatpush1.msra.mxu0 0.0
        %3788 = vmatprep.subr.mxu0 0.0
        %3789 = vmatpush1.msra.mxu0 0.0
        %3790 = vmatprep.subr.mxu0 0.0
        %3791 = vmatpush1.msra.mxu0 0.0
        %3792 = vmatprep.subr.mxu0 0.0
        %3793 = vmatpush1.msra.mxu0 0.0
        %3794 = vmatprep.subr.mxu0 0.0
        %3795 = vmatpush1.msra.mxu0 0.0
        %3796 = vmatprep.subr.mxu0 0.0
        %3797 = vmatpush1.msra.mxu0 0.0
        %3798 = vmatprep.subr.mxu0 0.0
        %3799 = vmatpush1.msra.mxu0 0.0
        %3800 = vmatprep.subr.mxu0 0.0
        %3801 = vmatpush1.msra.mxu0 0.0
        %3802 = vmatprep.mubr.f32.mxu0 0.0
        %3803 = vmatmul.mubr.f32.gmra.mrb[0].mxu0 %v3736
        %v3804 = vpop.f32.mrb[0].mxu0
        %v3805 = vadd.f32 0.0, %v3804
        %v3806 = vpop.f32.mrb[0].mxu0
        %3807 = vdwg.mxu0
        %v3808 = vadd.f32 %v3732, %v3805
        %v3809 = vxor.u32 %v3808, 2147483648
        %v3810 = vmul.f32 %v3809, 1.442695
        %v3811 = vpow.pop %v3810
        %v3812 = vadd.f32 %v3811, 1.0
        %v3813 = vrcp.pop %v3812
        %v3814 = vmul.f32 1.0, %v3813
        %v3815 = vtanh.pop %v3808
        %v3816 = vmul.f32 %v3814, %v3725
        %3818 = vrot.lane.b32.xlu0 %v3815, 64
        %v3819 = vpop.permute.xlu0 %3818
        %v3821 = vmul.f32 %v3814, %v3819
        %3823 = vrot.lane.b32.xlu0 %v3821, 32
        %v3824 = vpop.permute.xlu0 %3823
        %v3826 = vadd.f32 %v3816, %v3824
        %v3827 = vtanh.pop %v3826
        %3829 = vrot.lane.b32.xlu0 %v3827, 64
        %v3830 = vpop.permute.xlu0 %3829
        %v3832 = vmul.f32 %v3814, %v3830
        %v3833 = vld [vmem:[#allocation6 + $0x3] sm:$0x1]
        %3835 = vrot.lane.b32.xlu0 %v3832, 32
        %v3836 = vpop.permute.xlu0 %3835
        %v3837 = vsel %vm1055, %v3836, 0
        %3839 = vmatprep.subr.mxu0 0.0
        %3840 = vmatpush1.msra.mxu0 %v3528
        %3841 = vmatprep.subr.mxu0 0.0
        %3842 = vmatpush1.msra.mxu0 %v3529
        %3843 = vmatprep.subr.mxu0 0.0
        %3844 = vmatpush1.msra.mxu0 %v3530
        %3845 = vmatprep.subr.mxu0 0.0
        %3846 = vmatpush1.msra.mxu0 %v3531
        %3847 = vmatprep.subr.mxu0 0.0
        %3848 = vmatpush1.msra.mxu0 0.0
        %3849 = vmatprep.subr.mxu0 0.0
        %3850 = vmatpush1.msra.mxu0 0.0
        %3851 = vmatprep.subr.mxu0 0.0
        %3852 = vmatpush1.msra.mxu0 0.0
        %3853 = vmatprep.subr.mxu0 0.0
        %3854 = vmatpush1.msra.mxu0 0.0
        %3855 = vmatprep.subr.mxu0 0.0
        %3856 = vmatpush1.msra.mxu0 0.0
        %3857 = vmatprep.subr.mxu0 0.0
        %3858 = vmatpush1.msra.mxu0 0.0
        %3859 = vmatprep.subr.mxu0 0.0
        %3860 = vmatpush1.msra.mxu0 0.0
        %3861 = vmatprep.subr.mxu0 0.0
        %3862 = vmatpush1.msra.mxu0 0.0
        %3863 = vmatprep.subr.mxu0 0.0
        %3864 = vmatpush1.msra.mxu0 0.0
        %3865 = vmatprep.subr.mxu0 0.0
        %3866 = vmatpush1.msra.mxu0 0.0
        %3867 = vmatprep.subr.mxu0 0.0
        %3868 = vmatpush1.msra.mxu0 0.0
        %3869 = vmatprep.subr.mxu0 0.0
        %3870 = vmatpush1.msra.mxu0 0.0
        %3871 = vmatprep.subr.mxu0 0.0
        %3872 = vmatpush1.msra.mxu0 0.0
        %3873 = vmatprep.subr.mxu0 0.0
        %3874 = vmatpush1.msra.mxu0 0.0
        %3875 = vmatprep.subr.mxu0 0.0
        %3876 = vmatpush1.msra.mxu0 0.0
        %3877 = vmatprep.subr.mxu0 0.0
        %3878 = vmatpush1.msra.mxu0 0.0
        %3879 = vmatprep.subr.mxu0 0.0
        %3880 = vmatpush1.msra.mxu0 0.0
        %3881 = vmatprep.subr.mxu0 0.0
        %3882 = vmatpush1.msra.mxu0 0.0
        %3883 = vmatprep.subr.mxu0 0.0
        %3884 = vmatpush1.msra.mxu0 0.0
        %3885 = vmatprep.subr.mxu0 0.0
        %3886 = vmatpush1.msra.mxu0 0.0
        %3887 = vmatprep.subr.mxu0 0.0
        %3888 = vmatpush1.msra.mxu0 0.0
        %3889 = vmatprep.subr.mxu0 0.0
        %3890 = vmatpush1.msra.mxu0 0.0
        %3891 = vmatprep.subr.mxu0 0.0
        %3892 = vmatpush1.msra.mxu0 0.0
        %3893 = vmatprep.subr.mxu0 0.0
        %3894 = vmatpush1.msra.mxu0 0.0
        %3895 = vmatprep.subr.mxu0 0.0
        %3896 = vmatpush1.msra.mxu0 0.0
        %3897 = vmatprep.subr.mxu0 0.0
        %3898 = vmatpush1.msra.mxu0 0.0
        %3899 = vmatprep.subr.mxu0 0.0
        %3900 = vmatpush1.msra.mxu0 0.0
        %3901 = vmatprep.subr.mxu0 0.0
        %3902 = vmatpush1.msra.mxu0 0.0
        %3903 = vmatprep.mubr.f32.mxu0 0.0
        %3904 = vmatmul.mubr.f32.gmra.mrb[0].mxu0 %v3837
        %v3905 = vpop.f32.mrb[0].mxu0
        %v3906 = vadd.f32 0.0, %v3905
        %v3907 = vpop.f32.mrb[0].mxu0
        %3908 = vdwg.mxu0
        %v3909 = vadd.f32 %v3833, %v3906
        %v3910 = vxor.u32 %v3909, 2147483648
        %v3911 = vmul.f32 %v3910, 1.442695
        %v3912 = vpow.pop %v3911
        %v3913 = vadd.f32 %v3912, 1.0
        %v3914 = vrcp.pop %v3913
        %v3915 = vmul.f32 1.0, %v3914
        %v3916 = vtanh.pop %v3909
        %v3917 = vmul.f32 %v3915, %v3826
        %3919 = vrot.lane.b32.xlu0 %v3916, 64
        %v3920 = vpop.permute.xlu0 %3919
        %v3922 = vmul.f32 %v3915, %v3920
        %3924 = vrot.lane.b32.xlu0 %v3922, 32
        %v3925 = vpop.permute.xlu0 %3924
        %v3927 = vadd.f32 %v3917, %v3925
        %v3928 = vtanh.pop %v3927
        %3930 = vrot.lane.b32.xlu0 %v3928, 64
        %v3931 = vpop.permute.xlu0 %3930
        %v3933 = vmul.f32 %v3915, %v3931
        %v3934 = vld [vmem:[#allocation6 + $0x4] sm:$0x1]
        %3936 = vrot.lane.b32.xlu0 %v3933, 32
        %v3937 = vpop.permute.xlu0 %3936
        %v3938 = vsel %vm1055, %v3937, 0
        %3940 = vmatprep.subr.mxu0 0.0
        %3941 = vmatpush1.msra.mxu0 %v3528
        %3942 = vmatprep.subr.mxu0 0.0
        %3943 = vmatpush1.msra.mxu0 %v3529
        %3944 = vmatprep.subr.mxu0 0.0
        %3945 = vmatpush1.msra.mxu0 %v3530
        %3946 = vmatprep.subr.mxu0 0.0
        %3947 = vmatpush1.msra.mxu0 %v3531
        %3948 = vmatprep.subr.mxu0 0.0
        %3949 = vmatpush1.msra.mxu0 0.0
        %3950 = vmatprep.subr.mxu0 0.0
        %3951 = vmatpush1.msra.mxu0 0.0
        %3952 = vmatprep.subr.mxu0 0.0
        %3953 = vmatpush1.msra.mxu0 0.0
        %3954 = vmatprep.subr.mxu0 0.0
        %3955 = vmatpush1.msra.mxu0 0.0
        %3956 = vmatprep.subr.mxu0 0.0
        %3957 = vmatpush1.msra.mxu0 0.0
        %3958 = vmatprep.subr.mxu0 0.0
        %3959 = vmatpush1.msra.mxu0 0.0
        %3960 = vmatprep.subr.mxu0 0.0
        %3961 = vmatpush1.msra.mxu0 0.0
        %3962 = vmatprep.subr.mxu0 0.0
        %3963 = vmatpush1.msra.mxu0 0.0
        %3964 = vmatprep.subr.mxu0 0.0
        %3965 = vmatpush1.msra.mxu0 0.0
        %3966 = vmatprep.subr.mxu0 0.0
        %3967 = vmatpush1.msra.mxu0 0.0
        %3968 = vmatprep.subr.mxu0 0.0
        %3969 = vmatpush1.msra.mxu0 0.0
        %3970 = vmatprep.subr.mxu0 0.0
        %3971 = vmatpush1.msra.mxu0 0.0
        %3972 = vmatprep.subr.mxu0 0.0
        %3973 = vmatpush1.msra.mxu0 0.0
        %3974 = vmatprep.subr.mxu0 0.0
        %3975 = vmatpush1.msra.mxu0 0.0
        %3976 = vmatprep.subr.mxu0 0.0
        %3977 = vmatpush1.msra.mxu0 0.0
        %3978 = vmatprep.subr.mxu0 0.0
        %3979 = vmatpush1.msra.mxu0 0.0
        %3980 = vmatprep.subr.mxu0 0.0
        %3981 = vmatpush1.msra.mxu0 0.0
        %3982 = vmatprep.subr.mxu0 0.0
        %3983 = vmatpush1.msra.mxu0 0.0
        %3984 = vmatprep.subr.mxu0 0.0
        %3985 = vmatpush1.msra.mxu0 0.0
        %3986 = vmatprep.subr.mxu0 0.0
        %3987 = vmatpush1.msra.mxu0 0.0
        %3988 = vmatprep.subr.mxu0 0.0
        %3989 = vmatpush1.msra.mxu0 0.0
        %3990 = vmatprep.subr.mxu0 0.0
        %3991 = vmatpush1.msra.mxu0 0.0
        %3992 = vmatprep.subr.mxu0 0.0
        %3993 = vmatpush1.msra.mxu0 0.0
        %3994 = vmatprep.subr.mxu0 0.0
        %3995 = vmatpush1.msra.mxu0 0.0
        %3996 = vmatprep.subr.mxu0 0.0
        %3997 = vmatpush1.msra.mxu0 0.0
        %3998 = vmatprep.subr.mxu0 0.0
        %3999 = vmatpush1.msra.mxu0 0.0
        %4000 = vmatprep.subr.mxu0 0.0
        %4001 = vmatpush1.msra.mxu0 0.0
        %4002 = vmatprep.subr.mxu0 0.0
        %4003 = vmatpush1.msra.mxu0 0.0
        %4004 = vmatprep.mubr.f32.mxu0 0.0
        %4005 = vmatmul.mubr.f32.gmra.mrb[0].mxu0 %v3938
        %v4006 = vpop.f32.mrb[0].mxu0
        %v4007 = vadd.f32 0.0, %v4006
        %v4008 = vpop.f32.mrb[0].mxu0
        %4009 = vdwg.mxu0
        %v4010 = vadd.f32 %v3934, %v4007
        %v4011 = vxor.u32 %v4010, 2147483648
        %v4012 = vmul.f32 %v4011, 1.442695
        %v4013 = vpow.pop %v4012
        %v4014 = vadd.f32 %v4013, 1.0
        %v4015 = vrcp.pop %v4014
        %v4016 = vmul.f32 1.0, %v4015
        %v4017 = vtanh.pop %v4010
        %v4018 = vmul.f32 %v4016, %v3927
        %4020 = vrot.lane.b32.xlu0 %v4017, 64
        %v4021 = vpop.permute.xlu0 %4020
        %v4023 = vmul.f32 %v4016, %v4021
        %4025 = vrot.lane.b32.xlu0 %v4023, 32
        %v4026 = vpop.permute.xlu0 %4025
        %v4028 = vadd.f32 %v4018, %v4026
        %v4029 = vtanh.pop %v4028
        %4031 = vrot.lane.b32.xlu0 %v4029, 64
        %v4032 = vpop.permute.xlu0 %4031
        %v4034 = vmul.f32 %v4016, %v4032
        %v4035 = vld [vmem:[#allocation6 + $0x5] sm:$0x1]
        %4037 = vrot.lane.b32.xlu0 %v4034, 32
        %v4038 = vpop.permute.xlu0 %4037
        %v4039 = vsel %vm1055, %v4038, 0
        %4041 = vmatprep.subr.mxu0 0.0
        %4042 = vmatpush1.msra.mxu0 %v3528
        %4043 = vmatprep.subr.mxu0 0.0
        %4044 = vmatpush1.msra.mxu0 %v3529
        %4045 = vmatprep.subr.mxu0 0.0
        %4046 = vmatpush1.msra.mxu0 %v3530
        %4047 = vmatprep.subr.mxu0 0.0
        %4048 = vmatpush1.msra.mxu0 %v3531
        %4049 = vmatprep.subr.mxu0 0.0
        %4050 = vmatpush1.msra.mxu0 0.0
        %4051 = vmatprep.subr.mxu0 0.0
        %4052 = vmatpush1.msra.mxu0 0.0
        %4053 = vmatprep.subr.mxu0 0.0
        %4054 = vmatpush1.msra.mxu0 0.0
        %4055 = vmatprep.subr.mxu0 0.0
        %4056 = vmatpush1.msra.mxu0 0.0
        %4057 = vmatprep.subr.mxu0 0.0
        %4058 = vmatpush1.msra.mxu0 0.0
        %4059 = vmatprep.subr.mxu0 0.0
        %4060 = vmatpush1.msra.mxu0 0.0
        %4061 = vmatprep.subr.mxu0 0.0
        %4062 = vmatpush1.msra.mxu0 0.0
        %4063 = vmatprep.subr.mxu0 0.0
        %4064 = vmatpush1.msra.mxu0 0.0
        %4065 = vmatprep.subr.mxu0 0.0
        %4066 = vmatpush1.msra.mxu0 0.0
        %4067 = vmatprep.subr.mxu0 0.0
        %4068 = vmatpush1.msra.mxu0 0.0
        %4069 = vmatprep.subr.mxu0 0.0
        %4070 = vmatpush1.msra.mxu0 0.0
        %4071 = vmatprep.subr.mxu0 0.0
        %4072 = vmatpush1.msra.mxu0 0.0
        %4073 = vmatprep.subr.mxu0 0.0
        %4074 = vmatpush1.msra.mxu0 0.0
        %4075 = vmatprep.subr.mxu0 0.0
        %4076 = vmatpush1.msra.mxu0 0.0
        %4077 = vmatprep.subr.mxu0 0.0
        %4078 = vmatpush1.msra.mxu0 0.0
        %4079 = vmatprep.subr.mxu0 0.0
        %4080 = vmatpush1.msra.mxu0 0.0
        %4081 = vmatprep.subr.mxu0 0.0
        %4082 = vmatpush1.msra.mxu0 0.0
        %4083 = vmatprep.subr.mxu0 0.0
        %4084 = vmatpush1.msra.mxu0 0.0
        %4085 = vmatprep.subr.mxu0 0.0
        %4086 = vmatpush1.msra.mxu0 0.0
        %4087 = vmatprep.subr.mxu0 0.0
        %4088 = vmatpush1.msra.mxu0 0.0
        %4089 = vmatprep.subr.mxu0 0.0
        %4090 = vmatpush1.msra.mxu0 0.0
        %4091 = vmatprep.subr.mxu0 0.0
        %4092 = vmatpush1.msra.mxu0 0.0
        %4093 = vmatprep.subr.mxu0 0.0
        %4094 = vmatpush1.msra.mxu0 0.0
        %4095 = vmatprep.subr.mxu0 0.0
        %4096 = vmatpush1.msra.mxu0 0.0
        %4097 = vmatprep.subr.mxu0 0.0
        %4098 = vmatpush1.msra.mxu0 0.0
        %4099 = vmatprep.subr.mxu0 0.0
        %4100 = vmatpush1.msra.mxu0 0.0
        %4101 = vmatprep.subr.mxu0 0.0
        %4102 = vmatpush1.msra.mxu0 0.0
        %4103 = vmatprep.subr.mxu0 0.0
        %4104 = vmatpush1.msra.mxu0 0.0
        %4105 = vmatprep.mubr.f32.mxu0 0.0
        %4106 = vmatmul.mubr.f32.gmra.mrb[0].mxu0 %v4039
        %v4107 = vpop.f32.mrb[0].mxu0
        %v4108 = vadd.f32 0.0, %v4107
        %v4109 = vpop.f32.mrb[0].mxu0
        %4110 = vdwg.mxu0
        %v4111 = vadd.f32 %v4035, %v4108
        %v4112 = vxor.u32 %v4111, 2147483648
        %v4113 = vmul.f32 %v4112, 1.442695
        %v4114 = vpow.pop %v4113
        %v4115 = vadd.f32 %v4114, 1.0
        %v4116 = vrcp.pop %v4115
        %v4117 = vmul.f32 1.0, %v4116
        %v4118 = vtanh.pop %v4111
        %v4119 = vmul.f32 %v4117, %v4028
        %4121 = vrot.lane.b32.xlu0 %v4118, 64
        %v4122 = vpop.permute.xlu0 %4121
        %v4124 = vmul.f32 %v4117, %v4122
        %4126 = vrot.lane.b32.xlu0 %v4124, 32
        %v4127 = vpop.permute.xlu0 %4126
        %v4129 = vadd.f32 %v4119, %v4127
        %v4130 = vtanh.pop %v4129
        %4132 = vrot.lane.b32.xlu0 %v4130, 64
        %v4133 = vpop.permute.xlu0 %4132
        %v4135 = vmul.f32 %v4117, %v4133
        %v4136 = vld [vmem:[#allocation6 + $0x6] sm:$0x1]
        %4138 = vrot.lane.b32.xlu0 %v4135, 32
        %v4139 = vpop.permute.xlu0 %4138
        %v4140 = vsel %vm1055, %v4139, 0
        %4142 = vmatprep.subr.mxu0 0.0
        %4143 = vmatpush1.msra.mxu0 %v3528
        %4144 = vmatprep.subr.mxu0 0.0
        %4145 = vmatpush1.msra.mxu0 %v3529
        %4146 = vmatprep.subr.mxu0 0.0
        %4147 = vmatpush1.msra.mxu0 %v3530
        %4148 = vmatprep.subr.mxu0 0.0
        %4149 = vmatpush1.msra.mxu0 %v3531
        %4150 = vmatprep.subr.mxu0 0.0
        %4151 = vmatpush1.msra.mxu0 0.0
        %4152 = vmatprep.subr.mxu0 0.0
        %4153 = vmatpush1.msra.mxu0 0.0
        %4154 = vmatprep.subr.mxu0 0.0
        %4155 = vmatpush1.msra.mxu0 0.0
        %4156 = vmatprep.subr.mxu0 0.0
        %4157 = vmatpush1.msra.mxu0 0.0
        %4158 = vmatprep.subr.mxu0 0.0
        %4159 = vmatpush1.msra.mxu0 0.0
        %4160 = vmatprep.subr.mxu0 0.0
        %4161 = vmatpush1.msra.mxu0 0.0
        %4162 = vmatprep.subr.mxu0 0.0
        %4163 = vmatpush1.msra.mxu0 0.0
        %4164 = vmatprep.subr.mxu0 0.0
        %4165 = vmatpush1.msra.mxu0 0.0
        %4166 = vmatprep.subr.mxu0 0.0
        %4167 = vmatpush1.msra.mxu0 0.0
        %4168 = vmatprep.subr.mxu0 0.0
        %4169 = vmatpush1.msra.mxu0 0.0
        %4170 = vmatprep.subr.mxu0 0.0
        %4171 = vmatpush1.msra.mxu0 0.0
        %4172 = vmatprep.subr.mxu0 0.0
        %4173 = vmatpush1.msra.mxu0 0.0
        %4174 = vmatprep.subr.mxu0 0.0
        %4175 = vmatpush1.msra.mxu0 0.0
        %4176 = vmatprep.subr.mxu0 0.0
        %4177 = vmatpush1.msra.mxu0 0.0
        %4178 = vmatprep.subr.mxu0 0.0
        %4179 = vmatpush1.msra.mxu0 0.0
        %4180 = vmatprep.subr.mxu0 0.0
        %4181 = vmatpush1.msra.mxu0 0.0
        %4182 = vmatprep.subr.mxu0 0.0
        %4183 = vmatpush1.msra.mxu0 0.0
        %4184 = vmatprep.subr.mxu0 0.0
        %4185 = vmatpush1.msra.mxu0 0.0
        %4186 = vmatprep.subr.mxu0 0.0
        %4187 = vmatpush1.msra.mxu0 0.0
        %4188 = vmatprep.subr.mxu0 0.0
        %4189 = vmatpush1.msra.mxu0 0.0
        %4190 = vmatprep.subr.mxu0 0.0
        %4191 = vmatpush1.msra.mxu0 0.0
        %4192 = vmatprep.subr.mxu0 0.0
        %4193 = vmatpush1.msra.mxu0 0.0
        %4194 = vmatprep.subr.mxu0 0.0
        %4195 = vmatpush1.msra.mxu0 0.0
        %4196 = vmatprep.subr.mxu0 0.0
        %4197 = vmatpush1.msra.mxu0 0.0
        %4198 = vmatprep.subr.mxu0 0.0
        %4199 = vmatpush1.msra.mxu0 0.0
        %4200 = vmatprep.subr.mxu0 0.0
        %4201 = vmatpush1.msra.mxu0 0.0
        %4202 = vmatprep.subr.mxu0 0.0
        %4203 = vmatpush1.msra.mxu0 0.0
        %4204 = vmatprep.subr.mxu0 0.0
        %4205 = vmatpush1.msra.mxu0 0.0
        %4206 = vmatprep.mubr.f32.mxu0 0.0
        %4207 = vmatmul.mubr.f32.gmra.mrb[0].mxu0 %v4140
        %v4208 = vpop.f32.mrb[0].mxu0
        %v4209 = vadd.f32 0.0, %v4208
        %v4210 = vpop.f32.mrb[0].mxu0
        %4211 = vdwg.mxu0
        %v4212 = vadd.f32 %v4136, %v4209
        %v4213 = vxor.u32 %v4212, 2147483648
        %v4214 = vmul.f32 %v4213, 1.442695
        %v4215 = vpow.pop %v4214
        %v4216 = vadd.f32 %v4215, 1.0
        %v4217 = vrcp.pop %v4216
        %v4218 = vmul.f32 1.0, %v4217
        %v4219 = vtanh.pop %v4212
        %v4220 = vmul.f32 %v4218, %v4129
        %4222 = vrot.lane.b32.xlu0 %v4219, 64
        %v4223 = vpop.permute.xlu0 %4222
        %v4225 = vmul.f32 %v4218, %v4223
        %4227 = vrot.lane.b32.xlu0 %v4225, 32
        %v4228 = vpop.permute.xlu0 %4227
        %v4230 = vadd.f32 %v4220, %v4228
        %v4231 = vtanh.pop %v4230
        %4233 = vrot.lane.b32.xlu0 %v4231, 64
        %v4234 = vpop.permute.xlu0 %4233
        %v4236 = vmul.f32 %v4218, %v4234
        %v4237 = vld [vmem:[#allocation6 + $0x7] sm:$0x1]
        %4239 = vrot.lane.b32.xlu0 %v4236, 32
        %v4240 = vpop.permute.xlu0 %4239
        %v4241 = vsel %vm1055, %v4240, 0
        %4243 = vmatprep.subr.mxu0 0.0
        %4244 = vmatpush1.msra.mxu0 %v3528
        %4245 = vmatprep.subr.mxu0 0.0
        %4246 = vmatpush1.msra.mxu0 %v3529
        %4247 = vmatprep.subr.mxu0 0.0
        %4248 = vmatpush1.msra.mxu0 %v3530
        %4249 = vmatprep.subr.mxu0 0.0
        %4250 = vmatpush1.msra.mxu0 %v3531
        %4251 = vmatprep.subr.mxu0 0.0
        %4252 = vmatpush1.msra.mxu0 0.0
        %4253 = vmatprep.subr.mxu0 0.0
        %4254 = vmatpush1.msra.mxu0 0.0
        %4255 = vmatprep.subr.mxu0 0.0
        %4256 = vmatpush1.msra.mxu0 0.0
        %4257 = vmatprep.subr.mxu0 0.0
        %4258 = vmatpush1.msra.mxu0 0.0
        %4259 = vmatprep.subr.mxu0 0.0
        %4260 = vmatpush1.msra.mxu0 0.0
        %4261 = vmatprep.subr.mxu0 0.0
        %4262 = vmatpush1.msra.mxu0 0.0
        %4263 = vmatprep.subr.mxu0 0.0
        %4264 = vmatpush1.msra.mxu0 0.0
        %4265 = vmatprep.subr.mxu0 0.0
        %4266 = vmatpush1.msra.mxu0 0.0
        %4267 = vmatprep.subr.mxu0 0.0
        %4268 = vmatpush1.msra.mxu0 0.0
        %4269 = vmatprep.subr.mxu0 0.0
        %4270 = vmatpush1.msra.mxu0 0.0
        %4271 = vmatprep.subr.mxu0 0.0
        %4272 = vmatpush1.msra.mxu0 0.0
        %4273 = vmatprep.subr.mxu0 0.0
        %4274 = vmatpush1.msra.mxu0 0.0
        %4275 = vmatprep.subr.mxu0 0.0
        %4276 = vmatpush1.msra.mxu0 0.0
        %4277 = vmatprep.subr.mxu0 0.0
        %4278 = vmatpush1.msra.mxu0 0.0
        %4279 = vmatprep.subr.mxu0 0.0
        %4280 = vmatpush1.msra.mxu0 0.0
        %4281 = vmatprep.subr.mxu0 0.0
        %4282 = vmatpush1.msra.mxu0 0.0
        %4283 = vmatprep.subr.mxu0 0.0
        %4284 = vmatpush1.msra.mxu0 0.0
        %4285 = vmatprep.subr.mxu0 0.0
        %4286 = vmatpush1.msra.mxu0 0.0
        %4287 = vmatprep.subr.mxu0 0.0
        %4288 = vmatpush1.msra.mxu0 0.0
        %4289 = vmatprep.subr.mxu0 0.0
        %4290 = vmatpush1.msra.mxu0 0.0
        %4291 = vmatprep.subr.mxu0 0.0
        %4292 = vmatpush1.msra.mxu0 0.0
        %4293 = vmatprep.subr.mxu0 0.0
        %4294 = vmatpush1.msra.mxu0 0.0
        %4295 = vmatprep.subr.mxu0 0.0
        %4296 = vmatpush1.msra.mxu0 0.0
        %4297 = vmatprep.subr.mxu0 0.0
        %4298 = vmatpush1.msra.mxu0 0.0
        %4299 = vmatprep.subr.mxu0 0.0
        %4300 = vmatpush1.msra.mxu0 0.0
        %4301 = vmatprep.subr.mxu0 0.0
        %4302 = vmatpush1.msra.mxu0 0.0
        %4303 = vmatprep.subr.mxu0 0.0
        %4304 = vmatpush1.msra.mxu0 0.0
        %4305 = vmatprep.subr.mxu0 0.0
        %4306 = vmatpush1.msra.mxu0 0.0
        %4307 = vmatprep.mubr.f32.mxu0 0.0
        %4308 = vmatmul.mubr.f32.gmra.mrb[0].mxu0 %v4241
        %v4309 = vpop.f32.mrb[0].mxu0
        %v4310 = vadd.f32 0.0, %v4309
        %v4311 = vpop.f32.mrb[0].mxu0
        %4312 = vdwg.mxu0
        %v4313 = vadd.f32 %v4237, %v4310
        %v4314 = vxor.u32 %v4313, 2147483648
        %v4315 = vmul.f32 %v4314, 1.442695
        %v4316 = vpow.pop %v4315
        %v4317 = vadd.f32 %v4316, 1.0
        %v4318 = vrcp.pop %v4317
        %v4319 = vmul.f32 1.0, %v4318
        %v4320 = vtanh.pop %v4313
        %v4321 = vmul.f32 %v4319, %v4230
        %4323 = vrot.lane.b32.xlu0 %v4320, 64
        %v4324 = vpop.permute.xlu0 %4323
        %v4326 = vmul.f32 %v4319, %v4324
        %4328 = vrot.lane.b32.xlu0 %v4326, 32
        %v4329 = vpop.permute.xlu0 %4328
        %v4331 = vadd.f32 %v4321, %v4329
        %v4332 = vtanh.pop %v4331
        %4334 = vrot.lane.b32.xlu0 %v4332, 64
        %v4335 = vpop.permute.xlu0 %4334
        %v4337 = vmul.f32 %v4319, %v4335
        %v4338 = vld [vmem:[#allocation6 + $0x8] sm:$0x1]
        %4340 = vrot.lane.b32.xlu0 %v4337, 32
        %v4341 = vpop.permute.xlu0 %4340
        %v4342 = vsel %vm1055, %v4341, 0
        %4344 = vmatprep.subr.mxu0 0.0
        %4345 = vmatpush1.msra.mxu0 %v3528
        %4346 = vmatprep.subr.mxu0 0.0
        %4347 = vmatpush1.msra.mxu0 %v3529
        %4348 = vmatprep.subr.mxu0 0.0
        %4349 = vmatpush1.msra.mxu0 %v3530
        %4350 = vmatprep.subr.mxu0 0.0
        %4351 = vmatpush1.msra.mxu0 %v3531
        %4352 = vmatprep.subr.mxu0 0.0
        %4353 = vmatpush1.msra.mxu0 0.0
        %4354 = vmatprep.subr.mxu0 0.0
        %4355 = vmatpush1.msra.mxu0 0.0
        %4356 = vmatprep.subr.mxu0 0.0
        %4357 = vmatpush1.msra.mxu0 0.0
        %4358 = vmatprep.subr.mxu0 0.0
        %4359 = vmatpush1.msra.mxu0 0.0
        %4360 = vmatprep.subr.mxu0 0.0
        %4361 = vmatpush1.msra.mxu0 0.0
        %4362 = vmatprep.subr.mxu0 0.0
        %4363 = vmatpush1.msra.mxu0 0.0
        %4364 = vmatprep.subr.mxu0 0.0
        %4365 = vmatpush1.msra.mxu0 0.0
        %4366 = vmatprep.subr.mxu0 0.0
        %4367 = vmatpush1.msra.mxu0 0.0
        %4368 = vmatprep.subr.mxu0 0.0
        %4369 = vmatpush1.msra.mxu0 0.0
        %4370 = vmatprep.subr.mxu0 0.0
        %4371 = vmatpush1.msra.mxu0 0.0
        %4372 = vmatprep.subr.mxu0 0.0
        %4373 = vmatpush1.msra.mxu0 0.0
        %4374 = vmatprep.subr.mxu0 0.0
        %4375 = vmatpush1.msra.mxu0 0.0
        %4376 = vmatprep.subr.mxu0 0.0
        %4377 = vmatpush1.msra.mxu0 0.0
        %4378 = vmatprep.subr.mxu0 0.0
        %4379 = vmatpush1.msra.mxu0 0.0
        %4380 = vmatprep.subr.mxu0 0.0
        %4381 = vmatpush1.msra.mxu0 0.0
        %4382 = vmatprep.subr.mxu0 0.0
        %4383 = vmatpush1.msra.mxu0 0.0
        %4384 = vmatprep.subr.mxu0 0.0
        %4385 = vmatpush1.msra.mxu0 0.0
        %4386 = vmatprep.subr.mxu0 0.0
        %4387 = vmatpush1.msra.mxu0 0.0
        %4388 = vmatprep.subr.mxu0 0.0
        %4389 = vmatpush1.msra.mxu0 0.0
        %4390 = vmatprep.subr.mxu0 0.0
        %4391 = vmatpush1.msra.mxu0 0.0
        %4392 = vmatprep.subr.mxu0 0.0
        %4393 = vmatpush1.msra.mxu0 0.0
        %4394 = vmatprep.subr.mxu0 0.0
        %4395 = vmatpush1.msra.mxu0 0.0
        %4396 = vmatprep.subr.mxu0 0.0
        %4397 = vmatpush1.msra.mxu0 0.0
        %4398 = vmatprep.subr.mxu0 0.0
        %4399 = vmatpush1.msra.mxu0 0.0
        %4400 = vmatprep.subr.mxu0 0.0
        %4401 = vmatpush1.msra.mxu0 0.0
        %4402 = vmatprep.subr.mxu0 0.0
        %4403 = vmatpush1.msra.mxu0 0.0
        %4404 = vmatprep.subr.mxu0 0.0
        %4405 = vmatpush1.msra.mxu0 0.0
        %4406 = vmatprep.subr.mxu0 0.0
        %4407 = vmatpush1.msra.mxu0 0.0
        %4408 = vmatprep.mubr.f32.mxu0 0.0
        %4409 = vmatmul.mubr.f32.gmra.mrb[0].mxu0 %v4342
        %v4410 = vpop.f32.mrb[0].mxu0
        %v4411 = vadd.f32 0.0, %v4410
        %v4412 = vpop.f32.mrb[0].mxu0
        %4413 = vdwg.mxu0
        %v4414 = vadd.f32 %v4338, %v4411
        %v4415 = vxor.u32 %v4414, 2147483648
        %v4416 = vmul.f32 %v4415, 1.442695
        %v4417 = vpow.pop %v4416
        %v4418 = vadd.f32 %v4417, 1.0
        %v4419 = vrcp.pop %v4418
        %v4420 = vmul.f32 1.0, %v4419
        %v4421 = vtanh.pop %v4414
        %v4422 = vmul.f32 %v4420, %v4331
        %4424 = vrot.lane.b32.xlu0 %v4421, 64
        %v4425 = vpop.permute.xlu0 %4424
        %v4427 = vmul.f32 %v4420, %v4425
        %4429 = vrot.lane.b32.xlu0 %v4427, 32
        %v4430 = vpop.permute.xlu0 %4429
        %v4432 = vadd.f32 %v4422, %v4430
        %v4433 = vtanh.pop %v4432
        %4435 = vrot.lane.b32.xlu0 %v4433, 64
        %v4436 = vpop.permute.xlu0 %4435
        %v4438 = vmul.f32 %v4420, %v4436
        %v4439 = vld [vmem:[#allocation6 + $0x9] sm:$0x1]
        %4441 = vrot.lane.b32.xlu0 %v4438, 32
        %v4442 = vpop.permute.xlu0 %4441
        %v4443 = vsel %vm1055, %v4442, 0
        %4445 = vmatprep.subr.mxu0 0.0
        %4446 = vmatpush1.msra.mxu0 %v3528
        %4447 = vmatprep.subr.mxu0 0.0
        %4448 = vmatpush1.msra.mxu0 %v3529
        %4449 = vmatprep.subr.mxu0 0.0
        %4450 = vmatpush1.msra.mxu0 %v3530
        %4451 = vmatprep.subr.mxu0 0.0
        %4452 = vmatpush1.msra.mxu0 %v3531
        %4453 = vmatprep.subr.mxu0 0.0
        %4454 = vmatpush1.msra.mxu0 0.0
        %4455 = vmatprep.subr.mxu0 0.0
        %4456 = vmatpush1.msra.mxu0 0.0
        %4457 = vmatprep.subr.mxu0 0.0
        %4458 = vmatpush1.msra.mxu0 0.0
        %4459 = vmatprep.subr.mxu0 0.0
        %4460 = vmatpush1.msra.mxu0 0.0
        %4461 = vmatprep.subr.mxu0 0.0
        %4462 = vmatpush1.msra.mxu0 0.0
        %4463 = vmatprep.subr.mxu0 0.0
        %4464 = vmatpush1.msra.mxu0 0.0
        %4465 = vmatprep.subr.mxu0 0.0
        %4466 = vmatpush1.msra.mxu0 0.0
        %4467 = vmatprep.subr.mxu0 0.0
        %4468 = vmatpush1.msra.mxu0 0.0
        %4469 = vmatprep.subr.mxu0 0.0
        %4470 = vmatpush1.msra.mxu0 0.0
        %4471 = vmatprep.subr.mxu0 0.0
        %4472 = vmatpush1.msra.mxu0 0.0
        %4473 = vmatprep.subr.mxu0 0.0
        %4474 = vmatpush1.msra.mxu0 0.0
        %4475 = vmatprep.subr.mxu0 0.0
        %4476 = vmatpush1.msra.mxu0 0.0
        %4477 = vmatprep.subr.mxu0 0.0
        %4478 = vmatpush1.msra.mxu0 0.0
        %4479 = vmatprep.subr.mxu0 0.0
        %4480 = vmatpush1.msra.mxu0 0.0
        %4481 = vmatprep.subr.mxu0 0.0
        %4482 = vmatpush1.msra.mxu0 0.0
        %4483 = vmatprep.subr.mxu0 0.0
        %4484 = vmatpush1.msra.mxu0 0.0
        %4485 = vmatprep.subr.mxu0 0.0
        %4486 = vmatpush1.msra.mxu0 0.0
        %4487 = vmatprep.subr.mxu0 0.0
        %4488 = vmatpush1.msra.mxu0 0.0
        %4489 = vmatprep.subr.mxu0 0.0
        %4490 = vmatpush1.msra.mxu0 0.0
        %4491 = vmatprep.subr.mxu0 0.0
        %4492 = vmatpush1.msra.mxu0 0.0
        %4493 = vmatprep.subr.mxu0 0.0
        %4494 = vmatpush1.msra.mxu0 0.0
        %4495 = vmatprep.subr.mxu0 0.0
        %4496 = vmatpush1.msra.mxu0 0.0
        %4497 = vmatprep.subr.mxu0 0.0
        %4498 = vmatpush1.msra.mxu0 0.0
        %4499 = vmatprep.subr.mxu0 0.0
        %4500 = vmatpush1.msra.mxu0 0.0
        %4501 = vmatprep.subr.mxu0 0.0
        %4502 = vmatpush1.msra.mxu0 0.0
        %4503 = vmatprep.subr.mxu0 0.0
        %4504 = vmatpush1.msra.mxu0 0.0
        %4505 = vmatprep.subr.mxu0 0.0
        %4506 = vmatpush1.msra.mxu0 0.0
        %4507 = vmatprep.subr.mxu0 0.0
        %4508 = vmatpush1.msra.mxu0 0.0
        %4509 = vmatprep.mubr.f32.mxu0 0.0
        %4510 = vmatmul.mubr.f32.gmra.mrb[0].mxu0 %v4443
        %v4511 = vpop.f32.mrb[0].mxu0
        %v4512 = vadd.f32 0.0, %v4511
        %v4513 = vpop.f32.mrb[0].mxu0
        %4514 = vdwg.mxu0
        %v4515 = vadd.f32 %v4439, %v4512
        %v4516 = vxor.u32 %v4515, 2147483648
        %v4517 = vmul.f32 %v4516, 1.442695
        %v4518 = vpow.pop %v4517
        %v4519 = vadd.f32 %v4518, 1.0
        %v4520 = vrcp.pop %v4519
        %v4521 = vmul.f32 1.0, %v4520
        %v4522 = vtanh.pop %v4515
        %v4523 = vmul.f32 %v4521, %v4432
        %4525 = vrot.lane.b32.xlu0 %v4522, 64
        %v4526 = vpop.permute.xlu0 %4525
        %v4528 = vmul.f32 %v4521, %v4526
        %4530 = vrot.lane.b32.xlu0 %v4528, 32
        %v4531 = vpop.permute.xlu0 %4530
        %v4533 = vadd.f32 %v4523, %v4531
        %v4534 = vtanh.pop %v4533
        %4536 = vrot.lane.b32.xlu0 %v4534, 64
        %v4537 = vpop.permute.xlu0 %4536
        %v4539 = vmul.f32 %v4521, %v4537
        %v4540 = vld [vmem:[#allocation6 + $0xa] sm:$0x1]
        %4542 = vrot.lane.b32.xlu0 %v4539, 32
        %v4543 = vpop.permute.xlu0 %4542
        %v4544 = vsel %vm1055, %v4543, 0
        %4546 = vmatprep.subr.mxu0 0.0
        %4547 = vmatpush1.msra.mxu0 %v3528
        %4548 = vmatprep.subr.mxu0 0.0
        %4549 = vmatpush1.msra.mxu0 %v3529
        %4550 = vmatprep.subr.mxu0 0.0
        %4551 = vmatpush1.msra.mxu0 %v3530
        %4552 = vmatprep.subr.mxu0 0.0
        %4553 = vmatpush1.msra.mxu0 %v3531
        %4554 = vmatprep.subr.mxu0 0.0
        %4555 = vmatpush1.msra.mxu0 0.0
        %4556 = vmatprep.subr.mxu0 0.0
        %4557 = vmatpush1.msra.mxu0 0.0
        %4558 = vmatprep.subr.mxu0 0.0
        %4559 = vmatpush1.msra.mxu0 0.0
        %4560 = vmatprep.subr.mxu0 0.0
        %4561 = vmatpush1.msra.mxu0 0.0
        %4562 = vmatprep.subr.mxu0 0.0
        %4563 = vmatpush1.msra.mxu0 0.0
        %4564 = vmatprep.subr.mxu0 0.0
        %4565 = vmatpush1.msra.mxu0 0.0
        %4566 = vmatprep.subr.mxu0 0.0
        %4567 = vmatpush1.msra.mxu0 0.0
        %4568 = vmatprep.subr.mxu0 0.0
        %4569 = vmatpush1.msra.mxu0 0.0
        %4570 = vmatprep.subr.mxu0 0.0
        %4571 = vmatpush1.msra.mxu0 0.0
        %4572 = vmatprep.subr.mxu0 0.0
        %4573 = vmatpush1.msra.mxu0 0.0
        %4574 = vmatprep.subr.mxu0 0.0
        %4575 = vmatpush1.msra.mxu0 0.0
        %4576 = vmatprep.subr.mxu0 0.0
        %4577 = vmatpush1.msra.mxu0 0.0
        %4578 = vmatprep.subr.mxu0 0.0
        %4579 = vmatpush1.msra.mxu0 0.0
        %4580 = vmatprep.subr.mxu0 0.0
        %4581 = vmatpush1.msra.mxu0 0.0
        %4582 = vmatprep.subr.mxu0 0.0
        %4583 = vmatpush1.msra.mxu0 0.0
        %4584 = vmatprep.subr.mxu0 0.0
        %4585 = vmatpush1.msra.mxu0 0.0
        %4586 = vmatprep.subr.mxu0 0.0
        %4587 = vmatpush1.msra.mxu0 0.0
        %4588 = vmatprep.subr.mxu0 0.0
        %4589 = vmatpush1.msra.mxu0 0.0
        %4590 = vmatprep.subr.mxu0 0.0
        %4591 = vmatpush1.msra.mxu0 0.0
        %4592 = vmatprep.subr.mxu0 0.0
        %4593 = vmatpush1.msra.mxu0 0.0
        %4594 = vmatprep.subr.mxu0 0.0
        %4595 = vmatpush1.msra.mxu0 0.0
        %4596 = vmatprep.subr.mxu0 0.0
        %4597 = vmatpush1.msra.mxu0 0.0
        %4598 = vmatprep.subr.mxu0 0.0
        %4599 = vmatpush1.msra.mxu0 0.0
        %4600 = vmatprep.subr.mxu0 0.0
        %4601 = vmatpush1.msra.mxu0 0.0
        %4602 = vmatprep.subr.mxu0 0.0
        %4603 = vmatpush1.msra.mxu0 0.0
        %4604 = vmatprep.subr.mxu0 0.0
        %4605 = vmatpush1.msra.mxu0 0.0
        %4606 = vmatprep.subr.mxu0 0.0
        %4607 = vmatpush1.msra.mxu0 0.0
        %4608 = vmatprep.subr.mxu0 0.0
        %4609 = vmatpush1.msra.mxu0 0.0
        %4610 = vmatprep.mubr.f32.mxu0 0.0
        %4611 = vmatmul.mubr.f32.gmra.mrb[0].mxu0 %v4544
        %v4612 = vpop.f32.mrb[0].mxu0
        %v4613 = vadd.f32 0.0, %v4612
        %v4614 = vpop.f32.mrb[0].mxu0
        %4615 = vdwg.mxu0
        %v4616 = vadd.f32 %v4540, %v4613
        %v4617 = vxor.u32 %v4616, 2147483648
        %v4618 = vmul.f32 %v4617, 1.442695
        %v4619 = vpow.pop %v4618
        %v4620 = vadd.f32 %v4619, 1.0
        %v4621 = vrcp.pop %v4620
        %v4622 = vmul.f32 1.0, %v4621
        %v4623 = vtanh.pop %v4616
        %v4624 = vmul.f32 %v4622, %v4533
        %4626 = vrot.lane.b32.xlu0 %v4623, 64
        %v4627 = vpop.permute.xlu0 %4626
        %v4629 = vmul.f32 %v4622, %v4627
        %4631 = vrot.lane.b32.xlu0 %v4629, 32
        %v4632 = vpop.permute.xlu0 %4631
        %v4634 = vadd.f32 %v4624, %v4632
        %v4635 = vtanh.pop %v4634
        %4637 = vrot.lane.b32.xlu0 %v4635, 64
        %v4638 = vpop.permute.xlu0 %4637
        %v4640 = vmul.f32 %v4622, %v4638
        %v4641 = vld [vmem:[#allocation6 + $0xb] sm:$0x1]
        %4643 = vrot.lane.b32.xlu0 %v4640, 32
        %v4644 = vpop.permute.xlu0 %4643
        %v4645 = vsel %vm1055, %v4644, 0
        %4647 = vmatprep.subr.mxu0 0.0
        %4648 = vmatpush1.msra.mxu0 %v3528
        %4649 = vmatprep.subr.mxu0 0.0
        %4650 = vmatpush1.msra.mxu0 %v3529
        %4651 = vmatprep.subr.mxu0 0.0
        %4652 = vmatpush1.msra.mxu0 %v3530
        %4653 = vmatprep.subr.mxu0 0.0
        %4654 = vmatpush1.msra.mxu0 %v3531
        %4655 = vmatprep.subr.mxu0 0.0
        %4656 = vmatpush1.msra.mxu0 0.0
        %4657 = vmatprep.subr.mxu0 0.0
        %4658 = vmatpush1.msra.mxu0 0.0
        %4659 = vmatprep.subr.mxu0 0.0
        %4660 = vmatpush1.msra.mxu0 0.0
        %4661 = vmatprep.subr.mxu0 0.0
        %4662 = vmatpush1.msra.mxu0 0.0
        %4663 = vmatprep.subr.mxu0 0.0
        %4664 = vmatpush1.msra.mxu0 0.0
        %4665 = vmatprep.subr.mxu0 0.0
        %4666 = vmatpush1.msra.mxu0 0.0
        %4667 = vmatprep.subr.mxu0 0.0
        %4668 = vmatpush1.msra.mxu0 0.0
        %4669 = vmatprep.subr.mxu0 0.0
        %4670 = vmatpush1.msra.mxu0 0.0
        %4671 = vmatprep.subr.mxu0 0.0
        %4672 = vmatpush1.msra.mxu0 0.0
        %4673 = vmatprep.subr.mxu0 0.0
        %4674 = vmatpush1.msra.mxu0 0.0
        %4675 = vmatprep.subr.mxu0 0.0
        %4676 = vmatpush1.msra.mxu0 0.0
        %4677 = vmatprep.subr.mxu0 0.0
        %4678 = vmatpush1.msra.mxu0 0.0
        %4679 = vmatprep.subr.mxu0 0.0
        %4680 = vmatpush1.msra.mxu0 0.0
        %4681 = vmatprep.subr.mxu0 0.0
        %4682 = vmatpush1.msra.mxu0 0.0
        %4683 = vmatprep.subr.mxu0 0.0
        %4684 = vmatpush1.msra.mxu0 0.0
        %4685 = vmatprep.subr.mxu0 0.0
        %4686 = vmatpush1.msra.mxu0 0.0
        %4687 = vmatprep.subr.mxu0 0.0
        %4688 = vmatpush1.msra.mxu0 0.0
        %4689 = vmatprep.subr.mxu0 0.0
        %4690 = vmatpush1.msra.mxu0 0.0
        %4691 = vmatprep.subr.mxu0 0.0
        %4692 = vmatpush1.msra.mxu0 0.0
        %4693 = vmatprep.subr.mxu0 0.0
        %4694 = vmatpush1.msra.mxu0 0.0
        %4695 = vmatprep.subr.mxu0 0.0
        %4696 = vmatpush1.msra.mxu0 0.0
        %4697 = vmatprep.subr.mxu0 0.0
        %4698 = vmatpush1.msra.mxu0 0.0
        %4699 = vmatprep.subr.mxu0 0.0
        %4700 = vmatpush1.msra.mxu0 0.0
        %4701 = vmatprep.subr.mxu0 0.0
        %4702 = vmatpush1.msra.mxu0 0.0
        %4703 = vmatprep.subr.mxu0 0.0
        %4704 = vmatpush1.msra.mxu0 0.0
        %4705 = vmatprep.subr.mxu0 0.0
        %4706 = vmatpush1.msra.mxu0 0.0
        %4707 = vmatprep.subr.mxu0 0.0
        %4708 = vmatpush1.msra.mxu0 0.0
        %4709 = vmatprep.subr.mxu0 0.0
        %4710 = vmatpush1.msra.mxu0 0.0
        %4711 = vmatprep.mubr.f32.mxu0 0.0
        %4712 = vmatmul.mubr.f32.gmra.mrb[0].mxu0 %v4645
        %v4713 = vpop.f32.mrb[0].mxu0
        %v4714 = vadd.f32 0.0, %v4713
        %v4715 = vpop.f32.mrb[0].mxu0
        %4716 = vdwg.mxu0
        %v4717 = vadd.f32 %v4641, %v4714
        %v4718 = vxor.u32 %v4717, 2147483648
        %v4719 = vmul.f32 %v4718, 1.442695
        %v4720 = vpow.pop %v4719
        %v4721 = vadd.f32 %v4720, 1.0
        %v4722 = vrcp.pop %v4721
        %v4723 = vmul.f32 1.0, %v4722
        %v4724 = vtanh.pop %v4717
        %v4725 = vmul.f32 %v4723, %v4634
        %4727 = vrot.lane.b32.xlu0 %v4724, 64
        %v4728 = vpop.permute.xlu0 %4727
        %v4730 = vmul.f32 %v4723, %v4728
        %4732 = vrot.lane.b32.xlu0 %v4730, 32
        %v4733 = vpop.permute.xlu0 %4732
        %v4735 = vadd.f32 %v4725, %v4733
        %v4736 = vtanh.pop %v4735
        %4738 = vrot.lane.b32.xlu0 %v4736, 64
        %v4739 = vpop.permute.xlu0 %4738
        %v4741 = vmul.f32 %v4723, %v4739
        %v4742 = vld [vmem:[#allocation6 + $0xc] sm:$0x1]
        %4744 = vrot.lane.b32.xlu0 %v4741, 32
        %v4745 = vpop.permute.xlu0 %4744
        %v4746 = vsel %vm1055, %v4745, 0
        %4748 = vmatprep.subr.mxu0 0.0
        %4749 = vmatpush1.msra.mxu0 %v3528
        %4750 = vmatprep.subr.mxu0 0.0
        %4751 = vmatpush1.msra.mxu0 %v3529
        %4752 = vmatprep.subr.mxu0 0.0
        %4753 = vmatpush1.msra.mxu0 %v3530
        %4754 = vmatprep.subr.mxu0 0.0
        %4755 = vmatpush1.msra.mxu0 %v3531
        %4756 = vmatprep.subr.mxu0 0.0
        %4757 = vmatpush1.msra.mxu0 0.0
        %4758 = vmatprep.subr.mxu0 0.0
        %4759 = vmatpush1.msra.mxu0 0.0
        %4760 = vmatprep.subr.mxu0 0.0
        %4761 = vmatpush1.msra.mxu0 0.0
        %4762 = vmatprep.subr.mxu0 0.0
        %4763 = vmatpush1.msra.mxu0 0.0
        %4764 = vmatprep.subr.mxu0 0.0
        %4765 = vmatpush1.msra.mxu0 0.0
        %4766 = vmatprep.subr.mxu0 0.0
        %4767 = vmatpush1.msra.mxu0 0.0
        %4768 = vmatprep.subr.mxu0 0.0
        %4769 = vmatpush1.msra.mxu0 0.0
        %4770 = vmatprep.subr.mxu0 0.0
        %4771 = vmatpush1.msra.mxu0 0.0
        %4772 = vmatprep.subr.mxu0 0.0
        %4773 = vmatpush1.msra.mxu0 0.0
        %4774 = vmatprep.subr.mxu0 0.0
        %4775 = vmatpush1.msra.mxu0 0.0
        %4776 = vmatprep.subr.mxu0 0.0
        %4777 = vmatpush1.msra.mxu0 0.0
        %4778 = vmatprep.subr.mxu0 0.0
        %4779 = vmatpush1.msra.mxu0 0.0
        %4780 = vmatprep.subr.mxu0 0.0
        %4781 = vmatpush1.msra.mxu0 0.0
        %4782 = vmatprep.subr.mxu0 0.0
        %4783 = vmatpush1.msra.mxu0 0.0
        %4784 = vmatprep.subr.mxu0 0.0
        %4785 = vmatpush1.msra.mxu0 0.0
        %4786 = vmatprep.subr.mxu0 0.0
        %4787 = vmatpush1.msra.mxu0 0.0
        %4788 = vmatprep.subr.mxu0 0.0
        %4789 = vmatpush1.msra.mxu0 0.0
        %4790 = vmatprep.subr.mxu0 0.0
        %4791 = vmatpush1.msra.mxu0 0.0
        %4792 = vmatprep.subr.mxu0 0.0
        %4793 = vmatpush1.msra.mxu0 0.0
        %4794 = vmatprep.subr.mxu0 0.0
        %4795 = vmatpush1.msra.mxu0 0.0
        %4796 = vmatprep.subr.mxu0 0.0
        %4797 = vmatpush1.msra.mxu0 0.0
        %4798 = vmatprep.subr.mxu0 0.0
        %4799 = vmatpush1.msra.mxu0 0.0
        %4800 = vmatprep.subr.mxu0 0.0
        %4801 = vmatpush1.msra.mxu0 0.0
        %4802 = vmatprep.subr.mxu0 0.0
        %4803 = vmatpush1.msra.mxu0 0.0
        %4804 = vmatprep.subr.mxu0 0.0
        %4805 = vmatpush1.msra.mxu0 0.0
        %4806 = vmatprep.subr.mxu0 0.0
        %4807 = vmatpush1.msra.mxu0 0.0
        %4808 = vmatprep.subr.mxu0 0.0
        %4809 = vmatpush1.msra.mxu0 0.0
        %4810 = vmatprep.subr.mxu0 0.0
        %4811 = vmatpush1.msra.mxu0 0.0
        %4812 = vmatprep.mubr.f32.mxu0 0.0
        %4813 = vmatmul.mubr.f32.gmra.mrb[0].mxu0 %v4746
        %v4814 = vpop.f32.mrb[0].mxu0
        %v4815 = vadd.f32 0.0, %v4814
        %v4816 = vpop.f32.mrb[0].mxu0
        %4817 = vdwg.mxu0
        %v4818 = vadd.f32 %v4742, %v4815
        %v4819 = vxor.u32 %v4818, 2147483648
        %v4820 = vmul.f32 %v4819, 1.442695
        %v4821 = vpow.pop %v4820
        %v4822 = vadd.f32 %v4821, 1.0
        %v4823 = vrcp.pop %v4822
        %v4824 = vmul.f32 1.0, %v4823
        %v4825 = vtanh.pop %v4818
        %v4826 = vmul.f32 %v4824, %v4735
        %4828 = vrot.lane.b32.xlu0 %v4825, 64
        %v4829 = vpop.permute.xlu0 %4828
        %v4831 = vmul.f32 %v4824, %v4829
        %4833 = vrot.lane.b32.xlu0 %v4831, 32
        %v4834 = vpop.permute.xlu0 %4833
        %v4836 = vadd.f32 %v4826, %v4834
        %v4837 = vtanh.pop %v4836
        %4839 = vrot.lane.b32.xlu0 %v4837, 64
        %v4840 = vpop.permute.xlu0 %4839
        %v4842 = vmul.f32 %v4824, %v4840
        %v4843 = vld [vmem:[#allocation6 + $0xd] sm:$0x1]
        %4845 = vrot.lane.b32.xlu0 %v4842, 32
        %v4846 = vpop.permute.xlu0 %4845
        %v4847 = vsel %vm1055, %v4846, 0
        %4849 = vmatprep.subr.mxu0 0.0
        %4850 = vmatpush1.msra.mxu0 %v3528
        %4851 = vmatprep.subr.mxu0 0.0
        %4852 = vmatpush1.msra.mxu0 %v3529
        %4853 = vmatprep.subr.mxu0 0.0
        %4854 = vmatpush1.msra.mxu0 %v3530
        %4855 = vmatprep.subr.mxu0 0.0
        %4856 = vmatpush1.msra.mxu0 %v3531
        %4857 = vmatprep.subr.mxu0 0.0
        %4858 = vmatpush1.msra.mxu0 0.0
        %4859 = vmatprep.subr.mxu0 0.0
        %4860 = vmatpush1.msra.mxu0 0.0
        %4861 = vmatprep.subr.mxu0 0.0
        %4862 = vmatpush1.msra.mxu0 0.0
        %4863 = vmatprep.subr.mxu0 0.0
        %4864 = vmatpush1.msra.mxu0 0.0
        %4865 = vmatprep.subr.mxu0 0.0
        %4866 = vmatpush1.msra.mxu0 0.0
        %4867 = vmatprep.subr.mxu0 0.0
        %4868 = vmatpush1.msra.mxu0 0.0
        %4869 = vmatprep.subr.mxu0 0.0
        %4870 = vmatpush1.msra.mxu0 0.0
        %4871 = vmatprep.subr.mxu0 0.0
        %4872 = vmatpush1.msra.mxu0 0.0
        %4873 = vmatprep.subr.mxu0 0.0
        %4874 = vmatpush1.msra.mxu0 0.0
        %4875 = vmatprep.subr.mxu0 0.0
        %4876 = vmatpush1.msra.mxu0 0.0
        %4877 = vmatprep.subr.mxu0 0.0
        %4878 = vmatpush1.msra.mxu0 0.0
        %4879 = vmatprep.subr.mxu0 0.0
        %4880 = vmatpush1.msra.mxu0 0.0
        %4881 = vmatprep.subr.mxu0 0.0
        %4882 = vmatpush1.msra.mxu0 0.0
        %4883 = vmatprep.subr.mxu0 0.0
        %4884 = vmatpush1.msra.mxu0 0.0
        %4885 = vmatprep.subr.mxu0 0.0
        %4886 = vmatpush1.msra.mxu0 0.0
        %4887 = vmatprep.subr.mxu0 0.0
        %4888 = vmatpush1.msra.mxu0 0.0
        %4889 = vmatprep.subr.mxu0 0.0
        %4890 = vmatpush1.msra.mxu0 0.0
        %4891 = vmatprep.subr.mxu0 0.0
        %4892 = vmatpush1.msra.mxu0 0.0
        %4893 = vmatprep.subr.mxu0 0.0
        %4894 = vmatpush1.msra.mxu0 0.0
        %4895 = vmatprep.subr.mxu0 0.0
        %4896 = vmatpush1.msra.mxu0 0.0
        %4897 = vmatprep.subr.mxu0 0.0
        %4898 = vmatpush1.msra.mxu0 0.0
        %4899 = vmatprep.subr.mxu0 0.0
        %4900 = vmatpush1.msra.mxu0 0.0
        %4901 = vmatprep.subr.mxu0 0.0
        %4902 = vmatpush1.msra.mxu0 0.0
        %4903 = vmatprep.subr.mxu0 0.0
        %4904 = vmatpush1.msra.mxu0 0.0
        %4905 = vmatprep.subr.mxu0 0.0
        %4906 = vmatpush1.msra.mxu0 0.0
        %4907 = vmatprep.subr.mxu0 0.0
        %4908 = vmatpush1.msra.mxu0 0.0
        %4909 = vmatprep.subr.mxu0 0.0
        %4910 = vmatpush1.msra.mxu0 0.0
        %4911 = vmatprep.subr.mxu0 0.0
        %4912 = vmatpush1.msra.mxu0 0.0
        %4913 = vmatprep.mubr.f32.mxu0 0.0
        %4914 = vmatmul.mubr.f32.gmra.mrb[0].mxu0 %v4847
        %v4915 = vpop.f32.mrb[0].mxu0
        %v4916 = vadd.f32 0.0, %v4915
        %v4917 = vpop.f32.mrb[0].mxu0
        %4918 = vdwg.mxu0
        %v4919 = vadd.f32 %v4843, %v4916
        %v4920 = vxor.u32 %v4919, 2147483648
        %v4921 = vmul.f32 %v4920, 1.442695
        %v4922 = vpow.pop %v4921
        %v4923 = vadd.f32 %v4922, 1.0
        %v4924 = vrcp.pop %v4923
        %v4925 = vmul.f32 1.0, %v4924
        %v4926 = vtanh.pop %v4919
        %v4927 = vmul.f32 %v4925, %v4836
        %4929 = vrot.lane.b32.xlu0 %v4926, 64
        %v4930 = vpop.permute.xlu0 %4929
        %v4932 = vmul.f32 %v4925, %v4930
        %4934 = vrot.lane.b32.xlu0 %v4932, 32
        %v4935 = vpop.permute.xlu0 %4934
        %v4937 = vadd.f32 %v4927, %v4935
        %v4938 = vtanh.pop %v4937
        %4940 = vrot.lane.b32.xlu0 %v4938, 64
        %v4941 = vpop.permute.xlu0 %4940
        %v4943 = vmul.f32 %v4925, %v4941
        %v4944 = vld [vmem:[#allocation6 + $0xe] sm:$0x1]
        %4946 = vrot.lane.b32.xlu0 %v4943, 32
        %v4947 = vpop.permute.xlu0 %4946
        %v4948 = vsel %vm1055, %v4947, 0
        %4950 = vmatprep.subr.mxu0 0.0
        %4951 = vmatpush1.msra.mxu0 %v3528
        %4952 = vmatprep.subr.mxu0 0.0
        %4953 = vmatpush1.msra.mxu0 %v3529
        %4954 = vmatprep.subr.mxu0 0.0
        %4955 = vmatpush1.msra.mxu0 %v3530
        %4956 = vmatprep.subr.mxu0 0.0
        %4957 = vmatpush1.msra.mxu0 %v3531
        %4958 = vmatprep.subr.mxu0 0.0
        %4959 = vmatpush1.msra.mxu0 0.0
        %4960 = vmatprep.subr.mxu0 0.0
        %4961 = vmatpush1.msra.mxu0 0.0
        %4962 = vmatprep.subr.mxu0 0.0
        %4963 = vmatpush1.msra.mxu0 0.0
        %4964 = vmatprep.subr.mxu0 0.0
        %4965 = vmatpush1.msra.mxu0 0.0
        %4966 = vmatprep.subr.mxu0 0.0
        %4967 = vmatpush1.msra.mxu0 0.0
        %4968 = vmatprep.subr.mxu0 0.0
        %4969 = vmatpush1.msra.mxu0 0.0
        %4970 = vmatprep.subr.mxu0 0.0
        %4971 = vmatpush1.msra.mxu0 0.0
        %4972 = vmatprep.subr.mxu0 0.0
        %4973 = vmatpush1.msra.mxu0 0.0
        %4974 = vmatprep.subr.mxu0 0.0
        %4975 = vmatpush1.msra.mxu0 0.0
        %4976 = vmatprep.subr.mxu0 0.0
        %4977 = vmatpush1.msra.mxu0 0.0
        %4978 = vmatprep.subr.mxu0 0.0
        %4979 = vmatpush1.msra.mxu0 0.0
        %4980 = vmatprep.subr.mxu0 0.0
        %4981 = vmatpush1.msra.mxu0 0.0
        %4982 = vmatprep.subr.mxu0 0.0
        %4983 = vmatpush1.msra.mxu0 0.0
        %4984 = vmatprep.subr.mxu0 0.0
        %4985 = vmatpush1.msra.mxu0 0.0
        %4986 = vmatprep.subr.mxu0 0.0
        %4987 = vmatpush1.msra.mxu0 0.0
        %4988 = vmatprep.subr.mxu0 0.0
        %4989 = vmatpush1.msra.mxu0 0.0
        %4990 = vmatprep.subr.mxu0 0.0
        %4991 = vmatpush1.msra.mxu0 0.0
        %4992 = vmatprep.subr.mxu0 0.0
        %4993 = vmatpush1.msra.mxu0 0.0
        %4994 = vmatprep.subr.mxu0 0.0
        %4995 = vmatpush1.msra.mxu0 0.0
        %4996 = vmatprep.subr.mxu0 0.0
        %4997 = vmatpush1.msra.mxu0 0.0
        %4998 = vmatprep.subr.mxu0 0.0
        %4999 = vmatpush1.msra.mxu0 0.0
        %5000 = vmatprep.subr.mxu0 0.0
        %5001 = vmatpush1.msra.mxu0 0.0
        %5002 = vmatprep.subr.mxu0 0.0
        %5003 = vmatpush1.msra.mxu0 0.0
        %5004 = vmatprep.subr.mxu0 0.0
        %5005 = vmatpush1.msra.mxu0 0.0
        %5006 = vmatprep.subr.mxu0 0.0
        %5007 = vmatpush1.msra.mxu0 0.0
        %5008 = vmatprep.subr.mxu0 0.0
        %5009 = vmatpush1.msra.mxu0 0.0
        %5010 = vmatprep.subr.mxu0 0.0
        %5011 = vmatpush1.msra.mxu0 0.0
        %5012 = vmatprep.subr.mxu0 0.0
        %5013 = vmatpush1.msra.mxu0 0.0
        %5014 = vmatprep.mubr.f32.mxu0 0.0
        %5015 = vmatmul.mubr.f32.gmra.mrb[0].mxu0 %v4948
        %v5016 = vpop.f32.mrb[0].mxu0
        %v5017 = vadd.f32 0.0, %v5016
        %v5018 = vpop.f32.mrb[0].mxu0
        %5019 = vdwg.mxu0
        %v5020 = vadd.f32 %v4944, %v5017
        %v5021 = vxor.u32 %v5020, 2147483648
        %v5022 = vmul.f32 %v5021, 1.442695
        %v5023 = vpow.pop %v5022
        %v5024 = vadd.f32 %v5023, 1.0
        %v5025 = vrcp.pop %v5024
        %v5026 = vmul.f32 1.0, %v5025
        %v5027 = vtanh.pop %v5020
        %v5028 = vmul.f32 %v5026, %v4937
        %5030 = vrot.lane.b32.xlu0 %v5027, 64
        %v5031 = vpop.permute.xlu0 %5030
        %v5033 = vmul.f32 %v5026, %v5031
        %5035 = vrot.lane.b32.xlu0 %v5033, 32
        %v5036 = vpop.permute.xlu0 %5035
        %v5038 = vadd.f32 %v5028, %v5036
        %v5039 = vtanh.pop %v5038
        %5041 = vrot.lane.b32.xlu0 %v5039, 64
        %v5042 = vpop.permute.xlu0 %5041
        %v5044 = vmul.f32 %v5026, %v5042
        %v5045 = vld [vmem:[#allocation6 + $0xf] sm:$0x1]
        %5047 = vrot.lane.b32.xlu0 %v5044, 32
        %v5048 = vpop.permute.xlu0 %5047
        %v5049 = vsel %vm1055, %v5048, 0
        %5051 = vmatprep.subr.mxu0 0.0
        %5052 = vmatpush1.msra.mxu0 %v3528
        %5053 = vmatprep.subr.mxu0 0.0
        %5054 = vmatpush1.msra.mxu0 %v3529
        %5055 = vmatprep.subr.mxu0 0.0
        %5056 = vmatpush1.msra.mxu0 %v3530
        %5057 = vmatprep.subr.mxu0 0.0
        %5058 = vmatpush1.msra.mxu0 %v3531
        %5059 = vmatprep.subr.mxu0 0.0
        %5060 = vmatpush1.msra.mxu0 0.0
        %5061 = vmatprep.subr.mxu0 0.0
        %5062 = vmatpush1.msra.mxu0 0.0
        %5063 = vmatprep.subr.mxu0 0.0
        %5064 = vmatpush1.msra.mxu0 0.0
        %5065 = vmatprep.subr.mxu0 0.0
        %5066 = vmatpush1.msra.mxu0 0.0
        %5067 = vmatprep.subr.mxu0 0.0
        %5068 = vmatpush1.msra.mxu0 0.0
        %5069 = vmatprep.subr.mxu0 0.0
        %5070 = vmatpush1.msra.mxu0 0.0
        %5071 = vmatprep.subr.mxu0 0.0
        %5072 = vmatpush1.msra.mxu0 0.0
        %5073 = vmatprep.subr.mxu0 0.0
        %5074 = vmatpush1.msra.mxu0 0.0
        %5075 = vmatprep.subr.mxu0 0.0
        %5076 = vmatpush1.msra.mxu0 0.0
        %5077 = vmatprep.subr.mxu0 0.0
        %5078 = vmatpush1.msra.mxu0 0.0
        %5079 = vmatprep.subr.mxu0 0.0
        %5080 = vmatpush1.msra.mxu0 0.0
        %5081 = vmatprep.subr.mxu0 0.0
        %5082 = vmatpush1.msra.mxu0 0.0
        %5083 = vmatprep.subr.mxu0 0.0
        %5084 = vmatpush1.msra.mxu0 0.0
        %5085 = vmatprep.subr.mxu0 0.0
        %5086 = vmatpush1.msra.mxu0 0.0
        %5087 = vmatprep.subr.mxu0 0.0
        %5088 = vmatpush1.msra.mxu0 0.0
        %5089 = vmatprep.subr.mxu0 0.0
        %5090 = vmatpush1.msra.mxu0 0.0
        %5091 = vmatprep.subr.mxu0 0.0
        %5092 = vmatpush1.msra.mxu0 0.0
        %5093 = vmatprep.subr.mxu0 0.0
        %5094 = vmatpush1.msra.mxu0 0.0
        %5095 = vmatprep.subr.mxu0 0.0
        %5096 = vmatpush1.msra.mxu0 0.0
        %5097 = vmatprep.subr.mxu0 0.0
        %5098 = vmatpush1.msra.mxu0 0.0
        %5099 = vmatprep.subr.mxu0 0.0
        %5100 = vmatpush1.msra.mxu0 0.0
        %5101 = vmatprep.subr.mxu0 0.0
        %5102 = vmatpush1.msra.mxu0 0.0
        %5103 = vmatprep.subr.mxu0 0.0
        %5104 = vmatpush1.msra.mxu0 0.0
        %5105 = vmatprep.subr.mxu0 0.0
        %5106 = vmatpush1.msra.mxu0 0.0
        %5107 = vmatprep.subr.mxu0 0.0
        %5108 = vmatpush1.msra.mxu0 0.0
        %5109 = vmatprep.subr.mxu0 0.0
        %5110 = vmatpush1.msra.mxu0 0.0
        %5111 = vmatprep.subr.mxu0 0.0
        %5112 = vmatpush1.msra.mxu0 0.0
        %5113 = vmatprep.subr.mxu0 0.0
        %5114 = vmatpush1.msra.mxu0 0.0
        %5115 = vmatprep.mubr.f32.mxu0 0.0
        %5116 = vmatmul.mubr.f32.gmra.mrb[0].mxu0 %v5049
        %v5117 = vpop.f32.mrb[0].mxu0
        %v5118 = vadd.f32 0.0, %v5117
        %v5119 = vpop.f32.mrb[0].mxu0
        %5120 = vdwg.mxu0
        %v5121 = vadd.f32 %v5045, %v5118
        %v5122 = vxor.u32 %v5121, 2147483648
        %v5123 = vmul.f32 %v5122, 1.442695
        %v5124 = vpow.pop %v5123
        %v5125 = vadd.f32 %v5124, 1.0
        %v5126 = vrcp.pop %v5125
        %v5127 = vmul.f32 1.0, %v5126
        %v5128 = vtanh.pop %v5121
        %v5129 = vmul.f32 %v5127, %v5038
        %5131 = vrot.lane.b32.xlu0 %v5128, 64
        %v5132 = vpop.permute.xlu0 %5131
        %v5134 = vmul.f32 %v5127, %v5132
        %5136 = vrot.lane.b32.xlu0 %v5134, 32
        %v5137 = vpop.permute.xlu0 %5136
        %v5139 = vadd.f32 %v5129, %v5137
        %v5140 = vtanh.pop %v5139
        %5142 = vrot.lane.b32.xlu0 %v5140, 64
        %v5143 = vpop.permute.xlu0 %5142
        %v5145 = vmul.f32 %v5127, %v5143
        %v5146 = vld [vmem:[%s22] sm:$0xff]
        %v5147 = vld [vmem:[%s22 + $0x8] sm:$0xff]
        %v5148 = vld [vmem:[%s22 + $0x10] sm:$0xff]
        %v5149 = vld [vmem:[%s22 + $0x18] sm:$0xff]
        %v5150 = vld [vmem:[#allocation7] sm:$0x1]
        %5152 = vrot.lane.b32.xlu0 %v5145, 32
        %v5153 = vpop.permute.xlu0 %5152
        %v5154 = vsel %vm1055, %v5153, 0
        %5156 = vmatprep.subr.mxu0 0.0
        %5157 = vmatpush1.msra.mxu0 %v5146
        %5158 = vmatprep.subr.mxu0 0.0
        %5159 = vmatpush1.msra.mxu0 %v5147
        %5160 = vmatprep.subr.mxu0 0.0
        %5161 = vmatpush1.msra.mxu0 %v5148
        %5162 = vmatprep.subr.mxu0 0.0
        %5163 = vmatpush1.msra.mxu0 %v5149
        %5164 = vmatprep.subr.mxu0 0.0
        %5165 = vmatpush1.msra.mxu0 0.0
        %5166 = vmatprep.subr.mxu0 0.0
        %5167 = vmatpush1.msra.mxu0 0.0
        %5168 = vmatprep.subr.mxu0 0.0
        %5169 = vmatpush1.msra.mxu0 0.0
        %5170 = vmatprep.subr.mxu0 0.0
        %5171 = vmatpush1.msra.mxu0 0.0
        %5172 = vmatprep.subr.mxu0 0.0
        %5173 = vmatpush1.msra.mxu0 0.0
        %5174 = vmatprep.subr.mxu0 0.0
        %5175 = vmatpush1.msra.mxu0 0.0
        %5176 = vmatprep.subr.mxu0 0.0
        %5177 = vmatpush1.msra.mxu0 0.0
        %5178 = vmatprep.subr.mxu0 0.0
        %5179 = vmatpush1.msra.mxu0 0.0
        %5180 = vmatprep.subr.mxu0 0.0
        %5181 = vmatpush1.msra.mxu0 0.0
        %5182 = vmatprep.subr.mxu0 0.0
        %5183 = vmatpush1.msra.mxu0 0.0
        %5184 = vmatprep.subr.mxu0 0.0
        %5185 = vmatpush1.msra.mxu0 0.0
        %5186 = vmatprep.subr.mxu0 0.0
        %5187 = vmatpush1.msra.mxu0 0.0
        %5188 = vmatprep.subr.mxu0 0.0
        %5189 = vmatpush1.msra.mxu0 0.0
        %5190 = vmatprep.subr.mxu0 0.0
        %5191 = vmatpush1.msra.mxu0 0.0
        %5192 = vmatprep.subr.mxu0 0.0
        %5193 = vmatpush1.msra.mxu0 0.0
        %5194 = vmatprep.subr.mxu0 0.0
        %5195 = vmatpush1.msra.mxu0 0.0
        %5196 = vmatprep.subr.mxu0 0.0
        %5197 = vmatpush1.msra.mxu0 0.0
        %5198 = vmatprep.subr.mxu0 0.0
        %5199 = vmatpush1.msra.mxu0 0.0
        %5200 = vmatprep.subr.mxu0 0.0
        %5201 = vmatpush1.msra.mxu0 0.0
        %5202 = vmatprep.subr.mxu0 0.0
        %5203 = vmatpush1.msra.mxu0 0.0
        %5204 = vmatprep.subr.mxu0 0.0
        %5205 = vmatpush1.msra.mxu0 0.0
        %5206 = vmatprep.subr.mxu0 0.0
        %5207 = vmatpush1.msra.mxu0 0.0
        %5208 = vmatprep.subr.mxu0 0.0
        %5209 = vmatpush1.msra.mxu0 0.0
        %5210 = vmatprep.subr.mxu0 0.0
        %5211 = vmatpush1.msra.mxu0 0.0
        %5212 = vmatprep.subr.mxu0 0.0
        %5213 = vmatpush1.msra.mxu0 0.0
        %5214 = vmatprep.subr.mxu0 0.0
        %5215 = vmatpush1.msra.mxu0 0.0
        %5216 = vmatprep.subr.mxu0 0.0
        %5217 = vmatpush1.msra.mxu0 0.0
        %5218 = vmatprep.subr.mxu0 0.0
        %5219 = vmatpush1.msra.mxu0 0.0
        %5220 = vmatprep.mubr.f32.mxu0 0.0
        %5221 = vmatmul.mubr.f32.gmra.mrb[0].mxu0 %v5154
        %v5222 = vpop.f32.mrb[0].mxu0
        %v5223 = vadd.f32 %v5150, %v5222
        %v5224 = vpop.f32.mrb[0].mxu0
        %5225 = vdwg.mxu0
        %vm5226 = vcmask 0
        %5227 = vst.msk [vmem:[%s944] sm:$0x1] %vm5226, %v5223
        %p5228 = scmp.lt.s32.totalorder %s46, 1
        %s5229 = scalar_select %p5228, %s46, 1
        %s5230 = scalar_lea.vmem %s24, %s5229
        // Predicated region
        $region181: #{deepvol_forward.1} parent=115 // pred_check
          %p5231 = pneg %p573
        $region182: #{deepvol_forward.1} parent=115 // pred_check_branch
          %5233 = sbr.rel (%p5231) target = $region184
        $region183: #{deepvol_forward.1} parent=115 // pred_region
          _
        $region184: #{deepvol_forward.1} parent=115 // pred_fallthru
          _
      $region116: #{deepvol_forward.1} parent=5 // pred_fallthru
        _
      %p5234 = scmp.le.s32.totalorder 2, %s41
      // Predicated region
      $region185: #{deepvol_forward.1} parent=5 // pred_check
        %p5235 = pneg %p5234
      $region186: #{deepvol_forward.1} parent=5 // pred_check_branch
        %5237 = sbr.rel (%p5235) target = $region188
      $region187: #{deepvol_forward.1} parent=5 // pred_region
        %s5238 = ssub.s32 %s41, 2
        // Predicated region
        $region189: #{deepvol_forward.1} parent=187 // pred_check
          %p5239 = pneg %p579
        $region190: #{deepvol_forward.1} parent=187 // pred_check_branch
          %5241 = sbr.rel (%p5239) target = $region192
        $region191: #{deepvol_forward.1} parent=187 // pred_region
          %p5242 = scmp.lt.s32.totalorder %s47, 1
          %s5243 = scalar_select %p5242, %s47, 1
          %s5244 = scalar_lea.vmem %s24, %s5243
        $region192: #{deepvol_forward.1} parent=187 // pred_fallthru
          _
      $region188: #{deepvol_forward.1} parent=5 // pred_fallthru
        _
    $region6: #{deepvol_forward.1} parent=1 // loop_footer
      %s45 = sadd.s32 1, %s41
    $region7: #{deepvol_forward.1} parent=1 // loop_footer_branch
      %40 = sbr.rel target = $region3
    $region8: #{deepvol_forward.1} parent=1 // loop_exit
      _
    %5245 = vsyncpa [#allocation9], 1
    %s5246 = scalar_lea.sflag [#allocation9], 1
    %5247 = vsyncpa %s5246, 1
    %5248 = vsyncpa [#allocation11], 1
    %5249 = vsyncpa [#allocation14], 1
    %5250 = vsyncpa [#allocation17], 1
    %5251 = vsyncpa [#allocation20], 1
    %5252 = vsyncpa [#allocation23], 1
    %5253 = vsyncpa [#allocation26], 1
    %5254 = vsyncpa [#allocation29], 1
    %5255 = vsyncpa [#allocation32], 1

</llo_original>
